<compile_context>
chip_gen: v7x
topology: tpu7x:2x2x1
jax: 0.10.0
libtpu: 0.0.40
codegen_flags: <defaults>
</compile_context>

<pallas_src>
import functools
import math

import jax
import jax.numpy as jnp
from jax.experimental import pallas as pl
from jax.experimental.pallas import tpu as pltpu


# ---------------------------------------------------------------------------
# Generation-aware VMEM budget / tiling caps.
# ---------------------------------------------------------------------------
def _detect_vmem_limit():
    # ~3/4 of physical VMEM, capped at 96 MiB: v7x (64 MiB) -> 48 MiB,
    # v5e/v6e (128 MiB) -> 96 MiB.  Fallback is the conservative v7x figure.
    try:
        cap = int(pltpu.get_tpu_info().vmem_capacity_bytes)
    except Exception:
        cap = 64 * 1024 * 1024
    return min(cap * 3 // 4, 96 * 1024 * 1024)


_VMEM_LIMIT = _detect_vmem_limit()
_BIG_VMEM = _VMEM_LIMIT > 56 * 1024 * 1024     # v5e/v6e class (128 MiB physical)


def _cparams():
    return pltpu.CompilerParams(dimension_semantics=("parallel",),
                                vmem_limit_bytes=_VMEM_LIMIT)


# ---------------------------------------------------------------------------
# Row-tiling helpers (rows-parallel matmul grids).
# ---------------------------------------------------------------------------
def _pick_row_tile(m, k_max):
    """Largest row tile dividing m under a K- and VMEM-dependent cap, preferring
    >= 2 grid steps (dual TensorCore)."""
    if _BIG_VMEM:
        cap = 512 if k_max >= 2048 else 1024
    else:
        cap = 256 if k_max >= 2048 else 512
    cands = [c for c in (1024, 512, 256, 128, 64, 32, 16, 8) if c <= cap]
    for c in cands:                       # prefer >= 2 parallel grid iterations
        if m % c == 0 and m // c >= 2:
            return c
    for c in cands:                       # else: any clean divisor
        if m % c == 0:
            return c
    return None


def _row_tiling(m, k_max):
    tm = _pick_row_tile(m, k_max)
    if tm is not None:
        return m, tm
    step = 128 if m > 128 else 8
    mp = ((m + step - 1) // step) * step
    return mp, (_pick_row_tile(mp, k_max) or mp)


def _pad_rows(a, mp):
    # TODO(synk): replace with a masked tail tile (ceil-div grid + pltpu.store mask)
    # to avoid the extra HBM copy; never triggers at the shapes used here.
    m = a.shape[0]
    if mp == m:
        return a
    return jnp.pad(a, ((0, mp - m), (0, 0)))


def _bcast_spec(shape):
    zeros = (0,) * len(shape)
    return pl.BlockSpec(shape, lambda *_: zeros)


# ---------------------------------------------------------------------------
# In-kernel math helpers (f32).
# ---------------------------------------------------------------------------
def _layernorm(x, g, b, eps=1e-5):
    mu = jnp.mean(x, axis=-1, keepdims=True)
    var = jnp.mean((x - mu) ** 2, axis=-1, keepdims=True)
    return (x - mu) * jax.lax.rsqrt(var + eps) * g + b


def _gelu_tanh(x):
    # tanh-form GELU routes the transcendental to the EUP slot.
    # TODO(synk): deviates from PyTorch's exact-erf nn.GELU by ~1e-3 max abs.
    c = math.sqrt(2.0 / math.pi)
    return 0.5 * x * (1.0 + jnp.tanh(c * (x + 0.044715 * x * x * x)))


# ---------------------------------------------------------------------------
# PatchEmbedding: Conv2d(Cin, E, k=p, stride=p) -> flatten(2) -> transpose(1,2)
# with the positional-embedding add fused into the kernel epilogue.
# ---------------------------------------------------------------------------
def _patch_embed_kernel(p_ref, w_ref, b_ref, pos_ref, o_ref):
    p = p_ref[0].astype(jnp.bfloat16)                      # (T, K)
    y = jnp.dot(p, w_ref[...], preferred_element_type=jnp.float32)
    o_ref[0] = y + b_ref[...] + pos_ref[...]


def patch_embedding(x, wmat, b, pos, patch_size):
    # TODO(synk): for large images tile T with a 2-D grid instead of one
    # full-(T,K)+(T,E) block per batch element.
    B, C, Himg, Wimg = x.shape
    K, E = wmat.shape
    ps = patch_size
    H, W = Himg // ps, Wimg // ps
    T = H * W
    patches = (x.reshape(B, C, H, ps, W, ps)
                 .transpose(0, 2, 4, 1, 3, 5)
                 .reshape(B, T, K))                        # rows=(h,w), cols=(c,i,j)
    cost = pl.CostEstimate(
        flops=2 * B * T * K * E, transcendentals=0,
        bytes_accessed=4 * B * T * K + 2 * K * E + 4 * (T * E + B * T * E))
    return pl.pallas_call(
        _patch_embed_kernel,
        out_shape=jax.ShapeDtypeStruct((B, T, E), jnp.float32),
        grid=(B,),
        in_specs=[
            pl.BlockSpec((1, T, K), lambda i: (i, 0, 0)),
            _bcast_spec((K, E)),
            _bcast_spec((1, E)),
            _bcast_spec((T, E)),
        ],
        out_specs=pl.BlockSpec((1, T, E), lambda i: (i, 0, 0)),
        compiler_params=_cparams(),
        cost_estimate=cost,
    )(patches, wmat, b, pos)


# ---------------------------------------------------------------------------
# Fused AttentionBlock: one pallas_call per layer, gridded over batch.
#   LN1 -> QKV -> per-head softmax(QK^T/sqrt(Dh))V -> out-proj -> +residual ->
#   LN2 -> Linear -> GELU -> Linear -> +residual         (dropout p=0 -> identity)
# ---------------------------------------------------------------------------
def _attn_block_kernel(x_ref, g1_ref, c1_ref, wqkv_ref, bqkv_ref,
                       wo_ref, bo_ref, g2_ref, c2_ref,
                       w1_ref, b1_ref, w2_ref, b2_ref, o_ref,
                       *, num_heads, scale):
    x = x_ref[0]                                           # (T, E) f32
    E = x.shape[-1]
    Dh = E // num_heads

    y = _layernorm(x, g1_ref[...], c1_ref[...])
    qkv = (jnp.dot(y.astype(jnp.bfloat16), wqkv_ref[...],
                   preferred_element_type=jnp.float32) + bqkv_ref[...])   # (T, 3E)

    # Per-head attention with static lane slices (no in-kernel transposes).
    head_outs = []
    for h in range(num_heads):
        qh = (qkv[:, h * Dh:(h + 1) * Dh] * scale).astype(jnp.bfloat16)
        kh = qkv[:, E + h * Dh:E + (h + 1) * Dh].astype(jnp.bfloat16)
        vh = qkv[:, 2 * E + h * Dh:2 * E + (h + 1) * Dh].astype(jnp.bfloat16)
        s = jnp.einsum('td,sd->ts', qh, kh, preferred_element_type=jnp.float32)
        s = s - jnp.max(s, axis=-1, keepdims=True)
        e = jnp.exp(s)
        p = e * pl.reciprocal(jnp.sum(e, axis=-1, keepdims=True), approx=True)
        head_outs.append(jnp.einsum('ts,sd->td', p.astype(jnp.bfloat16), vh,
                                    preferred_element_type=jnp.float32))
    attn = head_outs[0] if num_heads == 1 else jnp.concatenate(head_outs, axis=-1)

    x1 = x + (jnp.dot(attn.astype(jnp.bfloat16), wo_ref[...],
                      preferred_element_type=jnp.float32) + bo_ref[...])
    y2 = _layernorm(x1, g2_ref[...], c2_ref[...])
    hdn = jnp.dot(y2.astype(jnp.bfloat16), w1_ref[...],
                  preferred_element_type=jnp.float32) + b1_ref[...]
    hdn = _gelu_tanh(hdn)
    o_ref[0] = x1 + (jnp.dot(hdn.astype(jnp.bfloat16), w2_ref[...],
                             preferred_element_type=jnp.float32) + b2_ref[...])


def attention_block(x, layer, num_heads):
    # TODO(synk): for large T, split back into row-tiled LN+QKV / flash-style
    # attention (KV-block inner loop) / proj+MLP kernels to bound VMEM on v7x.
    B, T, E = x.shape
    Hd = layer["w1"].shape[1]
    Dh = E // num_heads
    scale = 1.0 / math.sqrt(Dh)
    kernel = functools.partial(_attn_block_kernel, num_heads=num_heads, scale=scale)
    cost = pl.CostEstimate(
        flops=B * (2 * T * E * (3 * E + E + 2 * Hd) + 4 * num_heads * T * T * Dh),
        transcendentals=B * (num_heads * T * T + T * Hd),
        bytes_accessed=8 * B * T * E + 2 * (4 * E * E + 2 * E * Hd))
    return pl.pallas_call(
        kernel,
        out_shape=jax.ShapeDtypeStruct((B, T, E), jnp.float32),
        grid=(B,),
        in_specs=[
            pl.BlockSpec((1, T, E), lambda i: (i, 0, 0)),  # residual stream rows
            _bcast_spec((1, E)), _bcast_spec((1, E)),      # ln1 gamma/beta
            _bcast_spec((E, 3 * E)), _bcast_spec((1, 3 * E)),  # wqkv (bf16), bqkv
            _bcast_spec((E, E)), _bcast_spec((1, E)),      # wo (bf16), bo
            _bcast_spec((1, E)), _bcast_spec((1, E)),      # ln2 gamma/beta
            _bcast_spec((E, Hd)), _bcast_spec((1, Hd)),    # w1 (bf16), b1
            _bcast_spec((Hd, E)), _bcast_spec((1, E)),     # w2 (bf16), b2
        ],
        out_specs=pl.BlockSpec((1, T, E), lambda i: (i, 0, 0)),
        compiler_params=_cparams(),
        cost_estimate=cost,
    )(x, layer["ln1_w"], layer["ln1_b"], layer["wqkv"], layer["bqkv"],
      layer["wo"], layer["bo"], layer["ln2_w"], layer["ln2_b"],
      layer["w1"], layer["b1"], layer["w2"], layer["b2"])


# ---------------------------------------------------------------------------
# ConvTranspose2d(kernel=4, stride=2, padding=1) + ReLU, NHWC, subpixel form.
# One lane-dense bf16 Pallas matmul over the 16 taps folded into N; the tap
# scatter/interleave (+ bias + ReLU) is cheap bf16 XLA elementwise glue.
# ---------------------------------------------------------------------------
def _deconv_matmul_kernel(x_ref, w_ref, o_ref):
    o_ref[...] = jnp.dot(x_ref[...].astype(jnp.bfloat16), w_ref[...],
                         preferred_element_type=jnp.float32).astype(o_ref.dtype)


def conv_transpose2d_relu_nhwc(x, wmat, bias, cout):
    # TODO(synk): the tap-combine/interleave + bias + ReLU could be fused into the
    # matmul kernel (per-batch blocks with a 1-row halo) to save one more HBM pass.
    B, H, W, Cin = x.shape
    N = wmat.shape[1]
    Cp = N // 16                               # Cout padded so N is a multiple of 128
    M = B * H * W
    Mp, tm = _row_tiling(M, max(Cin, N))
    xr = _pad_rows(x.reshape(M, Cin), Mp)
    cost = pl.CostEstimate(flops=2 * Mp * Cin * N, transcendentals=0,
                           bytes_accessed=2 * (Mp * Cin + Cin * N + Mp * N))
    y = pl.pallas_call(
        _deconv_matmul_kernel,
        out_shape=jax.ShapeDtypeStruct((Mp, N), jnp.bfloat16),
        grid=(Mp // tm,),
        in_specs=[pl.BlockSpec((tm, Cin), lambda i: (i, 0)),
                  _bcast_spec((Cin, N))],
        out_specs=pl.BlockSpec((tm, N), lambda i: (i, 0)),
        compiler_params=_cparams(),
        cost_estimate=cost,
    )(xr, wmat)
    y = y[:M].reshape(B, H, W, 4, 4, Cp)       # (b, ih, iw, kh, kw, c) bf16

    # scatter/combine: out[2m+rh, 2n+rw] = sum of the (at most) 4 taps landing there.
    # rows: even m <- (i=m, kh=1) + (i=m-1, kh=3); odd m <- (i=m, kh=2) + (i=m+1, kh=0)
    zr = jnp.zeros((B, 1, W, 4, Cp), y.dtype)
    eh = y[:, :, :, 1] + jnp.concatenate([zr, y[:, :-1, :, 3]], axis=1)
    oh = y[:, :, :, 2] + jnp.concatenate([y[:, 1:, :, 0], zr], axis=1)
    a = jnp.stack([eh, oh], axis=2)            # (B, H, 2, W, 4, Cp)
    zc = jnp.zeros((B, H, 2, 1, Cp), y.dtype)
    ew = a[:, :, :, :, 1] + jnp.concatenate([zc, a[:, :, :, :-1, 3]], axis=3)
    ow = a[:, :, :, :, 2] + jnp.concatenate([a[:, :, :, 1:, 0], zc], axis=3)
    out = jnp.stack([ew, ow], axis=4).reshape(B, 2 * H, 2 * W, Cp)
    out = jnp.maximum(out + bias, 0.0)
    return out[..., :cout] if cout != Cp else out


# ---------------------------------------------------------------------------
# Full VisionTransformer forward (takes prepared / pre-cast params).
# ---------------------------------------------------------------------------
def vision_transformer_forward(x, params):
    ps = params["patch_size"]
    E = params["embed_dim"]
    B, _, Himg, Wimg = x.shape
    H, W = Himg // ps, Wimg // ps

    tok = patch_embedding(x, params["patch_wmat"], params["patch_b"],
                          params["pos_emb"], ps)           # (B, T, E), +pos fused

    # torch transposes to (T, B, E) here; the per-batch computation is identical in (B, T, E).
    for layer in params["layers"]:
        tok = attention_block(tok, layer, params["num_heads"])

    # torch: transpose back to (B, T, E), then .reshape(B, E, H, W) copies in the
    # (B, T, E) logical order == jnp.reshape on our array (no permute).
    feat = tok.reshape(B, E, H, W)

    y = feat.transpose(0, 2, 3, 1).astype(jnp.bfloat16)    # decoder NHWC, bf16 end-to-end
    for wmat, bias, cout in params["deconvs"]:
        y = conv_transpose2d_relu_nhwc(y, wmat, bias, cout)
    return y.transpose(0, 3, 1, 2).astype(jnp.float32)     # back to NCHW, f32 like torch


# ---------------------------------------------------------------------------
# Parameter initialization (torch-shaped, f32) + one-time inference prep
# (bf16 casts, weight re-layouts, lane-dense Cout padding).
# ---------------------------------------------------------------------------
def init_params(key, *, embed_dim, hidden_dim, in_channels, out_channels,
                num_heads, num_layers, patch_size, num_patches):
    assert embed_dim == 256, "the upsample stack hardcodes 256 input channels"
    keys = iter(jax.random.split(key, 32 + 16 * num_layers))

    def nrm(shape, fan_in):
        return jax.random.normal(next(keys), shape, jnp.float32) / math.sqrt(fan_in)

    E, Hd = embed_dim, hidden_dim
    params = {
        "patch_size": patch_size,
        "embed_dim": E,
        "num_heads": num_heads,
        "patch_w": nrm((E, in_channels, patch_size, patch_size),
                       in_channels * patch_size * patch_size),
        "patch_b": nrm((E,), E),
        "pos_emb": jax.random.normal(next(keys), (1, num_patches, E), jnp.float32),
        "layers": [],
        "deconvs": [],
    }
    for _ in range(num_layers):
        params["layers"].append({
            "ln1_w": jnp.ones((1, E), jnp.float32),
            "ln1_b": jnp.zeros((1, E), jnp.float32),
            "wqkv": nrm((E, 3 * E), E),            # = in_proj_weight.T
            "bqkv": jnp.zeros((1, 3 * E), jnp.float32),
            "wo": nrm((E, E), E),                  # = out_proj.weight.T
            "bo": jnp.zeros((1, E), jnp.float32),
            "ln2_w": jnp.ones((1, E), jnp.float32),
            "ln2_b": jnp.zeros((1, E), jnp.float32),
            "w1": nrm((E, Hd), E),                 # = linear1.weight.T
            "b1": jnp.zeros((1, Hd), jnp.float32),
            "w2": nrm((Hd, E), Hd),                # = linear2.weight.T
            "b2": jnp.zeros((1, E), jnp.float32),
        })
    chans = [256, 128, 64, 32, 16, out_channels]
    for cin, cout in zip(chans[:-1], chans[1:]):
        params["deconvs"].append(
            (nrm((cin, cout, 4, 4), cin * 16), nrm((cout,), cin * 16)))
    return params


def prepare_params(raw):
    """One-time inference prep: bf16 weight casts and MXU-friendly layouts."""
    E = raw["embed_dim"]
    ps = raw["patch_size"]
    C = raw["patch_w"].shape[1]
    K = C * ps * ps
    T = raw["pos_emb"].shape[1]
    prep = {
        "patch_size": ps,
        "embed_dim": E,
        "num_heads": raw["num_heads"],
        "patch_wmat": raw["patch_w"].reshape(E, K).T.astype(jnp.bfloat16),   # (K, E)
        "patch_b": raw["patch_b"].reshape(1, E),
        "pos_emb": raw["pos_emb"].reshape(T, E),
        "layers": [],
        "deconvs": [],
    }
    for layer in raw["layers"]:
        prep["layers"].append({
            "ln1_w": layer["ln1_w"], "ln1_b": layer["ln1_b"],
            "wqkv": layer["wqkv"].astype(jnp.bfloat16), "bqkv": layer["bqkv"],
            "wo": layer["wo"].astype(jnp.bfloat16), "bo": layer["bo"],
            "ln2_w": layer["ln2_w"], "ln2_b": layer["ln2_b"],
            "w1": layer["w1"].astype(jnp.bfloat16), "b1": layer["b1"],
            "w2": layer["w2"].astype(jnp.bfloat16), "b2": layer["b2"],
        })
    for w, b in raw["deconvs"]:
        cin, cout = w.shape[0], w.shape[1]
        coutp = ((cout + 7) // 8) * 8          # 16*coutp % 128 == 0 -> lane-dense store
        if coutp != cout:
            w = jnp.pad(w, ((0, 0), (0, coutp - cout), (0, 0), (0, 0)))
            b = jnp.pad(b, (0, coutp - cout))
        wmat = w.transpose(0, 2, 3, 1).reshape(cin, 16 * coutp).astype(jnp.bfloat16)
        prep["deconvs"].append((wmat, b.astype(jnp.bfloat16), cout))
    return prep


if __name__ == "__main__":
    embed_dim = 256        # required by the hardcoded ConvTranspose2d(256, ...) stack
    hidden_dim = 512
    in_channels = 3
    out_channels = 3
    num_heads = 2          # head_dim = 128 (lane-aligned)
    num_layers = 2
    patch_size = 4
    image_size = 8         # -> H = W = 2 patches, T = num_patches = 4
    num_patches = (image_size // patch_size) ** 2
    batch = 2

    key = jax.random.PRNGKey(0)
    pkey, xkey = jax.random.split(key)
    raw_params = init_params(pkey, embed_dim=embed_dim, hidden_dim=hidden_dim,
                             in_channels=in_channels, out_channels=out_channels,
                             num_heads=num_heads, num_layers=num_layers,
                             patch_size=patch_size, num_patches=num_patches)
    params = prepare_params(raw_params)       # one-time bf16 cast / layout prep
    x = jax.random.normal(xkey, (batch, in_channels, image_size, image_size),
                          jnp.float32)

    fwd = jax.jit(lambda inp: vision_transformer_forward(inp, params))
    out = fwd(x)
    out = jax.block_until_ready(out)

    spatial = (image_size // patch_size) * 32      # 5 ConvTranspose layers, each x2
    assert out.shape == (batch, out_channels, spatial, spatial), out.shape
    assert bool(jnp.all(jnp.isfinite(out)))
    print("KERNEL_OK")
</pallas_src>

<mosaic_0001>
module attributes {stable_mosaic.version = 11 : i64} {
  func.func @_patch_embed_kernel(%arg0: i32, %arg1: memref<1x4x48xf32, #tpu.memory_space<vmem>>, %arg2: memref<48x256xbf16, #tpu.memory_space<vmem>>, %arg3: memref<1x256xf32, #tpu.memory_space<vmem>>, %arg4: memref<4x256xf32, #tpu.memory_space<vmem>>, %arg5: memref<1x4x256xf32, #tpu.memory_space<vmem>>) attributes {dimension_semantics = [#tpu.dimension_semantics<parallel>], iteration_bounds = array<i64: 2>, scalar_prefetch = 0 : i64, scratch_operands = 0 : i64, tpu.core_type = #tpu.core_type<tc>, window_params = [{transform_indices = @transform_0, window_bounds = array<i64: 1, 4, 48>}, {pipeline_mode = #tpu.pipeline_mode<synchronous>, transform_indices = @transform_1, window_bounds = array<i64: 48, 256>}, {pipeline_mode = #tpu.pipeline_mode<synchronous>, transform_indices = @transform_2, window_bounds = array<i64: 1, 256>}, {pipeline_mode = #tpu.pipeline_mode<synchronous>, transform_indices = @transform_3, window_bounds = array<i64: 4, 256>}, {transform_indices = @transform_4, window_bounds = array<i64: 1, 4, 256>}]} {
    %c0 = arith.constant 0 : index
    %c0_0 = arith.constant 0 : index
    %c0_1 = arith.constant 0 : index
    %0 = vector.load %arg1[%c0, %c0_0, %c0_1] : memref<1x4x48xf32, #tpu.memory_space<vmem>>, vector<1x4x48xf32>
    %1 = vector.shape_cast %0 : vector<1x4x48xf32> to vector<4x48xf32>
    %2 = arith.truncf %1 : vector<4x48xf32> to vector<4x48xbf16>
    %c0_2 = arith.constant 0 : index
    %c0_3 = arith.constant 0 : index
    %3 = vector.load %arg2[%c0_2, %c0_3] : memref<48x256xbf16, #tpu.memory_space<vmem>>, vector<48x256xbf16>
    %cst = arith.constant dense<0.000000e+00> : vector<4x256xf32>
    %4 = tpu.matmul %2, %3, %cst {dimension_numbers = #tpu.dot_dimension_numbers<[1], [0], [0], [1], [0, 0, 1, 1], [], []>} : vector<4x48xbf16>, vector<48x256xbf16>, vector<4x256xf32> -> vector<4x256xf32>
    %c0_4 = arith.constant 0 : index
    %c0_5 = arith.constant 0 : index
    %5 = vector.load %arg3[%c0_4, %c0_5] : memref<1x256xf32, #tpu.memory_space<vmem>>, vector<1x256xf32>
    %6 = vector.broadcast %5 : vector<1x256xf32> to vector<4x256xf32>
    %7 = arith.addf %4, %6 : vector<4x256xf32>
    %c0_6 = arith.constant 0 : index
    %c0_7 = arith.constant 0 : index
    %8 = vector.load %arg4[%c0_6, %c0_7] : memref<4x256xf32, #tpu.memory_space<vmem>>, vector<4x256xf32>
    %9 = arith.addf %7, %8 : vector<4x256xf32>
    %c0_8 = arith.constant 0 : index
    %c0_9 = arith.constant 0 : index
    %c0_10 = arith.constant 0 : index
    %10 = vector.load %arg5[%c0_8, %c0_9, %c0_10] : memref<1x4x256xf32, #tpu.memory_space<vmem>>, vector<1x4x256xf32>
    %11 = vector.shape_cast %10 : vector<1x4x256xf32> to vector<4x256xf32>
    %12 = vector.shape_cast %9 : vector<4x256xf32> to vector<1x4x256xf32>
    tpu.vector_store %arg5[%c0_8, %c0_9, %c0_10], %12 {strides = array<i32>} : memref<1x4x256xf32, #tpu.memory_space<vmem>>, vector<1x4x256xf32>,
    return
  }
  func.func @transform_0(%arg0: i32) -> (i32, i32, i32) {
    %c0_i32 = arith.constant 0 : i32
    %c0_i32_0 = arith.constant 0 : i32
    %c0_i32_1 = arith.constant 0 : i32
    return %arg0, %c0_i32, %c0_i32_0 : i32, i32, i32
  }
  func.func @transform_1(%arg0: i32) -> (i32, i32) {
    %c0_i32 = arith.constant 0 : i32
    %c0_i32_0 = arith.constant 0 : i32
    %c0_i32_1 = arith.constant 0 : i32
    return %c0_i32, %c0_i32_0 : i32, i32
  }
  func.func @transform_2(%arg0: i32) -> (i32, i32) {
    %c0_i32 = arith.constant 0 : i32
    %c0_i32_0 = arith.constant 0 : i32
    %c0_i32_1 = arith.constant 0 : i32
    return %c0_i32, %c0_i32_0 : i32, i32
  }
  func.func @transform_3(%arg0: i32) -> (i32, i32) {
    %c0_i32 = arith.constant 0 : i32
    %c0_i32_0 = arith.constant 0 : i32
    %c0_i32_1 = arith.constant 0 : i32
    return %c0_i32, %c0_i32_0 : i32, i32
  }
  func.func @transform_4(%arg0: i32) -> (i32, i32, i32) {
    %c0_i32 = arith.constant 0 : i32
    %c0_i32_0 = arith.constant 0 : i32
    %c0_i32_1 = arith.constant 0 : i32
    return %arg0, %c0_i32, %c0_i32_0 : i32, i32, i32
  }
}

module attributes {stable_mosaic.version = 11 : i64} {
  func.func @_attn_block_kernel(%arg0: i32, %arg1: memref<1x4x256xf32, #tpu.memory_space<vmem>>, %arg2: memref<1x256xf32, #tpu.memory_space<vmem>>, %arg3: memref<1x256xf32, #tpu.memory_space<vmem>>, %arg4: memref<256x768xbf16, #tpu.memory_space<vmem>>, %arg5: memref<1x768xf32, #tpu.memory_space<vmem>>, %arg6: memref<256x256xbf16, #tpu.memory_space<vmem>>, %arg7: memref<1x256xf32, #tpu.memory_space<vmem>>, %arg8: memref<1x256xf32, #tpu.memory_space<vmem>>, %arg9: memref<1x256xf32, #tpu.memory_space<vmem>>, %arg10: memref<256x512xbf16, #tpu.memory_space<vmem>>, %arg11: memref<1x512xf32, #tpu.memory_space<vmem>>, %arg12: memref<512x256xbf16, #tpu.memory_space<vmem>>, %arg13: memref<1x256xf32, #tpu.memory_space<vmem>>, %arg14: memref<1x4x256xf32, #tpu.memory_space<vmem>>) attributes {dimension_semantics = [#tpu.dimension_semantics<parallel>], iteration_bounds = array<i64: 2>, scalar_prefetch = 0 : i64, scratch_operands = 0 : i64, tpu.core_type = #tpu.core_type<tc>, window_params = [{transform_indices = @transform_0, window_bounds = array<i64: 1, 4, 256>}, {pipeline_mode = #tpu.pipeline_mode<synchronous>, transform_indices = @transform_1, window_bounds = array<i64: 1, 256>}, {pipeline_mode = #tpu.pipeline_mode<synchronous>, transform_indices = @transform_2, window_bounds = array<i64: 1, 256>}, {pipeline_mode = #tpu.pipeline_mode<synchronous>, transform_indices = @transform_3, window_bounds = array<i64: 256, 768>}, {pipeline_mode = #tpu.pipeline_mode<synchronous>, transform_indices = @transform_4, window_bounds = array<i64: 1, 768>}, {pipeline_mode = #tpu.pipeline_mode<synchronous>, transform_indices = @transform_5, window_bounds = array<i64: 256, 256>}, {pipeline_mode = #tpu.pipeline_mode<synchronous>, transform_indices = @transform_6, window_bounds = array<i64: 1, 256>}, {pipeline_mode = #tpu.pipeline_mode<synchronous>, transform_indices = @transform_7, window_bounds = array<i64: 1, 256>}, {pipeline_mode = #tpu.pipeline_mode<synchronous>, transform_indices = @transform_8, window_bounds = array<i64: 1, 256>}, {pipeline_mode = #tpu.pipeline_mode<synchronous>, transform_indices = @transform_9, window_bounds = array<i64: 256, 512>}, {pipeline_mode = #tpu.pipeline_mode<synchronous>, transform_indices = @transform_10, window_bounds = array<i64: 1, 512>}, {pipeline_mode = #tpu.pipeline_mode<synchronous>, transform_indices = @transform_11, window_bounds = array<i64: 512, 256>}, {pipeline_mode = #tpu.pipeline_mode<synchronous>, transform_indices = @transform_12, window_bounds = array<i64: 1, 256>}, {transform_indices = @transform_13, window_bounds = array<i64: 1, 4, 256>}]} {
    %c0 = arith.constant 0 : index
    %c0_0 = arith.constant 0 : index
    %c0_1 = arith.constant 0 : index
    %0 = vector.load %arg1[%c0, %c0_0, %c0_1] : memref<1x4x256xf32, #tpu.memory_space<vmem>>, vector<1x4x256xf32>
    %1 = vector.shape_cast %0 : vector<1x4x256xf32> to vector<4x256xf32>
    %c0_2 = arith.constant 0 : index
    %c0_3 = arith.constant 0 : index
    %2 = vector.load %arg2[%c0_2, %c0_3] : memref<1x256xf32, #tpu.memory_space<vmem>>, vector<1x256xf32>
    %c0_4 = arith.constant 0 : index
    %c0_5 = arith.constant 0 : index
    %3 = vector.load %arg3[%c0_4, %c0_5] : memref<1x256xf32, #tpu.memory_space<vmem>>, vector<1x256xf32>
    %cst = arith.constant dense<0.000000e+00> : vector<4xf32>
    %4 = vector.multi_reduction <add>, %1, %cst [1] : vector<4x256xf32> to vector<4xf32>
    %5 = vector.shape_cast %4 : vector<4xf32> to vector<4x1xf32>
    %cst_6 = arith.constant 2.560000e+02 : f32
    %6 = vector.broadcast %cst_6 : f32 to vector<4x1xf32>
    %7 = arith.divf %5, %6 : vector<4x1xf32>
    %8 = vector.broadcast %7 : vector<4x1xf32> to vector<4x256xf32>
    %9 = arith.subf %1, %8 : vector<4x256xf32>
    %10 = arith.mulf %9, %9 : vector<4x256xf32>
    %cst_7 = arith.constant dense<0.000000e+00> : vector<4xf32>
    %11 = vector.multi_reduction <add>, %10, %cst_7 [1] : vector<4x256xf32> to vector<4xf32>
    %12 = vector.shape_cast %11 : vector<4xf32> to vector<4x1xf32>
    %cst_8 = arith.constant 2.560000e+02 : f32
    %13 = vector.broadcast %cst_8 : f32 to vector<4x1xf32>
    %14 = arith.divf %12, %13 : vector<4x1xf32>
    %15 = vector.broadcast %7 : vector<4x1xf32> to vector<4x256xf32>
    %16 = arith.subf %1, %15 : vector<4x256xf32>
    %cst_9 = arith.constant 9.99999974E-6 : f32
    %17 = vector.broadcast %cst_9 : f32 to vector<4x1xf32>
    %18 = arith.addf %14, %17 : vector<4x1xf32>
    %19 = math.rsqrt %18 : vector<4x1xf32>
    %20 = vector.broadcast %19 : vector<4x1xf32> to vector<4x256xf32>
    %21 = arith.mulf %16, %20 : vector<4x256xf32>
    %22 = vector.broadcast %2 : vector<1x256xf32> to vector<4x256xf32>
    %23 = arith.mulf %21, %22 : vector<4x256xf32>
    %24 = vector.broadcast %3 : vector<1x256xf32> to vector<4x256xf32>
    %25 = arith.addf %23, %24 : vector<4x256xf32>
    %26 = arith.truncf %25 : vector<4x256xf32> to vector<4x256xbf16>
    %c0_10 = arith.constant 0 : index
    %c0_11 = arith.constant 0 : index
    %27 = vector.load %arg4[%c0_10, %c0_11] : memref<256x768xbf16, #tpu.memory_space<vmem>>, vector<256x768xbf16>
    %cst_12 = arith.constant dense<0.000000e+00> : vector<4x768xf32>
    %28 = tpu.matmul %26, %27, %cst_12 {dimension_numbers = #tpu.dot_dimension_numbers<[1], [0], [0], [1], [0, 0, 1, 1], [], []>} : vector<4x256xbf16>, vector<256x768xbf16>, vector<4x768xf32> -> vector<4x768xf32>
    %c0_13 = arith.constant 0 : index
    %c0_14 = arith.constant 0 : index
    %29 = vector.load %arg5[%c0_13, %c0_14] : memref<1x768xf32, #tpu.memory_space<vmem>>, vector<1x768xf32>
    %30 = vector.broadcast %29 : vector<1x768xf32> to vector<4x768xf32>
    %31 = arith.addf %28, %30 : vector<4x768xf32>
    %32 = vector.extract_strided_slice %31 {offsets = [0, 0], sizes = [4, 128], strides = [1, 1]} : vector<4x768xf32> to vector<4x128xf32>
    %cst_15 = arith.constant 0.0883883461 : f32
    %33 = vector.broadcast %cst_15 : f32 to vector<4x128xf32>
    %34 = arith.mulf %32, %33 : vector<4x128xf32>
    %35 = arith.truncf %34 : vector<4x128xf32> to vector<4x128xbf16>
    %36 = vector.extract_strided_slice %31 {offsets = [0, 256], sizes = [4, 128], strides = [1, 1]} : vector<4x768xf32> to vector<4x128xf32>
    %37 = arith.truncf %36 : vector<4x128xf32> to vector<4x128xbf16>
    %38 = vector.extract_strided_slice %31 {offsets = [0, 512], sizes = [4, 128], strides = [1, 1]} : vector<4x768xf32> to vector<4x128xf32>
    %39 = arith.truncf %38 : vector<4x128xf32> to vector<4x128xbf16>
    "tpu.trace_start"() <{level = 10 : i32, message = "td,sd->ts"}> : () -> ()
    %cst_16 = arith.constant dense<0.000000e+00> : vector<4x4xf32>
    %40 = tpu.matmul %35, %37, %cst_16 {dimension_numbers = #tpu.dot_dimension_numbers<[1], [1], [0], [0], [0, 0, 1, 0], [], []>} : vector<4x128xbf16>, vector<4x128xbf16>, vector<4x4xf32> -> vector<4x4xf32>
    "tpu.trace_stop"() : () -> ()
    %cst_17 = arith.constant dense<0xFF800000> : vector<4xf32>
    %41 = vector.multi_reduction <maximumf>, %40, %cst_17 [1] : vector<4x4xf32> to vector<4xf32>
    %42 = vector.shape_cast %41 : vector<4xf32> to vector<4x1xf32>
    %43 = vector.broadcast %42 : vector<4x1xf32> to vector<4x4xf32>
    %44 = arith.subf %40, %43 : vector<4x4xf32>
    %45 = math.exp %44 : vector<4x4xf32>
    %cst_18 = arith.constant dense<0.000000e+00> : vector<4xf32>
    %46 = vector.multi_reduction <add>, %45, %cst_18 [1] : vector<4x4xf32> to vector<4xf32>
    %47 = vector.shape_cast %46 : vector<4xf32> to vector<4x1xf32>
    %48 = tpu.reciprocal %47 {approx = true} : vector<4x1xf32> -> vector<4x1xf32>
    %49 = vector.broadcast %48 : vector<4x1xf32> to vector<4x4xf32>
    %50 = arith.mulf %45, %49 : vector<4x4xf32>
    %51 = arith.truncf %50 : vector<4x4xf32> to vector<4x4xbf16>
    "tpu.trace_start"() <{level = 10 : i32, message = "ts,sd->td"}> : () -> ()
    %cst_19 = arith.constant dense<0.000000e+00> : vector<4x128xf32>
    %52 = tpu.matmul %51, %39, %cst_19 {dimension_numbers = #tpu.dot_dimension_numbers<[1], [0], [0], [1], [0, 0, 1, 1], [], []>} : vector<4x4xbf16>, vector<4x128xbf16>, vector<4x128xf32> -> vector<4x128xf32>
    "tpu.trace_stop"() : () -> ()
    %53 = vector.extract_strided_slice %31 {offsets = [0, 128], sizes = [4, 128], strides = [1, 1]} : vector<4x768xf32> to vector<4x128xf32>
    %cst_20 = arith.constant 0.0883883461 : f32
    %54 = vector.broadcast %cst_20 : f32 to vector<4x128xf32>
    %55 = arith.mulf %53, %54 : vector<4x128xf32>
    %56 = arith.truncf %55 : vector<4x128xf32> to vector<4x128xbf16>
    %57 = vector.extract_strided_slice %31 {offsets = [0, 384], sizes = [4, 128], strides = [1, 1]} : vector<4x768xf32> to vector<4x128xf32>
    %58 = arith.truncf %57 : vector<4x128xf32> to vector<4x128xbf16>
    %59 = vector.extract_strided_slice %31 {offsets = [0, 640], sizes = [4, 128], strides = [1, 1]} : vector<4x768xf32> to vector<4x128xf32>
    %60 = arith.truncf %59 : vector<4x128xf32> to vector<4x128xbf16>
    "tpu.trace_start"() <{level = 10 : i32, message = "td,sd->ts"}> : () -> ()
    %cst_21 = arith.constant dense<0.000000e+00> : vector<4x4xf32>
    %61 = tpu.matmul %56, %58, %cst_21 {dimension_numbers = #tpu.dot_dimension_numbers<[1], [1], [0], [0], [0, 0, 1, 0], [], []>} : vector<4x128xbf16>, vector<4x128xbf16>, vector<4x4xf32> -> vector<4x4xf32>
    "tpu.trace_stop"() : () -> ()
    %cst_22 = arith.constant dense<0xFF800000> : vector<4xf32>
    %62 = vector.multi_reduction <maximumf>, %61, %cst_22 [1] : vector<4x4xf32> to vector<4xf32>
    %63 = vector.shape_cast %62 : vector<4xf32> to vector<4x1xf32>
    %64 = vector.broadcast %63 : vector<4x1xf32> to vector<4x4xf32>
    %65 = arith.subf %61, %64 : vector<4x4xf32>
    %66 = math.exp %65 : vector<4x4xf32>
    %cst_23 = arith.constant dense<0.000000e+00> : vector<4xf32>
    %67 = vector.multi_reduction <add>, %66, %cst_23 [1] : vector<4x4xf32> to vector<4xf32>
    %68 = vector.shape_cast %67 : vector<4xf32> to vector<4x1xf32>
    %69 = tpu.reciprocal %68 {approx = true} : vector<4x1xf32> -> vector<4x1xf32>
    %70 = vector.broadcast %69 : vector<4x1xf32> to vector<4x4xf32>
    %71 = arith.mulf %66, %70 : vector<4x4xf32>
    %72 = arith.truncf %71 : vector<4x4xf32> to vector<4x4xbf16>
    "tpu.trace_start"() <{level = 10 : i32, message = "ts,sd->td"}> : () -> ()
    %cst_24 = arith.constant dense<0.000000e+00> : vector<4x128xf32>
    %73 = tpu.matmul %72, %60, %cst_24 {dimension_numbers = #tpu.dot_dimension_numbers<[1], [0], [0], [1], [0, 0, 1, 1], [], []>} : vector<4x4xbf16>, vector<4x128xbf16>, vector<4x128xf32> -> vector<4x128xf32>
    "tpu.trace_stop"() : () -> ()
    %74 = tpu.concatenate %52, %73 in 1 : vector<4x128xf32>, vector<4x128xf32> -> vector<4x256xf32>
    %75 = arith.truncf %74 : vector<4x256xf32> to vector<4x256xbf16>
    %c0_25 = arith.constant 0 : index
    %c0_26 = arith.constant 0 : index
    %76 = vector.load %arg6[%c0_25, %c0_26] : memref<256x256xbf16, #tpu.memory_space<vmem>>, vector<256x256xbf16>
    %cst_27 = arith.constant dense<0.000000e+00> : vector<4x256xf32>
    %77 = tpu.matmul %75, %76, %cst_27 {dimension_numbers = #tpu.dot_dimension_numbers<[1], [0], [0], [1], [0, 0, 1, 1], [], []>} : vector<4x256xbf16>, vector<256x256xbf16>, vector<4x256xf32> -> vector<4x256xf32>
    %c0_28 = arith.constant 0 : index
    %c0_29 = arith.constant 0 : index
    %78 = vector.load %arg7[%c0_28, %c0_29] : memref<1x256xf32, #tpu.memory_space<vmem>>, vector<1x256xf32>
    %79 = vector.broadcast %78 : vector<1x256xf32> to vector<4x256xf32>
    %80 = arith.addf %77, %79 : vector<4x256xf32>
    %81 = arith.addf %1, %80 : vector<4x256xf32>
    %c0_30 = arith.constant 0 : index
    %c0_31 = arith.constant 0 : index
    %82 = vector.load %arg8[%c0_30, %c0_31] : memref<1x256xf32, #tpu.memory_space<vmem>>, vector<1x256xf32>
    %c0_32 = arith.constant 0 : index
    %c0_33 = arith.constant 0 : index
    %83 = vector.load %arg9[%c0_32, %c0_33] : memref<1x256xf32, #tpu.memory_space<vmem>>, vector<1x256xf32>
    %cst_34 = arith.constant dense<0.000000e+00> : vector<4xf32>
    %84 = vector.multi_reduction <add>, %81, %cst_34 [1] : vector<4x256xf32> to vector<4xf32>
    %85 = vector.shape_cast %84 : vector<4xf32> to vector<4x1xf32>
    %cst_35 = arith.constant 2.560000e+02 : f32
    %86 = vector.broadcast %cst_35 : f32 to vector<4x1xf32>
    %87 = arith.divf %85, %86 : vector<4x1xf32>
    %88 = vector.broadcast %87 : vector<4x1xf32> to vector<4x256xf32>
    %89 = arith.subf %81, %88 : vector<4x256xf32>
    %90 = arith.mulf %89, %89 : vector<4x256xf32>
    %cst_36 = arith.constant dense<0.000000e+00> : vector<4xf32>
    %91 = vector.multi_reduction <add>, %90, %cst_36 [1] : vector<4x256xf32> to vector<4xf32>
    %92 = vector.shape_cast %91 : vector<4xf32> to vector<4x1xf32>
    %cst_37 = arith.constant 2.560000e+02 : f32
    %93 = vector.broadcast %cst_37 : f32 to vector<4x1xf32>
    %94 = arith.divf %92, %93 : vector<4x1xf32>
    %95 = vector.broadcast %87 : vector<4x1xf32> to vector<4x256xf32>
    %96 = arith.subf %81, %95 : vector<4x256xf32>
    %cst_38 = arith.constant 9.99999974E-6 : f32
    %97 = vector.broadcast %cst_38 : f32 to vector<4x1xf32>
    %98 = arith.addf %94, %97 : vector<4x1xf32>
    %99 = math.rsqrt %98 : vector<4x1xf32>
    %100 = vector.broadcast %99 : vector<4x1xf32> to vector<4x256xf32>
    %101 = arith.mulf %96, %100 : vector<4x256xf32>
    %102 = vector.broadcast %82 : vector<1x256xf32> to vector<4x256xf32>
    %103 = arith.mulf %101, %102 : vector<4x256xf32>
    %104 = vector.broadcast %83 : vector<1x256xf32> to vector<4x256xf32>
    %105 = arith.addf %103, %104 : vector<4x256xf32>
    %106 = arith.truncf %105 : vector<4x256xf32> to vector<4x256xbf16>
    %c0_39 = arith.constant 0 : index
    %c0_40 = arith.constant 0 : index
    %107 = vector.load %arg10[%c0_39, %c0_40] : memref<256x512xbf16, #tpu.memory_space<vmem>>, vector<256x512xbf16>
    %cst_41 = arith.constant dense<0.000000e+00> : vector<4x512xf32>
    %108 = tpu.matmul %106, %107, %cst_41 {dimension_numbers = #tpu.dot_dimension_numbers<[1], [0], [0], [1], [0, 0, 1, 1], [], []>} : vector<4x256xbf16>, vector<256x512xbf16>, vector<4x512xf32> -> vector<4x512xf32>
    %c0_42 = arith.constant 0 : index
    %c0_43 = arith.constant 0 : index
    %109 = vector.load %arg11[%c0_42, %c0_43] : memref<1x512xf32, #tpu.memory_space<vmem>>, vector<1x512xf32>
    %110 = vector.broadcast %109 : vector<1x512xf32> to vector<4x512xf32>
    %111 = arith.addf %108, %110 : vector<4x512xf32>
    %cst_44 = arith.constant 5.000000e-01 : f32
    %112 = vector.broadcast %cst_44 : f32 to vector<4x512xf32>
    %113 = arith.mulf %112, %111 : vector<4x512xf32>
    %cst_45 = arith.constant 4.471500e-02 : f32
    %114 = vector.broadcast %cst_45 : f32 to vector<4x512xf32>
    %115 = arith.mulf %114, %111 : vector<4x512xf32>
    %116 = arith.mulf %115, %111 : vector<4x512xf32>
    %117 = arith.mulf %116, %111 : vector<4x512xf32>
    %118 = arith.addf %111, %117 : vector<4x512xf32>
    %cst_46 = arith.constant 0.797884583 : f32
    %119 = vector.broadcast %cst_46 : f32 to vector<4x512xf32>
    %120 = arith.mulf %119, %118 : vector<4x512xf32>
    %121 = math.tanh %120 : vector<4x512xf32>
    %cst_47 = arith.constant 1.000000e+00 : f32
    %122 = vector.broadcast %cst_47 : f32 to vector<4x512xf32>
    %123 = arith.addf %122, %121 : vector<4x512xf32>
    %124 = arith.mulf %113, %123 : vector<4x512xf32>
    %125 = arith.truncf %124 : vector<4x512xf32> to vector<4x512xbf16>
    %c0_48 = arith.constant 0 : index
    %c0_49 = arith.constant 0 : index
    %126 = vector.load %arg12[%c0_48, %c0_49] : memref<512x256xbf16, #tpu.memory_space<vmem>>, vector<512x256xbf16>
    %cst_50 = arith.constant dense<0.000000e+00> : vector<4x256xf32>
    %127 = tpu.matmul %125, %126, %cst_50 {dimension_numbers = #tpu.dot_dimension_numbers<[1], [0], [0], [1], [0, 0, 1, 1], [], []>} : vector<4x512xbf16>, vector<512x256xbf16>, vector<4x256xf32> -> vector<4x256xf32>
    %c0_51 = arith.constant 0 : index
    %c0_52 = arith.constant 0 : index
    %128 = vector.load %arg13[%c0_51, %c0_52] : memref<1x256xf32, #tpu.memory_space<vmem>>, vector<1x256xf32>
    %129 = vector.broadcast %128 : vector<1x256xf32> to vector<4x256xf32>
    %130 = arith.addf %127, %129 : vector<4x256xf32>
    %131 = arith.addf %81, %130 : vector<4x256xf32>
    %c0_53 = arith.constant 0 : index
    %c0_54 = arith.constant 0 : index
    %c0_55 = arith.constant 0 : index
    %132 = vector.load %arg14[%c0_53, %c0_54, %c0_55] : memref<1x4x256xf32, #tpu.memory_space<vmem>>, vector<1x4x256xf32>
    %133 = vector.shape_cast %132 : vector<1x4x256xf32> to vector<4x256xf32>
    %134 = vector.shape_cast %131 : vector<4x256xf32> to vector<1x4x256xf32>
    tpu.vector_store %arg14[%c0_53, %c0_54, %c0_55], %134 {strides = array<i32>} : memref<1x4x256xf32, #tpu.memory_space<vmem>>, vector<1x4x256xf32>,
    return
  }
  func.func @transform_0(%arg0: i32) -> (i32, i32, i32) {
    %c0_i32 = arith.constant 0 : i32
    %c0_i32_0 = arith.constant 0 : i32
    %c0_i32_1 = arith.constant 0 : i32
    return %arg0, %c0_i32, %c0_i32_0 : i32, i32, i32
  }
  func.func @transform_1(%arg0: i32) -> (i32, i32) {
    %c0_i32 = arith.constant 0 : i32
    %c0_i32_0 = arith.constant 0 : i32
    %c0_i32_1 = arith.constant 0 : i32
    return %c0_i32, %c0_i32_0 : i32, i32
  }
  func.func @transform_2(%arg0: i32) -> (i32, i32) {
    %c0_i32 = arith.constant 0 : i32
    %c0_i32_0 = arith.constant 0 : i32
    %c0_i32_1 = arith.constant 0 : i32
    return %c0_i32, %c0_i32_0 : i32, i32
  }
  func.func @transform_3(%arg0: i32) -> (i32, i32) {
    %c0_i32 = arith.constant 0 : i32
    %c0_i32_0 = arith.constant 0 : i32
    %c0_i32_1 = arith.constant 0 : i32
    return %c0_i32, %c0_i32_0 : i32, i32
  }
  func.func @transform_4(%arg0: i32) -> (i32, i32) {
    %c0_i32 = arith.constant 0 : i32
    %c0_i32_0 = arith.constant 0 : i32
    %c0_i32_1 = arith.constant 0 : i32
    return %c0_i32, %c0_i32_0 : i32, i32
  }
  func.func @transform_5(%arg0: i32) -> (i32, i32) {
    %c0_i32 = arith.constant 0 : i32
    %c0_i32_0 = arith.constant 0 : i32
    %c0_i32_1 = arith.constant 0 : i32
    return %c0_i32, %c0_i32_0 : i32, i32
  }
  func.func @transform_6(%arg0: i32) -> (i32, i32) {
    %c0_i32 = arith.constant 0 : i32
    %c0_i32_0 = arith.constant 0 : i32
    %c0_i32_1 = arith.constant 0 : i32
    return %c0_i32, %c0_i32_0 : i32, i32
  }
  func.func @transform_7(%arg0: i32) -> (i32, i32) {
    %c0_i32 = arith.constant 0 : i32
    %c0_i32_0 = arith.constant 0 : i32
    %c0_i32_1 = arith.constant 0 : i32
    return %c0_i32, %c0_i32_0 : i32, i32
  }
  func.func @transform_8(%arg0: i32) -> (i32, i32) {
    %c0_i32 = arith.constant 0 : i32
    %c0_i32_0 = arith.constant 0 : i32
    %c0_i32_1 = arith.constant 0 : i32
    return %c0_i32, %c0_i32_0 : i32, i32
  }
  func.func @transform_9(%arg0: i32) -> (i32, i32) {
    %c0_i32 = arith.constant 0 : i32
    %c0_i32_0 = arith.constant 0 : i32
    %c0_i32_1 = arith.constant 0 : i32
    return %c0_i32, %c0_i32_0 : i32, i32
  }
  func.func @transform_10(%arg0: i32) -> (i32, i32) {
    %c0_i32 = arith.constant 0 : i32
    %c0_i32_0 = arith.constant 0 : i32
    %c0_i32_1 = arith.constant 0 : i32
    return %c0_i32, %c0_i32_0 : i32, i32
  }
  func.func @transform_11(%arg0: i32) -> (i32, i32) {
    %c0_i32 = arith.constant 0 : i32
    %c0_i32_0 = arith.constant 0 : i32
    %c0_i32_1 = arith.constant 0 : i32
    return %c0_i32, %c0_i32_0 : i32, i32
  }
  func.func @transform_12(%arg0: i32) -> (i32, i32) {
    %c0_i32 = arith.constant 0 : i32
    %c0_i32_0 = arith.constant 0 : i32
    %c0_i32_1 = arith.constant 0 : i32
    return %c0_i32, %c0_i32_0 : i32, i32
  }
  func.func @transform_13(%arg0: i32) -> (i32, i32, i32) {
    %c0_i32 = arith.constant 0 : i32
    %c0_i32_0 = arith.constant 0 : i32
    %c0_i32_1 = arith.constant 0 : i32
    return %arg0, %c0_i32, %c0_i32_0 : i32, i32, i32
  }
}

module attributes {stable_mosaic.version = 11 : i64} {
  func.func @_deconv_matmul_kernel(%arg0: i32, %arg1: memref<8x256xbf16, #tpu.memory_space<vmem>>, %arg2: memref<256x2048xbf16, #tpu.memory_space<vmem>>, %arg3: memref<8x2048xbf16, #tpu.memory_space<vmem>>) attributes {dimension_semantics = [#tpu.dimension_semantics<parallel>], iteration_bounds = array<i64: 1>, scalar_prefetch = 0 : i64, scratch_operands = 0 : i64, tpu.core_type = #tpu.core_type<tc>, window_params = [{transform_indices = @transform_0, window_bounds = array<i64: 8, 256>}, {pipeline_mode = #tpu.pipeline_mode<synchronous>, transform_indices = @transform_1, window_bounds = array<i64: 256, 2048>}, {transform_indices = @transform_2, window_bounds = array<i64: 8, 2048>}]} {
    %c0 = arith.constant 0 : index
    %c0_0 = arith.constant 0 : index
    %0 = vector.load %arg1[%c0, %c0_0] : memref<8x256xbf16, #tpu.memory_space<vmem>>, vector<8x256xbf16>
    %c0_1 = arith.constant 0 : index
    %c0_2 = arith.constant 0 : index
    %1 = vector.load %arg2[%c0_1, %c0_2] : memref<256x2048xbf16, #tpu.memory_space<vmem>>, vector<256x2048xbf16>
    %cst = arith.constant dense<0.000000e+00> : vector<8x2048xf32>
    %2 = tpu.matmul %0, %1, %cst {dimension_numbers = #tpu.dot_dimension_numbers<[1], [0], [0], [1], [0, 0, 1, 1], [], []>} : vector<8x256xbf16>, vector<256x2048xbf16>, vector<8x2048xf32> -> vector<8x2048xf32>
    %3 = arith.truncf %2 : vector<8x2048xf32> to vector<8x2048xbf16>
    %c0_3 = arith.constant 0 : index
    %c0_4 = arith.constant 0 : index
    %4 = vector.load %arg3[%c0_3, %c0_4] : memref<8x2048xbf16, #tpu.memory_space<vmem>>, vector<8x2048xbf16>
    tpu.vector_store %arg3[%c0_3, %c0_4], %3 {strides = array<i32>} : memref<8x2048xbf16, #tpu.memory_space<vmem>>, vector<8x2048xbf16>,
    return
  }
  func.func @transform_0(%arg0: i32) -> (i32, i32) {
    %c0_i32 = arith.constant 0 : i32
    %c0_i32_0 = arith.constant 0 : i32
    return %arg0, %c0_i32 : i32, i32
  }
  func.func @transform_1(%arg0: i32) -> (i32, i32) {
    %c0_i32 = arith.constant 0 : i32
    %c0_i32_0 = arith.constant 0 : i32
    %c0_i32_1 = arith.constant 0 : i32
    return %c0_i32, %c0_i32_0 : i32, i32
  }
  func.func @transform_2(%arg0: i32) -> (i32, i32) {
    %c0_i32 = arith.constant 0 : i32
    %c0_i32_0 = arith.constant 0 : i32
    return %arg0, %c0_i32 : i32, i32
  }
}

module attributes {stable_mosaic.version = 11 : i64} {
  func.func @_deconv_matmul_kernel(%arg0: i32, %arg1: memref<16x128xbf16, #tpu.memory_space<vmem>>, %arg2: memref<128x1024xbf16, #tpu.memory_space<vmem>>, %arg3: memref<16x1024xbf16, #tpu.memory_space<vmem>>) attributes {dimension_semantics = [#tpu.dimension_semantics<parallel>], iteration_bounds = array<i64: 2>, scalar_prefetch = 0 : i64, scratch_operands = 0 : i64, tpu.core_type = #tpu.core_type<tc>, window_params = [{transform_indices = @transform_0, window_bounds = array<i64: 16, 128>}, {pipeline_mode = #tpu.pipeline_mode<synchronous>, transform_indices = @transform_1, window_bounds = array<i64: 128, 1024>}, {transform_indices = @transform_2, window_bounds = array<i64: 16, 1024>}]} {
    %c0 = arith.constant 0 : index
    %c0_0 = arith.constant 0 : index
    %0 = vector.load %arg1[%c0, %c0_0] : memref<16x128xbf16, #tpu.memory_space<vmem>>, vector<16x128xbf16>
    %c0_1 = arith.constant 0 : index
    %c0_2 = arith.constant 0 : index
    %1 = vector.load %arg2[%c0_1, %c0_2] : memref<128x1024xbf16, #tpu.memory_space<vmem>>, vector<128x1024xbf16>
    %cst = arith.constant dense<0.000000e+00> : vector<16x1024xf32>
    %2 = tpu.matmul %0, %1, %cst {dimension_numbers = #tpu.dot_dimension_numbers<[1], [0], [0], [1], [0, 0, 1, 1], [], []>} : vector<16x128xbf16>, vector<128x1024xbf16>, vector<16x1024xf32> -> vector<16x1024xf32>
    %3 = arith.truncf %2 : vector<16x1024xf32> to vector<16x1024xbf16>
    %c0_3 = arith.constant 0 : index
    %c0_4 = arith.constant 0 : index
    %4 = vector.load %arg3[%c0_3, %c0_4] : memref<16x1024xbf16, #tpu.memory_space<vmem>>, vector<16x1024xbf16>
    tpu.vector_store %arg3[%c0_3, %c0_4], %3 {strides = array<i32>} : memref<16x1024xbf16, #tpu.memory_space<vmem>>, vector<16x1024xbf16>,
    return
  }
  func.func @transform_0(%arg0: i32) -> (i32, i32) {
    %c0_i32 = arith.constant 0 : i32
    %c0_i32_0 = arith.constant 0 : i32
    return %arg0, %c0_i32 : i32, i32
  }
  func.func @transform_1(%arg0: i32) -> (i32, i32) {
    %c0_i32 = arith.constant 0 : i32
    %c0_i32_0 = arith.constant 0 : i32
    %c0_i32_1 = arith.constant 0 : i32
    return %c0_i32, %c0_i32_0 : i32, i32
  }
  func.func @transform_2(%arg0: i32) -> (i32, i32) {
    %c0_i32 = arith.constant 0 : i32
    %c0_i32_0 = arith.constant 0 : i32
    return %arg0, %c0_i32 : i32, i32
  }
}

module attributes {stable_mosaic.version = 11 : i64} {
  func.func @_deconv_matmul_kernel(%arg0: i32, %arg1: memref<64x64xbf16, #tpu.memory_space<vmem>>, %arg2: memref<64x512xbf16, #tpu.memory_space<vmem>>, %arg3: memref<64x512xbf16, #tpu.memory_space<vmem>>) attributes {dimension_semantics = [#tpu.dimension_semantics<parallel>], iteration_bounds = array<i64: 2>, scalar_prefetch = 0 : i64, scratch_operands = 0 : i64, tpu.core_type = #tpu.core_type<tc>, window_params = [{transform_indices = @transform_0, window_bounds = array<i64: 64, 64>}, {pipeline_mode = #tpu.pipeline_mode<synchronous>, transform_indices = @transform_1, window_bounds = array<i64: 64, 512>}, {transform_indices = @transform_2, window_bounds = array<i64: 64, 512>}]} {
    %c0 = arith.constant 0 : index
    %c0_0 = arith.constant 0 : index
    %0 = vector.load %arg1[%c0, %c0_0] : memref<64x64xbf16, #tpu.memory_space<vmem>>, vector<64x64xbf16>
    %c0_1 = arith.constant 0 : index
    %c0_2 = arith.constant 0 : index
    %1 = vector.load %arg2[%c0_1, %c0_2] : memref<64x512xbf16, #tpu.memory_space<vmem>>, vector<64x512xbf16>
    %cst = arith.constant dense<0.000000e+00> : vector<64x512xf32>
    %2 = tpu.matmul %0, %1, %cst {dimension_numbers = #tpu.dot_dimension_numbers<[1], [0], [0], [1], [0, 0, 1, 1], [], []>} : vector<64x64xbf16>, vector<64x512xbf16>, vector<64x512xf32> -> vector<64x512xf32>
    %3 = arith.truncf %2 : vector<64x512xf32> to vector<64x512xbf16>
    %c0_3 = arith.constant 0 : index
    %c0_4 = arith.constant 0 : index
    %4 = vector.load %arg3[%c0_3, %c0_4] : memref<64x512xbf16, #tpu.memory_space<vmem>>, vector<64x512xbf16>
    tpu.vector_store %arg3[%c0_3, %c0_4], %3 {strides = array<i32>} : memref<64x512xbf16, #tpu.memory_space<vmem>>, vector<64x512xbf16>,
    return
  }
  func.func @transform_0(%arg0: i32) -> (i32, i32) {
    %c0_i32 = arith.constant 0 : i32
    %c0_i32_0 = arith.constant 0 : i32
    return %arg0, %c0_i32 : i32, i32
  }
  func.func @transform_1(%arg0: i32) -> (i32, i32) {
    %c0_i32 = arith.constant 0 : i32
    %c0_i32_0 = arith.constant 0 : i32
    %c0_i32_1 = arith.constant 0 : i32
    return %c0_i32, %c0_i32_0 : i32, i32
  }
  func.func @transform_2(%arg0: i32) -> (i32, i32) {
    %c0_i32 = arith.constant 0 : i32
    %c0_i32_0 = arith.constant 0 : i32
    return %arg0, %c0_i32 : i32, i32
  }
}

module attributes {stable_mosaic.version = 11 : i64} {
  func.func @_deconv_matmul_kernel(%arg0: i32, %arg1: memref<256x32xbf16, #tpu.memory_space<vmem>>, %arg2: memref<32x256xbf16, #tpu.memory_space<vmem>>, %arg3: memref<256x256xbf16, #tpu.memory_space<vmem>>) attributes {dimension_semantics = [#tpu.dimension_semantics<parallel>], iteration_bounds = array<i64: 2>, scalar_prefetch = 0 : i64, scratch_operands = 0 : i64, tpu.core_type = #tpu.core_type<tc>, window_params = [{transform_indices = @transform_0, window_bounds = array<i64: 256, 32>}, {pipeline_mode = #tpu.pipeline_mode<synchronous>, transform_indices = @transform_1, window_bounds = array<i64: 32, 256>}, {transform_indices = @transform_2, window_bounds = array<i64: 256, 256>}]} {
    %c0 = arith.constant 0 : index
    %c0_0 = arith.constant 0 : index
    %0 = vector.load %arg1[%c0, %c0_0] : memref<256x32xbf16, #tpu.memory_space<vmem>>, vector<256x32xbf16>
    %c0_1 = arith.constant 0 : index
    %c0_2 = arith.constant 0 : index
    %1 = vector.load %arg2[%c0_1, %c0_2] : memref<32x256xbf16, #tpu.memory_space<vmem>>, vector<32x256xbf16>
    %cst = arith.constant dense<0.000000e+00> : vector<256x256xf32>
    %2 = tpu.matmul %0, %1, %cst {dimension_numbers = #tpu.dot_dimension_numbers<[1], [0], [0], [1], [0, 0, 1, 1], [], []>} : vector<256x32xbf16>, vector<32x256xbf16>, vector<256x256xf32> -> vector<256x256xf32>
    %3 = arith.truncf %2 : vector<256x256xf32> to vector<256x256xbf16>
    %c0_3 = arith.constant 0 : index
    %c0_4 = arith.constant 0 : index
    %4 = vector.load %arg3[%c0_3, %c0_4] : memref<256x256xbf16, #tpu.memory_space<vmem>>, vector<256x256xbf16>
    tpu.vector_store %arg3[%c0_3, %c0_4], %3 {strides = array<i32>} : memref<256x256xbf16, #tpu.memory_space<vmem>>, vector<256x256xbf16>,
    return
  }
  func.func @transform_0(%arg0: i32) -> (i32, i32) {
    %c0_i32 = arith.constant 0 : i32
    %c0_i32_0 = arith.constant 0 : i32
    return %arg0, %c0_i32 : i32, i32
  }
  func.func @transform_1(%arg0: i32) -> (i32, i32) {
    %c0_i32 = arith.constant 0 : i32
    %c0_i32_0 = arith.constant 0 : i32
    %c0_i32_1 = arith.constant 0 : i32
    return %c0_i32, %c0_i32_0 : i32, i32
  }
  func.func @transform_2(%arg0: i32) -> (i32, i32) {
    %c0_i32 = arith.constant 0 : i32
    %c0_i32_0 = arith.constant 0 : i32
    return %arg0, %c0_i32 : i32, i32
  }
}

module attributes {stable_mosaic.version = 11 : i64} {
  func.func @_deconv_matmul_kernel(%arg0: i32, %arg1: memref<512x16xbf16, #tpu.memory_space<vmem>>, %arg2: memref<16x128xbf16, #tpu.memory_space<vmem>>, %arg3: memref<512x128xbf16, #tpu.memory_space<vmem>>) attributes {dimension_semantics = [#tpu.dimension_semantics<parallel>], iteration_bounds = array<i64: 4>, scalar_prefetch = 0 : i64, scratch_operands = 0 : i64, tpu.core_type = #tpu.core_type<tc>, window_params = [{transform_indices = @transform_0, window_bounds = array<i64: 512, 16>}, {pipeline_mode = #tpu.pipeline_mode<synchronous>, transform_indices = @transform_1, window_bounds = array<i64: 16, 128>}, {transform_indices = @transform_2, window_bounds = array<i64: 512, 128>}]} {
    %c0 = arith.constant 0 : index
    %c0_0 = arith.constant 0 : index
    %0 = vector.load %arg1[%c0, %c0_0] : memref<512x16xbf16, #tpu.memory_space<vmem>>, vector<512x16xbf16>
    %c0_1 = arith.constant 0 : index
    %c0_2 = arith.constant 0 : index
    %1 = vector.load %arg2[%c0_1, %c0_2] : memref<16x128xbf16, #tpu.memory_space<vmem>>, vector<16x128xbf16>
    %cst = arith.constant dense<0.000000e+00> : vector<512x128xf32>
    %2 = tpu.matmul %0, %1, %cst {dimension_numbers = #tpu.dot_dimension_numbers<[1], [0], [0], [1], [0, 0, 1, 1], [], []>} : vector<512x16xbf16>, vector<16x128xbf16>, vector<512x128xf32> -> vector<512x128xf32>
    %3 = arith.truncf %2 : vector<512x128xf32> to vector<512x128xbf16>
    %c0_3 = arith.constant 0 : index
    %c0_4 = arith.constant 0 : index
    %4 = vector.load %arg3[%c0_3, %c0_4] : memref<512x128xbf16, #tpu.memory_space<vmem>>, vector<512x128xbf16>
    tpu.vector_store %arg3[%c0_3, %c0_4], %3 {strides = array<i32>} : memref<512x128xbf16, #tpu.memory_space<vmem>>, vector<512x128xbf16>,
    return
  }
  func.func @transform_0(%arg0: i32) -> (i32, i32) {
    %c0_i32 = arith.constant 0 : i32
    %c0_i32_0 = arith.constant 0 : i32
    return %arg0, %c0_i32 : i32, i32
  }
  func.func @transform_1(%arg0: i32) -> (i32, i32) {
    %c0_i32 = arith.constant 0 : i32
    %c0_i32_0 = arith.constant 0 : i32
    %c0_i32_1 = arith.constant 0 : i32
    return %c0_i32, %c0_i32_0 : i32, i32
  }
  func.func @transform_2(%arg0: i32) -> (i32, i32) {
    %c0_i32 = arith.constant 0 : i32
    %c0_i32_0 = arith.constant 0 : i32
    return %arg0, %c0_i32 : i32, i32
  }
}

</mosaic_0001>

<llo_original>
// kernel: _lambda_.8
$region0: #{_lambda_.8}
  #allocation0 [shape = 'u32[]', space=smem, size = 0x4, offset = 0x4, fixed_abs, tag = 'smem constant byte address 0x4 - core index']
  #allocation1 [shape = 'u32[144,128]{1,0:T(1,128)}', space=vmem, size = 0x12000, scoped, tag = 'internal scratch']
  %s0 = inlined_call_operand.vmem [shape: f32[2,4,48], index: 0, kind: input, shape index: {}]
  %s1 = inlined_call_operand.vmem [shape: bf16[48,256], index: 1, kind: input, shape index: {}]
  %s2 = inlined_call_operand.hbm [shape: f32[1,256], index: 2, kind: input, shape index: {}]
  %s3 = inlined_call_operand.hbm [shape: f32[4,256], index: 3, kind: input, shape index: {}]
  %s4 = inlined_call_operand.vmem [shape: f32[2,4,256], index: 4, kind: output, shape index: {}]
  %s5 = sld [smem:[#allocation0]]
  $region57: #{_lambda_.8} parent=0
    _
  %s7 = ssub.s32 1, %s5
  %s8 = scalar_select 0, %s7, %s5
  $region1: #{_lambda_.8} parent=0
    #allocation2 [shape = 'u8[1024]{0}', space=vmem, size = 0x400, scoped, tag = 'input window, operand 2, single buffered']
    #allocation3 [shape = 's32[2]{0}', space=sflag, size = 0x8, scoped, tag = 'scoped memory for _lambda_.8']
    #allocation4 [shape = 'u8[4096]{0}', space=vmem, size = 0x1000, scoped, tag = 'input window, operand 3, single buffered']
    #allocation5 [shape = 's32[1]{0}', space=sflag, size = 0x4, scoped, tag = 'scoped memory for _lambda_.8']
    %9 = vsyncpa [#allocation3], 0
    %10 = vsyncpa [#allocation5], 0
    loop: start=0, step=1, limit=4
    $region2: #{_lambda_.8} parent=1 // loop_pre_header
      _
    $region3: #{_lambda_.8} parent=1 // loop_header
      %s12 = sphi 0, %s16
      %p13 = scmp.ge.s32.totalorder %s12, 4
      %s22 = sphi 0, %s24
      %s25 = sphi 0, %s22
      %s26 = sphi 0, %s25
      %s42 = sphi 0, %s26
      %s46 = sphi 0, %s46
      %s48 = sphi 0, %s46
      %s49 = sphi 0, %s48
      %s63 = sphi 0, %s49
      %s67 = sphi 0, %s67
      %s69 = sphi 0, %s67
      %s70 = sphi 0, %s69
      %s84 = sphi 0, %s70
      %s88 = sphi 0, %s88
      %s90 = sphi 0, %s88
      %s91 = sphi 0, %s90
      %s105 = sphi 0, %s91
      %s111 = sphi 0, %s113
      %s114 = sphi 0, %s111
      %s115 = sphi 0, %s114
      %s131 = sphi 0, %s115
    $region4: #{_lambda_.8} parent=1 // loop_header_branch
      %15 = sbr.rel (%p13) target = $region8
    $region5: #{_lambda_.8} parent=1 // loop_body
      %s17 = ssub.s32 %s12, 1
      %s18 = ssub.s32 %s12, 2
      %s19 = sadd.s32 %s12, 1
      %s20 = ssub.s32 %s12, %s19
      %p21 = scmp.eq.s32.totalorder %s20, 0
      %s23 = sadd.s32 %s22, 1
      %s24 = scalar_select %p21, %s22, %s23
      %p27 = pneg %p21
      %p28 = scmp.eq.s32.totalorder %s12, 1
      %p29 = por %p27, %p28
      %p30 = scmp.ne.s32.totalorder %s22, %s25
      %p31 = scmp.eq.s32.totalorder %s12, 0
      %p32 = por %p30, %p31
      %p33 = scmp.ne.s32.totalorder %s22, %s25
      %p34 = scmp.eq.s32.totalorder %s17, 1
      %p35 = por %p33, %p34
      %p36 = scmp.ne.s32.totalorder %s25, %s26
      %p37 = scmp.eq.s32.totalorder %s17, 0
      %p38 = por %p36, %p37
      %p39 = scmp.ne.s32.totalorder %s25, %s26
      %p40 = scmp.eq.s32.totalorder %s18, 1
      %p41 = por %p39, %p40
      %p43 = scmp.ne.s32.totalorder %s26, %s42
      %p44 = scmp.eq.s32.totalorder %s18, 0
      %p45 = por %p43, %p44
      %s47 = sadd.s32 %s46, 1
      %p50 = scmp.eq.s32.totalorder %s12, 1
      %p51 = scmp.ne.s32.totalorder %s46, %s48
      %p52 = scmp.eq.s32.totalorder %s12, 0
      %p53 = por %p51, %p52
      %p54 = scmp.ne.s32.totalorder %s46, %s48
      %p55 = scmp.eq.s32.totalorder %s17, 1
      %p56 = por %p54, %p55
      %p57 = scmp.ne.s32.totalorder %s48, %s49
      %p58 = scmp.eq.s32.totalorder %s17, 0
      %p59 = por %p57, %p58
      %p60 = scmp.ne.s32.totalorder %s48, %s49
      %p61 = scmp.eq.s32.totalorder %s18, 1
      %p62 = por %p60, %p61
      %p64 = scmp.ne.s32.totalorder %s49, %s63
      %p65 = scmp.eq.s32.totalorder %s18, 0
      %p66 = por %p64, %p65
      %s68 = sadd.s32 %s67, 1
      %p71 = scmp.eq.s32.totalorder %s12, 1
      %p72 = scmp.ne.s32.totalorder %s67, %s69
      %p73 = scmp.eq.s32.totalorder %s12, 0
      %p74 = por %p72, %p73
      %p75 = scmp.ne.s32.totalorder %s67, %s69
      %p76 = scmp.eq.s32.totalorder %s17, 1
      %p77 = por %p75, %p76
      %p78 = scmp.ne.s32.totalorder %s69, %s70
      %p79 = scmp.eq.s32.totalorder %s17, 0
      %p80 = por %p78, %p79
      %p81 = scmp.ne.s32.totalorder %s69, %s70
      %p82 = scmp.eq.s32.totalorder %s18, 1
      %p83 = por %p81, %p82
      %p85 = scmp.ne.s32.totalorder %s70, %s84
      %p86 = scmp.eq.s32.totalorder %s18, 0
      %p87 = por %p85, %p86
      %s89 = sadd.s32 %s88, 1
      %p92 = scmp.eq.s32.totalorder %s12, 1
      %p93 = scmp.ne.s32.totalorder %s88, %s90
      %p94 = scmp.eq.s32.totalorder %s12, 0
      %p95 = por %p93, %p94
      %p96 = scmp.ne.s32.totalorder %s88, %s90
      %p97 = scmp.eq.s32.totalorder %s17, 1
      %p98 = por %p96, %p97
      %p99 = scmp.ne.s32.totalorder %s90, %s91
      %p100 = scmp.eq.s32.totalorder %s17, 0
      %p101 = por %p99, %p100
      %p102 = scmp.ne.s32.totalorder %s90, %s91
      %p103 = scmp.eq.s32.totalorder %s18, 1
      %p104 = por %p102, %p103
      %p106 = scmp.ne.s32.totalorder %s91, %s105
      %p107 = scmp.eq.s32.totalorder %s18, 0
      %p108 = por %p106, %p107
      %s109 = ssub.s32 %s12, %s19
      %p110 = scmp.eq.s32.totalorder %s109, 0
      %s112 = sadd.s32 %s111, 1
      %s113 = scalar_select %p110, %s111, %s112
      %p116 = pneg %p110
      %p117 = scmp.eq.s32.totalorder %s12, 1
      %p118 = por %p116, %p117
      %p119 = scmp.ne.s32.totalorder %s111, %s114
      %p120 = scmp.eq.s32.totalorder %s12, 0
      %p121 = por %p119, %p120
      %p122 = scmp.ne.s32.totalorder %s111, %s114
      %p123 = scmp.eq.s32.totalorder %s17, 1
      %p124 = por %p122, %p123
      %p125 = scmp.ne.s32.totalorder %s114, %s115
      %p126 = scmp.eq.s32.totalorder %s17, 0
      %p127 = por %p125, %p126
      %p128 = scmp.ne.s32.totalorder %s114, %s115
      %p129 = scmp.eq.s32.totalorder %s18, 1
      %p130 = por %p128, %p129
      %p132 = scmp.ne.s32.totalorder %s115, %s131
      %p133 = scmp.eq.s32.totalorder %s18, 0
      %p134 = por %p132, %p133
      %p135 = scmp.le.s32.totalorder 1, %s12
      %p136 = scmp.lt.s32.totalorder %s12, 3
      %p137 = pnand %p135, %p136
      %p138 = pneg %p137
      // Predicated region
      $region9: #{_lambda_.8} parent=5 // pred_check
        _
      $region10: #{_lambda_.8} parent=5 // pred_check_branch
        %140 = sbr.rel (%p137) target = $region12
      $region11: #{_lambda_.8} parent=5 // pred_region
        %s141 = ssub.s32 %s12, 1
        // Predicated region
        $region13: #{_lambda_.8} parent=11 // pred_check
          %p142 = pneg %p59
        $region14: #{_lambda_.8} parent=11 // pred_check_branch
          %144 = sbr.rel (%p142) target = $region16
        $region15: #{_lambda_.8} parent=11 // pred_region
          _
        $region16: #{_lambda_.8} parent=11 // pred_fallthru
          _
        // Predicated region
        $region17: #{_lambda_.8} parent=11 // pred_check
          %p145 = pneg %p80
        $region18: #{_lambda_.8} parent=11 // pred_check_branch
          %147 = sbr.rel (%p145) target = $region20
        $region19: #{_lambda_.8} parent=11 // pred_region
          %s149 = ssub.s32 32, 32
          %150 = vsyncadd [#allocation3], %s149
          %s152 = sshll.u32 [#allocation2], 4
          %s153 = int_to_ptr.vmem [resolvable:$true] %s152
          %155 = dma.hbm_to_vmem [thread:$0]  %s2, 32, %s153, [#allocation3]
        $region20: #{_lambda_.8} parent=11 // pred_fallthru
          _
        // Predicated region
        $region21: #{_lambda_.8} parent=11 // pred_check
          %p156 = pneg %p101
        $region22: #{_lambda_.8} parent=11 // pred_check_branch
          %158 = sbr.rel (%p156) target = $region24
        $region23: #{_lambda_.8} parent=11 // pred_region
          %s160 = ssub.s32 128, 128
          %161 = vsyncadd [#allocation5], %s160
          %s163 = sshll.u32 [#allocation4], 4
          %s164 = int_to_ptr.vmem [resolvable:$true] %s163
          %166 = dma.hbm_to_vmem [thread:$0]  %s3, 128, %s164, [#allocation5]
        $region24: #{_lambda_.8} parent=11 // pred_fallthru
          _
      $region12: #{_lambda_.8} parent=5 // pred_fallthru
        _
      %p167 = scmp.lt.s32.totalorder %s12, 2
      // Predicated region
      $region25: #{_lambda_.8} parent=5 // pred_check
        %p168 = pneg %p167
      $region26: #{_lambda_.8} parent=5 // pred_check_branch
        %170 = sbr.rel (%p168) target = $region28
      $region27: #{_lambda_.8} parent=5 // pred_region
        // Predicated region
        $region29: #{_lambda_.8} parent=27 // pred_check
          %p171 = pneg %p32
        $region30: #{_lambda_.8} parent=27 // pred_check_branch
          %173 = sbr.rel (%p171) target = $region32
        $region31: #{_lambda_.8} parent=27 // pred_region
          %p174 = scmp.lt.s32.totalorder %s12, 1
          %s175 = scalar_select %p174, %s12, 1
          %s176 = smul.addr %s175, 4
          %s177 = scalar_lea.vmem %s0, %s176
        $region32: #{_lambda_.8} parent=27 // pred_fallthru
          _
      $region28: #{_lambda_.8} parent=5 // pred_fallthru
        _
      %p178 = scmp.le.s32.totalorder 1, %s12
      %p179 = scmp.lt.s32.totalorder %s12, 3
      %p180 = pnand %p178, %p179
      %p181 = pneg %p180
      // Predicated region
      $region33: #{_lambda_.8} parent=5 // pred_check
        _
      $region34: #{_lambda_.8} parent=5 // pred_check_branch
        %183 = sbr.rel (%p180) target = $region36
      $region35: #{_lambda_.8} parent=5 // pred_region
        %s184 = ssub.s32 %s12, 1
        // Predicated region
        $region37: #{_lambda_.8} parent=35 // pred_check
          %p185 = pneg %p80
        $region38: #{_lambda_.8} parent=35 // pred_check_branch
          %187 = sbr.rel (%p185) target = $region40
        $region39: #{_lambda_.8} parent=35 // pred_region
          %188 = dma.done [#allocation3], 32
        $region40: #{_lambda_.8} parent=35 // pred_fallthru
          _
        // Predicated region
        $region41: #{_lambda_.8} parent=35 // pred_check
          %p189 = pneg %p101
        $region42: #{_lambda_.8} parent=35 // pred_check_branch
          %191 = sbr.rel (%p189) target = $region44
        $region43: #{_lambda_.8} parent=35 // pred_region
          %192 = dma.done [#allocation5], 128
        $region44: #{_lambda_.8} parent=35 // pred_fallthru
          _
        %p193 = scmp.lt.s32.totalorder %s17, 1
        %s194 = scalar_select %p193, %s17, 1
        %s195 = smul.addr %s194, 4
        %s196 = scalar_lea.vmem %s0, %s195
        %p197 = pneg %p38
        %p198 = pneg %p35
        %p199 = pneg %p59
        %p200 = pneg %p56
        %p201 = pneg %p80
        %p202 = pneg %p77
        %p203 = pneg %p101
        %p204 = pneg %p98
        %p205 = pneg %p127
        %p206 = pneg %p124
        %p207 = scmp.lt.s32.totalorder %s17, 1
        %s208 = scalar_select %p207, %s17, 1
        %s209 = smul.addr %s208, 2
        %s210 = smul.addr %s209, 4
        %s211 = scalar_lea.vmem %s4, %s210
        %p212 = scmp.lt.s32.totalorder %s17, 1
        %s213 = scalar_select %p212, %s17, 1
        %s214 = smul.addr %s213, 4
        %s215 = scalar_lea.vmem %s0, %s214
        %p216 = scmp.lt.s32.totalorder %s17, 1
        %s217 = scalar_select %p216, %s17, 1
        %s218 = smul.addr %s217, 2
        %s219 = smul.addr %s218, 4
        %s220 = scalar_lea.vmem %s4, %s219
        %v222 = vld [vmem:[%s215] sm:$0xf]
        %v223 = vpack.c.bf16 %v222, %v222
        %v224 = vld [vmem:[%s1] sm:$0xff]
        %v225 = vld [vmem:[%s1 + $0x8] sm:$0xff]
        %v226 = vld [vmem:[%s1 + $0x10] sm:$0xff]
        %v227 = vld [vmem:[%s1 + $0x18] sm:$0xff]
        %v228 = vld [vmem:[%s1 + $0x20] sm:$0xff]
        %v229 = vld [vmem:[%s1 + $0x28] sm:$0xff]
        %v230 = vld [vmem:[#allocation2] sm:$0x3]
        %v232 = vlaneseq
        %v233 = vshrl.u32 %v232, 7
        %v234 = vsub.s32 0, %v233
        %v235 = vrot.slane %v230, %v234
        %v236 = vlaneseq
        %v237 = vshrl.u32 %v236, 7
        %v238 = vsub.s32 1, %v237
        %v239 = vrot.slane %v230, %v238
        %v248 = vunpack.c.l.b16 %v224
        %v249 = vunpack.c.h.b16 %v224
        %v250 = vunpack.c.l.b16 %v225
        %v251 = vunpack.c.h.b16 %v225
        %v252 = vunpack.c.l.b16 %v226
        %v253 = vunpack.c.h.b16 %v226
        %v254 = vunpack.c.l.b16 %v227
        %v255 = vunpack.c.h.b16 %v227
        %v256 = vunpack.c.l.b16 %v228
        %v257 = vunpack.c.h.b16 %v228
        %v258 = vunpack.c.l.b16 %v229
        %v259 = vunpack.c.h.b16 %v229
        %v260 = vpack.c.b16 %v250, %v248
        %v261 = vpack.c.b16 %v251, %v249
        %v262 = vpack.c.b16 %v254, %v252
        %v263 = vpack.c.b16 %v255, %v253
        %v264 = vpack.c.b16 %v258, %v256
        %v265 = vpack.c.b16 %v259, %v257
        %vm272 = vcmask 392192
        %v274 = vsel %vm272, %v223, 0
        %276 = vmatprep.subr.bf16.mxu0 %v261
        %277 = vmatpush1.bf16.msra.mxu0 %v260
        %278 = vmatprep.subr.bf16.mxu0 %v263
        %279 = vmatpush1.bf16.msra.mxu0 %v262
        %280 = vmatprep.subr.bf16.mxu0 %v265
        %281 = vmatpush1.bf16.msra.mxu0 %v264
        %282 = vmatprep.subr.bf16.mxu0 0
        %283 = vmatpush1.bf16.msra.mxu0 0
        %284 = vmatprep.subr.bf16.mxu0 0
        %285 = vmatpush1.bf16.msra.mxu0 0
        %286 = vmatprep.subr.bf16.mxu0 0
        %287 = vmatpush1.bf16.msra.mxu0 0
        %288 = vmatprep.subr.bf16.mxu0 0
        %289 = vmatpush1.bf16.msra.mxu0 0
        %290 = vmatprep.subr.bf16.mxu0 0
        %291 = vmatpush1.bf16.msra.mxu0 0
        %292 = vmatprep.subr.bf16.mxu0 0
        %293 = vmatpush1.bf16.msra.mxu0 0
        %294 = vmatprep.subr.bf16.mxu0 0
        %295 = vmatpush1.bf16.msra.mxu0 0
        %296 = vmatprep.subr.bf16.mxu0 0
        %297 = vmatpush1.bf16.msra.mxu0 0
        %298 = vmatprep.subr.bf16.mxu0 0
        %299 = vmatpush1.bf16.msra.mxu0 0
        %300 = vmatprep.subr.bf16.mxu0 0
        %301 = vmatpush1.bf16.msra.mxu0 0
        %302 = vmatprep.subr.bf16.mxu0 0
        %303 = vmatpush1.bf16.msra.mxu0 0
        %304 = vmatprep.subr.bf16.mxu0 0
        %305 = vmatpush1.bf16.msra.mxu0 0
        %306 = vmatprep.subr.bf16.mxu0 0
        %307 = vmatpush1.bf16.msra.mxu0 0
        %308 = vmatprep.mubr.bf16.mxu0 0
        %309 = vmatmul.mubr.bf16.gmra.mrb[0].mxu0 %v274
        %v310 = vpop.f32.mrb[0].mxu0
        %v311 = vadd.f32 %v235, %v310
        %v312 = vpop.f32.mrb[0].mxu0
        %v313 = vadd.f32 %v239, %v312
        %v314 = vpop.f32.mrb[0].mxu0
        %v315 = vpop.f32.mrb[0].mxu0
        %316 = vdwg.mxu0
        %v317 = vld [vmem:[#allocation4] sm:$0xff]
        %v319 = vcombine.high %v317, %v317
        %v321 = vadd.f32 %v311, %v317
        %v322 = vadd.f32 %v313, %v319
        %v325 = vcombine.low %v321, %v322
        %327 = vst [vmem:[%s220] sm:$0xff] %v325
        %p328 = scmp.lt.s32.totalorder %s17, 1
        %s329 = scalar_select %p328, %s17, 1
        %s330 = smul.addr %s329, 2
        %s331 = smul.addr %s330, 4
        %s332 = scalar_lea.vmem %s4, %s331
        // Predicated region
        $region45: #{_lambda_.8} parent=35 // pred_check
          %p333 = pneg %p124
        $region46: #{_lambda_.8} parent=35 // pred_check_branch
          %335 = sbr.rel (%p333) target = $region48
        $region47: #{_lambda_.8} parent=35 // pred_region
          _
        $region48: #{_lambda_.8} parent=35 // pred_fallthru
          _
      $region36: #{_lambda_.8} parent=5 // pred_fallthru
        _
      %p336 = scmp.le.s32.totalorder 2, %s12
      // Predicated region
      $region49: #{_lambda_.8} parent=5 // pred_check
        %p337 = pneg %p336
      $region50: #{_lambda_.8} parent=5 // pred_check_branch
        %339 = sbr.rel (%p337) target = $region52
      $region51: #{_lambda_.8} parent=5 // pred_region
        %s340 = ssub.s32 %s12, 2
        // Predicated region
        $region53: #{_lambda_.8} parent=51 // pred_check
          %p341 = pneg %p130
        $region54: #{_lambda_.8} parent=51 // pred_check_branch
          %343 = sbr.rel (%p341) target = $region56
        $region55: #{_lambda_.8} parent=51 // pred_region
          %p344 = scmp.lt.s32.totalorder %s18, 1
          %s345 = scalar_select %p344, %s18, 1
          %s346 = smul.addr %s345, 2
          %s347 = smul.addr %s346, 4
          %s348 = scalar_lea.vmem %s4, %s347
        $region56: #{_lambda_.8} parent=51 // pred_fallthru
          _
      $region52: #{_lambda_.8} parent=5 // pred_fallthru
        _
    $region6: #{_lambda_.8} parent=1 // loop_footer
      %s16 = sadd.s32 1, %s12
    $region7: #{_lambda_.8} parent=1 // loop_footer_branch
      %11 = sbr.rel target = $region3
    $region8: #{_lambda_.8} parent=1 // loop_exit
      _
    %349 = vsyncpa [#allocation3], 1
    %s350 = scalar_lea.sflag [#allocation3], 1
    %351 = vsyncpa %s350, 1
    %352 = vsyncpa [#allocation5], 1

// kernel: _lambda_.9
$region0: #{_lambda_.9}
  #allocation0 [shape = 'u32[]', space=smem, size = 0x4, offset = 0x4, fixed_abs, tag = 'smem constant byte address 0x4 - core index']
  #allocation1 [shape = 'u32[144,128]{1,0:T(1,128)}', space=vmem, size = 0x12000, scoped, tag = 'internal scratch']
  %s0 = inlined_call_operand.vmem [shape: f32[2,4,256], index: 0, kind: input, shape index: {}]
  %s1 = inlined_call_operand.vmem [shape: f32[1,256], index: 1, kind: input, shape index: {}, may-alias: {1,7}]
  %s2 = inlined_call_operand.vmem [shape: f32[1,256], index: 2, kind: input, shape index: {}, may-alias: {2,6,8,12}]
  %s3 = inlined_call_operand.vmem [shape: bf16[256,768], index: 3, kind: input, shape index: {}]
  %s4 = inlined_call_operand.vmem [shape: f32[1,768], index: 4, kind: input, shape index: {}]
  %s5 = inlined_call_operand.vmem [shape: bf16[256,256], index: 5, kind: input, shape index: {}]
  %s6 = inlined_call_operand.vmem [shape: f32[1,256], index: 6, kind: input, shape index: {}, may-alias: {2,6,8,12}]
  %s7 = inlined_call_operand.vmem [shape: f32[1,256], index: 7, kind: input, shape index: {}, may-alias: {1,7}]
  %s8 = inlined_call_operand.vmem [shape: f32[1,256], index: 8, kind: input, shape index: {}, may-alias: {2,6,8,12}]
  %s9 = inlined_call_operand.vmem [shape: bf16[256,512], index: 9, kind: input, shape index: {}]
  %s10 = inlined_call_operand.vmem [shape: f32[1,512], index: 10, kind: input, shape index: {}]
  %s11 = inlined_call_operand.vmem [shape: bf16[512,256], index: 11, kind: input, shape index: {}]
  %s12 = inlined_call_operand.vmem [shape: f32[1,256], index: 12, kind: input, shape index: {}, may-alias: {2,6,8,12}]
  %s13 = inlined_call_operand.vmem [shape: f32[2,4,256], index: 13, kind: output, shape index: {}]
  %s14 = sld [smem:[#allocation0]]
  $region85: #{_lambda_.9} parent=0
    _
  %s16 = ssub.s32 1, %s14
  %s17 = scalar_select 0, %s16, %s14
  loop: start=0, step=1, limit=4
  $region2: #{_lambda_.9} parent=0 // loop_pre_header
    _
  $region3: #{_lambda_.9} parent=0 // loop_header
    %s19 = sphi 0, %s23
    %p20 = scmp.ge.s32.totalorder %s19, 4
    %s29 = sphi 0, %s31
    %s32 = sphi 0, %s29
    %s33 = sphi 0, %s32
    %s49 = sphi 0, %s33
    %s53 = sphi 0, %s53
    %s55 = sphi 0, %s53
    %s56 = sphi 0, %s55
    %s70 = sphi 0, %s56
    %s74 = sphi 0, %s74
    %s76 = sphi 0, %s74
    %s77 = sphi 0, %s76
    %s91 = sphi 0, %s77
    %s95 = sphi 0, %s95
    %s97 = sphi 0, %s95
    %s98 = sphi 0, %s97
    %s112 = sphi 0, %s98
    %s116 = sphi 0, %s116
    %s118 = sphi 0, %s116
    %s119 = sphi 0, %s118
    %s133 = sphi 0, %s119
    %s137 = sphi 0, %s137
    %s139 = sphi 0, %s137
    %s140 = sphi 0, %s139
    %s154 = sphi 0, %s140
    %s158 = sphi 0, %s158
    %s160 = sphi 0, %s158
    %s161 = sphi 0, %s160
    %s175 = sphi 0, %s161
    %s179 = sphi 0, %s179
    %s181 = sphi 0, %s179
    %s182 = sphi 0, %s181
    %s196 = sphi 0, %s182
    %s200 = sphi 0, %s200
    %s202 = sphi 0, %s200
    %s203 = sphi 0, %s202
    %s217 = sphi 0, %s203
    %s221 = sphi 0, %s221
    %s223 = sphi 0, %s221
    %s224 = sphi 0, %s223
    %s238 = sphi 0, %s224
    %s242 = sphi 0, %s242
    %s244 = sphi 0, %s242
    %s245 = sphi 0, %s244
    %s259 = sphi 0, %s245
    %s263 = sphi 0, %s263
    %s265 = sphi 0, %s263
    %s266 = sphi 0, %s265
    %s280 = sphi 0, %s266
    %s284 = sphi 0, %s284
    %s286 = sphi 0, %s284
    %s287 = sphi 0, %s286
    %s301 = sphi 0, %s287
    %s307 = sphi 0, %s309
    %s310 = sphi 0, %s307
    %s311 = sphi 0, %s310
    %s327 = sphi 0, %s311
  $region4: #{_lambda_.9} parent=0 // loop_header_branch
    %22 = sbr.rel (%p20) target = $region8
  $region5: #{_lambda_.9} parent=0 // loop_body
    %s24 = ssub.s32 %s19, 1
    %s25 = ssub.s32 %s19, 2
    %s26 = sadd.s32 %s19, 1
    %s27 = ssub.s32 %s19, %s26
    %p28 = scmp.eq.s32.totalorder %s27, 0
    %s30 = sadd.s32 %s29, 1
    %s31 = scalar_select %p28, %s29, %s30
    %p34 = pneg %p28
    %p35 = scmp.eq.s32.totalorder %s19, 1
    %p36 = por %p34, %p35
    %p37 = scmp.ne.s32.totalorder %s29, %s32
    %p38 = scmp.eq.s32.totalorder %s19, 0
    %p39 = por %p37, %p38
    %p40 = scmp.ne.s32.totalorder %s29, %s32
    %p41 = scmp.eq.s32.totalorder %s24, 1
    %p42 = por %p40, %p41
    %p43 = scmp.ne.s32.totalorder %s32, %s33
    %p44 = scmp.eq.s32.totalorder %s24, 0
    %p45 = por %p43, %p44
    %p46 = scmp.ne.s32.totalorder %s32, %s33
    %p47 = scmp.eq.s32.totalorder %s25, 1
    %p48 = por %p46, %p47
    %p50 = scmp.ne.s32.totalorder %s33, %s49
    %p51 = scmp.eq.s32.totalorder %s25, 0
    %p52 = por %p50, %p51
    %s54 = sadd.s32 %s53, 1
    %p57 = scmp.eq.s32.totalorder %s19, 1
    %p58 = scmp.ne.s32.totalorder %s53, %s55
    %p59 = scmp.eq.s32.totalorder %s19, 0
    %p60 = por %p58, %p59
    %p61 = scmp.ne.s32.totalorder %s53, %s55
    %p62 = scmp.eq.s32.totalorder %s24, 1
    %p63 = por %p61, %p62
    %p64 = scmp.ne.s32.totalorder %s55, %s56
    %p65 = scmp.eq.s32.totalorder %s24, 0
    %p66 = por %p64, %p65
    %p67 = scmp.ne.s32.totalorder %s55, %s56
    %p68 = scmp.eq.s32.totalorder %s25, 1
    %p69 = por %p67, %p68
    %p71 = scmp.ne.s32.totalorder %s56, %s70
    %p72 = scmp.eq.s32.totalorder %s25, 0
    %p73 = por %p71, %p72
    %s75 = sadd.s32 %s74, 1
    %p78 = scmp.eq.s32.totalorder %s19, 1
    %p79 = scmp.ne.s32.totalorder %s74, %s76
    %p80 = scmp.eq.s32.totalorder %s19, 0
    %p81 = por %p79, %p80
    %p82 = scmp.ne.s32.totalorder %s74, %s76
    %p83 = scmp.eq.s32.totalorder %s24, 1
    %p84 = por %p82, %p83
    %p85 = scmp.ne.s32.totalorder %s76, %s77
    %p86 = scmp.eq.s32.totalorder %s24, 0
    %p87 = por %p85, %p86
    %p88 = scmp.ne.s32.totalorder %s76, %s77
    %p89 = scmp.eq.s32.totalorder %s25, 1
    %p90 = por %p88, %p89
    %p92 = scmp.ne.s32.totalorder %s77, %s91
    %p93 = scmp.eq.s32.totalorder %s25, 0
    %p94 = por %p92, %p93
    %s96 = sadd.s32 %s95, 1
    %p99 = scmp.eq.s32.totalorder %s19, 1
    %p100 = scmp.ne.s32.totalorder %s95, %s97
    %p101 = scmp.eq.s32.totalorder %s19, 0
    %p102 = por %p100, %p101
    %p103 = scmp.ne.s32.totalorder %s95, %s97
    %p104 = scmp.eq.s32.totalorder %s24, 1
    %p105 = por %p103, %p104
    %p106 = scmp.ne.s32.totalorder %s97, %s98
    %p107 = scmp.eq.s32.totalorder %s24, 0
    %p108 = por %p106, %p107
    %p109 = scmp.ne.s32.totalorder %s97, %s98
    %p110 = scmp.eq.s32.totalorder %s25, 1
    %p111 = por %p109, %p110
    %p113 = scmp.ne.s32.totalorder %s98, %s112
    %p114 = scmp.eq.s32.totalorder %s25, 0
    %p115 = por %p113, %p114
    %s117 = sadd.s32 %s116, 1
    %p120 = scmp.eq.s32.totalorder %s19, 1
    %p121 = scmp.ne.s32.totalorder %s116, %s118
    %p122 = scmp.eq.s32.totalorder %s19, 0
    %p123 = por %p121, %p122
    %p124 = scmp.ne.s32.totalorder %s116, %s118
    %p125 = scmp.eq.s32.totalorder %s24, 1
    %p126 = por %p124, %p125
    %p127 = scmp.ne.s32.totalorder %s118, %s119
    %p128 = scmp.eq.s32.totalorder %s24, 0
    %p129 = por %p127, %p128
    %p130 = scmp.ne.s32.totalorder %s118, %s119
    %p131 = scmp.eq.s32.totalorder %s25, 1
    %p132 = por %p130, %p131
    %p134 = scmp.ne.s32.totalorder %s119, %s133
    %p135 = scmp.eq.s32.totalorder %s25, 0
    %p136 = por %p134, %p135
    %s138 = sadd.s32 %s137, 1
    %p141 = scmp.eq.s32.totalorder %s19, 1
    %p142 = scmp.ne.s32.totalorder %s137, %s139
    %p143 = scmp.eq.s32.totalorder %s19, 0
    %p144 = por %p142, %p143
    %p145 = scmp.ne.s32.totalorder %s137, %s139
    %p146 = scmp.eq.s32.totalorder %s24, 1
    %p147 = por %p145, %p146
    %p148 = scmp.ne.s32.totalorder %s139, %s140
    %p149 = scmp.eq.s32.totalorder %s24, 0
    %p150 = por %p148, %p149
    %p151 = scmp.ne.s32.totalorder %s139, %s140
    %p152 = scmp.eq.s32.totalorder %s25, 1
    %p153 = por %p151, %p152
    %p155 = scmp.ne.s32.totalorder %s140, %s154
    %p156 = scmp.eq.s32.totalorder %s25, 0
    %p157 = por %p155, %p156
    %s159 = sadd.s32 %s158, 1
    %p162 = scmp.eq.s32.totalorder %s19, 1
    %p163 = scmp.ne.s32.totalorder %s158, %s160
    %p164 = scmp.eq.s32.totalorder %s19, 0
    %p165 = por %p163, %p164
    %p166 = scmp.ne.s32.totalorder %s158, %s160
    %p167 = scmp.eq.s32.totalorder %s24, 1
    %p168 = por %p166, %p167
    %p169 = scmp.ne.s32.totalorder %s160, %s161
    %p170 = scmp.eq.s32.totalorder %s24, 0
    %p171 = por %p169, %p170
    %p172 = scmp.ne.s32.totalorder %s160, %s161
    %p173 = scmp.eq.s32.totalorder %s25, 1
    %p174 = por %p172, %p173
    %p176 = scmp.ne.s32.totalorder %s161, %s175
    %p177 = scmp.eq.s32.totalorder %s25, 0
    %p178 = por %p176, %p177
    %s180 = sadd.s32 %s179, 1
    %p183 = scmp.eq.s32.totalorder %s19, 1
    %p184 = scmp.ne.s32.totalorder %s179, %s181
    %p185 = scmp.eq.s32.totalorder %s19, 0
    %p186 = por %p184, %p185
    %p187 = scmp.ne.s32.totalorder %s179, %s181
    %p188 = scmp.eq.s32.totalorder %s24, 1
    %p189 = por %p187, %p188
    %p190 = scmp.ne.s32.totalorder %s181, %s182
    %p191 = scmp.eq.s32.totalorder %s24, 0
    %p192 = por %p190, %p191
    %p193 = scmp.ne.s32.totalorder %s181, %s182
    %p194 = scmp.eq.s32.totalorder %s25, 1
    %p195 = por %p193, %p194
    %p197 = scmp.ne.s32.totalorder %s182, %s196
    %p198 = scmp.eq.s32.totalorder %s25, 0
    %p199 = por %p197, %p198
    %s201 = sadd.s32 %s200, 1
    %p204 = scmp.eq.s32.totalorder %s19, 1
    %p205 = scmp.ne.s32.totalorder %s200, %s202
    %p206 = scmp.eq.s32.totalorder %s19, 0
    %p207 = por %p205, %p206
    %p208 = scmp.ne.s32.totalorder %s200, %s202
    %p209 = scmp.eq.s32.totalorder %s24, 1
    %p210 = por %p208, %p209
    %p211 = scmp.ne.s32.totalorder %s202, %s203
    %p212 = scmp.eq.s32.totalorder %s24, 0
    %p213 = por %p211, %p212
    %p214 = scmp.ne.s32.totalorder %s202, %s203
    %p215 = scmp.eq.s32.totalorder %s25, 1
    %p216 = por %p214, %p215
    %p218 = scmp.ne.s32.totalorder %s203, %s217
    %p219 = scmp.eq.s32.totalorder %s25, 0
    %p220 = por %p218, %p219
    %s222 = sadd.s32 %s221, 1
    %p225 = scmp.eq.s32.totalorder %s19, 1
    %p226 = scmp.ne.s32.totalorder %s221, %s223
    %p227 = scmp.eq.s32.totalorder %s19, 0
    %p228 = por %p226, %p227
    %p229 = scmp.ne.s32.totalorder %s221, %s223
    %p230 = scmp.eq.s32.totalorder %s24, 1
    %p231 = por %p229, %p230
    %p232 = scmp.ne.s32.totalorder %s223, %s224
    %p233 = scmp.eq.s32.totalorder %s24, 0
    %p234 = por %p232, %p233
    %p235 = scmp.ne.s32.totalorder %s223, %s224
    %p236 = scmp.eq.s32.totalorder %s25, 1
    %p237 = por %p235, %p236
    %p239 = scmp.ne.s32.totalorder %s224, %s238
    %p240 = scmp.eq.s32.totalorder %s25, 0
    %p241 = por %p239, %p240
    %s243 = sadd.s32 %s242, 1
    %p246 = scmp.eq.s32.totalorder %s19, 1
    %p247 = scmp.ne.s32.totalorder %s242, %s244
    %p248 = scmp.eq.s32.totalorder %s19, 0
    %p249 = por %p247, %p248
    %p250 = scmp.ne.s32.totalorder %s242, %s244
    %p251 = scmp.eq.s32.totalorder %s24, 1
    %p252 = por %p250, %p251
    %p253 = scmp.ne.s32.totalorder %s244, %s245
    %p254 = scmp.eq.s32.totalorder %s24, 0
    %p255 = por %p253, %p254
    %p256 = scmp.ne.s32.totalorder %s244, %s245
    %p257 = scmp.eq.s32.totalorder %s25, 1
    %p258 = por %p256, %p257
    %p260 = scmp.ne.s32.totalorder %s245, %s259
    %p261 = scmp.eq.s32.totalorder %s25, 0
    %p262 = por %p260, %p261
    %s264 = sadd.s32 %s263, 1
    %p267 = scmp.eq.s32.totalorder %s19, 1
    %p268 = scmp.ne.s32.totalorder %s263, %s265
    %p269 = scmp.eq.s32.totalorder %s19, 0
    %p270 = por %p268, %p269
    %p271 = scmp.ne.s32.totalorder %s263, %s265
    %p272 = scmp.eq.s32.totalorder %s24, 1
    %p273 = por %p271, %p272
    %p274 = scmp.ne.s32.totalorder %s265, %s266
    %p275 = scmp.eq.s32.totalorder %s24, 0
    %p276 = por %p274, %p275
    %p277 = scmp.ne.s32.totalorder %s265, %s266
    %p278 = scmp.eq.s32.totalorder %s25, 1
    %p279 = por %p277, %p278
    %p281 = scmp.ne.s32.totalorder %s266, %s280
    %p282 = scmp.eq.s32.totalorder %s25, 0
    %p283 = por %p281, %p282
    %s285 = sadd.s32 %s284, 1
    %p288 = scmp.eq.s32.totalorder %s19, 1
    %p289 = scmp.ne.s32.totalorder %s284, %s286
    %p290 = scmp.eq.s32.totalorder %s19, 0
    %p291 = por %p289, %p290
    %p292 = scmp.ne.s32.totalorder %s284, %s286
    %p293 = scmp.eq.s32.totalorder %s24, 1
    %p294 = por %p292, %p293
    %p295 = scmp.ne.s32.totalorder %s286, %s287
    %p296 = scmp.eq.s32.totalorder %s24, 0
    %p297 = por %p295, %p296
    %p298 = scmp.ne.s32.totalorder %s286, %s287
    %p299 = scmp.eq.s32.totalorder %s25, 1
    %p300 = por %p298, %p299
    %p302 = scmp.ne.s32.totalorder %s287, %s301
    %p303 = scmp.eq.s32.totalorder %s25, 0
    %p304 = por %p302, %p303
    %s305 = ssub.s32 %s19, %s26
    %p306 = scmp.eq.s32.totalorder %s305, 0
    %s308 = sadd.s32 %s307, 1
    %s309 = scalar_select %p306, %s307, %s308
    %p312 = pneg %p306
    %p313 = scmp.eq.s32.totalorder %s19, 1
    %p314 = por %p312, %p313
    %p315 = scmp.ne.s32.totalorder %s307, %s310
    %p316 = scmp.eq.s32.totalorder %s19, 0
    %p317 = por %p315, %p316
    %p318 = scmp.ne.s32.totalorder %s307, %s310
    %p319 = scmp.eq.s32.totalorder %s24, 1
    %p320 = por %p318, %p319
    %p321 = scmp.ne.s32.totalorder %s310, %s311
    %p322 = scmp.eq.s32.totalorder %s24, 0
    %p323 = por %p321, %p322
    %p324 = scmp.ne.s32.totalorder %s310, %s311
    %p325 = scmp.eq.s32.totalorder %s25, 1
    %p326 = por %p324, %p325
    %p328 = scmp.ne.s32.totalorder %s311, %s327
    %p329 = scmp.eq.s32.totalorder %s25, 0
    %p330 = por %p328, %p329
    %p331 = scmp.le.s32.totalorder 1, %s19
    %p332 = scmp.lt.s32.totalorder %s19, 3
    %p333 = pnand %p331, %p332
    %p334 = pneg %p333
    // Predicated region
    $region9: #{_lambda_.9} parent=5 // pred_check
      _
    $region10: #{_lambda_.9} parent=5 // pred_check_branch
      %336 = sbr.rel (%p333) target = $region12
    $region11: #{_lambda_.9} parent=5 // pred_region
      %s337 = ssub.s32 %s19, 1
      // Predicated region
      $region13: #{_lambda_.9} parent=11 // pred_check
        %p338 = pneg %p66
      $region14: #{_lambda_.9} parent=11 // pred_check_branch
        %340 = sbr.rel (%p338) target = $region16
      $region15: #{_lambda_.9} parent=11 // pred_region
        _
      $region16: #{_lambda_.9} parent=11 // pred_fallthru
        _
      // Predicated region
      $region17: #{_lambda_.9} parent=11 // pred_check
        %p341 = pneg %p87
      $region18: #{_lambda_.9} parent=11 // pred_check_branch
        %343 = sbr.rel (%p341) target = $region20
      $region19: #{_lambda_.9} parent=11 // pred_region
        _
      $region20: #{_lambda_.9} parent=11 // pred_fallthru
        _
      // Predicated region
      $region21: #{_lambda_.9} parent=11 // pred_check
        %p344 = pneg %p108
      $region22: #{_lambda_.9} parent=11 // pred_check_branch
        %346 = sbr.rel (%p344) target = $region24
      $region23: #{_lambda_.9} parent=11 // pred_region
        _
      $region24: #{_lambda_.9} parent=11 // pred_fallthru
        _
      // Predicated region
      $region25: #{_lambda_.9} parent=11 // pred_check
        %p347 = pneg %p129
      $region26: #{_lambda_.9} parent=11 // pred_check_branch
        %349 = sbr.rel (%p347) target = $region28
      $region27: #{_lambda_.9} parent=11 // pred_region
        _
      $region28: #{_lambda_.9} parent=11 // pred_fallthru
        _
      // Predicated region
      $region29: #{_lambda_.9} parent=11 // pred_check
        %p350 = pneg %p150
      $region30: #{_lambda_.9} parent=11 // pred_check_branch
        %352 = sbr.rel (%p350) target = $region32
      $region31: #{_lambda_.9} parent=11 // pred_region
        _
      $region32: #{_lambda_.9} parent=11 // pred_fallthru
        _
      // Predicated region
      $region33: #{_lambda_.9} parent=11 // pred_check
        %p353 = pneg %p171
      $region34: #{_lambda_.9} parent=11 // pred_check_branch
        %355 = sbr.rel (%p353) target = $region36
      $region35: #{_lambda_.9} parent=11 // pred_region
        _
      $region36: #{_lambda_.9} parent=11 // pred_fallthru
        _
      // Predicated region
      $region37: #{_lambda_.9} parent=11 // pred_check
        %p356 = pneg %p192
      $region38: #{_lambda_.9} parent=11 // pred_check_branch
        %358 = sbr.rel (%p356) target = $region40
      $region39: #{_lambda_.9} parent=11 // pred_region
        _
      $region40: #{_lambda_.9} parent=11 // pred_fallthru
        _
      // Predicated region
      $region41: #{_lambda_.9} parent=11 // pred_check
        %p359 = pneg %p213
      $region42: #{_lambda_.9} parent=11 // pred_check_branch
        %361 = sbr.rel (%p359) target = $region44
      $region43: #{_lambda_.9} parent=11 // pred_region
        _
      $region44: #{_lambda_.9} parent=11 // pred_fallthru
        _
      // Predicated region
      $region45: #{_lambda_.9} parent=11 // pred_check
        %p362 = pneg %p234
      $region46: #{_lambda_.9} parent=11 // pred_check_branch
        %364 = sbr.rel (%p362) target = $region48
      $region47: #{_lambda_.9} parent=11 // pred_region
        _
      $region48: #{_lambda_.9} parent=11 // pred_fallthru
        _
      // Predicated region
      $region49: #{_lambda_.9} parent=11 // pred_check
        %p365 = pneg %p255
      $region50: #{_lambda_.9} parent=11 // pred_check_branch
        %367 = sbr.rel (%p365) target = $region52
      $region51: #{_lambda_.9} parent=11 // pred_region
        _
      $region52: #{_lambda_.9} parent=11 // pred_fallthru
        _
      // Predicated region
      $region53: #{_lambda_.9} parent=11 // pred_check
        %p368 = pneg %p276
      $region54: #{_lambda_.9} parent=11 // pred_check_branch
        %370 = sbr.rel (%p368) target = $region56
      $region55: #{_lambda_.9} parent=11 // pred_region
        _
      $region56: #{_lambda_.9} parent=11 // pred_fallthru
        _
      // Predicated region
      $region57: #{_lambda_.9} parent=11 // pred_check
        %p371 = pneg %p297
      $region58: #{_lambda_.9} parent=11 // pred_check_branch
        %373 = sbr.rel (%p371) target = $region60
      $region59: #{_lambda_.9} parent=11 // pred_region
        _
      $region60: #{_lambda_.9} parent=11 // pred_fallthru
        _
    $region12: #{_lambda_.9} parent=5 // pred_fallthru
      _
    %p374 = scmp.lt.s32.totalorder %s19, 2
    // Predicated region
    $region61: #{_lambda_.9} parent=5 // pred_check
      %p375 = pneg %p374
    $region62: #{_lambda_.9} parent=5 // pred_check_branch
      %377 = sbr.rel (%p375) target = $region64
    $region63: #{_lambda_.9} parent=5 // pred_region
      // Predicated region
      $region65: #{_lambda_.9} parent=63 // pred_check
        %p378 = pneg %p39
      $region66: #{_lambda_.9} parent=63 // pred_check_branch
        %380 = sbr.rel (%p378) target = $region68
      $region67: #{_lambda_.9} parent=63 // pred_region
        %p381 = scmp.lt.s32.totalorder %s19, 1
        %s382 = scalar_select %p381, %s19, 1
        %s383 = smul.addr %s382, 2
        %s384 = smul.addr %s383, 4
        %s385 = scalar_lea.vmem %s0, %s384
      $region68: #{_lambda_.9} parent=63 // pred_fallthru
        _
    $region64: #{_lambda_.9} parent=5 // pred_fallthru
      _
    %p386 = scmp.le.s32.totalorder 1, %s19
    %p387 = scmp.lt.s32.totalorder %s19, 3
    %p388 = pnand %p386, %p387
    %p389 = pneg %p388
    // Predicated region
    $region69: #{_lambda_.9} parent=5 // pred_check
      _
    $region70: #{_lambda_.9} parent=5 // pred_check_branch
      %391 = sbr.rel (%p388) target = $region72
    $region71: #{_lambda_.9} parent=5 // pred_region
      %s392 = ssub.s32 %s19, 1
      %p393 = scmp.lt.s32.totalorder %s24, 1
      %s394 = scalar_select %p393, %s24, 1
      %s395 = smul.addr %s394, 2
      %s396 = smul.addr %s395, 4
      %s397 = scalar_lea.vmem %s0, %s396
      %p398 = pneg %p45
      %p399 = pneg %p42
      %p400 = pneg %p66
      %p401 = pneg %p63
      %p402 = pneg %p87
      %p403 = pneg %p84
      %p404 = pneg %p108
      %p405 = pneg %p105
      %p406 = pneg %p129
      %p407 = pneg %p126
      %p408 = pneg %p150
      %p409 = pneg %p147
      %p410 = pneg %p171
      %p411 = pneg %p168
      %p412 = pneg %p192
      %p413 = pneg %p189
      %p414 = pneg %p213
      %p415 = pneg %p210
      %p416 = pneg %p234
      %p417 = pneg %p231
      %p418 = pneg %p255
      %p419 = pneg %p252
      %p420 = pneg %p276
      %p421 = pneg %p273
      %p422 = pneg %p297
      %p423 = pneg %p294
      %p424 = pneg %p323
      %p425 = pneg %p320
      %p426 = scmp.lt.s32.totalorder %s24, 1
      %s427 = scalar_select %p426, %s24, 1
      %s428 = smul.addr %s427, 2
      %s429 = smul.addr %s428, 4
      %s430 = scalar_lea.vmem %s13, %s429
      %p431 = scmp.lt.s32.totalorder %s24, 1
      %s432 = scalar_select %p431, %s24, 1
      %s433 = smul.addr %s432, 2
      %s434 = smul.addr %s433, 4
      %s435 = scalar_lea.vmem %s0, %s434
      %p436 = scmp.lt.s32.totalorder %s24, 1
      %s437 = scalar_select %p436, %s24, 1
      %s438 = smul.addr %s437, 2
      %s439 = smul.addr %s438, 4
      %s440 = scalar_lea.vmem %s13, %s439
      %v442 = vld [vmem:[%s435] sm:$0xff]
      %v443 = vld [vmem:[%s1] sm:$0x3]
      %v444 = vld [vmem:[%s2] sm:$0x3]
      %v446 = vcombine.high %v442, %v442
      %vm448 = vcmask 1043456
      %v449 = vsel %vm448, %v442, 0.0
      %v450 = vsel %vm448, %v446, 0.0
      %v451 = vadd.f32 %v449, %v450
      %452 = vadd.xlane.f32.xlu0 %v451
      %v453 = vpop.xlane.xlu0 %452
      %v454 = vrcp.pop 256.0
      %v455 = vmul.f32 %v453, %v454
      %v458 = vunpack.c.l.s4 839922192
      %v459 = vunpack.c.0.s8 %v458
      %v460 = vlaneseq
      %v461 = vshrl.u32 %v460, 7
      %v462 = vsub.s32 %v459, %v461
      %v463 = vrot.slane %v455, %v462
      %v465 = vsub.f32 %v442, %v463
      %v466 = vmul.f32 %v465, %v465
      %v468 = vcombine.high %v466, %v466
      %v470 = vsel %vm448, %v466, 0.0
      %v471 = vsel %vm448, %v468, 0.0
      %v472 = vadd.f32 %v470, %v471
      %473 = vadd.xlane.f32.xlu0 %v472
      %v474 = vpop.xlane.xlu0 %473
      %v475 = vmul.f32 %v474, %v454
      %v476 = vadd.f32 %v475, 1e-05
      %v477 = vrsqrt.pop %v476
      %v480 = vunpack.c.l.s4 839922192
      %v481 = vunpack.c.0.s8 %v480
      %v482 = vlaneseq
      %v483 = vshrl.u32 %v482, 7
      %v484 = vsub.s32 %v481, %v483
      %v485 = vrot.slane %v477, %v484
      %v487 = vmul.f32 %v465, %v485
      %v489 = vlaneseq
      %v490 = vshrl.u32 %v489, 7
      %v491 = vsub.s32 0, %v490
      %v492 = vrot.slane %v443, %v491
      %v493 = vlaneseq
      %v494 = vshrl.u32 %v493, 7
      %v495 = vsub.s32 1, %v494
      %v496 = vrot.slane %v443, %v495
      %v497 = vcombine.low %v492, %v496
      %v499 = vmul.f32 %v487, %v497
      %v501 = vlaneseq
      %v502 = vshrl.u32 %v501, 7
      %v503 = vsub.s32 0, %v502
      %v504 = vrot.slane %v444, %v503
      %v505 = vlaneseq
      %v506 = vshrl.u32 %v505, 7
      %v507 = vsub.s32 1, %v506
      %v508 = vrot.slane %v444, %v507
      %v509 = vcombine.low %v504, %v508
      %v511 = vadd.f32 %v499, %v509
      %v513 = vcombine.high %v511, %v511
      %v515 = vpack.c.bf16 %v511, %v511
      %v516 = vpack.c.bf16 %v513, %v513
      %v517 = vld [vmem:[%s3] sm:$0xff]
      %v518 = vld [vmem:[%s3 + $0x8] sm:$0xff]
      %v519 = vld [vmem:[%s3 + $0x10] sm:$0xff]
      %v520 = vld [vmem:[%s3 + $0x18] sm:$0xff]
      %v521 = vld [vmem:[%s3 + $0x20] sm:$0xff]
      %v522 = vld [vmem:[%s3 + $0x28] sm:$0xff]
      %v523 = vld [vmem:[%s3 + $0x30] sm:$0xff]
      %v524 = vld [vmem:[%s3 + $0x38] sm:$0xff]
      %v525 = vld [vmem:[%s3 + $0x40] sm:$0xff]
      %v526 = vld [vmem:[%s3 + $0x48] sm:$0xff]
      %v527 = vld [vmem:[%s3 + $0x50] sm:$0xff]
      %v528 = vld [vmem:[%s3 + $0x58] sm:$0xff]
      %v529 = vld [vmem:[%s3 + $0x60] sm:$0xff]
      %v530 = vld [vmem:[%s3 + $0x68] sm:$0xff]
      %v531 = vld [vmem:[%s3 + $0x70] sm:$0xff]
      %v532 = vld [vmem:[%s3 + $0x78] sm:$0xff]
      %v533 = vld [vmem:[%s3 + $0x80] sm:$0xff]
      %v534 = vld [vmem:[%s3 + $0x88] sm:$0xff]
      %v535 = vld [vmem:[%s3 + $0x90] sm:$0xff]
      %v536 = vld [vmem:[%s3 + $0x98] sm:$0xff]
      %v537 = vld [vmem:[%s3 + $0xa0] sm:$0xff]
      %v538 = vld [vmem:[%s3 + $0xa8] sm:$0xff]
      %v539 = vld [vmem:[%s3 + $0xb0] sm:$0xff]
      %v540 = vld [vmem:[%s3 + $0xb8] sm:$0xff]
      %v541 = vld [vmem:[%s3 + $0xc0] sm:$0xff]
      %v542 = vld [vmem:[%s3 + $0xc8] sm:$0xff]
      %v543 = vld [vmem:[%s3 + $0xd0] sm:$0xff]
      %v544 = vld [vmem:[%s3 + $0xd8] sm:$0xff]
      %v545 = vld [vmem:[%s3 + $0xe0] sm:$0xff]
      %v546 = vld [vmem:[%s3 + $0xe8] sm:$0xff]
      %v547 = vld [vmem:[%s3 + $0xf0] sm:$0xff]
      %v548 = vld [vmem:[%s3 + $0xf8] sm:$0xff]
      %v549 = vld [vmem:[%s3 + $0x100] sm:$0xff]
      %v550 = vld [vmem:[%s3 + $0x108] sm:$0xff]
      %v551 = vld [vmem:[%s3 + $0x110] sm:$0xff]
      %v552 = vld [vmem:[%s3 + $0x118] sm:$0xff]
      %v553 = vld [vmem:[%s3 + $0x120] sm:$0xff]
      %v554 = vld [vmem:[%s3 + $0x128] sm:$0xff]
      %v555 = vld [vmem:[%s3 + $0x130] sm:$0xff]
      %v556 = vld [vmem:[%s3 + $0x138] sm:$0xff]
      %v557 = vld [vmem:[%s3 + $0x140] sm:$0xff]
      %v558 = vld [vmem:[%s3 + $0x148] sm:$0xff]
      %v559 = vld [vmem:[%s3 + $0x150] sm:$0xff]
      %v560 = vld [vmem:[%s3 + $0x158] sm:$0xff]
      %v561 = vld [vmem:[%s3 + $0x160] sm:$0xff]
      %v562 = vld [vmem:[%s3 + $0x168] sm:$0xff]
      %v563 = vld [vmem:[%s3 + $0x170] sm:$0xff]
      %v564 = vld [vmem:[%s3 + $0x178] sm:$0xff]
      %v565 = vld [vmem:[%s3 + $0x180] sm:$0xff]
      %v566 = vld [vmem:[%s3 + $0x188] sm:$0xff]
      %v567 = vld [vmem:[%s3 + $0x190] sm:$0xff]
      %v568 = vld [vmem:[%s3 + $0x198] sm:$0xff]
      %v569 = vld [vmem:[%s3 + $0x1a0] sm:$0xff]
      %v570 = vld [vmem:[%s3 + $0x1a8] sm:$0xff]
      %v571 = vld [vmem:[%s3 + $0x1b0] sm:$0xff]
      %v572 = vld [vmem:[%s3 + $0x1b8] sm:$0xff]
      %v573 = vld [vmem:[%s3 + $0x1c0] sm:$0xff]
      %v574 = vld [vmem:[%s3 + $0x1c8] sm:$0xff]
      %v575 = vld [vmem:[%s3 + $0x1d0] sm:$0xff]
      %v576 = vld [vmem:[%s3 + $0x1d8] sm:$0xff]
      %v577 = vld [vmem:[%s3 + $0x1e0] sm:$0xff]
      %v578 = vld [vmem:[%s3 + $0x1e8] sm:$0xff]
      %v579 = vld [vmem:[%s3 + $0x1f0] sm:$0xff]
      %v580 = vld [vmem:[%s3 + $0x1f8] sm:$0xff]
      %v581 = vld [vmem:[%s3 + $0x200] sm:$0xff]
      %v582 = vld [vmem:[%s3 + $0x208] sm:$0xff]
      %v583 = vld [vmem:[%s3 + $0x210] sm:$0xff]
      %v584 = vld [vmem:[%s3 + $0x218] sm:$0xff]
      %v585 = vld [vmem:[%s3 + $0x220] sm:$0xff]
      %v586 = vld [vmem:[%s3 + $0x228] sm:$0xff]
      %v587 = vld [vmem:[%s3 + $0x230] sm:$0xff]
      %v588 = vld [vmem:[%s3 + $0x238] sm:$0xff]
      %v589 = vld [vmem:[%s3 + $0x240] sm:$0xff]
      %v590 = vld [vmem:[%s3 + $0x248] sm:$0xff]
      %v591 = vld [vmem:[%s3 + $0x250] sm:$0xff]
      %v592 = vld [vmem:[%s3 + $0x258] sm:$0xff]
      %v593 = vld [vmem:[%s3 + $0x260] sm:$0xff]
      %v594 = vld [vmem:[%s3 + $0x268] sm:$0xff]
      %v595 = vld [vmem:[%s3 + $0x270] sm:$0xff]
      %v596 = vld [vmem:[%s3 + $0x278] sm:$0xff]
      %v597 = vld [vmem:[%s3 + $0x280] sm:$0xff]
      %v598 = vld [vmem:[%s3 + $0x288] sm:$0xff]
      %v599 = vld [vmem:[%s3 + $0x290] sm:$0xff]
      %v600 = vld [vmem:[%s3 + $0x298] sm:$0xff]
      %v601 = vld [vmem:[%s3 + $0x2a0] sm:$0xff]
      %v602 = vld [vmem:[%s3 + $0x2a8] sm:$0xff]
      %v603 = vld [vmem:[%s3 + $0x2b0] sm:$0xff]
      %v604 = vld [vmem:[%s3 + $0x2b8] sm:$0xff]
      %v605 = vld [vmem:[%s3 + $0x2c0] sm:$0xff]
      %v606 = vld [vmem:[%s3 + $0x2c8] sm:$0xff]
      %v607 = vld [vmem:[%s3 + $0x2d0] sm:$0xff]
      %v608 = vld [vmem:[%s3 + $0x2d8] sm:$0xff]
      %v609 = vld [vmem:[%s3 + $0x2e0] sm:$0xff]
      %v610 = vld [vmem:[%s3 + $0x2e8] sm:$0xff]
      %v611 = vld [vmem:[%s3 + $0x2f0] sm:$0xff]
      %v612 = vld [vmem:[%s3 + $0x2f8] sm:$0xff]
      %v613 = vld [vmem:[%s4] sm:$0x3f]
      %v615 = vlaneseq
      %v616 = vshrl.u32 %v615, 7
      %v617 = vsub.s32 0, %v616
      %v618 = vrot.slane %v613, %v617
      %v619 = vlaneseq
      %v620 = vshrl.u32 %v619, 7
      %v621 = vsub.s32 1, %v620
      %v622 = vrot.slane %v613, %v621
      %v623 = vlaneseq
      %v624 = vshrl.u32 %v623, 7
      %v625 = vsub.s32 2, %v624
      %v626 = vrot.slane %v613, %v625
      %v627 = vlaneseq
      %v628 = vshrl.u32 %v627, 7
      %v629 = vsub.s32 3, %v628
      %v630 = vrot.slane %v613, %v629
      %v631 = vlaneseq
      %v632 = vshrl.u32 %v631, 7
      %v633 = vsub.s32 4, %v632
      %v634 = vrot.slane %v613, %v633
      %v635 = vlaneseq
      %v636 = vshrl.u32 %v635, 7
      %v637 = vsub.s32 5, %v636
      %v638 = vrot.slane %v613, %v637
      %v741 = vunpack.c.l.b16 %v517
      %v742 = vunpack.c.h.b16 %v517
      %v743 = vunpack.c.l.b16 %v518
      %v744 = vunpack.c.h.b16 %v518
      %v745 = vunpack.c.l.b16 %v519
      %v746 = vunpack.c.h.b16 %v519
      %v747 = vunpack.c.l.b16 %v520
      %v748 = vunpack.c.h.b16 %v520
      %v749 = vunpack.c.l.b16 %v521
      %v750 = vunpack.c.h.b16 %v521
      %v751 = vunpack.c.l.b16 %v522
      %v752 = vunpack.c.h.b16 %v522
      %v753 = vunpack.c.l.b16 %v523
      %v754 = vunpack.c.h.b16 %v523
      %v755 = vunpack.c.l.b16 %v524
      %v756 = vunpack.c.h.b16 %v524
      %v757 = vunpack.c.l.b16 %v525
      %v758 = vunpack.c.h.b16 %v525
      %v759 = vunpack.c.l.b16 %v526
      %v760 = vunpack.c.h.b16 %v526
      %v761 = vunpack.c.l.b16 %v527
      %v762 = vunpack.c.h.b16 %v527
      %v763 = vunpack.c.l.b16 %v528
      %v764 = vunpack.c.h.b16 %v528
      %v765 = vunpack.c.l.b16 %v529
      %v766 = vunpack.c.h.b16 %v529
      %v767 = vunpack.c.l.b16 %v530
      %v768 = vunpack.c.h.b16 %v530
      %v769 = vunpack.c.l.b16 %v531
      %v770 = vunpack.c.h.b16 %v531
      %v771 = vunpack.c.l.b16 %v532
      %v772 = vunpack.c.h.b16 %v532
      %v773 = vunpack.c.l.b16 %v533
      %v774 = vunpack.c.h.b16 %v533
      %v775 = vunpack.c.l.b16 %v534
      %v776 = vunpack.c.h.b16 %v534
      %v777 = vunpack.c.l.b16 %v535
      %v778 = vunpack.c.h.b16 %v535
      %v779 = vunpack.c.l.b16 %v536
      %v780 = vunpack.c.h.b16 %v536
      %v781 = vunpack.c.l.b16 %v537
      %v782 = vunpack.c.h.b16 %v537
      %v783 = vunpack.c.l.b16 %v538
      %v784 = vunpack.c.h.b16 %v538
      %v785 = vunpack.c.l.b16 %v539
      %v786 = vunpack.c.h.b16 %v539
      %v787 = vunpack.c.l.b16 %v540
      %v788 = vunpack.c.h.b16 %v540
      %v789 = vunpack.c.l.b16 %v541
      %v790 = vunpack.c.h.b16 %v541
      %v791 = vunpack.c.l.b16 %v542
      %v792 = vunpack.c.h.b16 %v542
      %v793 = vunpack.c.l.b16 %v543
      %v794 = vunpack.c.h.b16 %v543
      %v795 = vunpack.c.l.b16 %v544
      %v796 = vunpack.c.h.b16 %v544
      %v797 = vunpack.c.l.b16 %v545
      %v798 = vunpack.c.h.b16 %v545
      %v799 = vunpack.c.l.b16 %v546
      %v800 = vunpack.c.h.b16 %v546
      %v801 = vunpack.c.l.b16 %v547
      %v802 = vunpack.c.h.b16 %v547
      %v803 = vunpack.c.l.b16 %v548
      %v804 = vunpack.c.h.b16 %v548
      %v805 = vunpack.c.l.b16 %v549
      %v806 = vunpack.c.h.b16 %v549
      %v807 = vunpack.c.l.b16 %v550
      %v808 = vunpack.c.h.b16 %v550
      %v809 = vunpack.c.l.b16 %v551
      %v810 = vunpack.c.h.b16 %v551
      %v811 = vunpack.c.l.b16 %v552
      %v812 = vunpack.c.h.b16 %v552
      %v813 = vunpack.c.l.b16 %v553
      %v814 = vunpack.c.h.b16 %v553
      %v815 = vunpack.c.l.b16 %v554
      %v816 = vunpack.c.h.b16 %v554
      %v817 = vunpack.c.l.b16 %v555
      %v818 = vunpack.c.h.b16 %v555
      %v819 = vunpack.c.l.b16 %v556
      %v820 = vunpack.c.h.b16 %v556
      %v821 = vunpack.c.l.b16 %v557
      %v822 = vunpack.c.h.b16 %v557
      %v823 = vunpack.c.l.b16 %v558
      %v824 = vunpack.c.h.b16 %v558
      %v825 = vunpack.c.l.b16 %v559
      %v826 = vunpack.c.h.b16 %v559
      %v827 = vunpack.c.l.b16 %v560
      %v828 = vunpack.c.h.b16 %v560
      %v829 = vunpack.c.l.b16 %v561
      %v830 = vunpack.c.h.b16 %v561
      %v831 = vunpack.c.l.b16 %v562
      %v832 = vunpack.c.h.b16 %v562
      %v833 = vunpack.c.l.b16 %v563
      %v834 = vunpack.c.h.b16 %v563
      %v835 = vunpack.c.l.b16 %v564
      %v836 = vunpack.c.h.b16 %v564
      %v837 = vunpack.c.l.b16 %v565
      %v838 = vunpack.c.h.b16 %v565
      %v839 = vunpack.c.l.b16 %v566
      %v840 = vunpack.c.h.b16 %v566
      %v841 = vunpack.c.l.b16 %v567
      %v842 = vunpack.c.h.b16 %v567
      %v843 = vunpack.c.l.b16 %v568
      %v844 = vunpack.c.h.b16 %v568
      %v845 = vunpack.c.l.b16 %v569
      %v846 = vunpack.c.h.b16 %v569
      %v847 = vunpack.c.l.b16 %v570
      %v848 = vunpack.c.h.b16 %v570
      %v849 = vunpack.c.l.b16 %v571
      %v850 = vunpack.c.h.b16 %v571
      %v851 = vunpack.c.l.b16 %v572
      %v852 = vunpack.c.h.b16 %v572
      %v853 = vunpack.c.l.b16 %v573
      %v854 = vunpack.c.h.b16 %v573
      %v855 = vunpack.c.l.b16 %v574
      %v856 = vunpack.c.h.b16 %v574
      %v857 = vunpack.c.l.b16 %v575
      %v858 = vunpack.c.h.b16 %v575
      %v859 = vunpack.c.l.b16 %v576
      %v860 = vunpack.c.h.b16 %v576
      %v861 = vunpack.c.l.b16 %v577
      %v862 = vunpack.c.h.b16 %v577
      %v863 = vunpack.c.l.b16 %v578
      %v864 = vunpack.c.h.b16 %v578
      %v865 = vunpack.c.l.b16 %v579
      %v866 = vunpack.c.h.b16 %v579
      %v867 = vunpack.c.l.b16 %v580
      %v868 = vunpack.c.h.b16 %v580
      %v869 = vunpack.c.l.b16 %v581
      %v870 = vunpack.c.h.b16 %v581
      %v871 = vunpack.c.l.b16 %v582
      %v872 = vunpack.c.h.b16 %v582
      %v873 = vunpack.c.l.b16 %v583
      %v874 = vunpack.c.h.b16 %v583
      %v875 = vunpack.c.l.b16 %v584
      %v876 = vunpack.c.h.b16 %v584
      %v877 = vunpack.c.l.b16 %v585
      %v878 = vunpack.c.h.b16 %v585
      %v879 = vunpack.c.l.b16 %v586
      %v880 = vunpack.c.h.b16 %v586
      %v881 = vunpack.c.l.b16 %v587
      %v882 = vunpack.c.h.b16 %v587
      %v883 = vunpack.c.l.b16 %v588
      %v884 = vunpack.c.h.b16 %v588
      %v885 = vunpack.c.l.b16 %v589
      %v886 = vunpack.c.h.b16 %v589
      %v887 = vunpack.c.l.b16 %v590
      %v888 = vunpack.c.h.b16 %v590
      %v889 = vunpack.c.l.b16 %v591
      %v890 = vunpack.c.h.b16 %v591
      %v891 = vunpack.c.l.b16 %v592
      %v892 = vunpack.c.h.b16 %v592
      %v893 = vunpack.c.l.b16 %v593
      %v894 = vunpack.c.h.b16 %v593
      %v895 = vunpack.c.l.b16 %v594
      %v896 = vunpack.c.h.b16 %v594
      %v897 = vunpack.c.l.b16 %v595
      %v898 = vunpack.c.h.b16 %v595
      %v899 = vunpack.c.l.b16 %v596
      %v900 = vunpack.c.h.b16 %v596
      %v901 = vunpack.c.l.b16 %v597
      %v902 = vunpack.c.h.b16 %v597
      %v903 = vunpack.c.l.b16 %v598
      %v904 = vunpack.c.h.b16 %v598
      %v905 = vunpack.c.l.b16 %v599
      %v906 = vunpack.c.h.b16 %v599
      %v907 = vunpack.c.l.b16 %v600
      %v908 = vunpack.c.h.b16 %v600
      %v909 = vunpack.c.l.b16 %v601
      %v910 = vunpack.c.h.b16 %v601
      %v911 = vunpack.c.l.b16 %v602
      %v912 = vunpack.c.h.b16 %v602
      %v913 = vunpack.c.l.b16 %v603
      %v914 = vunpack.c.h.b16 %v603
      %v915 = vunpack.c.l.b16 %v604
      %v916 = vunpack.c.h.b16 %v604
      %v917 = vunpack.c.l.b16 %v605
      %v918 = vunpack.c.h.b16 %v605
      %v919 = vunpack.c.l.b16 %v606
      %v920 = vunpack.c.h.b16 %v606
      %v921 = vunpack.c.l.b16 %v607
      %v922 = vunpack.c.h.b16 %v607
      %v923 = vunpack.c.l.b16 %v608
      %v924 = vunpack.c.h.b16 %v608
      %v925 = vunpack.c.l.b16 %v609
      %v926 = vunpack.c.h.b16 %v609
      %v927 = vunpack.c.l.b16 %v610
      %v928 = vunpack.c.h.b16 %v610
      %v929 = vunpack.c.l.b16 %v611
      %v930 = vunpack.c.h.b16 %v611
      %v931 = vunpack.c.l.b16 %v612
      %v932 = vunpack.c.h.b16 %v612
      %v933 = vpack.c.b16 %v747, %v741
      %v934 = vpack.c.b16 %v748, %v742
      %v935 = vpack.c.b16 %v749, %v743
      %v936 = vpack.c.b16 %v750, %v744
      %v937 = vpack.c.b16 %v751, %v745
      %v938 = vpack.c.b16 %v752, %v746
      %v939 = vpack.c.b16 %v759, %v753
      %v940 = vpack.c.b16 %v760, %v754
      %v941 = vpack.c.b16 %v761, %v755
      %v942 = vpack.c.b16 %v762, %v756
      %v943 = vpack.c.b16 %v763, %v757
      %v944 = vpack.c.b16 %v764, %v758
      %v945 = vpack.c.b16 %v771, %v765
      %v946 = vpack.c.b16 %v772, %v766
      %v947 = vpack.c.b16 %v773, %v767
      %v948 = vpack.c.b16 %v774, %v768
      %v949 = vpack.c.b16 %v775, %v769
      %v950 = vpack.c.b16 %v776, %v770
      %v951 = vpack.c.b16 %v783, %v777
      %v952 = vpack.c.b16 %v784, %v778
      %v953 = vpack.c.b16 %v785, %v779
      %v954 = vpack.c.b16 %v786, %v780
      %v955 = vpack.c.b16 %v787, %v781
      %v956 = vpack.c.b16 %v788, %v782
      %v957 = vpack.c.b16 %v795, %v789
      %v958 = vpack.c.b16 %v796, %v790
      %v959 = vpack.c.b16 %v797, %v791
      %v960 = vpack.c.b16 %v798, %v792
      %v961 = vpack.c.b16 %v799, %v793
      %v962 = vpack.c.b16 %v800, %v794
      %v963 = vpack.c.b16 %v807, %v801
      %v964 = vpack.c.b16 %v808, %v802
      %v965 = vpack.c.b16 %v809, %v803
      %v966 = vpack.c.b16 %v810, %v804
      %v967 = vpack.c.b16 %v811, %v805
      %v968 = vpack.c.b16 %v812, %v806
      %v969 = vpack.c.b16 %v819, %v813
      %v970 = vpack.c.b16 %v820, %v814
      %v971 = vpack.c.b16 %v821, %v815
      %v972 = vpack.c.b16 %v822, %v816
      %v973 = vpack.c.b16 %v823, %v817
      %v974 = vpack.c.b16 %v824, %v818
      %v975 = vpack.c.b16 %v831, %v825
      %v976 = vpack.c.b16 %v832, %v826
      %v977 = vpack.c.b16 %v833, %v827
      %v978 = vpack.c.b16 %v834, %v828
      %v979 = vpack.c.b16 %v835, %v829
      %v980 = vpack.c.b16 %v836, %v830
      %v981 = vpack.c.b16 %v843, %v837
      %v982 = vpack.c.b16 %v844, %v838
      %v983 = vpack.c.b16 %v845, %v839
      %v984 = vpack.c.b16 %v846, %v840
      %v985 = vpack.c.b16 %v847, %v841
      %v986 = vpack.c.b16 %v848, %v842
      %v987 = vpack.c.b16 %v855, %v849
      %v988 = vpack.c.b16 %v856, %v850
      %v989 = vpack.c.b16 %v857, %v851
      %v990 = vpack.c.b16 %v858, %v852
      %v991 = vpack.c.b16 %v859, %v853
      %v992 = vpack.c.b16 %v860, %v854
      %v993 = vpack.c.b16 %v867, %v861
      %v994 = vpack.c.b16 %v868, %v862
      %v995 = vpack.c.b16 %v869, %v863
      %v996 = vpack.c.b16 %v870, %v864
      %v997 = vpack.c.b16 %v871, %v865
      %v998 = vpack.c.b16 %v872, %v866
      %v999 = vpack.c.b16 %v879, %v873
      %v1000 = vpack.c.b16 %v880, %v874
      %v1001 = vpack.c.b16 %v881, %v875
      %v1002 = vpack.c.b16 %v882, %v876
      %v1003 = vpack.c.b16 %v883, %v877
      %v1004 = vpack.c.b16 %v884, %v878
      %v1005 = vpack.c.b16 %v891, %v885
      %v1006 = vpack.c.b16 %v892, %v886
      %v1007 = vpack.c.b16 %v893, %v887
      %v1008 = vpack.c.b16 %v894, %v888
      %v1009 = vpack.c.b16 %v895, %v889
      %v1010 = vpack.c.b16 %v896, %v890
      %v1011 = vpack.c.b16 %v903, %v897
      %v1012 = vpack.c.b16 %v904, %v898
      %v1013 = vpack.c.b16 %v905, %v899
      %v1014 = vpack.c.b16 %v906, %v900
      %v1015 = vpack.c.b16 %v907, %v901
      %v1016 = vpack.c.b16 %v908, %v902
      %v1017 = vpack.c.b16 %v915, %v909
      %v1018 = vpack.c.b16 %v916, %v910
      %v1019 = vpack.c.b16 %v917, %v911
      %v1020 = vpack.c.b16 %v918, %v912
      %v1021 = vpack.c.b16 %v919, %v913
      %v1022 = vpack.c.b16 %v920, %v914
      %v1023 = vpack.c.b16 %v927, %v921
      %v1024 = vpack.c.b16 %v928, %v922
      %v1025 = vpack.c.b16 %v929, %v923
      %v1026 = vpack.c.b16 %v930, %v924
      %v1027 = vpack.c.b16 %v931, %v925
      %v1028 = vpack.c.b16 %v932, %v926
      %1125 = vmatprep.subr.bf16.mxu0 %v934
      %1126 = vmatpush1.bf16.msra.mxu0 %v933
      %1127 = vmatprep.subr.bf16.mxu0 %v940
      %1128 = vmatpush1.bf16.msra.mxu0 %v939
      %1129 = vmatprep.subr.bf16.mxu0 %v946
      %1130 = vmatpush1.bf16.msra.mxu0 %v945
      %1131 = vmatprep.subr.bf16.mxu0 %v952
      %1132 = vmatpush1.bf16.msra.mxu0 %v951
      %1133 = vmatprep.subr.bf16.mxu0 %v958
      %1134 = vmatpush1.bf16.msra.mxu0 %v957
      %1135 = vmatprep.subr.bf16.mxu0 %v964
      %1136 = vmatpush1.bf16.msra.mxu0 %v963
      %1137 = vmatprep.subr.bf16.mxu0 %v970
      %1138 = vmatpush1.bf16.msra.mxu0 %v969
      %1139 = vmatprep.subr.bf16.mxu0 %v976
      %1140 = vmatpush1.bf16.msra.mxu0 %v975
      %1141 = vmatprep.subr.bf16.mxu0 %v982
      %1142 = vmatpush1.bf16.msra.mxu0 %v981
      %1143 = vmatprep.subr.bf16.mxu0 %v988
      %1144 = vmatpush1.bf16.msra.mxu0 %v987
      %1145 = vmatprep.subr.bf16.mxu0 %v994
      %1146 = vmatpush1.bf16.msra.mxu0 %v993
      %1147 = vmatprep.subr.bf16.mxu0 %v1000
      %1148 = vmatpush1.bf16.msra.mxu0 %v999
      %1149 = vmatprep.subr.bf16.mxu0 %v1006
      %1150 = vmatpush1.bf16.msra.mxu0 %v1005
      %1151 = vmatprep.subr.bf16.mxu0 %v1012
      %1152 = vmatpush1.bf16.msra.mxu0 %v1011
      %1153 = vmatprep.subr.bf16.mxu0 %v1018
      %1154 = vmatpush1.bf16.msra.mxu0 %v1017
      %1155 = vmatprep.subr.bf16.mxu0 %v1024
      %1156 = vmatpush1.bf16.msra.mxu0 %v1023
      %1157 = vmatprep.mubr.bf16.mxu0 %v516
      %1158 = vmatmul.mubr.bf16.gmra.mrb[0].mxu0 %v515
      %v1159 = vpop.f32.mrb[0].mxu0
      %v1160 = vadd.f32 %v618, %v1159
      %v1161 = vpop.f32.mrb[0].mxu0
      %v1162 = vadd.f32 %v622, %v1161
      %v1163 = vpop.f32.mrb[0].mxu0
      %v1164 = vpop.f32.mrb[0].mxu0
      %1165 = vdwg.mxu0
      %1166 = vmatprep.subr.bf16.mxu0 %v936
      %1167 = vmatpush1.bf16.msra.mxu0 %v935
      %1168 = vmatprep.subr.bf16.mxu0 %v942
      %1169 = vmatpush1.bf16.msra.mxu0 %v941
      %1170 = vmatprep.subr.bf16.mxu0 %v948
      %1171 = vmatpush1.bf16.msra.mxu0 %v947
      %1172 = vmatprep.subr.bf16.mxu0 %v954
      %1173 = vmatpush1.bf16.msra.mxu0 %v953
      %1174 = vmatprep.subr.bf16.mxu0 %v960
      %1175 = vmatpush1.bf16.msra.mxu0 %v959
      %1176 = vmatprep.subr.bf16.mxu0 %v966
      %1177 = vmatpush1.bf16.msra.mxu0 %v965
      %1178 = vmatprep.subr.bf16.mxu0 %v972
      %1179 = vmatpush1.bf16.msra.mxu0 %v971
      %1180 = vmatprep.subr.bf16.mxu0 %v978
      %1181 = vmatpush1.bf16.msra.mxu0 %v977
      %1182 = vmatprep.subr.bf16.mxu0 %v984
      %1183 = vmatpush1.bf16.msra.mxu0 %v983
      %1184 = vmatprep.subr.bf16.mxu0 %v990
      %1185 = vmatpush1.bf16.msra.mxu0 %v989
      %1186 = vmatprep.subr.bf16.mxu0 %v996
      %1187 = vmatpush1.bf16.msra.mxu0 %v995
      %1188 = vmatprep.subr.bf16.mxu0 %v1002
      %1189 = vmatpush1.bf16.msra.mxu0 %v1001
      %1190 = vmatprep.subr.bf16.mxu0 %v1008
      %1191 = vmatpush1.bf16.msra.mxu0 %v1007
      %1192 = vmatprep.subr.bf16.mxu0 %v1014
      %1193 = vmatpush1.bf16.msra.mxu0 %v1013
      %1194 = vmatprep.subr.bf16.mxu0 %v1020
      %1195 = vmatpush1.bf16.msra.mxu0 %v1019
      %1196 = vmatprep.subr.bf16.mxu0 %v1026
      %1197 = vmatpush1.bf16.msra.mxu0 %v1025
      %1198 = vmatprep.mubr.bf16.mxu0 %v516
      %1199 = vmatmul.mubr.bf16.gmra.mrb[0].mxu0 %v515
      %v1200 = vpop.f32.mrb[0].mxu0
      %v1201 = vadd.f32 %v626, %v1200
      %v1202 = vpop.f32.mrb[0].mxu0
      %v1203 = vadd.f32 %v630, %v1202
      %v1204 = vpop.f32.mrb[0].mxu0
      %v1205 = vpop.f32.mrb[0].mxu0
      %1206 = vdwg.mxu0
      %1207 = vmatprep.subr.bf16.mxu0 %v938
      %1208 = vmatpush1.bf16.msra.mxu0 %v937
      %1209 = vmatprep.subr.bf16.mxu0 %v944
      %1210 = vmatpush1.bf16.msra.mxu0 %v943
      %1211 = vmatprep.subr.bf16.mxu0 %v950
      %1212 = vmatpush1.bf16.msra.mxu0 %v949
      %1213 = vmatprep.subr.bf16.mxu0 %v956
      %1214 = vmatpush1.bf16.msra.mxu0 %v955
      %1215 = vmatprep.subr.bf16.mxu0 %v962
      %1216 = vmatpush1.bf16.msra.mxu0 %v961
      %1217 = vmatprep.subr.bf16.mxu0 %v968
      %1218 = vmatpush1.bf16.msra.mxu0 %v967
      %1219 = vmatprep.subr.bf16.mxu0 %v974
      %1220 = vmatpush1.bf16.msra.mxu0 %v973
      %1221 = vmatprep.subr.bf16.mxu0 %v980
      %1222 = vmatpush1.bf16.msra.mxu0 %v979
      %1223 = vmatprep.subr.bf16.mxu0 %v986
      %1224 = vmatpush1.bf16.msra.mxu0 %v985
      %1225 = vmatprep.subr.bf16.mxu0 %v992
      %1226 = vmatpush1.bf16.msra.mxu0 %v991
      %1227 = vmatprep.subr.bf16.mxu0 %v998
      %1228 = vmatpush1.bf16.msra.mxu0 %v997
      %1229 = vmatprep.subr.bf16.mxu0 %v1004
      %1230 = vmatpush1.bf16.msra.mxu0 %v1003
      %1231 = vmatprep.subr.bf16.mxu0 %v1010
      %1232 = vmatpush1.bf16.msra.mxu0 %v1009
      %1233 = vmatprep.subr.bf16.mxu0 %v1016
      %1234 = vmatpush1.bf16.msra.mxu0 %v1015
      %1235 = vmatprep.subr.bf16.mxu0 %v1022
      %1236 = vmatpush1.bf16.msra.mxu0 %v1021
      %1237 = vmatprep.subr.bf16.mxu0 %v1028
      %1238 = vmatpush1.bf16.msra.mxu0 %v1027
      %1239 = vmatprep.mubr.bf16.mxu0 %v516
      %1240 = vmatmul.mubr.bf16.gmra.mrb[0].mxu0 %v515
      %v1241 = vpop.f32.mrb[0].mxu0
      %v1242 = vadd.f32 %v634, %v1241
      %v1243 = vpop.f32.mrb[0].mxu0
      %v1244 = vadd.f32 %v638, %v1243
      %v1245 = vpop.f32.mrb[0].mxu0
      %v1246 = vpop.f32.mrb[0].mxu0
      %1247 = vdwg.mxu0
      %v1248 = vmul.f32 %v1160, 0.088388346
      %v1249 = vpack.c.bf16 %v1248, %v1248
      %v1250 = vpack.c.bf16 %v1201, %v1201
      %v1251 = vpack.c.bf16 %v1242, %v1242
      %1252 = vmatprep.subr.bf16.mxu0 0
      %1253 = vmatpush1.bf16.xpose.msra.mxu0 %v1250
      %1254 = vmatprep.subr.bf16.mxu0 0
      %1255 = vmatpush1.bf16.xpose.msra.mxu0 0
      %1256 = vmatprep.subr.bf16.mxu0 0
      %1257 = vmatpush1.bf16.xpose.msra.mxu0 0
      %1258 = vmatprep.subr.bf16.mxu0 0
      %1259 = vmatpush1.bf16.xpose.msra.mxu0 0
      %1260 = vmatprep.subr.bf16.mxu0 0
      %1261 = vmatpush1.bf16.xpose.msra.mxu0 0
      %1262 = vmatprep.subr.bf16.mxu0 0
      %1263 = vmatpush1.bf16.xpose.msra.mxu0 0
      %1264 = vmatprep.subr.bf16.mxu0 0
      %1265 = vmatpush1.bf16.xpose.msra.mxu0 0
      %1266 = vmatprep.subr.bf16.mxu0 0
      %1267 = vmatpush1.bf16.xpose.msra.mxu0 0
      %1268 = vmatprep.subr.bf16.mxu0 0
      %1269 = vmatpush1.bf16.xpose.msra.mxu0 0
      %1270 = vmatprep.subr.bf16.mxu0 0
      %1271 = vmatpush1.bf16.xpose.msra.mxu0 0
      %1272 = vmatprep.subr.bf16.mxu0 0
      %1273 = vmatpush1.bf16.xpose.msra.mxu0 0
      %1274 = vmatprep.subr.bf16.mxu0 0
      %1275 = vmatpush1.bf16.xpose.msra.mxu0 0
      %1276 = vmatprep.subr.bf16.mxu0 0
      %1277 = vmatpush1.bf16.xpose.msra.mxu0 0
      %1278 = vmatprep.subr.bf16.mxu0 0
      %1279 = vmatpush1.bf16.xpose.msra.mxu0 0
      %1280 = vmatprep.subr.bf16.mxu0 0
      %1281 = vmatpush1.bf16.xpose.msra.mxu0 0
      %1282 = vmatprep.subr.bf16.mxu0 0
      %1283 = vmatpush1.bf16.xpose.msra.mxu0 0
      %1284 = vmatprep.mubr.bf16.mxu0 0
      %1285 = vmatmul.mubr.bf16.gmra.mrb[0].mxu0 %v1249
      %v1286 = vpop.f32.mrb[0].mxu0
      %v1287 = vadd.f32 0.0, %v1286
      %v1288 = vpop.f32.mrb[0].mxu0
      %v1289 = vpop.f32.mrb[0].mxu0
      %v1290 = vpop.f32.mrb[0].mxu0
      %1291 = vdwg.mxu0
      %vm1292 = vcmask 27648
      %v1293 = vsel %vm1292, %v1287, -inf
      %1294 = vmax.xlane.f32.xlu0 %v1293
      %v1295 = vpop.xlane.xlu0 %1294
      %v1296 = vsub.f32 %v1287, %v1295
      %v1297 = vmul.f32 %v1296, 1.442695
      %v1298 = vpow.pop %v1297
      %v1299 = vsel %vm1292, %v1298, 0.0
      %1300 = vadd.xlane.f32.xlu0 %v1299
      %v1301 = vpop.xlane.xlu0 %1300
      %v1302 = vrcp.pop %v1301
      %v1303 = vmul.f32 %v1298, %v1302
      %v1304 = vpack.c.bf16 %v1303, %v1303
      %vm1305 = vcmask 31744
      %v1307 = vsel %vm1305, %v1304, 0
      %vm1309 = vcmask 1041408
      %v1311 = vsel %vm1309, %v1251, 0
      %1313 = vmatprep.subr.bf16.mxu0 0
      %1314 = vmatpush1.bf16.msra.mxu0 %v1311
      %1315 = vmatprep.subr.bf16.mxu0 0
      %1316 = vmatpush1.bf16.msra.mxu0 0
      %1317 = vmatprep.subr.bf16.mxu0 0
      %1318 = vmatpush1.bf16.msra.mxu0 0
      %1319 = vmatprep.subr.bf16.mxu0 0
      %1320 = vmatpush1.bf16.msra.mxu0 0
      %1321 = vmatprep.subr.bf16.mxu0 0
      %1322 = vmatpush1.bf16.msra.mxu0 0
      %1323 = vmatprep.subr.bf16.mxu0 0
      %1324 = vmatpush1.bf16.msra.mxu0 0
      %1325 = vmatprep.subr.bf16.mxu0 0
      %1326 = vmatpush1.bf16.msra.mxu0 0
      %1327 = vmatprep.subr.bf16.mxu0 0
      %1328 = vmatpush1.bf16.msra.mxu0 0
      %1329 = vmatprep.subr.bf16.mxu0 0
      %1330 = vmatpush1.bf16.msra.mxu0 0
      %1331 = vmatprep.subr.bf16.mxu0 0
      %1332 = vmatpush1.bf16.msra.mxu0 0
      %1333 = vmatprep.subr.bf16.mxu0 0
      %1334 = vmatpush1.bf16.msra.mxu0 0
      %1335 = vmatprep.subr.bf16.mxu0 0
      %1336 = vmatpush1.bf16.msra.mxu0 0
      %1337 = vmatprep.subr.bf16.mxu0 0
      %1338 = vmatpush1.bf16.msra.mxu0 0
      %1339 = vmatprep.subr.bf16.mxu0 0
      %1340 = vmatpush1.bf16.msra.mxu0 0
      %1341 = vmatprep.subr.bf16.mxu0 0
      %1342 = vmatpush1.bf16.msra.mxu0 0
      %1343 = vmatprep.subr.bf16.mxu0 0
      %1344 = vmatpush1.bf16.msra.mxu0 0
      %1345 = vmatprep.mubr.bf16.mxu0 0
      %1346 = vmatmul.mubr.bf16.gmra.mrb[0].mxu0 %v1307
      %v1347 = vpop.f32.mrb[0].mxu0
      %v1348 = vadd.f32 0.0, %v1347
      %v1349 = vpop.f32.mrb[0].mxu0
      %v1350 = vpop.f32.mrb[0].mxu0
      %v1351 = vpop.f32.mrb[0].mxu0
      %1352 = vdwg.mxu0
      %v1353 = vmul.f32 %v1162, 0.088388346
      %v1354 = vpack.c.bf16 %v1353, %v1353
      %v1355 = vpack.c.bf16 %v1203, %v1203
      %v1356 = vpack.c.bf16 %v1244, %v1244
      %1357 = vmatprep.subr.bf16.mxu0 0
      %1358 = vmatpush1.bf16.xpose.msra.mxu0 %v1355
      %1359 = vmatprep.subr.bf16.mxu0 0
      %1360 = vmatpush1.bf16.xpose.msra.mxu0 0
      %1361 = vmatprep.subr.bf16.mxu0 0
      %1362 = vmatpush1.bf16.xpose.msra.mxu0 0
      %1363 = vmatprep.subr.bf16.mxu0 0
      %1364 = vmatpush1.bf16.xpose.msra.mxu0 0
      %1365 = vmatprep.subr.bf16.mxu0 0
      %1366 = vmatpush1.bf16.xpose.msra.mxu0 0
      %1367 = vmatprep.subr.bf16.mxu0 0
      %1368 = vmatpush1.bf16.xpose.msra.mxu0 0
      %1369 = vmatprep.subr.bf16.mxu0 0
      %1370 = vmatpush1.bf16.xpose.msra.mxu0 0
      %1371 = vmatprep.subr.bf16.mxu0 0
      %1372 = vmatpush1.bf16.xpose.msra.mxu0 0
      %1373 = vmatprep.subr.bf16.mxu0 0
      %1374 = vmatpush1.bf16.xpose.msra.mxu0 0
      %1375 = vmatprep.subr.bf16.mxu0 0
      %1376 = vmatpush1.bf16.xpose.msra.mxu0 0
      %1377 = vmatprep.subr.bf16.mxu0 0
      %1378 = vmatpush1.bf16.xpose.msra.mxu0 0
      %1379 = vmatprep.subr.bf16.mxu0 0
      %1380 = vmatpush1.bf16.xpose.msra.mxu0 0
      %1381 = vmatprep.subr.bf16.mxu0 0
      %1382 = vmatpush1.bf16.xpose.msra.mxu0 0
      %1383 = vmatprep.subr.bf16.mxu0 0
      %1384 = vmatpush1.bf16.xpose.msra.mxu0 0
      %1385 = vmatprep.subr.bf16.mxu0 0
      %1386 = vmatpush1.bf16.xpose.msra.mxu0 0
      %1387 = vmatprep.subr.bf16.mxu0 0
      %1388 = vmatpush1.bf16.xpose.msra.mxu0 0
      %1389 = vmatprep.mubr.bf16.mxu0 0
      %1390 = vmatmul.mubr.bf16.gmra.mrb[0].mxu0 %v1354
      %v1391 = vpop.f32.mrb[0].mxu0
      %v1392 = vadd.f32 0.0, %v1391
      %v1393 = vpop.f32.mrb[0].mxu0
      %v1394 = vpop.f32.mrb[0].mxu0
      %v1395 = vpop.f32.mrb[0].mxu0
      %1396 = vdwg.mxu0
      %v1397 = vsel %vm1292, %v1392, -inf
      %1398 = vmax.xlane.f32.xlu0 %v1397
      %v1399 = vpop.xlane.xlu0 %1398
      %v1400 = vsub.f32 %v1392, %v1399
      %v1401 = vmul.f32 %v1400, 1.442695
      %v1402 = vpow.pop %v1401
      %v1403 = vsel %vm1292, %v1402, 0.0
      %1404 = vadd.xlane.f32.xlu0 %v1403
      %v1405 = vpop.xlane.xlu0 %1404
      %v1406 = vrcp.pop %v1405
      %v1407 = vmul.f32 %v1402, %v1406
      %v1408 = vpack.c.bf16 %v1407, %v1407
      %v1410 = vsel %vm1305, %v1408, 0
      %v1413 = vsel %vm1309, %v1356, 0
      %1415 = vmatprep.subr.bf16.mxu0 0
      %1416 = vmatpush1.bf16.msra.mxu0 %v1413
      %1417 = vmatprep.subr.bf16.mxu0 0
      %1418 = vmatpush1.bf16.msra.mxu0 0
      %1419 = vmatprep.subr.bf16.mxu0 0
      %1420 = vmatpush1.bf16.msra.mxu0 0
      %1421 = vmatprep.subr.bf16.mxu0 0
      %1422 = vmatpush1.bf16.msra.mxu0 0
      %1423 = vmatprep.subr.bf16.mxu0 0
      %1424 = vmatpush1.bf16.msra.mxu0 0
      %1425 = vmatprep.subr.bf16.mxu0 0
      %1426 = vmatpush1.bf16.msra.mxu0 0
      %1427 = vmatprep.subr.bf16.mxu0 0
      %1428 = vmatpush1.bf16.msra.mxu0 0
      %1429 = vmatprep.subr.bf16.mxu0 0
      %1430 = vmatpush1.bf16.msra.mxu0 0
      %1431 = vmatprep.subr.bf16.mxu0 0
      %1432 = vmatpush1.bf16.msra.mxu0 0
      %1433 = vmatprep.subr.bf16.mxu0 0
      %1434 = vmatpush1.bf16.msra.mxu0 0
      %1435 = vmatprep.subr.bf16.mxu0 0
      %1436 = vmatpush1.bf16.msra.mxu0 0
      %1437 = vmatprep.subr.bf16.mxu0 0
      %1438 = vmatpush1.bf16.msra.mxu0 0
      %1439 = vmatprep.subr.bf16.mxu0 0
      %1440 = vmatpush1.bf16.msra.mxu0 0
      %1441 = vmatprep.subr.bf16.mxu0 0
      %1442 = vmatpush1.bf16.msra.mxu0 0
      %1443 = vmatprep.subr.bf16.mxu0 0
      %1444 = vmatpush1.bf16.msra.mxu0 0
      %1445 = vmatprep.subr.bf16.mxu0 0
      %1446 = vmatpush1.bf16.msra.mxu0 0
      %1447 = vmatprep.mubr.bf16.mxu0 0
      %1448 = vmatmul.mubr.bf16.gmra.mrb[0].mxu0 %v1410
      %v1449 = vpop.f32.mrb[0].mxu0
      %v1450 = vadd.f32 0.0, %v1449
      %v1451 = vpop.f32.mrb[0].mxu0
      %v1452 = vpop.f32.mrb[0].mxu0
      %v1453 = vpop.f32.mrb[0].mxu0
      %1454 = vdwg.mxu0
      %v1455 = vpack.c.bf16 %v1348, %v1348
      %v1456 = vpack.c.bf16 %v1450, %v1450
      %v1457 = vld [vmem:[%s5] sm:$0xff]
      %v1458 = vld [vmem:[%s5 + $0x8] sm:$0xff]
      %v1459 = vld [vmem:[%s5 + $0x10] sm:$0xff]
      %v1460 = vld [vmem:[%s5 + $0x18] sm:$0xff]
      %v1461 = vld [vmem:[%s5 + $0x20] sm:$0xff]
      %v1462 = vld [vmem:[%s5 + $0x28] sm:$0xff]
      %v1463 = vld [vmem:[%s5 + $0x30] sm:$0xff]
      %v1464 = vld [vmem:[%s5 + $0x38] sm:$0xff]
      %v1465 = vld [vmem:[%s5 + $0x40] sm:$0xff]
      %v1466 = vld [vmem:[%s5 + $0x48] sm:$0xff]
      %v1467 = vld [vmem:[%s5 + $0x50] sm:$0xff]
      %v1468 = vld [vmem:[%s5 + $0x58] sm:$0xff]
      %v1469 = vld [vmem:[%s5 + $0x60] sm:$0xff]
      %v1470 = vld [vmem:[%s5 + $0x68] sm:$0xff]
      %v1471 = vld [vmem:[%s5 + $0x70] sm:$0xff]
      %v1472 = vld [vmem:[%s5 + $0x78] sm:$0xff]
      %v1473 = vld [vmem:[%s5 + $0x80] sm:$0xff]
      %v1474 = vld [vmem:[%s5 + $0x88] sm:$0xff]
      %v1475 = vld [vmem:[%s5 + $0x90] sm:$0xff]
      %v1476 = vld [vmem:[%s5 + $0x98] sm:$0xff]
      %v1477 = vld [vmem:[%s5 + $0xa0] sm:$0xff]
      %v1478 = vld [vmem:[%s5 + $0xa8] sm:$0xff]
      %v1479 = vld [vmem:[%s5 + $0xb0] sm:$0xff]
      %v1480 = vld [vmem:[%s5 + $0xb8] sm:$0xff]
      %v1481 = vld [vmem:[%s5 + $0xc0] sm:$0xff]
      %v1482 = vld [vmem:[%s5 + $0xc8] sm:$0xff]
      %v1483 = vld [vmem:[%s5 + $0xd0] sm:$0xff]
      %v1484 = vld [vmem:[%s5 + $0xd8] sm:$0xff]
      %v1485 = vld [vmem:[%s5 + $0xe0] sm:$0xff]
      %v1486 = vld [vmem:[%s5 + $0xe8] sm:$0xff]
      %v1487 = vld [vmem:[%s5 + $0xf0] sm:$0xff]
      %v1488 = vld [vmem:[%s5 + $0xf8] sm:$0xff]
      %v1489 = vld [vmem:[%s6] sm:$0x3]
      %v1491 = vlaneseq
      %v1492 = vshrl.u32 %v1491, 7
      %v1493 = vsub.s32 0, %v1492
      %v1494 = vrot.slane %v1489, %v1493
      %v1495 = vlaneseq
      %v1496 = vshrl.u32 %v1495, 7
      %v1497 = vsub.s32 1, %v1496
      %v1498 = vrot.slane %v1489, %v1497
      %v1533 = vunpack.c.l.b16 %v1457
      %v1534 = vunpack.c.h.b16 %v1457
      %v1535 = vunpack.c.l.b16 %v1458
      %v1536 = vunpack.c.h.b16 %v1458
      %v1537 = vunpack.c.l.b16 %v1459
      %v1538 = vunpack.c.h.b16 %v1459
      %v1539 = vunpack.c.l.b16 %v1460
      %v1540 = vunpack.c.h.b16 %v1460
      %v1541 = vunpack.c.l.b16 %v1461
      %v1542 = vunpack.c.h.b16 %v1461
      %v1543 = vunpack.c.l.b16 %v1462
      %v1544 = vunpack.c.h.b16 %v1462
      %v1545 = vunpack.c.l.b16 %v1463
      %v1546 = vunpack.c.h.b16 %v1463
      %v1547 = vunpack.c.l.b16 %v1464
      %v1548 = vunpack.c.h.b16 %v1464
      %v1549 = vunpack.c.l.b16 %v1465
      %v1550 = vunpack.c.h.b16 %v1465
      %v1551 = vunpack.c.l.b16 %v1466
      %v1552 = vunpack.c.h.b16 %v1466
      %v1553 = vunpack.c.l.b16 %v1467
      %v1554 = vunpack.c.h.b16 %v1467
      %v1555 = vunpack.c.l.b16 %v1468
      %v1556 = vunpack.c.h.b16 %v1468
      %v1557 = vunpack.c.l.b16 %v1469
      %v1558 = vunpack.c.h.b16 %v1469
      %v1559 = vunpack.c.l.b16 %v1470
      %v1560 = vunpack.c.h.b16 %v1470
      %v1561 = vunpack.c.l.b16 %v1471
      %v1562 = vunpack.c.h.b16 %v1471
      %v1563 = vunpack.c.l.b16 %v1472
      %v1564 = vunpack.c.h.b16 %v1472
      %v1565 = vunpack.c.l.b16 %v1473
      %v1566 = vunpack.c.h.b16 %v1473
      %v1567 = vunpack.c.l.b16 %v1474
      %v1568 = vunpack.c.h.b16 %v1474
      %v1569 = vunpack.c.l.b16 %v1475
      %v1570 = vunpack.c.h.b16 %v1475
      %v1571 = vunpack.c.l.b16 %v1476
      %v1572 = vunpack.c.h.b16 %v1476
      %v1573 = vunpack.c.l.b16 %v1477
      %v1574 = vunpack.c.h.b16 %v1477
      %v1575 = vunpack.c.l.b16 %v1478
      %v1576 = vunpack.c.h.b16 %v1478
      %v1577 = vunpack.c.l.b16 %v1479
      %v1578 = vunpack.c.h.b16 %v1479
      %v1579 = vunpack.c.l.b16 %v1480
      %v1580 = vunpack.c.h.b16 %v1480
      %v1581 = vunpack.c.l.b16 %v1481
      %v1582 = vunpack.c.h.b16 %v1481
      %v1583 = vunpack.c.l.b16 %v1482
      %v1584 = vunpack.c.h.b16 %v1482
      %v1585 = vunpack.c.l.b16 %v1483
      %v1586 = vunpack.c.h.b16 %v1483
      %v1587 = vunpack.c.l.b16 %v1484
      %v1588 = vunpack.c.h.b16 %v1484
      %v1589 = vunpack.c.l.b16 %v1485
      %v1590 = vunpack.c.h.b16 %v1485
      %v1591 = vunpack.c.l.b16 %v1486
      %v1592 = vunpack.c.h.b16 %v1486
      %v1593 = vunpack.c.l.b16 %v1487
      %v1594 = vunpack.c.h.b16 %v1487
      %v1595 = vunpack.c.l.b16 %v1488
      %v1596 = vunpack.c.h.b16 %v1488
      %v1597 = vpack.c.b16 %v1535, %v1533
      %v1598 = vpack.c.b16 %v1536, %v1534
      %v1599 = vpack.c.b16 %v1539, %v1537
      %v1600 = vpack.c.b16 %v1540, %v1538
      %v1601 = vpack.c.b16 %v1543, %v1541
      %v1602 = vpack.c.b16 %v1544, %v1542
      %v1603 = vpack.c.b16 %v1547, %v1545
      %v1604 = vpack.c.b16 %v1548, %v1546
      %v1605 = vpack.c.b16 %v1551, %v1549
      %v1606 = vpack.c.b16 %v1552, %v1550
      %v1607 = vpack.c.b16 %v1555, %v1553
      %v1608 = vpack.c.b16 %v1556, %v1554
      %v1609 = vpack.c.b16 %v1559, %v1557
      %v1610 = vpack.c.b16 %v1560, %v1558
      %v1611 = vpack.c.b16 %v1563, %v1561
      %v1612 = vpack.c.b16 %v1564, %v1562
      %v1613 = vpack.c.b16 %v1567, %v1565
      %v1614 = vpack.c.b16 %v1568, %v1566
      %v1615 = vpack.c.b16 %v1571, %v1569
      %v1616 = vpack.c.b16 %v1572, %v1570
      %v1617 = vpack.c.b16 %v1575, %v1573
      %v1618 = vpack.c.b16 %v1576, %v1574
      %v1619 = vpack.c.b16 %v1579, %v1577
      %v1620 = vpack.c.b16 %v1580, %v1578
      %v1621 = vpack.c.b16 %v1583, %v1581
      %v1622 = vpack.c.b16 %v1584, %v1582
      %v1623 = vpack.c.b16 %v1587, %v1585
      %v1624 = vpack.c.b16 %v1588, %v1586
      %v1625 = vpack.c.b16 %v1591, %v1589
      %v1626 = vpack.c.b16 %v1592, %v1590
      %v1627 = vpack.c.b16 %v1595, %v1593
      %v1628 = vpack.c.b16 %v1596, %v1594
      %1661 = vmatprep.subr.bf16.mxu0 %v1598
      %1662 = vmatpush1.bf16.msra.mxu0 %v1597
      %1663 = vmatprep.subr.bf16.mxu0 %v1600
      %1664 = vmatpush1.bf16.msra.mxu0 %v1599
      %1665 = vmatprep.subr.bf16.mxu0 %v1602
      %1666 = vmatpush1.bf16.msra.mxu0 %v1601
      %1667 = vmatprep.subr.bf16.mxu0 %v1604
      %1668 = vmatpush1.bf16.msra.mxu0 %v1603
      %1669 = vmatprep.subr.bf16.mxu0 %v1606
      %1670 = vmatpush1.bf16.msra.mxu0 %v1605
      %1671 = vmatprep.subr.bf16.mxu0 %v1608
      %1672 = vmatpush1.bf16.msra.mxu0 %v1607
      %1673 = vmatprep.subr.bf16.mxu0 %v1610
      %1674 = vmatpush1.bf16.msra.mxu0 %v1609
      %1675 = vmatprep.subr.bf16.mxu0 %v1612
      %1676 = vmatpush1.bf16.msra.mxu0 %v1611
      %1677 = vmatprep.subr.bf16.mxu0 %v1614
      %1678 = vmatpush1.bf16.msra.mxu0 %v1613
      %1679 = vmatprep.subr.bf16.mxu0 %v1616
      %1680 = vmatpush1.bf16.msra.mxu0 %v1615
      %1681 = vmatprep.subr.bf16.mxu0 %v1618
      %1682 = vmatpush1.bf16.msra.mxu0 %v1617
      %1683 = vmatprep.subr.bf16.mxu0 %v1620
      %1684 = vmatpush1.bf16.msra.mxu0 %v1619
      %1685 = vmatprep.subr.bf16.mxu0 %v1622
      %1686 = vmatpush1.bf16.msra.mxu0 %v1621
      %1687 = vmatprep.subr.bf16.mxu0 %v1624
      %1688 = vmatpush1.bf16.msra.mxu0 %v1623
      %1689 = vmatprep.subr.bf16.mxu0 %v1626
      %1690 = vmatpush1.bf16.msra.mxu0 %v1625
      %1691 = vmatprep.subr.bf16.mxu0 %v1628
      %1692 = vmatpush1.bf16.msra.mxu0 %v1627
      %1693 = vmatprep.mubr.bf16.mxu0 %v1456
      %1694 = vmatmul.mubr.bf16.gmra.mrb[0].mxu0 %v1455
      %v1695 = vpop.f32.mrb[0].mxu0
      %v1696 = vadd.f32 %v1494, %v1695
      %v1697 = vpop.f32.mrb[0].mxu0
      %v1698 = vadd.f32 %v1498, %v1697
      %v1699 = vpop.f32.mrb[0].mxu0
      %v1700 = vpop.f32.mrb[0].mxu0
      %1701 = vdwg.mxu0
      %v1704 = vcombine.low %v1696, %v1698
      %v1706 = vadd.f32 %v442, %v1704
      %v1707 = vld [vmem:[%s7] sm:$0x3]
      %v1708 = vld [vmem:[%s8] sm:$0x3]
      %v1710 = vcombine.high %v1706, %v1706
      %v1712 = vsel %vm448, %v1706, 0.0
      %v1713 = vsel %vm448, %v1710, 0.0
      %v1714 = vadd.f32 %v1712, %v1713
      %1715 = vadd.xlane.f32.xlu0 %v1714
      %v1716 = vpop.xlane.xlu0 %1715
      %v1717 = vmul.f32 %v1716, %v454
      %v1720 = vunpack.c.l.s4 839922192
      %v1721 = vunpack.c.0.s8 %v1720
      %v1722 = vlaneseq
      %v1723 = vshrl.u32 %v1722, 7
      %v1724 = vsub.s32 %v1721, %v1723
      %v1725 = vrot.slane %v1717, %v1724
      %v1727 = vsub.f32 %v1706, %v1725
      %v1728 = vmul.f32 %v1727, %v1727
      %v1730 = vcombine.high %v1728, %v1728
      %v1732 = vsel %vm448, %v1728, 0.0
      %v1733 = vsel %vm448, %v1730, 0.0
      %v1734 = vadd.f32 %v1732, %v1733
      %1735 = vadd.xlane.f32.xlu0 %v1734
      %v1736 = vpop.xlane.xlu0 %1735
      %v1737 = vmul.f32 %v1736, %v454
      %v1738 = vadd.f32 %v1737, 1e-05
      %v1739 = vrsqrt.pop %v1738
      %v1742 = vunpack.c.l.s4 839922192
      %v1743 = vunpack.c.0.s8 %v1742
      %v1744 = vlaneseq
      %v1745 = vshrl.u32 %v1744, 7
      %v1746 = vsub.s32 %v1743, %v1745
      %v1747 = vrot.slane %v1739, %v1746
      %v1749 = vmul.f32 %v1727, %v1747
      %v1751 = vlaneseq
      %v1752 = vshrl.u32 %v1751, 7
      %v1753 = vsub.s32 0, %v1752
      %v1754 = vrot.slane %v1707, %v1753
      %v1755 = vlaneseq
      %v1756 = vshrl.u32 %v1755, 7
      %v1757 = vsub.s32 1, %v1756
      %v1758 = vrot.slane %v1707, %v1757
      %v1759 = vcombine.low %v1754, %v1758
      %v1761 = vmul.f32 %v1749, %v1759
      %v1763 = vlaneseq
      %v1764 = vshrl.u32 %v1763, 7
      %v1765 = vsub.s32 0, %v1764
      %v1766 = vrot.slane %v1708, %v1765
      %v1767 = vlaneseq
      %v1768 = vshrl.u32 %v1767, 7
      %v1769 = vsub.s32 1, %v1768
      %v1770 = vrot.slane %v1708, %v1769
      %v1771 = vcombine.low %v1766, %v1770
      %v1773 = vadd.f32 %v1761, %v1771
      %v1775 = vcombine.high %v1773, %v1773
      %v1777 = vpack.c.bf16 %v1773, %v1773
      %v1778 = vpack.c.bf16 %v1775, %v1775
      %v1779 = vld [vmem:[%s9] sm:$0xff]
      %v1780 = vld [vmem:[%s9 + $0x8] sm:$0xff]
      %v1781 = vld [vmem:[%s9 + $0x10] sm:$0xff]
      %v1782 = vld [vmem:[%s9 + $0x18] sm:$0xff]
      %v1783 = vld [vmem:[%s9 + $0x20] sm:$0xff]
      %v1784 = vld [vmem:[%s9 + $0x28] sm:$0xff]
      %v1785 = vld [vmem:[%s9 + $0x30] sm:$0xff]
      %v1786 = vld [vmem:[%s9 + $0x38] sm:$0xff]
      %v1787 = vld [vmem:[%s9 + $0x40] sm:$0xff]
      %v1788 = vld [vmem:[%s9 + $0x48] sm:$0xff]
      %v1789 = vld [vmem:[%s9 + $0x50] sm:$0xff]
      %v1790 = vld [vmem:[%s9 + $0x58] sm:$0xff]
      %v1791 = vld [vmem:[%s9 + $0x60] sm:$0xff]
      %v1792 = vld [vmem:[%s9 + $0x68] sm:$0xff]
      %v1793 = vld [vmem:[%s9 + $0x70] sm:$0xff]
      %v1794 = vld [vmem:[%s9 + $0x78] sm:$0xff]
      %v1795 = vld [vmem:[%s9 + $0x80] sm:$0xff]
      %v1796 = vld [vmem:[%s9 + $0x88] sm:$0xff]
      %v1797 = vld [vmem:[%s9 + $0x90] sm:$0xff]
      %v1798 = vld [vmem:[%s9 + $0x98] sm:$0xff]
      %v1799 = vld [vmem:[%s9 + $0xa0] sm:$0xff]
      %v1800 = vld [vmem:[%s9 + $0xa8] sm:$0xff]
      %v1801 = vld [vmem:[%s9 + $0xb0] sm:$0xff]
      %v1802 = vld [vmem:[%s9 + $0xb8] sm:$0xff]
      %v1803 = vld [vmem:[%s9 + $0xc0] sm:$0xff]
      %v1804 = vld [vmem:[%s9 + $0xc8] sm:$0xff]
      %v1805 = vld [vmem:[%s9 + $0xd0] sm:$0xff]
      %v1806 = vld [vmem:[%s9 + $0xd8] sm:$0xff]
      %v1807 = vld [vmem:[%s9 + $0xe0] sm:$0xff]
      %v1808 = vld [vmem:[%s9 + $0xe8] sm:$0xff]
      %v1809 = vld [vmem:[%s9 + $0xf0] sm:$0xff]
      %v1810 = vld [vmem:[%s9 + $0xf8] sm:$0xff]
      %v1811 = vld [vmem:[%s9 + $0x100] sm:$0xff]
      %v1812 = vld [vmem:[%s9 + $0x108] sm:$0xff]
      %v1813 = vld [vmem:[%s9 + $0x110] sm:$0xff]
      %v1814 = vld [vmem:[%s9 + $0x118] sm:$0xff]
      %v1815 = vld [vmem:[%s9 + $0x120] sm:$0xff]
      %v1816 = vld [vmem:[%s9 + $0x128] sm:$0xff]
      %v1817 = vld [vmem:[%s9 + $0x130] sm:$0xff]
      %v1818 = vld [vmem:[%s9 + $0x138] sm:$0xff]
      %v1819 = vld [vmem:[%s9 + $0x140] sm:$0xff]
      %v1820 = vld [vmem:[%s9 + $0x148] sm:$0xff]
      %v1821 = vld [vmem:[%s9 + $0x150] sm:$0xff]
      %v1822 = vld [vmem:[%s9 + $0x158] sm:$0xff]
      %v1823 = vld [vmem:[%s9 + $0x160] sm:$0xff]
      %v1824 = vld [vmem:[%s9 + $0x168] sm:$0xff]
      %v1825 = vld [vmem:[%s9 + $0x170] sm:$0xff]
      %v1826 = vld [vmem:[%s9 + $0x178] sm:$0xff]
      %v1827 = vld [vmem:[%s9 + $0x180] sm:$0xff]
      %v1828 = vld [vmem:[%s9 + $0x188] sm:$0xff]
      %v1829 = vld [vmem:[%s9 + $0x190] sm:$0xff]
      %v1830 = vld [vmem:[%s9 + $0x198] sm:$0xff]
      %v1831 = vld [vmem:[%s9 + $0x1a0] sm:$0xff]
      %v1832 = vld [vmem:[%s9 + $0x1a8] sm:$0xff]
      %v1833 = vld [vmem:[%s9 + $0x1b0] sm:$0xff]
      %v1834 = vld [vmem:[%s9 + $0x1b8] sm:$0xff]
      %v1835 = vld [vmem:[%s9 + $0x1c0] sm:$0xff]
      %v1836 = vld [vmem:[%s9 + $0x1c8] sm:$0xff]
      %v1837 = vld [vmem:[%s9 + $0x1d0] sm:$0xff]
      %v1838 = vld [vmem:[%s9 + $0x1d8] sm:$0xff]
      %v1839 = vld [vmem:[%s9 + $0x1e0] sm:$0xff]
      %v1840 = vld [vmem:[%s9 + $0x1e8] sm:$0xff]
      %v1841 = vld [vmem:[%s9 + $0x1f0] sm:$0xff]
      %v1842 = vld [vmem:[%s9 + $0x1f8] sm:$0xff]
      %v1843 = vld [vmem:[%s10] sm:$0xf]
      %v1845 = vlaneseq
      %v1846 = vshrl.u32 %v1845, 7
      %v1847 = vsub.s32 0, %v1846
      %v1848 = vrot.slane %v1843, %v1847
      %v1849 = vlaneseq
      %v1850 = vshrl.u32 %v1849, 7
      %v1851 = vsub.s32 1, %v1850
      %v1852 = vrot.slane %v1843, %v1851
      %v1853 = vlaneseq
      %v1854 = vshrl.u32 %v1853, 7
      %v1855 = vsub.s32 2, %v1854
      %v1856 = vrot.slane %v1843, %v1855
      %v1857 = vlaneseq
      %v1858 = vshrl.u32 %v1857, 7
      %v1859 = vsub.s32 3, %v1858
      %v1860 = vrot.slane %v1843, %v1859
      %v1929 = vunpack.c.l.b16 %v1779
      %v1930 = vunpack.c.h.b16 %v1779
      %v1931 = vunpack.c.l.b16 %v1780
      %v1932 = vunpack.c.h.b16 %v1780
      %v1933 = vunpack.c.l.b16 %v1781
      %v1934 = vunpack.c.h.b16 %v1781
      %v1935 = vunpack.c.l.b16 %v1782
      %v1936 = vunpack.c.h.b16 %v1782
      %v1937 = vunpack.c.l.b16 %v1783
      %v1938 = vunpack.c.h.b16 %v1783
      %v1939 = vunpack.c.l.b16 %v1784
      %v1940 = vunpack.c.h.b16 %v1784
      %v1941 = vunpack.c.l.b16 %v1785
      %v1942 = vunpack.c.h.b16 %v1785
      %v1943 = vunpack.c.l.b16 %v1786
      %v1944 = vunpack.c.h.b16 %v1786
      %v1945 = vunpack.c.l.b16 %v1787
      %v1946 = vunpack.c.h.b16 %v1787
      %v1947 = vunpack.c.l.b16 %v1788
      %v1948 = vunpack.c.h.b16 %v1788
      %v1949 = vunpack.c.l.b16 %v1789
      %v1950 = vunpack.c.h.b16 %v1789
      %v1951 = vunpack.c.l.b16 %v1790
      %v1952 = vunpack.c.h.b16 %v1790
      %v1953 = vunpack.c.l.b16 %v1791
      %v1954 = vunpack.c.h.b16 %v1791
      %v1955 = vunpack.c.l.b16 %v1792
      %v1956 = vunpack.c.h.b16 %v1792
      %v1957 = vunpack.c.l.b16 %v1793
      %v1958 = vunpack.c.h.b16 %v1793
      %v1959 = vunpack.c.l.b16 %v1794
      %v1960 = vunpack.c.h.b16 %v1794
      %v1961 = vunpack.c.l.b16 %v1795
      %v1962 = vunpack.c.h.b16 %v1795
      %v1963 = vunpack.c.l.b16 %v1796
      %v1964 = vunpack.c.h.b16 %v1796
      %v1965 = vunpack.c.l.b16 %v1797
      %v1966 = vunpack.c.h.b16 %v1797
      %v1967 = vunpack.c.l.b16 %v1798
      %v1968 = vunpack.c.h.b16 %v1798
      %v1969 = vunpack.c.l.b16 %v1799
      %v1970 = vunpack.c.h.b16 %v1799
      %v1971 = vunpack.c.l.b16 %v1800
      %v1972 = vunpack.c.h.b16 %v1800
      %v1973 = vunpack.c.l.b16 %v1801
      %v1974 = vunpack.c.h.b16 %v1801
      %v1975 = vunpack.c.l.b16 %v1802
      %v1976 = vunpack.c.h.b16 %v1802
      %v1977 = vunpack.c.l.b16 %v1803
      %v1978 = vunpack.c.h.b16 %v1803
      %v1979 = vunpack.c.l.b16 %v1804
      %v1980 = vunpack.c.h.b16 %v1804
      %v1981 = vunpack.c.l.b16 %v1805
      %v1982 = vunpack.c.h.b16 %v1805
      %v1983 = vunpack.c.l.b16 %v1806
      %v1984 = vunpack.c.h.b16 %v1806
      %v1985 = vunpack.c.l.b16 %v1807
      %v1986 = vunpack.c.h.b16 %v1807
      %v1987 = vunpack.c.l.b16 %v1808
      %v1988 = vunpack.c.h.b16 %v1808
      %v1989 = vunpack.c.l.b16 %v1809
      %v1990 = vunpack.c.h.b16 %v1809
      %v1991 = vunpack.c.l.b16 %v1810
      %v1992 = vunpack.c.h.b16 %v1810
      %v1993 = vunpack.c.l.b16 %v1811
      %v1994 = vunpack.c.h.b16 %v1811
      %v1995 = vunpack.c.l.b16 %v1812
      %v1996 = vunpack.c.h.b16 %v1812
      %v1997 = vunpack.c.l.b16 %v1813
      %v1998 = vunpack.c.h.b16 %v1813
      %v1999 = vunpack.c.l.b16 %v1814
      %v2000 = vunpack.c.h.b16 %v1814
      %v2001 = vunpack.c.l.b16 %v1815
      %v2002 = vunpack.c.h.b16 %v1815
      %v2003 = vunpack.c.l.b16 %v1816
      %v2004 = vunpack.c.h.b16 %v1816
      %v2005 = vunpack.c.l.b16 %v1817
      %v2006 = vunpack.c.h.b16 %v1817
      %v2007 = vunpack.c.l.b16 %v1818
      %v2008 = vunpack.c.h.b16 %v1818
      %v2009 = vunpack.c.l.b16 %v1819
      %v2010 = vunpack.c.h.b16 %v1819
      %v2011 = vunpack.c.l.b16 %v1820
      %v2012 = vunpack.c.h.b16 %v1820
      %v2013 = vunpack.c.l.b16 %v1821
      %v2014 = vunpack.c.h.b16 %v1821
      %v2015 = vunpack.c.l.b16 %v1822
      %v2016 = vunpack.c.h.b16 %v1822
      %v2017 = vunpack.c.l.b16 %v1823
      %v2018 = vunpack.c.h.b16 %v1823
      %v2019 = vunpack.c.l.b16 %v1824
      %v2020 = vunpack.c.h.b16 %v1824
      %v2021 = vunpack.c.l.b16 %v1825
      %v2022 = vunpack.c.h.b16 %v1825
      %v2023 = vunpack.c.l.b16 %v1826
      %v2024 = vunpack.c.h.b16 %v1826
      %v2025 = vunpack.c.l.b16 %v1827
      %v2026 = vunpack.c.h.b16 %v1827
      %v2027 = vunpack.c.l.b16 %v1828
      %v2028 = vunpack.c.h.b16 %v1828
      %v2029 = vunpack.c.l.b16 %v1829
      %v2030 = vunpack.c.h.b16 %v1829
      %v2031 = vunpack.c.l.b16 %v1830
      %v2032 = vunpack.c.h.b16 %v1830
      %v2033 = vunpack.c.l.b16 %v1831
      %v2034 = vunpack.c.h.b16 %v1831
      %v2035 = vunpack.c.l.b16 %v1832
      %v2036 = vunpack.c.h.b16 %v1832
      %v2037 = vunpack.c.l.b16 %v1833
      %v2038 = vunpack.c.h.b16 %v1833
      %v2039 = vunpack.c.l.b16 %v1834
      %v2040 = vunpack.c.h.b16 %v1834
      %v2041 = vunpack.c.l.b16 %v1835
      %v2042 = vunpack.c.h.b16 %v1835
      %v2043 = vunpack.c.l.b16 %v1836
      %v2044 = vunpack.c.h.b16 %v1836
      %v2045 = vunpack.c.l.b16 %v1837
      %v2046 = vunpack.c.h.b16 %v1837
      %v2047 = vunpack.c.l.b16 %v1838
      %v2048 = vunpack.c.h.b16 %v1838
      %v2049 = vunpack.c.l.b16 %v1839
      %v2050 = vunpack.c.h.b16 %v1839
      %v2051 = vunpack.c.l.b16 %v1840
      %v2052 = vunpack.c.h.b16 %v1840
      %v2053 = vunpack.c.l.b16 %v1841
      %v2054 = vunpack.c.h.b16 %v1841
      %v2055 = vunpack.c.l.b16 %v1842
      %v2056 = vunpack.c.h.b16 %v1842
      %v2057 = vpack.c.b16 %v1933, %v1929
      %v2058 = vpack.c.b16 %v1934, %v1930
      %v2059 = vpack.c.b16 %v1935, %v1931
      %v2060 = vpack.c.b16 %v1936, %v1932
      %v2061 = vpack.c.b16 %v1941, %v1937
      %v2062 = vpack.c.b16 %v1942, %v1938
      %v2063 = vpack.c.b16 %v1943, %v1939
      %v2064 = vpack.c.b16 %v1944, %v1940
      %v2065 = vpack.c.b16 %v1949, %v1945
      %v2066 = vpack.c.b16 %v1950, %v1946
      %v2067 = vpack.c.b16 %v1951, %v1947
      %v2068 = vpack.c.b16 %v1952, %v1948
      %v2069 = vpack.c.b16 %v1957, %v1953
      %v2070 = vpack.c.b16 %v1958, %v1954
      %v2071 = vpack.c.b16 %v1959, %v1955
      %v2072 = vpack.c.b16 %v1960, %v1956
      %v2073 = vpack.c.b16 %v1965, %v1961
      %v2074 = vpack.c.b16 %v1966, %v1962
      %v2075 = vpack.c.b16 %v1967, %v1963
      %v2076 = vpack.c.b16 %v1968, %v1964
      %v2077 = vpack.c.b16 %v1973, %v1969
      %v2078 = vpack.c.b16 %v1974, %v1970
      %v2079 = vpack.c.b16 %v1975, %v1971
      %v2080 = vpack.c.b16 %v1976, %v1972
      %v2081 = vpack.c.b16 %v1981, %v1977
      %v2082 = vpack.c.b16 %v1982, %v1978
      %v2083 = vpack.c.b16 %v1983, %v1979
      %v2084 = vpack.c.b16 %v1984, %v1980
      %v2085 = vpack.c.b16 %v1989, %v1985
      %v2086 = vpack.c.b16 %v1990, %v1986
      %v2087 = vpack.c.b16 %v1991, %v1987
      %v2088 = vpack.c.b16 %v1992, %v1988
      %v2089 = vpack.c.b16 %v1997, %v1993
      %v2090 = vpack.c.b16 %v1998, %v1994
      %v2091 = vpack.c.b16 %v1999, %v1995
      %v2092 = vpack.c.b16 %v2000, %v1996
      %v2093 = vpack.c.b16 %v2005, %v2001
      %v2094 = vpack.c.b16 %v2006, %v2002
      %v2095 = vpack.c.b16 %v2007, %v2003
      %v2096 = vpack.c.b16 %v2008, %v2004
      %v2097 = vpack.c.b16 %v2013, %v2009
      %v2098 = vpack.c.b16 %v2014, %v2010
      %v2099 = vpack.c.b16 %v2015, %v2011
      %v2100 = vpack.c.b16 %v2016, %v2012
      %v2101 = vpack.c.b16 %v2021, %v2017
      %v2102 = vpack.c.b16 %v2022, %v2018
      %v2103 = vpack.c.b16 %v2023, %v2019
      %v2104 = vpack.c.b16 %v2024, %v2020
      %v2105 = vpack.c.b16 %v2029, %v2025
      %v2106 = vpack.c.b16 %v2030, %v2026
      %v2107 = vpack.c.b16 %v2031, %v2027
      %v2108 = vpack.c.b16 %v2032, %v2028
      %v2109 = vpack.c.b16 %v2037, %v2033
      %v2110 = vpack.c.b16 %v2038, %v2034
      %v2111 = vpack.c.b16 %v2039, %v2035
      %v2112 = vpack.c.b16 %v2040, %v2036
      %v2113 = vpack.c.b16 %v2045, %v2041
      %v2114 = vpack.c.b16 %v2046, %v2042
      %v2115 = vpack.c.b16 %v2047, %v2043
      %v2116 = vpack.c.b16 %v2048, %v2044
      %v2117 = vpack.c.b16 %v2053, %v2049
      %v2118 = vpack.c.b16 %v2054, %v2050
      %v2119 = vpack.c.b16 %v2055, %v2051
      %v2120 = vpack.c.b16 %v2056, %v2052
      %2185 = vmatprep.subr.bf16.mxu0 %v2058
      %2186 = vmatpush1.bf16.msra.mxu0 %v2057
      %2187 = vmatprep.subr.bf16.mxu0 %v2062
      %2188 = vmatpush1.bf16.msra.mxu0 %v2061
      %2189 = vmatprep.subr.bf16.mxu0 %v2066
      %2190 = vmatpush1.bf16.msra.mxu0 %v2065
      %2191 = vmatprep.subr.bf16.mxu0 %v2070
      %2192 = vmatpush1.bf16.msra.mxu0 %v2069
      %2193 = vmatprep.subr.bf16.mxu0 %v2074
      %2194 = vmatpush1.bf16.msra.mxu0 %v2073
      %2195 = vmatprep.subr.bf16.mxu0 %v2078
      %2196 = vmatpush1.bf16.msra.mxu0 %v2077
      %2197 = vmatprep.subr.bf16.mxu0 %v2082
      %2198 = vmatpush1.bf16.msra.mxu0 %v2081
      %2199 = vmatprep.subr.bf16.mxu0 %v2086
      %2200 = vmatpush1.bf16.msra.mxu0 %v2085
      %2201 = vmatprep.subr.bf16.mxu0 %v2090
      %2202 = vmatpush1.bf16.msra.mxu0 %v2089
      %2203 = vmatprep.subr.bf16.mxu0 %v2094
      %2204 = vmatpush1.bf16.msra.mxu0 %v2093
      %2205 = vmatprep.subr.bf16.mxu0 %v2098
      %2206 = vmatpush1.bf16.msra.mxu0 %v2097
      %2207 = vmatprep.subr.bf16.mxu0 %v2102
      %2208 = vmatpush1.bf16.msra.mxu0 %v2101
      %2209 = vmatprep.subr.bf16.mxu0 %v2106
      %2210 = vmatpush1.bf16.msra.mxu0 %v2105
      %2211 = vmatprep.subr.bf16.mxu0 %v2110
      %2212 = vmatpush1.bf16.msra.mxu0 %v2109
      %2213 = vmatprep.subr.bf16.mxu0 %v2114
      %2214 = vmatpush1.bf16.msra.mxu0 %v2113
      %2215 = vmatprep.subr.bf16.mxu0 %v2118
      %2216 = vmatpush1.bf16.msra.mxu0 %v2117
      %2217 = vmatprep.mubr.bf16.mxu0 %v1778
      %2218 = vmatmul.mubr.bf16.gmra.mrb[0].mxu0 %v1777
      %v2219 = vpop.f32.mrb[0].mxu0
      %v2220 = vadd.f32 %v1848, %v2219
      %v2221 = vpop.f32.mrb[0].mxu0
      %v2222 = vadd.f32 %v1852, %v2221
      %v2223 = vpop.f32.mrb[0].mxu0
      %v2224 = vpop.f32.mrb[0].mxu0
      %2225 = vdwg.mxu0
      %2226 = vmatprep.subr.bf16.mxu0 %v2060
      %2227 = vmatpush1.bf16.msra.mxu0 %v2059
      %2228 = vmatprep.subr.bf16.mxu0 %v2064
      %2229 = vmatpush1.bf16.msra.mxu0 %v2063
      %2230 = vmatprep.subr.bf16.mxu0 %v2068
      %2231 = vmatpush1.bf16.msra.mxu0 %v2067
      %2232 = vmatprep.subr.bf16.mxu0 %v2072
      %2233 = vmatpush1.bf16.msra.mxu0 %v2071
      %2234 = vmatprep.subr.bf16.mxu0 %v2076
      %2235 = vmatpush1.bf16.msra.mxu0 %v2075
      %2236 = vmatprep.subr.bf16.mxu0 %v2080
      %2237 = vmatpush1.bf16.msra.mxu0 %v2079
      %2238 = vmatprep.subr.bf16.mxu0 %v2084
      %2239 = vmatpush1.bf16.msra.mxu0 %v2083
      %2240 = vmatprep.subr.bf16.mxu0 %v2088
      %2241 = vmatpush1.bf16.msra.mxu0 %v2087
      %2242 = vmatprep.subr.bf16.mxu0 %v2092
      %2243 = vmatpush1.bf16.msra.mxu0 %v2091
      %2244 = vmatprep.subr.bf16.mxu0 %v2096
      %2245 = vmatpush1.bf16.msra.mxu0 %v2095
      %2246 = vmatprep.subr.bf16.mxu0 %v2100
      %2247 = vmatpush1.bf16.msra.mxu0 %v2099
      %2248 = vmatprep.subr.bf16.mxu0 %v2104
      %2249 = vmatpush1.bf16.msra.mxu0 %v2103
      %2250 = vmatprep.subr.bf16.mxu0 %v2108
      %2251 = vmatpush1.bf16.msra.mxu0 %v2107
      %2252 = vmatprep.subr.bf16.mxu0 %v2112
      %2253 = vmatpush1.bf16.msra.mxu0 %v2111
      %2254 = vmatprep.subr.bf16.mxu0 %v2116
      %2255 = vmatpush1.bf16.msra.mxu0 %v2115
      %2256 = vmatprep.subr.bf16.mxu0 %v2120
      %2257 = vmatpush1.bf16.msra.mxu0 %v2119
      %2258 = vmatprep.mubr.bf16.mxu0 %v1778
      %2259 = vmatmul.mubr.bf16.gmra.mrb[0].mxu0 %v1777
      %v2260 = vpop.f32.mrb[0].mxu0
      %v2261 = vadd.f32 %v1856, %v2260
      %v2262 = vpop.f32.mrb[0].mxu0
      %v2263 = vadd.f32 %v1860, %v2262
      %v2264 = vpop.f32.mrb[0].mxu0
      %v2265 = vpop.f32.mrb[0].mxu0
      %2266 = vdwg.mxu0
      %v2267 = vmul.f32 %v2220, 0.5
      %v2268 = vmul.f32 %v2222, 0.5
      %v2269 = vmul.f32 %v2261, 0.5
      %v2270 = vmul.f32 %v2263, 0.5
      %v2271 = vmul.f32 %v2220, 0.044715
      %v2272 = vmul.f32 %v2222, 0.044715
      %v2273 = vmul.f32 %v2261, 0.044715
      %v2274 = vmul.f32 %v2263, 0.044715
      %v2275 = vmul.f32 %v2271, %v2220
      %v2276 = vmul.f32 %v2272, %v2222
      %v2277 = vmul.f32 %v2273, %v2261
      %v2278 = vmul.f32 %v2274, %v2263
      %v2279 = vmul.f32 %v2275, %v2220
      %v2280 = vmul.f32 %v2276, %v2222
      %v2281 = vmul.f32 %v2277, %v2261
      %v2282 = vmul.f32 %v2278, %v2263
      %v2283 = vadd.f32 %v2220, %v2279
      %v2284 = vadd.f32 %v2222, %v2280
      %v2285 = vadd.f32 %v2261, %v2281
      %v2286 = vadd.f32 %v2263, %v2282
      %v2287 = vmul.f32 %v2283, 0.7978846
      %v2288 = vmul.f32 %v2284, 0.7978846
      %v2289 = vmul.f32 %v2285, 0.7978846
      %v2290 = vmul.f32 %v2286, 0.7978846
      %v2291 = vtanh.pop %v2287
      %v2292 = vtanh.pop %v2288
      %v2293 = vtanh.pop %v2289
      %v2294 = vtanh.pop %v2290
      %v2295 = vadd.f32 %v2291, 1.0
      %v2296 = vadd.f32 %v2292, 1.0
      %v2297 = vadd.f32 %v2293, 1.0
      %v2298 = vadd.f32 %v2294, 1.0
      %v2299 = vmul.f32 %v2267, %v2295
      %v2300 = vmul.f32 %v2268, %v2296
      %v2301 = vmul.f32 %v2269, %v2297
      %v2302 = vmul.f32 %v2270, %v2298
      %v2303 = vpack.c.bf16 %v2299, %v2299
      %v2304 = vpack.c.bf16 %v2300, %v2300
      %v2305 = vpack.c.bf16 %v2301, %v2301
      %v2306 = vpack.c.bf16 %v2302, %v2302
      %v2307 = vld [vmem:[%s11] sm:$0xff]
      %v2308 = vld [vmem:[%s11 + $0x8] sm:$0xff]
      %v2309 = vld [vmem:[%s11 + $0x10] sm:$0xff]
      %v2310 = vld [vmem:[%s11 + $0x18] sm:$0xff]
      %v2311 = vld [vmem:[%s11 + $0x20] sm:$0xff]
      %v2312 = vld [vmem:[%s11 + $0x28] sm:$0xff]
      %v2313 = vld [vmem:[%s11 + $0x30] sm:$0xff]
      %v2314 = vld [vmem:[%s11 + $0x38] sm:$0xff]
      %v2315 = vld [vmem:[%s11 + $0x40] sm:$0xff]
      %v2316 = vld [vmem:[%s11 + $0x48] sm:$0xff]
      %v2317 = vld [vmem:[%s11 + $0x50] sm:$0xff]
      %v2318 = vld [vmem:[%s11 + $0x58] sm:$0xff]
      %v2319 = vld [vmem:[%s11 + $0x60] sm:$0xff]
      %v2320 = vld [vmem:[%s11 + $0x68] sm:$0xff]
      %v2321 = vld [vmem:[%s11 + $0x70] sm:$0xff]
      %v2322 = vld [vmem:[%s11 + $0x78] sm:$0xff]
      %v2323 = vld [vmem:[%s11 + $0x80] sm:$0xff]
      %v2324 = vld [vmem:[%s11 + $0x88] sm:$0xff]
      %v2325 = vld [vmem:[%s11 + $0x90] sm:$0xff]
      %v2326 = vld [vmem:[%s11 + $0x98] sm:$0xff]
      %v2327 = vld [vmem:[%s11 + $0xa0] sm:$0xff]
      %v2328 = vld [vmem:[%s11 + $0xa8] sm:$0xff]
      %v2329 = vld [vmem:[%s11 + $0xb0] sm:$0xff]
      %v2330 = vld [vmem:[%s11 + $0xb8] sm:$0xff]
      %v2331 = vld [vmem:[%s11 + $0xc0] sm:$0xff]
      %v2332 = vld [vmem:[%s11 + $0xc8] sm:$0xff]
      %v2333 = vld [vmem:[%s11 + $0xd0] sm:$0xff]
      %v2334 = vld [vmem:[%s11 + $0xd8] sm:$0xff]
      %v2335 = vld [vmem:[%s11 + $0xe0] sm:$0xff]
      %v2336 = vld [vmem:[%s11 + $0xe8] sm:$0xff]
      %v2337 = vld [vmem:[%s11 + $0xf0] sm:$0xff]
      %v2338 = vld [vmem:[%s11 + $0xf8] sm:$0xff]
      %v2339 = vld [vmem:[%s11 + $0x100] sm:$0xff]
      %v2340 = vld [vmem:[%s11 + $0x108] sm:$0xff]
      %v2341 = vld [vmem:[%s11 + $0x110] sm:$0xff]
      %v2342 = vld [vmem:[%s11 + $0x118] sm:$0xff]
      %v2343 = vld [vmem:[%s11 + $0x120] sm:$0xff]
      %v2344 = vld [vmem:[%s11 + $0x128] sm:$0xff]
      %v2345 = vld [vmem:[%s11 + $0x130] sm:$0xff]
      %v2346 = vld [vmem:[%s11 + $0x138] sm:$0xff]
      %v2347 = vld [vmem:[%s11 + $0x140] sm:$0xff]
      %v2348 = vld [vmem:[%s11 + $0x148] sm:$0xff]
      %v2349 = vld [vmem:[%s11 + $0x150] sm:$0xff]
      %v2350 = vld [vmem:[%s11 + $0x158] sm:$0xff]
      %v2351 = vld [vmem:[%s11 + $0x160] sm:$0xff]
      %v2352 = vld [vmem:[%s11 + $0x168] sm:$0xff]
      %v2353 = vld [vmem:[%s11 + $0x170] sm:$0xff]
      %v2354 = vld [vmem:[%s11 + $0x178] sm:$0xff]
      %v2355 = vld [vmem:[%s11 + $0x180] sm:$0xff]
      %v2356 = vld [vmem:[%s11 + $0x188] sm:$0xff]
      %v2357 = vld [vmem:[%s11 + $0x190] sm:$0xff]
      %v2358 = vld [vmem:[%s11 + $0x198] sm:$0xff]
      %v2359 = vld [vmem:[%s11 + $0x1a0] sm:$0xff]
      %v2360 = vld [vmem:[%s11 + $0x1a8] sm:$0xff]
      %v2361 = vld [vmem:[%s11 + $0x1b0] sm:$0xff]
      %v2362 = vld [vmem:[%s11 + $0x1b8] sm:$0xff]
      %v2363 = vld [vmem:[%s11 + $0x1c0] sm:$0xff]
      %v2364 = vld [vmem:[%s11 + $0x1c8] sm:$0xff]
      %v2365 = vld [vmem:[%s11 + $0x1d0] sm:$0xff]
      %v2366 = vld [vmem:[%s11 + $0x1d8] sm:$0xff]
      %v2367 = vld [vmem:[%s11 + $0x1e0] sm:$0xff]
      %v2368 = vld [vmem:[%s11 + $0x1e8] sm:$0xff]
      %v2369 = vld [vmem:[%s11 + $0x1f0] sm:$0xff]
      %v2370 = vld [vmem:[%s11 + $0x1f8] sm:$0xff]
      %v2371 = vld [vmem:[%s12] sm:$0x3]
      %v2373 = vlaneseq
      %v2374 = vshrl.u32 %v2373, 7
      %v2375 = vsub.s32 0, %v2374
      %v2376 = vrot.slane %v2371, %v2375
      %v2377 = vlaneseq
      %v2378 = vshrl.u32 %v2377, 7
      %v2379 = vsub.s32 1, %v2378
      %v2380 = vrot.slane %v2371, %v2379
      %v2447 = vunpack.c.l.b16 %v2307
      %v2448 = vunpack.c.h.b16 %v2307
      %v2449 = vunpack.c.l.b16 %v2308
      %v2450 = vunpack.c.h.b16 %v2308
      %v2451 = vunpack.c.l.b16 %v2309
      %v2452 = vunpack.c.h.b16 %v2309
      %v2453 = vunpack.c.l.b16 %v2310
      %v2454 = vunpack.c.h.b16 %v2310
      %v2455 = vunpack.c.l.b16 %v2311
      %v2456 = vunpack.c.h.b16 %v2311
      %v2457 = vunpack.c.l.b16 %v2312
      %v2458 = vunpack.c.h.b16 %v2312
      %v2459 = vunpack.c.l.b16 %v2313
      %v2460 = vunpack.c.h.b16 %v2313
      %v2461 = vunpack.c.l.b16 %v2314
      %v2462 = vunpack.c.h.b16 %v2314
      %v2463 = vunpack.c.l.b16 %v2315
      %v2464 = vunpack.c.h.b16 %v2315
      %v2465 = vunpack.c.l.b16 %v2316
      %v2466 = vunpack.c.h.b16 %v2316
      %v2467 = vunpack.c.l.b16 %v2317
      %v2468 = vunpack.c.h.b16 %v2317
      %v2469 = vunpack.c.l.b16 %v2318
      %v2470 = vunpack.c.h.b16 %v2318
      %v2471 = vunpack.c.l.b16 %v2319
      %v2472 = vunpack.c.h.b16 %v2319
      %v2473 = vunpack.c.l.b16 %v2320
      %v2474 = vunpack.c.h.b16 %v2320
      %v2475 = vunpack.c.l.b16 %v2321
      %v2476 = vunpack.c.h.b16 %v2321
      %v2477 = vunpack.c.l.b16 %v2322
      %v2478 = vunpack.c.h.b16 %v2322
      %v2479 = vunpack.c.l.b16 %v2323
      %v2480 = vunpack.c.h.b16 %v2323
      %v2481 = vunpack.c.l.b16 %v2324
      %v2482 = vunpack.c.h.b16 %v2324
      %v2483 = vunpack.c.l.b16 %v2325
      %v2484 = vunpack.c.h.b16 %v2325
      %v2485 = vunpack.c.l.b16 %v2326
      %v2486 = vunpack.c.h.b16 %v2326
      %v2487 = vunpack.c.l.b16 %v2327
      %v2488 = vunpack.c.h.b16 %v2327
      %v2489 = vunpack.c.l.b16 %v2328
      %v2490 = vunpack.c.h.b16 %v2328
      %v2491 = vunpack.c.l.b16 %v2329
      %v2492 = vunpack.c.h.b16 %v2329
      %v2493 = vunpack.c.l.b16 %v2330
      %v2494 = vunpack.c.h.b16 %v2330
      %v2495 = vunpack.c.l.b16 %v2331
      %v2496 = vunpack.c.h.b16 %v2331
      %v2497 = vunpack.c.l.b16 %v2332
      %v2498 = vunpack.c.h.b16 %v2332
      %v2499 = vunpack.c.l.b16 %v2333
      %v2500 = vunpack.c.h.b16 %v2333
      %v2501 = vunpack.c.l.b16 %v2334
      %v2502 = vunpack.c.h.b16 %v2334
      %v2503 = vunpack.c.l.b16 %v2335
      %v2504 = vunpack.c.h.b16 %v2335
      %v2505 = vunpack.c.l.b16 %v2336
      %v2506 = vunpack.c.h.b16 %v2336
      %v2507 = vunpack.c.l.b16 %v2337
      %v2508 = vunpack.c.h.b16 %v2337
      %v2509 = vunpack.c.l.b16 %v2338
      %v2510 = vunpack.c.h.b16 %v2338
      %v2511 = vunpack.c.l.b16 %v2339
      %v2512 = vunpack.c.h.b16 %v2339
      %v2513 = vunpack.c.l.b16 %v2340
      %v2514 = vunpack.c.h.b16 %v2340
      %v2515 = vunpack.c.l.b16 %v2341
      %v2516 = vunpack.c.h.b16 %v2341
      %v2517 = vunpack.c.l.b16 %v2342
      %v2518 = vunpack.c.h.b16 %v2342
      %v2519 = vunpack.c.l.b16 %v2343
      %v2520 = vunpack.c.h.b16 %v2343
      %v2521 = vunpack.c.l.b16 %v2344
      %v2522 = vunpack.c.h.b16 %v2344
      %v2523 = vunpack.c.l.b16 %v2345
      %v2524 = vunpack.c.h.b16 %v2345
      %v2525 = vunpack.c.l.b16 %v2346
      %v2526 = vunpack.c.h.b16 %v2346
      %v2527 = vunpack.c.l.b16 %v2347
      %v2528 = vunpack.c.h.b16 %v2347
      %v2529 = vunpack.c.l.b16 %v2348
      %v2530 = vunpack.c.h.b16 %v2348
      %v2531 = vunpack.c.l.b16 %v2349
      %v2532 = vunpack.c.h.b16 %v2349
      %v2533 = vunpack.c.l.b16 %v2350
      %v2534 = vunpack.c.h.b16 %v2350
      %v2535 = vunpack.c.l.b16 %v2351
      %v2536 = vunpack.c.h.b16 %v2351
      %v2537 = vunpack.c.l.b16 %v2352
      %v2538 = vunpack.c.h.b16 %v2352
      %v2539 = vunpack.c.l.b16 %v2353
      %v2540 = vunpack.c.h.b16 %v2353
      %v2541 = vunpack.c.l.b16 %v2354
      %v2542 = vunpack.c.h.b16 %v2354
      %v2543 = vunpack.c.l.b16 %v2355
      %v2544 = vunpack.c.h.b16 %v2355
      %v2545 = vunpack.c.l.b16 %v2356
      %v2546 = vunpack.c.h.b16 %v2356
      %v2547 = vunpack.c.l.b16 %v2357
      %v2548 = vunpack.c.h.b16 %v2357
      %v2549 = vunpack.c.l.b16 %v2358
      %v2550 = vunpack.c.h.b16 %v2358
      %v2551 = vunpack.c.l.b16 %v2359
      %v2552 = vunpack.c.h.b16 %v2359
      %v2553 = vunpack.c.l.b16 %v2360
      %v2554 = vunpack.c.h.b16 %v2360
      %v2555 = vunpack.c.l.b16 %v2361
      %v2556 = vunpack.c.h.b16 %v2361
      %v2557 = vunpack.c.l.b16 %v2362
      %v2558 = vunpack.c.h.b16 %v2362
      %v2559 = vunpack.c.l.b16 %v2363
      %v2560 = vunpack.c.h.b16 %v2363
      %v2561 = vunpack.c.l.b16 %v2364
      %v2562 = vunpack.c.h.b16 %v2364
      %v2563 = vunpack.c.l.b16 %v2365
      %v2564 = vunpack.c.h.b16 %v2365
      %v2565 = vunpack.c.l.b16 %v2366
      %v2566 = vunpack.c.h.b16 %v2366
      %v2567 = vunpack.c.l.b16 %v2367
      %v2568 = vunpack.c.h.b16 %v2367
      %v2569 = vunpack.c.l.b16 %v2368
      %v2570 = vunpack.c.h.b16 %v2368
      %v2571 = vunpack.c.l.b16 %v2369
      %v2572 = vunpack.c.h.b16 %v2369
      %v2573 = vunpack.c.l.b16 %v2370
      %v2574 = vunpack.c.h.b16 %v2370
      %v2575 = vpack.c.b16 %v2449, %v2447
      %v2576 = vpack.c.b16 %v2450, %v2448
      %v2577 = vpack.c.b16 %v2453, %v2451
      %v2578 = vpack.c.b16 %v2454, %v2452
      %v2579 = vpack.c.b16 %v2457, %v2455
      %v2580 = vpack.c.b16 %v2458, %v2456
      %v2581 = vpack.c.b16 %v2461, %v2459
      %v2582 = vpack.c.b16 %v2462, %v2460
      %v2583 = vpack.c.b16 %v2465, %v2463
      %v2584 = vpack.c.b16 %v2466, %v2464
      %v2585 = vpack.c.b16 %v2469, %v2467
      %v2586 = vpack.c.b16 %v2470, %v2468
      %v2587 = vpack.c.b16 %v2473, %v2471
      %v2588 = vpack.c.b16 %v2474, %v2472
      %v2589 = vpack.c.b16 %v2477, %v2475
      %v2590 = vpack.c.b16 %v2478, %v2476
      %v2591 = vpack.c.b16 %v2481, %v2479
      %v2592 = vpack.c.b16 %v2482, %v2480
      %v2593 = vpack.c.b16 %v2485, %v2483
      %v2594 = vpack.c.b16 %v2486, %v2484
      %v2595 = vpack.c.b16 %v2489, %v2487
      %v2596 = vpack.c.b16 %v2490, %v2488
      %v2597 = vpack.c.b16 %v2493, %v2491
      %v2598 = vpack.c.b16 %v2494, %v2492
      %v2599 = vpack.c.b16 %v2497, %v2495
      %v2600 = vpack.c.b16 %v2498, %v2496
      %v2601 = vpack.c.b16 %v2501, %v2499
      %v2602 = vpack.c.b16 %v2502, %v2500
      %v2603 = vpack.c.b16 %v2505, %v2503
      %v2604 = vpack.c.b16 %v2506, %v2504
      %v2605 = vpack.c.b16 %v2509, %v2507
      %v2606 = vpack.c.b16 %v2510, %v2508
      %v2607 = vpack.c.b16 %v2513, %v2511
      %v2608 = vpack.c.b16 %v2514, %v2512
      %v2609 = vpack.c.b16 %v2517, %v2515
      %v2610 = vpack.c.b16 %v2518, %v2516
      %v2611 = vpack.c.b16 %v2521, %v2519
      %v2612 = vpack.c.b16 %v2522, %v2520
      %v2613 = vpack.c.b16 %v2525, %v2523
      %v2614 = vpack.c.b16 %v2526, %v2524
      %v2615 = vpack.c.b16 %v2529, %v2527
      %v2616 = vpack.c.b16 %v2530, %v2528
      %v2617 = vpack.c.b16 %v2533, %v2531
      %v2618 = vpack.c.b16 %v2534, %v2532
      %v2619 = vpack.c.b16 %v2537, %v2535
      %v2620 = vpack.c.b16 %v2538, %v2536
      %v2621 = vpack.c.b16 %v2541, %v2539
      %v2622 = vpack.c.b16 %v2542, %v2540
      %v2623 = vpack.c.b16 %v2545, %v2543
      %v2624 = vpack.c.b16 %v2546, %v2544
      %v2625 = vpack.c.b16 %v2549, %v2547
      %v2626 = vpack.c.b16 %v2550, %v2548
      %v2627 = vpack.c.b16 %v2553, %v2551
      %v2628 = vpack.c.b16 %v2554, %v2552
      %v2629 = vpack.c.b16 %v2557, %v2555
      %v2630 = vpack.c.b16 %v2558, %v2556
      %v2631 = vpack.c.b16 %v2561, %v2559
      %v2632 = vpack.c.b16 %v2562, %v2560
      %v2633 = vpack.c.b16 %v2565, %v2563
      %v2634 = vpack.c.b16 %v2566, %v2564
      %v2635 = vpack.c.b16 %v2569, %v2567
      %v2636 = vpack.c.b16 %v2570, %v2568
      %v2637 = vpack.c.b16 %v2573, %v2571
      %v2638 = vpack.c.b16 %v2574, %v2572
      %2703 = vmatprep.subr.bf16.mxu0 %v2576
      %2704 = vmatpush1.bf16.msra.mxu0 %v2575
      %2705 = vmatprep.subr.bf16.mxu0 %v2578
      %2706 = vmatpush1.bf16.msra.mxu0 %v2577
      %2707 = vmatprep.subr.bf16.mxu0 %v2580
      %2708 = vmatpush1.bf16.msra.mxu0 %v2579
      %2709 = vmatprep.subr.bf16.mxu0 %v2582
      %2710 = vmatpush1.bf16.msra.mxu0 %v2581
      %2711 = vmatprep.subr.bf16.mxu0 %v2584
      %2712 = vmatpush1.bf16.msra.mxu0 %v2583
      %2713 = vmatprep.subr.bf16.mxu0 %v2586
      %2714 = vmatpush1.bf16.msra.mxu0 %v2585
      %2715 = vmatprep.subr.bf16.mxu0 %v2588
      %2716 = vmatpush1.bf16.msra.mxu0 %v2587
      %2717 = vmatprep.subr.bf16.mxu0 %v2590
      %2718 = vmatpush1.bf16.msra.mxu0 %v2589
      %2719 = vmatprep.subr.bf16.mxu0 %v2592
      %2720 = vmatpush1.bf16.msra.mxu0 %v2591
      %2721 = vmatprep.subr.bf16.mxu0 %v2594
      %2722 = vmatpush1.bf16.msra.mxu0 %v2593
      %2723 = vmatprep.subr.bf16.mxu0 %v2596
      %2724 = vmatpush1.bf16.msra.mxu0 %v2595
      %2725 = vmatprep.subr.bf16.mxu0 %v2598
      %2726 = vmatpush1.bf16.msra.mxu0 %v2597
      %2727 = vmatprep.subr.bf16.mxu0 %v2600
      %2728 = vmatpush1.bf16.msra.mxu0 %v2599
      %2729 = vmatprep.subr.bf16.mxu0 %v2602
      %2730 = vmatpush1.bf16.msra.mxu0 %v2601
      %2731 = vmatprep.subr.bf16.mxu0 %v2604
      %2732 = vmatpush1.bf16.msra.mxu0 %v2603
      %2733 = vmatprep.subr.bf16.mxu0 %v2606
      %2734 = vmatpush1.bf16.msra.mxu0 %v2605
      %2735 = vmatprep.mubr.bf16.mxu0 %v2304
      %2736 = vmatmul.mubr.bf16.gmra.mrb[0].mxu0 %v2303
      %v2737 = vpop.f32.mrb[0].mxu0
      %v2738 = vadd.f32 %v2376, %v2737
      %v2739 = vpop.f32.mrb[0].mxu0
      %v2740 = vadd.f32 %v2380, %v2739
      %v2741 = vpop.f32.mrb[0].mxu0
      %v2742 = vpop.f32.mrb[0].mxu0
      %2743 = vdwg.mxu0
      %2744 = vmatprep.subr.bf16.mxu0 %v2608
      %2745 = vmatpush1.bf16.msra.mxu0 %v2607
      %2746 = vmatprep.subr.bf16.mxu0 %v2610
      %2747 = vmatpush1.bf16.msra.mxu0 %v2609
      %2748 = vmatprep.subr.bf16.mxu0 %v2612
      %2749 = vmatpush1.bf16.msra.mxu0 %v2611
      %2750 = vmatprep.subr.bf16.mxu0 %v2614
      %2751 = vmatpush1.bf16.msra.mxu0 %v2613
      %2752 = vmatprep.subr.bf16.mxu0 %v2616
      %2753 = vmatpush1.bf16.msra.mxu0 %v2615
      %2754 = vmatprep.subr.bf16.mxu0 %v2618
      %2755 = vmatpush1.bf16.msra.mxu0 %v2617
      %2756 = vmatprep.subr.bf16.mxu0 %v2620
      %2757 = vmatpush1.bf16.msra.mxu0 %v2619
      %2758 = vmatprep.subr.bf16.mxu0 %v2622
      %2759 = vmatpush1.bf16.msra.mxu0 %v2621
      %2760 = vmatprep.subr.bf16.mxu0 %v2624
      %2761 = vmatpush1.bf16.msra.mxu0 %v2623
      %2762 = vmatprep.subr.bf16.mxu0 %v2626
      %2763 = vmatpush1.bf16.msra.mxu0 %v2625
      %2764 = vmatprep.subr.bf16.mxu0 %v2628
      %2765 = vmatpush1.bf16.msra.mxu0 %v2627
      %2766 = vmatprep.subr.bf16.mxu0 %v2630
      %2767 = vmatpush1.bf16.msra.mxu0 %v2629
      %2768 = vmatprep.subr.bf16.mxu0 %v2632
      %2769 = vmatpush1.bf16.msra.mxu0 %v2631
      %2770 = vmatprep.subr.bf16.mxu0 %v2634
      %2771 = vmatpush1.bf16.msra.mxu0 %v2633
      %2772 = vmatprep.subr.bf16.mxu0 %v2636
      %2773 = vmatpush1.bf16.msra.mxu0 %v2635
      %2774 = vmatprep.subr.bf16.mxu0 %v2638
      %2775 = vmatpush1.bf16.msra.mxu0 %v2637
      %2776 = vmatprep.mubr.bf16.mxu0 %v2306
      %2777 = vmatmul.mubr.bf16.gmra.mrb[0].mxu0 %v2305
      %v2778 = vpop.f32.mrb[0].mxu0
      %v2779 = vadd.f32 %v2738, %v2778
      %v2780 = vpop.f32.mrb[0].mxu0
      %v2781 = vadd.f32 %v2740, %v2780
      %v2782 = vpop.f32.mrb[0].mxu0
      %v2783 = vpop.f32.mrb[0].mxu0
      %2784 = vdwg.mxu0
      %v2787 = vcombine.low %v2779, %v2781
      %v2789 = vadd.f32 %v1706, %v2787
      %2790 = vst [vmem:[%s440] sm:$0xff] %v2789
      %p2791 = scmp.lt.s32.totalorder %s24, 1
      %s2792 = scalar_select %p2791, %s24, 1
      %s2793 = smul.addr %s2792, 2
      %s2794 = smul.addr %s2793, 4
      %s2795 = scalar_lea.vmem %s13, %s2794
      // Predicated region
      $region73: #{_lambda_.9} parent=71 // pred_check
        %p2796 = pneg %p320
      $region74: #{_lambda_.9} parent=71 // pred_check_branch
        %2798 = sbr.rel (%p2796) target = $region76
      $region75: #{_lambda_.9} parent=71 // pred_region
        _
      $region76: #{_lambda_.9} parent=71 // pred_fallthru
        _
    $region72: #{_lambda_.9} parent=5 // pred_fallthru
      _
    %p2799 = scmp.le.s32.totalorder 2, %s19
    // Predicated region
    $region77: #{_lambda_.9} parent=5 // pred_check
      %p2800 = pneg %p2799
    $region78: #{_lambda_.9} parent=5 // pred_check_branch
      %2802 = sbr.rel (%p2800) target = $region80
    $region79: #{_lambda_.9} parent=5 // pred_region
      %s2803 = ssub.s32 %s19, 2
      // Predicated region
      $region81: #{_lambda_.9} parent=79 // pred_check
        %p2804 = pneg %p326
      $region82: #{_lambda_.9} parent=79 // pred_check_branch
        %2806 = sbr.rel (%p2804) target = $region84
      $region83: #{_lambda_.9} parent=79 // pred_region
        %p2807 = scmp.lt.s32.totalorder %s25, 1
        %s2808 = scalar_select %p2807, %s25, 1
        %s2809 = smul.addr %s2808, 2
        %s2810 = smul.addr %s2809, 4
        %s2811 = scalar_lea.vmem %s13, %s2810
      $region84: #{_lambda_.9} parent=79 // pred_fallthru
        _
    $region80: #{_lambda_.9} parent=5 // pred_fallthru
      _
  $region6: #{_lambda_.9} parent=0 // loop_footer
    %s23 = sadd.s32 1, %s19
  $region7: #{_lambda_.9} parent=0 // loop_footer_branch
    %18 = sbr.rel target = $region3
  $region8: #{_lambda_.9} parent=0 // loop_exit
    _

// kernel: _lambda_.11
$region0: #{_lambda_.11}
  #allocation0 [shape = 'u32[]', space=smem, size = 0x4, offset = 0x4, fixed_abs, tag = 'smem constant byte address 0x4 - core index']
  #allocation1 [shape = 'u32[144,128]{1,0:T(1,128)}', space=vmem, size = 0x12000, scoped, tag = 'internal scratch']
  %s0 = inlined_call_operand.vmem [shape: bf16[8,256], index: 0, kind: input, shape index: {}]
  %s1 = inlined_call_operand.vmem [shape: bf16[256,2048], index: 1, kind: input, shape index: {}]
  %s2 = inlined_call_operand.vmem [shape: bf16[8,2048], index: 2, kind: output, shape index: {}]
  %s3 = sld [smem:[#allocation0]]
  $region18: #{_lambda_.11} parent=0
    _
  %s5 = ssub.s32 1, %s3
  %s6 = scalar_select 0, %s5, %s3
  // Predicated region
  $region2: #{_lambda_.11} parent=0 // pred_check
    _
  $region3: #{_lambda_.11} parent=0 // pred_check_branch
    %8 = sbr.rel (0) target = $region5
  $region4: #{_lambda_.11} parent=0 // pred_region
    _
  $region5: #{_lambda_.11} parent=0 // pred_fallthru
    _
  // Predicated region
  $region6: #{_lambda_.11} parent=0 // pred_check
    _
  $region7: #{_lambda_.11} parent=0 // pred_check_branch
    %10 = sbr.rel (0) target = $region9
  $region8: #{_lambda_.11} parent=0 // pred_region
    _
  $region9: #{_lambda_.11} parent=0 // pred_fallthru
    _
  %v11 = vld [vmem:[%s0] sm:$0xff]
  %v12 = vld [vmem:[%s1] sm:$0xff]
  %v13 = vld [vmem:[%s1 + $0x8] sm:$0xff]
  %v14 = vld [vmem:[%s1 + $0x10] sm:$0xff]
  %v15 = vld [vmem:[%s1 + $0x18] sm:$0xff]
  %v16 = vld [vmem:[%s1 + $0x20] sm:$0xff]
  %v17 = vld [vmem:[%s1 + $0x28] sm:$0xff]
  %v18 = vld [vmem:[%s1 + $0x30] sm:$0xff]
  %v19 = vld [vmem:[%s1 + $0x38] sm:$0xff]
  %v20 = vld [vmem:[%s1 + $0x40] sm:$0xff]
  %v21 = vld [vmem:[%s1 + $0x48] sm:$0xff]
  %v22 = vld [vmem:[%s1 + $0x50] sm:$0xff]
  %v23 = vld [vmem:[%s1 + $0x58] sm:$0xff]
  %v24 = vld [vmem:[%s1 + $0x60] sm:$0xff]
  %v25 = vld [vmem:[%s1 + $0x68] sm:$0xff]
  %v26 = vld [vmem:[%s1 + $0x70] sm:$0xff]
  %v27 = vld [vmem:[%s1 + $0x78] sm:$0xff]
  %v28 = vld [vmem:[%s1 + $0x80] sm:$0xff]
  %v29 = vld [vmem:[%s1 + $0x88] sm:$0xff]
  %v30 = vld [vmem:[%s1 + $0x90] sm:$0xff]
  %v31 = vld [vmem:[%s1 + $0x98] sm:$0xff]
  %v32 = vld [vmem:[%s1 + $0xa0] sm:$0xff]
  %v33 = vld [vmem:[%s1 + $0xa8] sm:$0xff]
  %v34 = vld [vmem:[%s1 + $0xb0] sm:$0xff]
  %v35 = vld [vmem:[%s1 + $0xb8] sm:$0xff]
  %v36 = vld [vmem:[%s1 + $0xc0] sm:$0xff]
  %v37 = vld [vmem:[%s1 + $0xc8] sm:$0xff]
  %v38 = vld [vmem:[%s1 + $0xd0] sm:$0xff]
  %v39 = vld [vmem:[%s1 + $0xd8] sm:$0xff]
  %v40 = vld [vmem:[%s1 + $0xe0] sm:$0xff]
  %v41 = vld [vmem:[%s1 + $0xe8] sm:$0xff]
  %v42 = vld [vmem:[%s1 + $0xf0] sm:$0xff]
  %v43 = vld [vmem:[%s1 + $0xf8] sm:$0xff]
  %v44 = vld [vmem:[%s1 + $0x100] sm:$0xff]
  %v45 = vld [vmem:[%s1 + $0x108] sm:$0xff]
  %v46 = vld [vmem:[%s1 + $0x110] sm:$0xff]
  %v47 = vld [vmem:[%s1 + $0x118] sm:$0xff]
  %v48 = vld [vmem:[%s1 + $0x120] sm:$0xff]
  %v49 = vld [vmem:[%s1 + $0x128] sm:$0xff]
  %v50 = vld [vmem:[%s1 + $0x130] sm:$0xff]
  %v51 = vld [vmem:[%s1 + $0x138] sm:$0xff]
  %v52 = vld [vmem:[%s1 + $0x140] sm:$0xff]
  %v53 = vld [vmem:[%s1 + $0x148] sm:$0xff]
  %v54 = vld [vmem:[%s1 + $0x150] sm:$0xff]
  %v55 = vld [vmem:[%s1 + $0x158] sm:$0xff]
  %v56 = vld [vmem:[%s1 + $0x160] sm:$0xff]
  %v57 = vld [vmem:[%s1 + $0x168] sm:$0xff]
  %v58 = vld [vmem:[%s1 + $0x170] sm:$0xff]
  %v59 = vld [vmem:[%s1 + $0x178] sm:$0xff]
  %v60 = vld [vmem:[%s1 + $0x180] sm:$0xff]
  %v61 = vld [vmem:[%s1 + $0x188] sm:$0xff]
  %v62 = vld [vmem:[%s1 + $0x190] sm:$0xff]
  %v63 = vld [vmem:[%s1 + $0x198] sm:$0xff]
  %v64 = vld [vmem:[%s1 + $0x1a0] sm:$0xff]
  %v65 = vld [vmem:[%s1 + $0x1a8] sm:$0xff]
  %v66 = vld [vmem:[%s1 + $0x1b0] sm:$0xff]
  %v67 = vld [vmem:[%s1 + $0x1b8] sm:$0xff]
  %v68 = vld [vmem:[%s1 + $0x1c0] sm:$0xff]
  %v69 = vld [vmem:[%s1 + $0x1c8] sm:$0xff]
  %v70 = vld [vmem:[%s1 + $0x1d0] sm:$0xff]
  %v71 = vld [vmem:[%s1 + $0x1d8] sm:$0xff]
  %v72 = vld [vmem:[%s1 + $0x1e0] sm:$0xff]
  %v73 = vld [vmem:[%s1 + $0x1e8] sm:$0xff]
  %v74 = vld [vmem:[%s1 + $0x1f0] sm:$0xff]
  %v75 = vld [vmem:[%s1 + $0x1f8] sm:$0xff]
  %v76 = vld [vmem:[%s1 + $0x200] sm:$0xff]
  %v77 = vld [vmem:[%s1 + $0x208] sm:$0xff]
  %v78 = vld [vmem:[%s1 + $0x210] sm:$0xff]
  %v79 = vld [vmem:[%s1 + $0x218] sm:$0xff]
  %v80 = vld [vmem:[%s1 + $0x220] sm:$0xff]
  %v81 = vld [vmem:[%s1 + $0x228] sm:$0xff]
  %v82 = vld [vmem:[%s1 + $0x230] sm:$0xff]
  %v83 = vld [vmem:[%s1 + $0x238] sm:$0xff]
  %v84 = vld [vmem:[%s1 + $0x240] sm:$0xff]
  %v85 = vld [vmem:[%s1 + $0x248] sm:$0xff]
  %v86 = vld [vmem:[%s1 + $0x250] sm:$0xff]
  %v87 = vld [vmem:[%s1 + $0x258] sm:$0xff]
  %v88 = vld [vmem:[%s1 + $0x260] sm:$0xff]
  %v89 = vld [vmem:[%s1 + $0x268] sm:$0xff]
  %v90 = vld [vmem:[%s1 + $0x270] sm:$0xff]
  %v91 = vld [vmem:[%s1 + $0x278] sm:$0xff]
  %v92 = vld [vmem:[%s1 + $0x280] sm:$0xff]
  %v93 = vld [vmem:[%s1 + $0x288] sm:$0xff]
  %v94 = vld [vmem:[%s1 + $0x290] sm:$0xff]
  %v95 = vld [vmem:[%s1 + $0x298] sm:$0xff]
  %v96 = vld [vmem:[%s1 + $0x2a0] sm:$0xff]
  %v97 = vld [vmem:[%s1 + $0x2a8] sm:$0xff]
  %v98 = vld [vmem:[%s1 + $0x2b0] sm:$0xff]
  %v99 = vld [vmem:[%s1 + $0x2b8] sm:$0xff]
  %v100 = vld [vmem:[%s1 + $0x2c0] sm:$0xff]
  %v101 = vld [vmem:[%s1 + $0x2c8] sm:$0xff]
  %v102 = vld [vmem:[%s1 + $0x2d0] sm:$0xff]
  %v103 = vld [vmem:[%s1 + $0x2d8] sm:$0xff]
  %v104 = vld [vmem:[%s1 + $0x2e0] sm:$0xff]
  %v105 = vld [vmem:[%s1 + $0x2e8] sm:$0xff]
  %v106 = vld [vmem:[%s1 + $0x2f0] sm:$0xff]
  %v107 = vld [vmem:[%s1 + $0x2f8] sm:$0xff]
  %v108 = vld [vmem:[%s1 + $0x300] sm:$0xff]
  %v109 = vld [vmem:[%s1 + $0x308] sm:$0xff]
  %v110 = vld [vmem:[%s1 + $0x310] sm:$0xff]
  %v111 = vld [vmem:[%s1 + $0x318] sm:$0xff]
  %v112 = vld [vmem:[%s1 + $0x320] sm:$0xff]
  %v113 = vld [vmem:[%s1 + $0x328] sm:$0xff]
  %v114 = vld [vmem:[%s1 + $0x330] sm:$0xff]
  %v115 = vld [vmem:[%s1 + $0x338] sm:$0xff]
  %v116 = vld [vmem:[%s1 + $0x340] sm:$0xff]
  %v117 = vld [vmem:[%s1 + $0x348] sm:$0xff]
  %v118 = vld [vmem:[%s1 + $0x350] sm:$0xff]
  %v119 = vld [vmem:[%s1 + $0x358] sm:$0xff]
  %v120 = vld [vmem:[%s1 + $0x360] sm:$0xff]
  %v121 = vld [vmem:[%s1 + $0x368] sm:$0xff]
  %v122 = vld [vmem:[%s1 + $0x370] sm:$0xff]
  %v123 = vld [vmem:[%s1 + $0x378] sm:$0xff]
  %v124 = vld [vmem:[%s1 + $0x380] sm:$0xff]
  %v125 = vld [vmem:[%s1 + $0x388] sm:$0xff]
  %v126 = vld [vmem:[%s1 + $0x390] sm:$0xff]
  %v127 = vld [vmem:[%s1 + $0x398] sm:$0xff]
  %v128 = vld [vmem:[%s1 + $0x3a0] sm:$0xff]
  %v129 = vld [vmem:[%s1 + $0x3a8] sm:$0xff]
  %v130 = vld [vmem:[%s1 + $0x3b0] sm:$0xff]
  %v131 = vld [vmem:[%s1 + $0x3b8] sm:$0xff]
  %v132 = vld [vmem:[%s1 + $0x3c0] sm:$0xff]
  %v133 = vld [vmem:[%s1 + $0x3c8] sm:$0xff]
  %v134 = vld [vmem:[%s1 + $0x3d0] sm:$0xff]
  %v135 = vld [vmem:[%s1 + $0x3d8] sm:$0xff]
  %v136 = vld [vmem:[%s1 + $0x3e0] sm:$0xff]
  %v137 = vld [vmem:[%s1 + $0x3e8] sm:$0xff]
  %v138 = vld [vmem:[%s1 + $0x3f0] sm:$0xff]
  %v139 = vld [vmem:[%s1 + $0x3f8] sm:$0xff]
  %v140 = vld [vmem:[%s1 + $0x400] sm:$0xff]
  %v141 = vld [vmem:[%s1 + $0x408] sm:$0xff]
  %v142 = vld [vmem:[%s1 + $0x410] sm:$0xff]
  %v143 = vld [vmem:[%s1 + $0x418] sm:$0xff]
  %v144 = vld [vmem:[%s1 + $0x420] sm:$0xff]
  %v145 = vld [vmem:[%s1 + $0x428] sm:$0xff]
  %v146 = vld [vmem:[%s1 + $0x430] sm:$0xff]
  %v147 = vld [vmem:[%s1 + $0x438] sm:$0xff]
  %v148 = vld [vmem:[%s1 + $0x440] sm:$0xff]
  %v149 = vld [vmem:[%s1 + $0x448] sm:$0xff]
  %v150 = vld [vmem:[%s1 + $0x450] sm:$0xff]
  %v151 = vld [vmem:[%s1 + $0x458] sm:$0xff]
  %v152 = vld [vmem:[%s1 + $0x460] sm:$0xff]
  %v153 = vld [vmem:[%s1 + $0x468] sm:$0xff]
  %v154 = vld [vmem:[%s1 + $0x470] sm:$0xff]
  %v155 = vld [vmem:[%s1 + $0x478] sm:$0xff]
  %v156 = vld [vmem:[%s1 + $0x480] sm:$0xff]
  %v157 = vld [vmem:[%s1 + $0x488] sm:$0xff]
  %v158 = vld [vmem:[%s1 + $0x490] sm:$0xff]
  %v159 = vld [vmem:[%s1 + $0x498] sm:$0xff]
  %v160 = vld [vmem:[%s1 + $0x4a0] sm:$0xff]
  %v161 = vld [vmem:[%s1 + $0x4a8] sm:$0xff]
  %v162 = vld [vmem:[%s1 + $0x4b0] sm:$0xff]
  %v163 = vld [vmem:[%s1 + $0x4b8] sm:$0xff]
  %v164 = vld [vmem:[%s1 + $0x4c0] sm:$0xff]
  %v165 = vld [vmem:[%s1 + $0x4c8] sm:$0xff]
  %v166 = vld [vmem:[%s1 + $0x4d0] sm:$0xff]
  %v167 = vld [vmem:[%s1 + $0x4d8] sm:$0xff]
  %v168 = vld [vmem:[%s1 + $0x4e0] sm:$0xff]
  %v169 = vld [vmem:[%s1 + $0x4e8] sm:$0xff]
  %v170 = vld [vmem:[%s1 + $0x4f0] sm:$0xff]
  %v171 = vld [vmem:[%s1 + $0x4f8] sm:$0xff]
  %v172 = vld [vmem:[%s1 + $0x500] sm:$0xff]
  %v173 = vld [vmem:[%s1 + $0x508] sm:$0xff]
  %v174 = vld [vmem:[%s1 + $0x510] sm:$0xff]
  %v175 = vld [vmem:[%s1 + $0x518] sm:$0xff]
  %v176 = vld [vmem:[%s1 + $0x520] sm:$0xff]
  %v177 = vld [vmem:[%s1 + $0x528] sm:$0xff]
  %v178 = vld [vmem:[%s1 + $0x530] sm:$0xff]
  %v179 = vld [vmem:[%s1 + $0x538] sm:$0xff]
  %v180 = vld [vmem:[%s1 + $0x540] sm:$0xff]
  %v181 = vld [vmem:[%s1 + $0x548] sm:$0xff]
  %v182 = vld [vmem:[%s1 + $0x550] sm:$0xff]
  %v183 = vld [vmem:[%s1 + $0x558] sm:$0xff]
  %v184 = vld [vmem:[%s1 + $0x560] sm:$0xff]
  %v185 = vld [vmem:[%s1 + $0x568] sm:$0xff]
  %v186 = vld [vmem:[%s1 + $0x570] sm:$0xff]
  %v187 = vld [vmem:[%s1 + $0x578] sm:$0xff]
  %v188 = vld [vmem:[%s1 + $0x580] sm:$0xff]
  %v189 = vld [vmem:[%s1 + $0x588] sm:$0xff]
  %v190 = vld [vmem:[%s1 + $0x590] sm:$0xff]
  %v191 = vld [vmem:[%s1 + $0x598] sm:$0xff]
  %v192 = vld [vmem:[%s1 + $0x5a0] sm:$0xff]
  %v193 = vld [vmem:[%s1 + $0x5a8] sm:$0xff]
  %v194 = vld [vmem:[%s1 + $0x5b0] sm:$0xff]
  %v195 = vld [vmem:[%s1 + $0x5b8] sm:$0xff]
  %v196 = vld [vmem:[%s1 + $0x5c0] sm:$0xff]
  %v197 = vld [vmem:[%s1 + $0x5c8] sm:$0xff]
  %v198 = vld [vmem:[%s1 + $0x5d0] sm:$0xff]
  %v199 = vld [vmem:[%s1 + $0x5d8] sm:$0xff]
  %v200 = vld [vmem:[%s1 + $0x5e0] sm:$0xff]
  %v201 = vld [vmem:[%s1 + $0x5e8] sm:$0xff]
  %v202 = vld [vmem:[%s1 + $0x5f0] sm:$0xff]
  %v203 = vld [vmem:[%s1 + $0x5f8] sm:$0xff]
  %v204 = vld [vmem:[%s1 + $0x600] sm:$0xff]
  %v205 = vld [vmem:[%s1 + $0x608] sm:$0xff]
  %v206 = vld [vmem:[%s1 + $0x610] sm:$0xff]
  %v207 = vld [vmem:[%s1 + $0x618] sm:$0xff]
  %v208 = vld [vmem:[%s1 + $0x620] sm:$0xff]
  %v209 = vld [vmem:[%s1 + $0x628] sm:$0xff]
  %v210 = vld [vmem:[%s1 + $0x630] sm:$0xff]
  %v211 = vld [vmem:[%s1 + $0x638] sm:$0xff]
  %v212 = vld [vmem:[%s1 + $0x640] sm:$0xff]
  %v213 = vld [vmem:[%s1 + $0x648] sm:$0xff]
  %v214 = vld [vmem:[%s1 + $0x650] sm:$0xff]
  %v215 = vld [vmem:[%s1 + $0x658] sm:$0xff]
  %v216 = vld [vmem:[%s1 + $0x660] sm:$0xff]
  %v217 = vld [vmem:[%s1 + $0x668] sm:$0xff]
  %v218 = vld [vmem:[%s1 + $0x670] sm:$0xff]
  %v219 = vld [vmem:[%s1 + $0x678] sm:$0xff]
  %v220 = vld [vmem:[%s1 + $0x680] sm:$0xff]
  %v221 = vld [vmem:[%s1 + $0x688] sm:$0xff]
  %v222 = vld [vmem:[%s1 + $0x690] sm:$0xff]
  %v223 = vld [vmem:[%s1 + $0x698] sm:$0xff]
  %v224 = vld [vmem:[%s1 + $0x6a0] sm:$0xff]
  %v225 = vld [vmem:[%s1 + $0x6a8] sm:$0xff]
  %v226 = vld [vmem:[%s1 + $0x6b0] sm:$0xff]
  %v227 = vld [vmem:[%s1 + $0x6b8] sm:$0xff]
  %v228 = vld [vmem:[%s1 + $0x6c0] sm:$0xff]
  %v229 = vld [vmem:[%s1 + $0x6c8] sm:$0xff]
  %v230 = vld [vmem:[%s1 + $0x6d0] sm:$0xff]
  %v231 = vld [vmem:[%s1 + $0x6d8] sm:$0xff]
  %v232 = vld [vmem:[%s1 + $0x6e0] sm:$0xff]
  %v233 = vld [vmem:[%s1 + $0x6e8] sm:$0xff]
  %v234 = vld [vmem:[%s1 + $0x6f0] sm:$0xff]
  %v235 = vld [vmem:[%s1 + $0x6f8] sm:$0xff]
  %v236 = vld [vmem:[%s1 + $0x700] sm:$0xff]
  %v237 = vld [vmem:[%s1 + $0x708] sm:$0xff]
  %v238 = vld [vmem:[%s1 + $0x710] sm:$0xff]
  %v239 = vld [vmem:[%s1 + $0x718] sm:$0xff]
  %v240 = vld [vmem:[%s1 + $0x720] sm:$0xff]
  %v241 = vld [vmem:[%s1 + $0x728] sm:$0xff]
  %v242 = vld [vmem:[%s1 + $0x730] sm:$0xff]
  %v243 = vld [vmem:[%s1 + $0x738] sm:$0xff]
  %v244 = vld [vmem:[%s1 + $0x740] sm:$0xff]
  %v245 = vld [vmem:[%s1 + $0x748] sm:$0xff]
  %v246 = vld [vmem:[%s1 + $0x750] sm:$0xff]
  %v247 = vld [vmem:[%s1 + $0x758] sm:$0xff]
  %v248 = vld [vmem:[%s1 + $0x760] sm:$0xff]
  %v249 = vld [vmem:[%s1 + $0x768] sm:$0xff]
  %v250 = vld [vmem:[%s1 + $0x770] sm:$0xff]
  %v251 = vld [vmem:[%s1 + $0x778] sm:$0xff]
  %v252 = vld [vmem:[%s1 + $0x780] sm:$0xff]
  %v253 = vld [vmem:[%s1 + $0x788] sm:$0xff]
  %v254 = vld [vmem:[%s1 + $0x790] sm:$0xff]
  %v255 = vld [vmem:[%s1 + $0x798] sm:$0xff]
  %v256 = vld [vmem:[%s1 + $0x7a0] sm:$0xff]
  %v257 = vld [vmem:[%s1 + $0x7a8] sm:$0xff]
  %v258 = vld [vmem:[%s1 + $0x7b0] sm:$0xff]
  %v259 = vld [vmem:[%s1 + $0x7b8] sm:$0xff]
  %v260 = vld [vmem:[%s1 + $0x7c0] sm:$0xff]
  %v261 = vld [vmem:[%s1 + $0x7c8] sm:$0xff]
  %v262 = vld [vmem:[%s1 + $0x7d0] sm:$0xff]
  %v263 = vld [vmem:[%s1 + $0x7d8] sm:$0xff]
  %v264 = vld [vmem:[%s1 + $0x7e0] sm:$0xff]
  %v265 = vld [vmem:[%s1 + $0x7e8] sm:$0xff]
  %v266 = vld [vmem:[%s1 + $0x7f0] sm:$0xff]
  %v267 = vld [vmem:[%s1 + $0x7f8] sm:$0xff]
  %v269 = vunpack.c.l.b16 %v11
  %v270 = vunpack.c.h.b16 %v11
  %v271 = vpack.c.b16 %v269, %v269
  %v272 = vpack.c.b16 %v270, %v270
  %v531 = vunpack.c.l.b16 %v12
  %v532 = vunpack.c.h.b16 %v12
  %v533 = vunpack.c.l.b16 %v13
  %v534 = vunpack.c.h.b16 %v13
  %v535 = vunpack.c.l.b16 %v14
  %v536 = vunpack.c.h.b16 %v14
  %v537 = vunpack.c.l.b16 %v15
  %v538 = vunpack.c.h.b16 %v15
  %v539 = vunpack.c.l.b16 %v16
  %v540 = vunpack.c.h.b16 %v16
  %v541 = vunpack.c.l.b16 %v17
  %v542 = vunpack.c.h.b16 %v17
  %v543 = vunpack.c.l.b16 %v18
  %v544 = vunpack.c.h.b16 %v18
  %v545 = vunpack.c.l.b16 %v19
  %v546 = vunpack.c.h.b16 %v19
  %v547 = vunpack.c.l.b16 %v20
  %v548 = vunpack.c.h.b16 %v20
  %v549 = vunpack.c.l.b16 %v21
  %v550 = vunpack.c.h.b16 %v21
  %v551 = vunpack.c.l.b16 %v22
  %v552 = vunpack.c.h.b16 %v22
  %v553 = vunpack.c.l.b16 %v23
  %v554 = vunpack.c.h.b16 %v23
  %v555 = vunpack.c.l.b16 %v24
  %v556 = vunpack.c.h.b16 %v24
  %v557 = vunpack.c.l.b16 %v25
  %v558 = vunpack.c.h.b16 %v25
  %v559 = vunpack.c.l.b16 %v26
  %v560 = vunpack.c.h.b16 %v26
  %v561 = vunpack.c.l.b16 %v27
  %v562 = vunpack.c.h.b16 %v27
  %v563 = vunpack.c.l.b16 %v28
  %v564 = vunpack.c.h.b16 %v28
  %v565 = vunpack.c.l.b16 %v29
  %v566 = vunpack.c.h.b16 %v29
  %v567 = vunpack.c.l.b16 %v30
  %v568 = vunpack.c.h.b16 %v30
  %v569 = vunpack.c.l.b16 %v31
  %v570 = vunpack.c.h.b16 %v31
  %v571 = vunpack.c.l.b16 %v32
  %v572 = vunpack.c.h.b16 %v32
  %v573 = vunpack.c.l.b16 %v33
  %v574 = vunpack.c.h.b16 %v33
  %v575 = vunpack.c.l.b16 %v34
  %v576 = vunpack.c.h.b16 %v34
  %v577 = vunpack.c.l.b16 %v35
  %v578 = vunpack.c.h.b16 %v35
  %v579 = vunpack.c.l.b16 %v36
  %v580 = vunpack.c.h.b16 %v36
  %v581 = vunpack.c.l.b16 %v37
  %v582 = vunpack.c.h.b16 %v37
  %v583 = vunpack.c.l.b16 %v38
  %v584 = vunpack.c.h.b16 %v38
  %v585 = vunpack.c.l.b16 %v39
  %v586 = vunpack.c.h.b16 %v39
  %v587 = vunpack.c.l.b16 %v40
  %v588 = vunpack.c.h.b16 %v40
  %v589 = vunpack.c.l.b16 %v41
  %v590 = vunpack.c.h.b16 %v41
  %v591 = vunpack.c.l.b16 %v42
  %v592 = vunpack.c.h.b16 %v42
  %v593 = vunpack.c.l.b16 %v43
  %v594 = vunpack.c.h.b16 %v43
  %v595 = vunpack.c.l.b16 %v44
  %v596 = vunpack.c.h.b16 %v44
  %v597 = vunpack.c.l.b16 %v45
  %v598 = vunpack.c.h.b16 %v45
  %v599 = vunpack.c.l.b16 %v46
  %v600 = vunpack.c.h.b16 %v46
  %v601 = vunpack.c.l.b16 %v47
  %v602 = vunpack.c.h.b16 %v47
  %v603 = vunpack.c.l.b16 %v48
  %v604 = vunpack.c.h.b16 %v48
  %v605 = vunpack.c.l.b16 %v49
  %v606 = vunpack.c.h.b16 %v49
  %v607 = vunpack.c.l.b16 %v50
  %v608 = vunpack.c.h.b16 %v50
  %v609 = vunpack.c.l.b16 %v51
  %v610 = vunpack.c.h.b16 %v51
  %v611 = vunpack.c.l.b16 %v52
  %v612 = vunpack.c.h.b16 %v52
  %v613 = vunpack.c.l.b16 %v53
  %v614 = vunpack.c.h.b16 %v53
  %v615 = vunpack.c.l.b16 %v54
  %v616 = vunpack.c.h.b16 %v54
  %v617 = vunpack.c.l.b16 %v55
  %v618 = vunpack.c.h.b16 %v55
  %v619 = vunpack.c.l.b16 %v56
  %v620 = vunpack.c.h.b16 %v56
  %v621 = vunpack.c.l.b16 %v57
  %v622 = vunpack.c.h.b16 %v57
  %v623 = vunpack.c.l.b16 %v58
  %v624 = vunpack.c.h.b16 %v58
  %v625 = vunpack.c.l.b16 %v59
  %v626 = vunpack.c.h.b16 %v59
  %v627 = vunpack.c.l.b16 %v60
  %v628 = vunpack.c.h.b16 %v60
  %v629 = vunpack.c.l.b16 %v61
  %v630 = vunpack.c.h.b16 %v61
  %v631 = vunpack.c.l.b16 %v62
  %v632 = vunpack.c.h.b16 %v62
  %v633 = vunpack.c.l.b16 %v63
  %v634 = vunpack.c.h.b16 %v63
  %v635 = vunpack.c.l.b16 %v64
  %v636 = vunpack.c.h.b16 %v64
  %v637 = vunpack.c.l.b16 %v65
  %v638 = vunpack.c.h.b16 %v65
  %v639 = vunpack.c.l.b16 %v66
  %v640 = vunpack.c.h.b16 %v66
  %v641 = vunpack.c.l.b16 %v67
  %v642 = vunpack.c.h.b16 %v67
  %v643 = vunpack.c.l.b16 %v68
  %v644 = vunpack.c.h.b16 %v68
  %v645 = vunpack.c.l.b16 %v69
  %v646 = vunpack.c.h.b16 %v69
  %v647 = vunpack.c.l.b16 %v70
  %v648 = vunpack.c.h.b16 %v70
  %v649 = vunpack.c.l.b16 %v71
  %v650 = vunpack.c.h.b16 %v71
  %v651 = vunpack.c.l.b16 %v72
  %v652 = vunpack.c.h.b16 %v72
  %v653 = vunpack.c.l.b16 %v73
  %v654 = vunpack.c.h.b16 %v73
  %v655 = vunpack.c.l.b16 %v74
  %v656 = vunpack.c.h.b16 %v74
  %v657 = vunpack.c.l.b16 %v75
  %v658 = vunpack.c.h.b16 %v75
  %v659 = vunpack.c.l.b16 %v76
  %v660 = vunpack.c.h.b16 %v76
  %v661 = vunpack.c.l.b16 %v77
  %v662 = vunpack.c.h.b16 %v77
  %v663 = vunpack.c.l.b16 %v78
  %v664 = vunpack.c.h.b16 %v78
  %v665 = vunpack.c.l.b16 %v79
  %v666 = vunpack.c.h.b16 %v79
  %v667 = vunpack.c.l.b16 %v80
  %v668 = vunpack.c.h.b16 %v80
  %v669 = vunpack.c.l.b16 %v81
  %v670 = vunpack.c.h.b16 %v81
  %v671 = vunpack.c.l.b16 %v82
  %v672 = vunpack.c.h.b16 %v82
  %v673 = vunpack.c.l.b16 %v83
  %v674 = vunpack.c.h.b16 %v83
  %v675 = vunpack.c.l.b16 %v84
  %v676 = vunpack.c.h.b16 %v84
  %v677 = vunpack.c.l.b16 %v85
  %v678 = vunpack.c.h.b16 %v85
  %v679 = vunpack.c.l.b16 %v86
  %v680 = vunpack.c.h.b16 %v86
  %v681 = vunpack.c.l.b16 %v87
  %v682 = vunpack.c.h.b16 %v87
  %v683 = vunpack.c.l.b16 %v88
  %v684 = vunpack.c.h.b16 %v88
  %v685 = vunpack.c.l.b16 %v89
  %v686 = vunpack.c.h.b16 %v89
  %v687 = vunpack.c.l.b16 %v90
  %v688 = vunpack.c.h.b16 %v90
  %v689 = vunpack.c.l.b16 %v91
  %v690 = vunpack.c.h.b16 %v91
  %v691 = vunpack.c.l.b16 %v92
  %v692 = vunpack.c.h.b16 %v92
  %v693 = vunpack.c.l.b16 %v93
  %v694 = vunpack.c.h.b16 %v93
  %v695 = vunpack.c.l.b16 %v94
  %v696 = vunpack.c.h.b16 %v94
  %v697 = vunpack.c.l.b16 %v95
  %v698 = vunpack.c.h.b16 %v95
  %v699 = vunpack.c.l.b16 %v96
  %v700 = vunpack.c.h.b16 %v96
  %v701 = vunpack.c.l.b16 %v97
  %v702 = vunpack.c.h.b16 %v97
  %v703 = vunpack.c.l.b16 %v98
  %v704 = vunpack.c.h.b16 %v98
  %v705 = vunpack.c.l.b16 %v99
  %v706 = vunpack.c.h.b16 %v99
  %v707 = vunpack.c.l.b16 %v100
  %v708 = vunpack.c.h.b16 %v100
  %v709 = vunpack.c.l.b16 %v101
  %v710 = vunpack.c.h.b16 %v101
  %v711 = vunpack.c.l.b16 %v102
  %v712 = vunpack.c.h.b16 %v102
  %v713 = vunpack.c.l.b16 %v103
  %v714 = vunpack.c.h.b16 %v103
  %v715 = vunpack.c.l.b16 %v104
  %v716 = vunpack.c.h.b16 %v104
  %v717 = vunpack.c.l.b16 %v105
  %v718 = vunpack.c.h.b16 %v105
  %v719 = vunpack.c.l.b16 %v106
  %v720 = vunpack.c.h.b16 %v106
  %v721 = vunpack.c.l.b16 %v107
  %v722 = vunpack.c.h.b16 %v107
  %v723 = vunpack.c.l.b16 %v108
  %v724 = vunpack.c.h.b16 %v108
  %v725 = vunpack.c.l.b16 %v109
  %v726 = vunpack.c.h.b16 %v109
  %v727 = vunpack.c.l.b16 %v110
  %v728 = vunpack.c.h.b16 %v110
  %v729 = vunpack.c.l.b16 %v111
  %v730 = vunpack.c.h.b16 %v111
  %v731 = vunpack.c.l.b16 %v112
  %v732 = vunpack.c.h.b16 %v112
  %v733 = vunpack.c.l.b16 %v113
  %v734 = vunpack.c.h.b16 %v113
  %v735 = vunpack.c.l.b16 %v114
  %v736 = vunpack.c.h.b16 %v114
  %v737 = vunpack.c.l.b16 %v115
  %v738 = vunpack.c.h.b16 %v115
  %v739 = vunpack.c.l.b16 %v116
  %v740 = vunpack.c.h.b16 %v116
  %v741 = vunpack.c.l.b16 %v117
  %v742 = vunpack.c.h.b16 %v117
  %v743 = vunpack.c.l.b16 %v118
  %v744 = vunpack.c.h.b16 %v118
  %v745 = vunpack.c.l.b16 %v119
  %v746 = vunpack.c.h.b16 %v119
  %v747 = vunpack.c.l.b16 %v120
  %v748 = vunpack.c.h.b16 %v120
  %v749 = vunpack.c.l.b16 %v121
  %v750 = vunpack.c.h.b16 %v121
  %v751 = vunpack.c.l.b16 %v122
  %v752 = vunpack.c.h.b16 %v122
  %v753 = vunpack.c.l.b16 %v123
  %v754 = vunpack.c.h.b16 %v123
  %v755 = vunpack.c.l.b16 %v124
  %v756 = vunpack.c.h.b16 %v124
  %v757 = vunpack.c.l.b16 %v125
  %v758 = vunpack.c.h.b16 %v125
  %v759 = vunpack.c.l.b16 %v126
  %v760 = vunpack.c.h.b16 %v126
  %v761 = vunpack.c.l.b16 %v127
  %v762 = vunpack.c.h.b16 %v127
  %v763 = vunpack.c.l.b16 %v128
  %v764 = vunpack.c.h.b16 %v128
  %v765 = vunpack.c.l.b16 %v129
  %v766 = vunpack.c.h.b16 %v129
  %v767 = vunpack.c.l.b16 %v130
  %v768 = vunpack.c.h.b16 %v130
  %v769 = vunpack.c.l.b16 %v131
  %v770 = vunpack.c.h.b16 %v131
  %v771 = vunpack.c.l.b16 %v132
  %v772 = vunpack.c.h.b16 %v132
  %v773 = vunpack.c.l.b16 %v133
  %v774 = vunpack.c.h.b16 %v133
  %v775 = vunpack.c.l.b16 %v134
  %v776 = vunpack.c.h.b16 %v134
  %v777 = vunpack.c.l.b16 %v135
  %v778 = vunpack.c.h.b16 %v135
  %v779 = vunpack.c.l.b16 %v136
  %v780 = vunpack.c.h.b16 %v136
  %v781 = vunpack.c.l.b16 %v137
  %v782 = vunpack.c.h.b16 %v137
  %v783 = vunpack.c.l.b16 %v138
  %v784 = vunpack.c.h.b16 %v138
  %v785 = vunpack.c.l.b16 %v139
  %v786 = vunpack.c.h.b16 %v139
  %v787 = vunpack.c.l.b16 %v140
  %v788 = vunpack.c.h.b16 %v140
  %v789 = vunpack.c.l.b16 %v141
  %v790 = vunpack.c.h.b16 %v141
  %v791 = vunpack.c.l.b16 %v142
  %v792 = vunpack.c.h.b16 %v142
  %v793 = vunpack.c.l.b16 %v143
  %v794 = vunpack.c.h.b16 %v143
  %v795 = vunpack.c.l.b16 %v144
  %v796 = vunpack.c.h.b16 %v144
  %v797 = vunpack.c.l.b16 %v145
  %v798 = vunpack.c.h.b16 %v145
  %v799 = vunpack.c.l.b16 %v146
  %v800 = vunpack.c.h.b16 %v146
  %v801 = vunpack.c.l.b16 %v147
  %v802 = vunpack.c.h.b16 %v147
  %v803 = vunpack.c.l.b16 %v148
  %v804 = vunpack.c.h.b16 %v148
  %v805 = vunpack.c.l.b16 %v149
  %v806 = vunpack.c.h.b16 %v149
  %v807 = vunpack.c.l.b16 %v150
  %v808 = vunpack.c.h.b16 %v150
  %v809 = vunpack.c.l.b16 %v151
  %v810 = vunpack.c.h.b16 %v151
  %v811 = vunpack.c.l.b16 %v152
  %v812 = vunpack.c.h.b16 %v152
  %v813 = vunpack.c.l.b16 %v153
  %v814 = vunpack.c.h.b16 %v153
  %v815 = vunpack.c.l.b16 %v154
  %v816 = vunpack.c.h.b16 %v154
  %v817 = vunpack.c.l.b16 %v155
  %v818 = vunpack.c.h.b16 %v155
  %v819 = vunpack.c.l.b16 %v156
  %v820 = vunpack.c.h.b16 %v156
  %v821 = vunpack.c.l.b16 %v157
  %v822 = vunpack.c.h.b16 %v157
  %v823 = vunpack.c.l.b16 %v158
  %v824 = vunpack.c.h.b16 %v158
  %v825 = vunpack.c.l.b16 %v159
  %v826 = vunpack.c.h.b16 %v159
  %v827 = vunpack.c.l.b16 %v160
  %v828 = vunpack.c.h.b16 %v160
  %v829 = vunpack.c.l.b16 %v161
  %v830 = vunpack.c.h.b16 %v161
  %v831 = vunpack.c.l.b16 %v162
  %v832 = vunpack.c.h.b16 %v162
  %v833 = vunpack.c.l.b16 %v163
  %v834 = vunpack.c.h.b16 %v163
  %v835 = vunpack.c.l.b16 %v164
  %v836 = vunpack.c.h.b16 %v164
  %v837 = vunpack.c.l.b16 %v165
  %v838 = vunpack.c.h.b16 %v165
  %v839 = vunpack.c.l.b16 %v166
  %v840 = vunpack.c.h.b16 %v166
  %v841 = vunpack.c.l.b16 %v167
  %v842 = vunpack.c.h.b16 %v167
  %v843 = vunpack.c.l.b16 %v168
  %v844 = vunpack.c.h.b16 %v168
  %v845 = vunpack.c.l.b16 %v169
  %v846 = vunpack.c.h.b16 %v169
  %v847 = vunpack.c.l.b16 %v170
  %v848 = vunpack.c.h.b16 %v170
  %v849 = vunpack.c.l.b16 %v171
  %v850 = vunpack.c.h.b16 %v171
  %v851 = vunpack.c.l.b16 %v172
  %v852 = vunpack.c.h.b16 %v172
  %v853 = vunpack.c.l.b16 %v173
  %v854 = vunpack.c.h.b16 %v173
  %v855 = vunpack.c.l.b16 %v174
  %v856 = vunpack.c.h.b16 %v174
  %v857 = vunpack.c.l.b16 %v175
  %v858 = vunpack.c.h.b16 %v175
  %v859 = vunpack.c.l.b16 %v176
  %v860 = vunpack.c.h.b16 %v176
  %v861 = vunpack.c.l.b16 %v177
  %v862 = vunpack.c.h.b16 %v177
  %v863 = vunpack.c.l.b16 %v178
  %v864 = vunpack.c.h.b16 %v178
  %v865 = vunpack.c.l.b16 %v179
  %v866 = vunpack.c.h.b16 %v179
  %v867 = vunpack.c.l.b16 %v180
  %v868 = vunpack.c.h.b16 %v180
  %v869 = vunpack.c.l.b16 %v181
  %v870 = vunpack.c.h.b16 %v181
  %v871 = vunpack.c.l.b16 %v182
  %v872 = vunpack.c.h.b16 %v182
  %v873 = vunpack.c.l.b16 %v183
  %v874 = vunpack.c.h.b16 %v183
  %v875 = vunpack.c.l.b16 %v184
  %v876 = vunpack.c.h.b16 %v184
  %v877 = vunpack.c.l.b16 %v185
  %v878 = vunpack.c.h.b16 %v185
  %v879 = vunpack.c.l.b16 %v186
  %v880 = vunpack.c.h.b16 %v186
  %v881 = vunpack.c.l.b16 %v187
  %v882 = vunpack.c.h.b16 %v187
  %v883 = vunpack.c.l.b16 %v188
  %v884 = vunpack.c.h.b16 %v188
  %v885 = vunpack.c.l.b16 %v189
  %v886 = vunpack.c.h.b16 %v189
  %v887 = vunpack.c.l.b16 %v190
  %v888 = vunpack.c.h.b16 %v190
  %v889 = vunpack.c.l.b16 %v191
  %v890 = vunpack.c.h.b16 %v191
  %v891 = vunpack.c.l.b16 %v192
  %v892 = vunpack.c.h.b16 %v192
  %v893 = vunpack.c.l.b16 %v193
  %v894 = vunpack.c.h.b16 %v193
  %v895 = vunpack.c.l.b16 %v194
  %v896 = vunpack.c.h.b16 %v194
  %v897 = vunpack.c.l.b16 %v195
  %v898 = vunpack.c.h.b16 %v195
  %v899 = vunpack.c.l.b16 %v196
  %v900 = vunpack.c.h.b16 %v196
  %v901 = vunpack.c.l.b16 %v197
  %v902 = vunpack.c.h.b16 %v197
  %v903 = vunpack.c.l.b16 %v198
  %v904 = vunpack.c.h.b16 %v198
  %v905 = vunpack.c.l.b16 %v199
  %v906 = vunpack.c.h.b16 %v199
  %v907 = vunpack.c.l.b16 %v200
  %v908 = vunpack.c.h.b16 %v200
  %v909 = vunpack.c.l.b16 %v201
  %v910 = vunpack.c.h.b16 %v201
  %v911 = vunpack.c.l.b16 %v202
  %v912 = vunpack.c.h.b16 %v202
  %v913 = vunpack.c.l.b16 %v203
  %v914 = vunpack.c.h.b16 %v203
  %v915 = vunpack.c.l.b16 %v204
  %v916 = vunpack.c.h.b16 %v204
  %v917 = vunpack.c.l.b16 %v205
  %v918 = vunpack.c.h.b16 %v205
  %v919 = vunpack.c.l.b16 %v206
  %v920 = vunpack.c.h.b16 %v206
  %v921 = vunpack.c.l.b16 %v207
  %v922 = vunpack.c.h.b16 %v207
  %v923 = vunpack.c.l.b16 %v208
  %v924 = vunpack.c.h.b16 %v208
  %v925 = vunpack.c.l.b16 %v209
  %v926 = vunpack.c.h.b16 %v209
  %v927 = vunpack.c.l.b16 %v210
  %v928 = vunpack.c.h.b16 %v210
  %v929 = vunpack.c.l.b16 %v211
  %v930 = vunpack.c.h.b16 %v211
  %v931 = vunpack.c.l.b16 %v212
  %v932 = vunpack.c.h.b16 %v212
  %v933 = vunpack.c.l.b16 %v213
  %v934 = vunpack.c.h.b16 %v213
  %v935 = vunpack.c.l.b16 %v214
  %v936 = vunpack.c.h.b16 %v214
  %v937 = vunpack.c.l.b16 %v215
  %v938 = vunpack.c.h.b16 %v215
  %v939 = vunpack.c.l.b16 %v216
  %v940 = vunpack.c.h.b16 %v216
  %v941 = vunpack.c.l.b16 %v217
  %v942 = vunpack.c.h.b16 %v217
  %v943 = vunpack.c.l.b16 %v218
  %v944 = vunpack.c.h.b16 %v218
  %v945 = vunpack.c.l.b16 %v219
  %v946 = vunpack.c.h.b16 %v219
  %v947 = vunpack.c.l.b16 %v220
  %v948 = vunpack.c.h.b16 %v220
  %v949 = vunpack.c.l.b16 %v221
  %v950 = vunpack.c.h.b16 %v221
  %v951 = vunpack.c.l.b16 %v222
  %v952 = vunpack.c.h.b16 %v222
  %v953 = vunpack.c.l.b16 %v223
  %v954 = vunpack.c.h.b16 %v223
  %v955 = vunpack.c.l.b16 %v224
  %v956 = vunpack.c.h.b16 %v224
  %v957 = vunpack.c.l.b16 %v225
  %v958 = vunpack.c.h.b16 %v225
  %v959 = vunpack.c.l.b16 %v226
  %v960 = vunpack.c.h.b16 %v226
  %v961 = vunpack.c.l.b16 %v227
  %v962 = vunpack.c.h.b16 %v227
  %v963 = vunpack.c.l.b16 %v228
  %v964 = vunpack.c.h.b16 %v228
  %v965 = vunpack.c.l.b16 %v229
  %v966 = vunpack.c.h.b16 %v229
  %v967 = vunpack.c.l.b16 %v230
  %v968 = vunpack.c.h.b16 %v230
  %v969 = vunpack.c.l.b16 %v231
  %v970 = vunpack.c.h.b16 %v231
  %v971 = vunpack.c.l.b16 %v232
  %v972 = vunpack.c.h.b16 %v232
  %v973 = vunpack.c.l.b16 %v233
  %v974 = vunpack.c.h.b16 %v233
  %v975 = vunpack.c.l.b16 %v234
  %v976 = vunpack.c.h.b16 %v234
  %v977 = vunpack.c.l.b16 %v235
  %v978 = vunpack.c.h.b16 %v235
  %v979 = vunpack.c.l.b16 %v236
  %v980 = vunpack.c.h.b16 %v236
  %v981 = vunpack.c.l.b16 %v237
  %v982 = vunpack.c.h.b16 %v237
  %v983 = vunpack.c.l.b16 %v238
  %v984 = vunpack.c.h.b16 %v238
  %v985 = vunpack.c.l.b16 %v239
  %v986 = vunpack.c.h.b16 %v239
  %v987 = vunpack.c.l.b16 %v240
  %v988 = vunpack.c.h.b16 %v240
  %v989 = vunpack.c.l.b16 %v241
  %v990 = vunpack.c.h.b16 %v241
  %v991 = vunpack.c.l.b16 %v242
  %v992 = vunpack.c.h.b16 %v242
  %v993 = vunpack.c.l.b16 %v243
  %v994 = vunpack.c.h.b16 %v243
  %v995 = vunpack.c.l.b16 %v244
  %v996 = vunpack.c.h.b16 %v244
  %v997 = vunpack.c.l.b16 %v245
  %v998 = vunpack.c.h.b16 %v245
  %v999 = vunpack.c.l.b16 %v246
  %v1000 = vunpack.c.h.b16 %v246
  %v1001 = vunpack.c.l.b16 %v247
  %v1002 = vunpack.c.h.b16 %v247
  %v1003 = vunpack.c.l.b16 %v248
  %v1004 = vunpack.c.h.b16 %v248
  %v1005 = vunpack.c.l.b16 %v249
  %v1006 = vunpack.c.h.b16 %v249
  %v1007 = vunpack.c.l.b16 %v250
  %v1008 = vunpack.c.h.b16 %v250
  %v1009 = vunpack.c.l.b16 %v251
  %v1010 = vunpack.c.h.b16 %v251
  %v1011 = vunpack.c.l.b16 %v252
  %v1012 = vunpack.c.h.b16 %v252
  %v1013 = vunpack.c.l.b16 %v253
  %v1014 = vunpack.c.h.b16 %v253
  %v1015 = vunpack.c.l.b16 %v254
  %v1016 = vunpack.c.h.b16 %v254
  %v1017 = vunpack.c.l.b16 %v255
  %v1018 = vunpack.c.h.b16 %v255
  %v1019 = vunpack.c.l.b16 %v256
  %v1020 = vunpack.c.h.b16 %v256
  %v1021 = vunpack.c.l.b16 %v257
  %v1022 = vunpack.c.h.b16 %v257
  %v1023 = vunpack.c.l.b16 %v258
  %v1024 = vunpack.c.h.b16 %v258
  %v1025 = vunpack.c.l.b16 %v259
  %v1026 = vunpack.c.h.b16 %v259
  %v1027 = vunpack.c.l.b16 %v260
  %v1028 = vunpack.c.h.b16 %v260
  %v1029 = vunpack.c.l.b16 %v261
  %v1030 = vunpack.c.h.b16 %v261
  %v1031 = vunpack.c.l.b16 %v262
  %v1032 = vunpack.c.h.b16 %v262
  %v1033 = vunpack.c.l.b16 %v263
  %v1034 = vunpack.c.h.b16 %v263
  %v1035 = vunpack.c.l.b16 %v264
  %v1036 = vunpack.c.h.b16 %v264
  %v1037 = vunpack.c.l.b16 %v265
  %v1038 = vunpack.c.h.b16 %v265
  %v1039 = vunpack.c.l.b16 %v266
  %v1040 = vunpack.c.h.b16 %v266
  %v1041 = vunpack.c.l.b16 %v267
  %v1042 = vunpack.c.h.b16 %v267
  %v1043 = vpack.c.b16 %v547, %v531
  %v1044 = vpack.c.b16 %v548, %v532
  %v1045 = vpack.c.b16 %v549, %v533
  %v1046 = vpack.c.b16 %v550, %v534
  %v1047 = vpack.c.b16 %v551, %v535
  %v1048 = vpack.c.b16 %v552, %v536
  %v1049 = vpack.c.b16 %v553, %v537
  %v1050 = vpack.c.b16 %v554, %v538
  %v1051 = vpack.c.b16 %v555, %v539
  %v1052 = vpack.c.b16 %v556, %v540
  %v1053 = vpack.c.b16 %v557, %v541
  %v1054 = vpack.c.b16 %v558, %v542
  %v1055 = vpack.c.b16 %v559, %v543
  %v1056 = vpack.c.b16 %v560, %v544
  %v1057 = vpack.c.b16 %v561, %v545
  %v1058 = vpack.c.b16 %v562, %v546
  %v1059 = vpack.c.b16 %v579, %v563
  %v1060 = vpack.c.b16 %v580, %v564
  %v1061 = vpack.c.b16 %v581, %v565
  %v1062 = vpack.c.b16 %v582, %v566
  %v1063 = vpack.c.b16 %v583, %v567
  %v1064 = vpack.c.b16 %v584, %v568
  %v1065 = vpack.c.b16 %v585, %v569
  %v1066 = vpack.c.b16 %v586, %v570
  %v1067 = vpack.c.b16 %v587, %v571
  %v1068 = vpack.c.b16 %v588, %v572
  %v1069 = vpack.c.b16 %v589, %v573
  %v1070 = vpack.c.b16 %v590, %v574
  %v1071 = vpack.c.b16 %v591, %v575
  %v1072 = vpack.c.b16 %v592, %v576
  %v1073 = vpack.c.b16 %v593, %v577
  %v1074 = vpack.c.b16 %v594, %v578
  %v1075 = vpack.c.b16 %v611, %v595
  %v1076 = vpack.c.b16 %v612, %v596
  %v1077 = vpack.c.b16 %v613, %v597
  %v1078 = vpack.c.b16 %v614, %v598
  %v1079 = vpack.c.b16 %v615, %v599
  %v1080 = vpack.c.b16 %v616, %v600
  %v1081 = vpack.c.b16 %v617, %v601
  %v1082 = vpack.c.b16 %v618, %v602
  %v1083 = vpack.c.b16 %v619, %v603
  %v1084 = vpack.c.b16 %v620, %v604
  %v1085 = vpack.c.b16 %v621, %v605
  %v1086 = vpack.c.b16 %v622, %v606
  %v1087 = vpack.c.b16 %v623, %v607
  %v1088 = vpack.c.b16 %v624, %v608
  %v1089 = vpack.c.b16 %v625, %v609
  %v1090 = vpack.c.b16 %v626, %v610
  %v1091 = vpack.c.b16 %v643, %v627
  %v1092 = vpack.c.b16 %v644, %v628
  %v1093 = vpack.c.b16 %v645, %v629
  %v1094 = vpack.c.b16 %v646, %v630
  %v1095 = vpack.c.b16 %v647, %v631
  %v1096 = vpack.c.b16 %v648, %v632
  %v1097 = vpack.c.b16 %v649, %v633
  %v1098 = vpack.c.b16 %v650, %v634
  %v1099 = vpack.c.b16 %v651, %v635
  %v1100 = vpack.c.b16 %v652, %v636
  %v1101 = vpack.c.b16 %v653, %v637
  %v1102 = vpack.c.b16 %v654, %v638
  %v1103 = vpack.c.b16 %v655, %v639
  %v1104 = vpack.c.b16 %v656, %v640
  %v1105 = vpack.c.b16 %v657, %v641
  %v1106 = vpack.c.b16 %v658, %v642
  %v1107 = vpack.c.b16 %v675, %v659
  %v1108 = vpack.c.b16 %v676, %v660
  %v1109 = vpack.c.b16 %v677, %v661
  %v1110 = vpack.c.b16 %v678, %v662
  %v1111 = vpack.c.b16 %v679, %v663
  %v1112 = vpack.c.b16 %v680, %v664
  %v1113 = vpack.c.b16 %v681, %v665
  %v1114 = vpack.c.b16 %v682, %v666
  %v1115 = vpack.c.b16 %v683, %v667
  %v1116 = vpack.c.b16 %v684, %v668
  %v1117 = vpack.c.b16 %v685, %v669
  %v1118 = vpack.c.b16 %v686, %v670
  %v1119 = vpack.c.b16 %v687, %v671
  %v1120 = vpack.c.b16 %v688, %v672
  %v1121 = vpack.c.b16 %v689, %v673
  %v1122 = vpack.c.b16 %v690, %v674
  %v1123 = vpack.c.b16 %v707, %v691
  %v1124 = vpack.c.b16 %v708, %v692
  %v1125 = vpack.c.b16 %v709, %v693
  %v1126 = vpack.c.b16 %v710, %v694
  %v1127 = vpack.c.b16 %v711, %v695
  %v1128 = vpack.c.b16 %v712, %v696
  %v1129 = vpack.c.b16 %v713, %v697
  %v1130 = vpack.c.b16 %v714, %v698
  %v1131 = vpack.c.b16 %v715, %v699
  %v1132 = vpack.c.b16 %v716, %v700
  %v1133 = vpack.c.b16 %v717, %v701
  %v1134 = vpack.c.b16 %v718, %v702
  %v1135 = vpack.c.b16 %v719, %v703
  %v1136 = vpack.c.b16 %v720, %v704
  %v1137 = vpack.c.b16 %v721, %v705
  %v1138 = vpack.c.b16 %v722, %v706
  %v1139 = vpack.c.b16 %v739, %v723
  %v1140 = vpack.c.b16 %v740, %v724
  %v1141 = vpack.c.b16 %v741, %v725
  %v1142 = vpack.c.b16 %v742, %v726
  %v1143 = vpack.c.b16 %v743, %v727
  %v1144 = vpack.c.b16 %v744, %v728
  %v1145 = vpack.c.b16 %v745, %v729
  %v1146 = vpack.c.b16 %v746, %v730
  %v1147 = vpack.c.b16 %v747, %v731
  %v1148 = vpack.c.b16 %v748, %v732
  %v1149 = vpack.c.b16 %v749, %v733
  %v1150 = vpack.c.b16 %v750, %v734
  %v1151 = vpack.c.b16 %v751, %v735
  %v1152 = vpack.c.b16 %v752, %v736
  %v1153 = vpack.c.b16 %v753, %v737
  %v1154 = vpack.c.b16 %v754, %v738
  %v1155 = vpack.c.b16 %v771, %v755
  %v1156 = vpack.c.b16 %v772, %v756
  %v1157 = vpack.c.b16 %v773, %v757
  %v1158 = vpack.c.b16 %v774, %v758
  %v1159 = vpack.c.b16 %v775, %v759
  %v1160 = vpack.c.b16 %v776, %v760
  %v1161 = vpack.c.b16 %v777, %v761
  %v1162 = vpack.c.b16 %v778, %v762
  %v1163 = vpack.c.b16 %v779, %v763
  %v1164 = vpack.c.b16 %v780, %v764
  %v1165 = vpack.c.b16 %v781, %v765
  %v1166 = vpack.c.b16 %v782, %v766
  %v1167 = vpack.c.b16 %v783, %v767
  %v1168 = vpack.c.b16 %v784, %v768
  %v1169 = vpack.c.b16 %v785, %v769
  %v1170 = vpack.c.b16 %v786, %v770
  %v1171 = vpack.c.b16 %v803, %v787
  %v1172 = vpack.c.b16 %v804, %v788
  %v1173 = vpack.c.b16 %v805, %v789
  %v1174 = vpack.c.b16 %v806, %v790
  %v1175 = vpack.c.b16 %v807, %v791
  %v1176 = vpack.c.b16 %v808, %v792
  %v1177 = vpack.c.b16 %v809, %v793
  %v1178 = vpack.c.b16 %v810, %v794
  %v1179 = vpack.c.b16 %v811, %v795
  %v1180 = vpack.c.b16 %v812, %v796
  %v1181 = vpack.c.b16 %v813, %v797
  %v1182 = vpack.c.b16 %v814, %v798
  %v1183 = vpack.c.b16 %v815, %v799
  %v1184 = vpack.c.b16 %v816, %v800
  %v1185 = vpack.c.b16 %v817, %v801
  %v1186 = vpack.c.b16 %v818, %v802
  %v1187 = vpack.c.b16 %v835, %v819
  %v1188 = vpack.c.b16 %v836, %v820
  %v1189 = vpack.c.b16 %v837, %v821
  %v1190 = vpack.c.b16 %v838, %v822
  %v1191 = vpack.c.b16 %v839, %v823
  %v1192 = vpack.c.b16 %v840, %v824
  %v1193 = vpack.c.b16 %v841, %v825
  %v1194 = vpack.c.b16 %v842, %v826
  %v1195 = vpack.c.b16 %v843, %v827
  %v1196 = vpack.c.b16 %v844, %v828
  %v1197 = vpack.c.b16 %v845, %v829
  %v1198 = vpack.c.b16 %v846, %v830
  %v1199 = vpack.c.b16 %v847, %v831
  %v1200 = vpack.c.b16 %v848, %v832
  %v1201 = vpack.c.b16 %v849, %v833
  %v1202 = vpack.c.b16 %v850, %v834
  %v1203 = vpack.c.b16 %v867, %v851
  %v1204 = vpack.c.b16 %v868, %v852
  %v1205 = vpack.c.b16 %v869, %v853
  %v1206 = vpack.c.b16 %v870, %v854
  %v1207 = vpack.c.b16 %v871, %v855
  %v1208 = vpack.c.b16 %v872, %v856
  %v1209 = vpack.c.b16 %v873, %v857
  %v1210 = vpack.c.b16 %v874, %v858
  %v1211 = vpack.c.b16 %v875, %v859
  %v1212 = vpack.c.b16 %v876, %v860
  %v1213 = vpack.c.b16 %v877, %v861
  %v1214 = vpack.c.b16 %v878, %v862
  %v1215 = vpack.c.b16 %v879, %v863
  %v1216 = vpack.c.b16 %v880, %v864
  %v1217 = vpack.c.b16 %v881, %v865
  %v1218 = vpack.c.b16 %v882, %v866
  %v1219 = vpack.c.b16 %v899, %v883
  %v1220 = vpack.c.b16 %v900, %v884
  %v1221 = vpack.c.b16 %v901, %v885
  %v1222 = vpack.c.b16 %v902, %v886
  %v1223 = vpack.c.b16 %v903, %v887
  %v1224 = vpack.c.b16 %v904, %v888
  %v1225 = vpack.c.b16 %v905, %v889
  %v1226 = vpack.c.b16 %v906, %v890
  %v1227 = vpack.c.b16 %v907, %v891
  %v1228 = vpack.c.b16 %v908, %v892
  %v1229 = vpack.c.b16 %v909, %v893
  %v1230 = vpack.c.b16 %v910, %v894
  %v1231 = vpack.c.b16 %v911, %v895
  %v1232 = vpack.c.b16 %v912, %v896
  %v1233 = vpack.c.b16 %v913, %v897
  %v1234 = vpack.c.b16 %v914, %v898
  %v1235 = vpack.c.b16 %v931, %v915
  %v1236 = vpack.c.b16 %v932, %v916
  %v1237 = vpack.c.b16 %v933, %v917
  %v1238 = vpack.c.b16 %v934, %v918
  %v1239 = vpack.c.b16 %v935, %v919
  %v1240 = vpack.c.b16 %v936, %v920
  %v1241 = vpack.c.b16 %v937, %v921
  %v1242 = vpack.c.b16 %v938, %v922
  %v1243 = vpack.c.b16 %v939, %v923
  %v1244 = vpack.c.b16 %v940, %v924
  %v1245 = vpack.c.b16 %v941, %v925
  %v1246 = vpack.c.b16 %v942, %v926
  %v1247 = vpack.c.b16 %v943, %v927
  %v1248 = vpack.c.b16 %v944, %v928
  %v1249 = vpack.c.b16 %v945, %v929
  %v1250 = vpack.c.b16 %v946, %v930
  %v1251 = vpack.c.b16 %v963, %v947
  %v1252 = vpack.c.b16 %v964, %v948
  %v1253 = vpack.c.b16 %v965, %v949
  %v1254 = vpack.c.b16 %v966, %v950
  %v1255 = vpack.c.b16 %v967, %v951
  %v1256 = vpack.c.b16 %v968, %v952
  %v1257 = vpack.c.b16 %v969, %v953
  %v1258 = vpack.c.b16 %v970, %v954
  %v1259 = vpack.c.b16 %v971, %v955
  %v1260 = vpack.c.b16 %v972, %v956
  %v1261 = vpack.c.b16 %v973, %v957
  %v1262 = vpack.c.b16 %v974, %v958
  %v1263 = vpack.c.b16 %v975, %v959
  %v1264 = vpack.c.b16 %v976, %v960
  %v1265 = vpack.c.b16 %v977, %v961
  %v1266 = vpack.c.b16 %v978, %v962
  %v1267 = vpack.c.b16 %v995, %v979
  %v1268 = vpack.c.b16 %v996, %v980
  %v1269 = vpack.c.b16 %v997, %v981
  %v1270 = vpack.c.b16 %v998, %v982
  %v1271 = vpack.c.b16 %v999, %v983
  %v1272 = vpack.c.b16 %v1000, %v984
  %v1273 = vpack.c.b16 %v1001, %v985
  %v1274 = vpack.c.b16 %v1002, %v986
  %v1275 = vpack.c.b16 %v1003, %v987
  %v1276 = vpack.c.b16 %v1004, %v988
  %v1277 = vpack.c.b16 %v1005, %v989
  %v1278 = vpack.c.b16 %v1006, %v990
  %v1279 = vpack.c.b16 %v1007, %v991
  %v1280 = vpack.c.b16 %v1008, %v992
  %v1281 = vpack.c.b16 %v1009, %v993
  %v1282 = vpack.c.b16 %v1010, %v994
  %v1283 = vpack.c.b16 %v1027, %v1011
  %v1284 = vpack.c.b16 %v1028, %v1012
  %v1285 = vpack.c.b16 %v1029, %v1013
  %v1286 = vpack.c.b16 %v1030, %v1014
  %v1287 = vpack.c.b16 %v1031, %v1015
  %v1288 = vpack.c.b16 %v1032, %v1016
  %v1289 = vpack.c.b16 %v1033, %v1017
  %v1290 = vpack.c.b16 %v1034, %v1018
  %v1291 = vpack.c.b16 %v1035, %v1019
  %v1292 = vpack.c.b16 %v1036, %v1020
  %v1293 = vpack.c.b16 %v1037, %v1021
  %v1294 = vpack.c.b16 %v1038, %v1022
  %v1295 = vpack.c.b16 %v1039, %v1023
  %v1296 = vpack.c.b16 %v1040, %v1024
  %v1297 = vpack.c.b16 %v1041, %v1025
  %v1298 = vpack.c.b16 %v1042, %v1026
  %1555 = vmatprep.subr.bf16.mxu0 %v1044
  %1556 = vmatpush1.bf16.msra.mxu0 %v1043
  %1557 = vmatprep.subr.bf16.mxu0 %v1060
  %1558 = vmatpush1.bf16.msra.mxu0 %v1059
  %1559 = vmatprep.subr.bf16.mxu0 %v1076
  %1560 = vmatpush1.bf16.msra.mxu0 %v1075
  %1561 = vmatprep.subr.bf16.mxu0 %v1092
  %1562 = vmatpush1.bf16.msra.mxu0 %v1091
  %1563 = vmatprep.subr.bf16.mxu0 %v1108
  %1564 = vmatpush1.bf16.msra.mxu0 %v1107
  %1565 = vmatprep.subr.bf16.mxu0 %v1124
  %1566 = vmatpush1.bf16.msra.mxu0 %v1123
  %1567 = vmatprep.subr.bf16.mxu0 %v1140
  %1568 = vmatpush1.bf16.msra.mxu0 %v1139
  %1569 = vmatprep.subr.bf16.mxu0 %v1156
  %1570 = vmatpush1.bf16.msra.mxu0 %v1155
  %1571 = vmatprep.subr.bf16.mxu0 %v1172
  %1572 = vmatpush1.bf16.msra.mxu0 %v1171
  %1573 = vmatprep.subr.bf16.mxu0 %v1188
  %1574 = vmatpush1.bf16.msra.mxu0 %v1187
  %1575 = vmatprep.subr.bf16.mxu0 %v1204
  %1576 = vmatpush1.bf16.msra.mxu0 %v1203
  %1577 = vmatprep.subr.bf16.mxu0 %v1220
  %1578 = vmatpush1.bf16.msra.mxu0 %v1219
  %1579 = vmatprep.subr.bf16.mxu0 %v1236
  %1580 = vmatpush1.bf16.msra.mxu0 %v1235
  %1581 = vmatprep.subr.bf16.mxu0 %v1252
  %1582 = vmatpush1.bf16.msra.mxu0 %v1251
  %1583 = vmatprep.subr.bf16.mxu0 %v1268
  %1584 = vmatpush1.bf16.msra.mxu0 %v1267
  %1585 = vmatprep.subr.bf16.mxu0 %v1284
  %1586 = vmatpush1.bf16.msra.mxu0 %v1283
  %1587 = vmatprep.mubr.bf16.mxu0 %v272
  %1588 = vmatmul.mubr.bf16.gmra.mrb[0].mxu0 %v271
  %v1589 = vpop.f32.mrb[0].mxu0
  %v1590 = vadd.f32 0.0, %v1589
  %v1591 = vpop.f32.mrb[0].mxu0
  %v1592 = vadd.f32 0.0, %v1591
  %v1593 = vpop.f32.mrb[0].mxu0
  %v1594 = vpop.f32.mrb[0].mxu0
  %1595 = vdwg.mxu0
  %1596 = vmatprep.subr.bf16.mxu0 %v1046
  %1597 = vmatpush1.bf16.msra.mxu0 %v1045
  %1598 = vmatprep.subr.bf16.mxu0 %v1062
  %1599 = vmatpush1.bf16.msra.mxu0 %v1061
  %1600 = vmatprep.subr.bf16.mxu0 %v1078
  %1601 = vmatpush1.bf16.msra.mxu0 %v1077
  %1602 = vmatprep.subr.bf16.mxu0 %v1094
  %1603 = vmatpush1.bf16.msra.mxu0 %v1093
  %1604 = vmatprep.subr.bf16.mxu0 %v1110
  %1605 = vmatpush1.bf16.msra.mxu0 %v1109
  %1606 = vmatprep.subr.bf16.mxu0 %v1126
  %1607 = vmatpush1.bf16.msra.mxu0 %v1125
  %1608 = vmatprep.subr.bf16.mxu0 %v1142
  %1609 = vmatpush1.bf16.msra.mxu0 %v1141
  %1610 = vmatprep.subr.bf16.mxu0 %v1158
  %1611 = vmatpush1.bf16.msra.mxu0 %v1157
  %1612 = vmatprep.subr.bf16.mxu0 %v1174
  %1613 = vmatpush1.bf16.msra.mxu0 %v1173
  %1614 = vmatprep.subr.bf16.mxu0 %v1190
  %1615 = vmatpush1.bf16.msra.mxu0 %v1189
  %1616 = vmatprep.subr.bf16.mxu0 %v1206
  %1617 = vmatpush1.bf16.msra.mxu0 %v1205
  %1618 = vmatprep.subr.bf16.mxu0 %v1222
  %1619 = vmatpush1.bf16.msra.mxu0 %v1221
  %1620 = vmatprep.subr.bf16.mxu0 %v1238
  %1621 = vmatpush1.bf16.msra.mxu0 %v1237
  %1622 = vmatprep.subr.bf16.mxu0 %v1254
  %1623 = vmatpush1.bf16.msra.mxu0 %v1253
  %1624 = vmatprep.subr.bf16.mxu0 %v1270
  %1625 = vmatpush1.bf16.msra.mxu0 %v1269
  %1626 = vmatprep.subr.bf16.mxu0 %v1286
  %1627 = vmatpush1.bf16.msra.mxu0 %v1285
  %1628 = vmatprep.mubr.bf16.mxu0 %v272
  %1629 = vmatmul.mubr.bf16.gmra.mrb[0].mxu0 %v271
  %v1630 = vpop.f32.mrb[0].mxu0
  %v1631 = vadd.f32 0.0, %v1630
  %v1632 = vpop.f32.mrb[0].mxu0
  %v1633 = vadd.f32 0.0, %v1632
  %v1634 = vpop.f32.mrb[0].mxu0
  %v1635 = vpop.f32.mrb[0].mxu0
  %1636 = vdwg.mxu0
  %1637 = vmatprep.subr.bf16.mxu0 %v1048
  %1638 = vmatpush1.bf16.msra.mxu0 %v1047
  %1639 = vmatprep.subr.bf16.mxu0 %v1064
  %1640 = vmatpush1.bf16.msra.mxu0 %v1063
  %1641 = vmatprep.subr.bf16.mxu0 %v1080
  %1642 = vmatpush1.bf16.msra.mxu0 %v1079
  %1643 = vmatprep.subr.bf16.mxu0 %v1096
  %1644 = vmatpush1.bf16.msra.mxu0 %v1095
  %1645 = vmatprep.subr.bf16.mxu0 %v1112
  %1646 = vmatpush1.bf16.msra.mxu0 %v1111
  %1647 = vmatprep.subr.bf16.mxu0 %v1128
  %1648 = vmatpush1.bf16.msra.mxu0 %v1127
  %1649 = vmatprep.subr.bf16.mxu0 %v1144
  %1650 = vmatpush1.bf16.msra.mxu0 %v1143
  %1651 = vmatprep.subr.bf16.mxu0 %v1160
  %1652 = vmatpush1.bf16.msra.mxu0 %v1159
  %1653 = vmatprep.subr.bf16.mxu0 %v1176
  %1654 = vmatpush1.bf16.msra.mxu0 %v1175
  %1655 = vmatprep.subr.bf16.mxu0 %v1192
  %1656 = vmatpush1.bf16.msra.mxu0 %v1191
  %1657 = vmatprep.subr.bf16.mxu0 %v1208
  %1658 = vmatpush1.bf16.msra.mxu0 %v1207
  %1659 = vmatprep.subr.bf16.mxu0 %v1224
  %1660 = vmatpush1.bf16.msra.mxu0 %v1223
  %1661 = vmatprep.subr.bf16.mxu0 %v1240
  %1662 = vmatpush1.bf16.msra.mxu0 %v1239
  %1663 = vmatprep.subr.bf16.mxu0 %v1256
  %1664 = vmatpush1.bf16.msra.mxu0 %v1255
  %1665 = vmatprep.subr.bf16.mxu0 %v1272
  %1666 = vmatpush1.bf16.msra.mxu0 %v1271
  %1667 = vmatprep.subr.bf16.mxu0 %v1288
  %1668 = vmatpush1.bf16.msra.mxu0 %v1287
  %1669 = vmatprep.mubr.bf16.mxu0 %v272
  %1670 = vmatmul.mubr.bf16.gmra.mrb[0].mxu0 %v271
  %v1671 = vpop.f32.mrb[0].mxu0
  %v1672 = vadd.f32 0.0, %v1671
  %v1673 = vpop.f32.mrb[0].mxu0
  %v1674 = vadd.f32 0.0, %v1673
  %v1675 = vpop.f32.mrb[0].mxu0
  %v1676 = vpop.f32.mrb[0].mxu0
  %1677 = vdwg.mxu0
  %1678 = vmatprep.subr.bf16.mxu0 %v1050
  %1679 = vmatpush1.bf16.msra.mxu0 %v1049
  %1680 = vmatprep.subr.bf16.mxu0 %v1066
  %1681 = vmatpush1.bf16.msra.mxu0 %v1065
  %1682 = vmatprep.subr.bf16.mxu0 %v1082
  %1683 = vmatpush1.bf16.msra.mxu0 %v1081
  %1684 = vmatprep.subr.bf16.mxu0 %v1098
  %1685 = vmatpush1.bf16.msra.mxu0 %v1097
  %1686 = vmatprep.subr.bf16.mxu0 %v1114
  %1687 = vmatpush1.bf16.msra.mxu0 %v1113
  %1688 = vmatprep.subr.bf16.mxu0 %v1130
  %1689 = vmatpush1.bf16.msra.mxu0 %v1129
  %1690 = vmatprep.subr.bf16.mxu0 %v1146
  %1691 = vmatpush1.bf16.msra.mxu0 %v1145
  %1692 = vmatprep.subr.bf16.mxu0 %v1162
  %1693 = vmatpush1.bf16.msra.mxu0 %v1161
  %1694 = vmatprep.subr.bf16.mxu0 %v1178
  %1695 = vmatpush1.bf16.msra.mxu0 %v1177
  %1696 = vmatprep.subr.bf16.mxu0 %v1194
  %1697 = vmatpush1.bf16.msra.mxu0 %v1193
  %1698 = vmatprep.subr.bf16.mxu0 %v1210
  %1699 = vmatpush1.bf16.msra.mxu0 %v1209
  %1700 = vmatprep.subr.bf16.mxu0 %v1226
  %1701 = vmatpush1.bf16.msra.mxu0 %v1225
  %1702 = vmatprep.subr.bf16.mxu0 %v1242
  %1703 = vmatpush1.bf16.msra.mxu0 %v1241
  %1704 = vmatprep.subr.bf16.mxu0 %v1258
  %1705 = vmatpush1.bf16.msra.mxu0 %v1257
  %1706 = vmatprep.subr.bf16.mxu0 %v1274
  %1707 = vmatpush1.bf16.msra.mxu0 %v1273
  %1708 = vmatprep.subr.bf16.mxu0 %v1290
  %1709 = vmatpush1.bf16.msra.mxu0 %v1289
  %1710 = vmatprep.mubr.bf16.mxu0 %v272
  %1711 = vmatmul.mubr.bf16.gmra.mrb[0].mxu0 %v271
  %v1712 = vpop.f32.mrb[0].mxu0
  %v1713 = vadd.f32 0.0, %v1712
  %v1714 = vpop.f32.mrb[0].mxu0
  %v1715 = vadd.f32 0.0, %v1714
  %v1716 = vpop.f32.mrb[0].mxu0
  %v1717 = vpop.f32.mrb[0].mxu0
  %1718 = vdwg.mxu0
  %1719 = vmatprep.subr.bf16.mxu0 %v1052
  %1720 = vmatpush1.bf16.msra.mxu0 %v1051
  %1721 = vmatprep.subr.bf16.mxu0 %v1068
  %1722 = vmatpush1.bf16.msra.mxu0 %v1067
  %1723 = vmatprep.subr.bf16.mxu0 %v1084
  %1724 = vmatpush1.bf16.msra.mxu0 %v1083
  %1725 = vmatprep.subr.bf16.mxu0 %v1100
  %1726 = vmatpush1.bf16.msra.mxu0 %v1099
  %1727 = vmatprep.subr.bf16.mxu0 %v1116
  %1728 = vmatpush1.bf16.msra.mxu0 %v1115
  %1729 = vmatprep.subr.bf16.mxu0 %v1132
  %1730 = vmatpush1.bf16.msra.mxu0 %v1131
  %1731 = vmatprep.subr.bf16.mxu0 %v1148
  %1732 = vmatpush1.bf16.msra.mxu0 %v1147
  %1733 = vmatprep.subr.bf16.mxu0 %v1164
  %1734 = vmatpush1.bf16.msra.mxu0 %v1163
  %1735 = vmatprep.subr.bf16.mxu0 %v1180
  %1736 = vmatpush1.bf16.msra.mxu0 %v1179
  %1737 = vmatprep.subr.bf16.mxu0 %v1196
  %1738 = vmatpush1.bf16.msra.mxu0 %v1195
  %1739 = vmatprep.subr.bf16.mxu0 %v1212
  %1740 = vmatpush1.bf16.msra.mxu0 %v1211
  %1741 = vmatprep.subr.bf16.mxu0 %v1228
  %1742 = vmatpush1.bf16.msra.mxu0 %v1227
  %1743 = vmatprep.subr.bf16.mxu0 %v1244
  %1744 = vmatpush1.bf16.msra.mxu0 %v1243
  %1745 = vmatprep.subr.bf16.mxu0 %v1260
  %1746 = vmatpush1.bf16.msra.mxu0 %v1259
  %1747 = vmatprep.subr.bf16.mxu0 %v1276
  %1748 = vmatpush1.bf16.msra.mxu0 %v1275
  %1749 = vmatprep.subr.bf16.mxu0 %v1292
  %1750 = vmatpush1.bf16.msra.mxu0 %v1291
  %1751 = vmatprep.mubr.bf16.mxu0 %v272
  %1752 = vmatmul.mubr.bf16.gmra.mrb[0].mxu0 %v271
  %v1753 = vpop.f32.mrb[0].mxu0
  %v1754 = vadd.f32 0.0, %v1753
  %v1755 = vpop.f32.mrb[0].mxu0
  %v1756 = vadd.f32 0.0, %v1755
  %v1757 = vpop.f32.mrb[0].mxu0
  %v1758 = vpop.f32.mrb[0].mxu0
  %1759 = vdwg.mxu0
  %1760 = vmatprep.subr.bf16.mxu0 %v1054
  %1761 = vmatpush1.bf16.msra.mxu0 %v1053
  %1762 = vmatprep.subr.bf16.mxu0 %v1070
  %1763 = vmatpush1.bf16.msra.mxu0 %v1069
  %1764 = vmatprep.subr.bf16.mxu0 %v1086
  %1765 = vmatpush1.bf16.msra.mxu0 %v1085
  %1766 = vmatprep.subr.bf16.mxu0 %v1102
  %1767 = vmatpush1.bf16.msra.mxu0 %v1101
  %1768 = vmatprep.subr.bf16.mxu0 %v1118
  %1769 = vmatpush1.bf16.msra.mxu0 %v1117
  %1770 = vmatprep.subr.bf16.mxu0 %v1134
  %1771 = vmatpush1.bf16.msra.mxu0 %v1133
  %1772 = vmatprep.subr.bf16.mxu0 %v1150
  %1773 = vmatpush1.bf16.msra.mxu0 %v1149
  %1774 = vmatprep.subr.bf16.mxu0 %v1166
  %1775 = vmatpush1.bf16.msra.mxu0 %v1165
  %1776 = vmatprep.subr.bf16.mxu0 %v1182
  %1777 = vmatpush1.bf16.msra.mxu0 %v1181
  %1778 = vmatprep.subr.bf16.mxu0 %v1198
  %1779 = vmatpush1.bf16.msra.mxu0 %v1197
  %1780 = vmatprep.subr.bf16.mxu0 %v1214
  %1781 = vmatpush1.bf16.msra.mxu0 %v1213
  %1782 = vmatprep.subr.bf16.mxu0 %v1230
  %1783 = vmatpush1.bf16.msra.mxu0 %v1229
  %1784 = vmatprep.subr.bf16.mxu0 %v1246
  %1785 = vmatpush1.bf16.msra.mxu0 %v1245
  %1786 = vmatprep.subr.bf16.mxu0 %v1262
  %1787 = vmatpush1.bf16.msra.mxu0 %v1261
  %1788 = vmatprep.subr.bf16.mxu0 %v1278
  %1789 = vmatpush1.bf16.msra.mxu0 %v1277
  %1790 = vmatprep.subr.bf16.mxu0 %v1294
  %1791 = vmatpush1.bf16.msra.mxu0 %v1293
  %1792 = vmatprep.mubr.bf16.mxu0 %v272
  %1793 = vmatmul.mubr.bf16.gmra.mrb[0].mxu0 %v271
  %v1794 = vpop.f32.mrb[0].mxu0
  %v1795 = vadd.f32 0.0, %v1794
  %v1796 = vpop.f32.mrb[0].mxu0
  %v1797 = vadd.f32 0.0, %v1796
  %v1798 = vpop.f32.mrb[0].mxu0
  %v1799 = vpop.f32.mrb[0].mxu0
  %1800 = vdwg.mxu0
  %1801 = vmatprep.subr.bf16.mxu0 %v1056
  %1802 = vmatpush1.bf16.msra.mxu0 %v1055
  %1803 = vmatprep.subr.bf16.mxu0 %v1072
  %1804 = vmatpush1.bf16.msra.mxu0 %v1071
  %1805 = vmatprep.subr.bf16.mxu0 %v1088
  %1806 = vmatpush1.bf16.msra.mxu0 %v1087
  %1807 = vmatprep.subr.bf16.mxu0 %v1104
  %1808 = vmatpush1.bf16.msra.mxu0 %v1103
  %1809 = vmatprep.subr.bf16.mxu0 %v1120
  %1810 = vmatpush1.bf16.msra.mxu0 %v1119
  %1811 = vmatprep.subr.bf16.mxu0 %v1136
  %1812 = vmatpush1.bf16.msra.mxu0 %v1135
  %1813 = vmatprep.subr.bf16.mxu0 %v1152
  %1814 = vmatpush1.bf16.msra.mxu0 %v1151
  %1815 = vmatprep.subr.bf16.mxu0 %v1168
  %1816 = vmatpush1.bf16.msra.mxu0 %v1167
  %1817 = vmatprep.subr.bf16.mxu0 %v1184
  %1818 = vmatpush1.bf16.msra.mxu0 %v1183
  %1819 = vmatprep.subr.bf16.mxu0 %v1200
  %1820 = vmatpush1.bf16.msra.mxu0 %v1199
  %1821 = vmatprep.subr.bf16.mxu0 %v1216
  %1822 = vmatpush1.bf16.msra.mxu0 %v1215
  %1823 = vmatprep.subr.bf16.mxu0 %v1232
  %1824 = vmatpush1.bf16.msra.mxu0 %v1231
  %1825 = vmatprep.subr.bf16.mxu0 %v1248
  %1826 = vmatpush1.bf16.msra.mxu0 %v1247
  %1827 = vmatprep.subr.bf16.mxu0 %v1264
  %1828 = vmatpush1.bf16.msra.mxu0 %v1263
  %1829 = vmatprep.subr.bf16.mxu0 %v1280
  %1830 = vmatpush1.bf16.msra.mxu0 %v1279
  %1831 = vmatprep.subr.bf16.mxu0 %v1296
  %1832 = vmatpush1.bf16.msra.mxu0 %v1295
  %1833 = vmatprep.mubr.bf16.mxu0 %v272
  %1834 = vmatmul.mubr.bf16.gmra.mrb[0].mxu0 %v271
  %v1835 = vpop.f32.mrb[0].mxu0
  %v1836 = vadd.f32 0.0, %v1835
  %v1837 = vpop.f32.mrb[0].mxu0
  %v1838 = vadd.f32 0.0, %v1837
  %v1839 = vpop.f32.mrb[0].mxu0
  %v1840 = vpop.f32.mrb[0].mxu0
  %1841 = vdwg.mxu0
  %1842 = vmatprep.subr.bf16.mxu0 %v1058
  %1843 = vmatpush1.bf16.msra.mxu0 %v1057
  %1844 = vmatprep.subr.bf16.mxu0 %v1074
  %1845 = vmatpush1.bf16.msra.mxu0 %v1073
  %1846 = vmatprep.subr.bf16.mxu0 %v1090
  %1847 = vmatpush1.bf16.msra.mxu0 %v1089
  %1848 = vmatprep.subr.bf16.mxu0 %v1106
  %1849 = vmatpush1.bf16.msra.mxu0 %v1105
  %1850 = vmatprep.subr.bf16.mxu0 %v1122
  %1851 = vmatpush1.bf16.msra.mxu0 %v1121
  %1852 = vmatprep.subr.bf16.mxu0 %v1138
  %1853 = vmatpush1.bf16.msra.mxu0 %v1137
  %1854 = vmatprep.subr.bf16.mxu0 %v1154
  %1855 = vmatpush1.bf16.msra.mxu0 %v1153
  %1856 = vmatprep.subr.bf16.mxu0 %v1170
  %1857 = vmatpush1.bf16.msra.mxu0 %v1169
  %1858 = vmatprep.subr.bf16.mxu0 %v1186
  %1859 = vmatpush1.bf16.msra.mxu0 %v1185
  %1860 = vmatprep.subr.bf16.mxu0 %v1202
  %1861 = vmatpush1.bf16.msra.mxu0 %v1201
  %1862 = vmatprep.subr.bf16.mxu0 %v1218
  %1863 = vmatpush1.bf16.msra.mxu0 %v1217
  %1864 = vmatprep.subr.bf16.mxu0 %v1234
  %1865 = vmatpush1.bf16.msra.mxu0 %v1233
  %1866 = vmatprep.subr.bf16.mxu0 %v1250
  %1867 = vmatpush1.bf16.msra.mxu0 %v1249
  %1868 = vmatprep.subr.bf16.mxu0 %v1266
  %1869 = vmatpush1.bf16.msra.mxu0 %v1265
  %1870 = vmatprep.subr.bf16.mxu0 %v1282
  %1871 = vmatpush1.bf16.msra.mxu0 %v1281
  %1872 = vmatprep.subr.bf16.mxu0 %v1298
  %1873 = vmatpush1.bf16.msra.mxu0 %v1297
  %1874 = vmatprep.mubr.bf16.mxu0 %v272
  %1875 = vmatmul.mubr.bf16.gmra.mrb[0].mxu0 %v271
  %v1876 = vpop.f32.mrb[0].mxu0
  %v1877 = vadd.f32 0.0, %v1876
  %v1878 = vpop.f32.mrb[0].mxu0
  %v1879 = vadd.f32 0.0, %v1878
  %v1880 = vpop.f32.mrb[0].mxu0
  %v1881 = vpop.f32.mrb[0].mxu0
  %1882 = vdwg.mxu0
  %v1883 = vpack.c.bf16 %v1590, %v1590
  %v1884 = vpack.c.bf16 %v1592, %v1592
  %v1885 = vpack.c.bf16 %v1631, %v1631
  %v1886 = vpack.c.bf16 %v1633, %v1633
  %v1887 = vpack.c.bf16 %v1672, %v1672
  %v1888 = vpack.c.bf16 %v1674, %v1674
  %v1889 = vpack.c.bf16 %v1713, %v1713
  %v1890 = vpack.c.bf16 %v1715, %v1715
  %v1891 = vpack.c.bf16 %v1754, %v1754
  %v1892 = vpack.c.bf16 %v1756, %v1756
  %v1893 = vpack.c.bf16 %v1795, %v1795
  %v1894 = vpack.c.bf16 %v1797, %v1797
  %v1895 = vpack.c.bf16 %v1836, %v1836
  %v1896 = vpack.c.bf16 %v1838, %v1838
  %v1897 = vpack.c.bf16 %v1877, %v1877
  %v1898 = vpack.c.bf16 %v1879, %v1879
  %v1915 = vunpack.c.l.b16 %v1883
  %v1916 = vunpack.c.l.b16 %v1884
  %v1917 = vunpack.c.l.b16 %v1885
  %v1918 = vunpack.c.l.b16 %v1886
  %v1919 = vunpack.c.l.b16 %v1887
  %v1920 = vunpack.c.l.b16 %v1888
  %v1921 = vunpack.c.l.b16 %v1889
  %v1922 = vunpack.c.l.b16 %v1890
  %v1923 = vunpack.c.l.b16 %v1891
  %v1924 = vunpack.c.l.b16 %v1892
  %v1925 = vunpack.c.l.b16 %v1893
  %v1926 = vunpack.c.l.b16 %v1894
  %v1927 = vunpack.c.l.b16 %v1895
  %v1928 = vunpack.c.l.b16 %v1896
  %v1929 = vunpack.c.l.b16 %v1897
  %v1930 = vunpack.c.l.b16 %v1898
  %v1931 = vpack.c.b16 %v1916, %v1915
  %v1932 = vpack.c.b16 %v1918, %v1917
  %v1933 = vpack.c.b16 %v1920, %v1919
  %v1934 = vpack.c.b16 %v1922, %v1921
  %v1935 = vpack.c.b16 %v1924, %v1923
  %v1936 = vpack.c.b16 %v1926, %v1925
  %v1937 = vpack.c.b16 %v1928, %v1927
  %v1938 = vpack.c.b16 %v1930, %v1929
  %1947 = vst [vmem:[%s2] sm:$0xff] %v1931
  %1948 = vst [vmem:[%s2 + $0x8] sm:$0xff] %v1932
  %1949 = vst [vmem:[%s2 + $0x10] sm:$0xff] %v1933
  %1950 = vst [vmem:[%s2 + $0x18] sm:$0xff] %v1934
  %1951 = vst [vmem:[%s2 + $0x20] sm:$0xff] %v1935
  %1952 = vst [vmem:[%s2 + $0x28] sm:$0xff] %v1936
  %1953 = vst [vmem:[%s2 + $0x30] sm:$0xff] %v1937
  %1954 = vst [vmem:[%s2 + $0x38] sm:$0xff] %v1938
  // Predicated region
  $region10: #{_lambda_.11} parent=0 // pred_check
    _
  $region11: #{_lambda_.11} parent=0 // pred_check_branch
    %1956 = sbr.rel (0) target = $region13
  $region12: #{_lambda_.11} parent=0 // pred_region
    _
  $region13: #{_lambda_.11} parent=0 // pred_fallthru
    _
  // Predicated region
  $region14: #{_lambda_.11} parent=0 // pred_check
    _
  $region15: #{_lambda_.11} parent=0 // pred_check_branch
    %1958 = sbr.rel (0) target = $region17
  $region16: #{_lambda_.11} parent=0 // pred_region
    _
  $region17: #{_lambda_.11} parent=0 // pred_fallthru
    _

// kernel: _lambda_.12
$region0: #{_lambda_.12}
  #allocation0 [shape = 'u32[]', space=smem, size = 0x4, offset = 0x4, fixed_abs, tag = 'smem constant byte address 0x4 - core index']
  #allocation1 [shape = 'u32[144,128]{1,0:T(1,128)}', space=vmem, size = 0x12000, scoped, tag = 'internal scratch']
  %s0 = inlined_call_operand.vmem [shape: bf16[32,128], index: 0, kind: input, shape index: {}]
  %s1 = inlined_call_operand.vmem [shape: bf16[128,1024], index: 1, kind: input, shape index: {}]
  %s2 = inlined_call_operand.vmem [shape: bf16[32,1024], index: 2, kind: output, shape index: {}]
  %s3 = sld [smem:[#allocation0]]
  $region41: #{_lambda_.12} parent=0
    _
  %s5 = ssub.s32 1, %s3
  %s6 = scalar_select 0, %s5, %s3
  loop: start=0, step=1, limit=4
  $region2: #{_lambda_.12} parent=0 // loop_pre_header
    _
  $region3: #{_lambda_.12} parent=0 // loop_header
    %s8 = sphi 0, %s12
    %p9 = scmp.ge.s32.totalorder %s8, 4
    %s18 = sphi 0, %s20
    %s21 = sphi 0, %s18
    %s22 = sphi 0, %s21
    %s38 = sphi 0, %s22
    %s42 = sphi 0, %s42
    %s44 = sphi 0, %s42
    %s45 = sphi 0, %s44
    %s59 = sphi 0, %s45
    %s65 = sphi 0, %s67
    %s68 = sphi 0, %s65
    %s69 = sphi 0, %s68
    %s85 = sphi 0, %s69
  $region4: #{_lambda_.12} parent=0 // loop_header_branch
    %11 = sbr.rel (%p9) target = $region8
  $region5: #{_lambda_.12} parent=0 // loop_body
    %s13 = ssub.s32 %s8, 1
    %s14 = ssub.s32 %s8, 2
    %s15 = sadd.s32 %s8, 1
    %s16 = ssub.s32 %s8, %s15
    %p17 = scmp.eq.s32.totalorder %s16, 0
    %s19 = sadd.s32 %s18, 1
    %s20 = scalar_select %p17, %s18, %s19
    %p23 = pneg %p17
    %p24 = scmp.eq.s32.totalorder %s8, 1
    %p25 = por %p23, %p24
    %p26 = scmp.ne.s32.totalorder %s18, %s21
    %p27 = scmp.eq.s32.totalorder %s8, 0
    %p28 = por %p26, %p27
    %p29 = scmp.ne.s32.totalorder %s18, %s21
    %p30 = scmp.eq.s32.totalorder %s13, 1
    %p31 = por %p29, %p30
    %p32 = scmp.ne.s32.totalorder %s21, %s22
    %p33 = scmp.eq.s32.totalorder %s13, 0
    %p34 = por %p32, %p33
    %p35 = scmp.ne.s32.totalorder %s21, %s22
    %p36 = scmp.eq.s32.totalorder %s14, 1
    %p37 = por %p35, %p36
    %p39 = scmp.ne.s32.totalorder %s22, %s38
    %p40 = scmp.eq.s32.totalorder %s14, 0
    %p41 = por %p39, %p40
    %s43 = sadd.s32 %s42, 1
    %p46 = scmp.eq.s32.totalorder %s8, 1
    %p47 = scmp.ne.s32.totalorder %s42, %s44
    %p48 = scmp.eq.s32.totalorder %s8, 0
    %p49 = por %p47, %p48
    %p50 = scmp.ne.s32.totalorder %s42, %s44
    %p51 = scmp.eq.s32.totalorder %s13, 1
    %p52 = por %p50, %p51
    %p53 = scmp.ne.s32.totalorder %s44, %s45
    %p54 = scmp.eq.s32.totalorder %s13, 0
    %p55 = por %p53, %p54
    %p56 = scmp.ne.s32.totalorder %s44, %s45
    %p57 = scmp.eq.s32.totalorder %s14, 1
    %p58 = por %p56, %p57
    %p60 = scmp.ne.s32.totalorder %s45, %s59
    %p61 = scmp.eq.s32.totalorder %s14, 0
    %p62 = por %p60, %p61
    %s63 = ssub.s32 %s8, %s15
    %p64 = scmp.eq.s32.totalorder %s63, 0
    %s66 = sadd.s32 %s65, 1
    %s67 = scalar_select %p64, %s65, %s66
    %p70 = pneg %p64
    %p71 = scmp.eq.s32.totalorder %s8, 1
    %p72 = por %p70, %p71
    %p73 = scmp.ne.s32.totalorder %s65, %s68
    %p74 = scmp.eq.s32.totalorder %s8, 0
    %p75 = por %p73, %p74
    %p76 = scmp.ne.s32.totalorder %s65, %s68
    %p77 = scmp.eq.s32.totalorder %s13, 1
    %p78 = por %p76, %p77
    %p79 = scmp.ne.s32.totalorder %s68, %s69
    %p80 = scmp.eq.s32.totalorder %s13, 0
    %p81 = por %p79, %p80
    %p82 = scmp.ne.s32.totalorder %s68, %s69
    %p83 = scmp.eq.s32.totalorder %s14, 1
    %p84 = por %p82, %p83
    %p86 = scmp.ne.s32.totalorder %s69, %s85
    %p87 = scmp.eq.s32.totalorder %s14, 0
    %p88 = por %p86, %p87
    %p89 = scmp.le.s32.totalorder 1, %s8
    %p90 = scmp.lt.s32.totalorder %s8, 3
    %p91 = pnand %p89, %p90
    %p92 = pneg %p91
    // Predicated region
    $region9: #{_lambda_.12} parent=5 // pred_check
      _
    $region10: #{_lambda_.12} parent=5 // pred_check_branch
      %94 = sbr.rel (%p91) target = $region12
    $region11: #{_lambda_.12} parent=5 // pred_region
      %s95 = ssub.s32 %s8, 1
      // Predicated region
      $region13: #{_lambda_.12} parent=11 // pred_check
        %p96 = pneg %p55
      $region14: #{_lambda_.12} parent=11 // pred_check_branch
        %98 = sbr.rel (%p96) target = $region16
      $region15: #{_lambda_.12} parent=11 // pred_region
        _
      $region16: #{_lambda_.12} parent=11 // pred_fallthru
        _
    $region12: #{_lambda_.12} parent=5 // pred_fallthru
      _
    %p99 = scmp.lt.s32.totalorder %s8, 2
    // Predicated region
    $region17: #{_lambda_.12} parent=5 // pred_check
      %p100 = pneg %p99
    $region18: #{_lambda_.12} parent=5 // pred_check_branch
      %102 = sbr.rel (%p100) target = $region20
    $region19: #{_lambda_.12} parent=5 // pred_region
      // Predicated region
      $region21: #{_lambda_.12} parent=19 // pred_check
        %p103 = pneg %p28
      $region22: #{_lambda_.12} parent=19 // pred_check_branch
        %105 = sbr.rel (%p103) target = $region24
      $region23: #{_lambda_.12} parent=19 // pred_region
        %s106 = smul.u32 2, %s8
        %p107 = scmp.lt.s32.totalorder %s106, 3
        %s108 = scalar_select %p107, %s106, 3
        %s109 = smul.addr %s108, 4
        %s110 = scalar_lea.vmem %s0, %s109
        %s111 = smul.u32 2, %s8
      $region24: #{_lambda_.12} parent=19 // pred_fallthru
        _
    $region20: #{_lambda_.12} parent=5 // pred_fallthru
      _
    %p112 = scmp.le.s32.totalorder 1, %s8
    %p113 = scmp.lt.s32.totalorder %s8, 3
    %p114 = pnand %p112, %p113
    %p115 = pneg %p114
    // Predicated region
    $region25: #{_lambda_.12} parent=5 // pred_check
      _
    $region26: #{_lambda_.12} parent=5 // pred_check_branch
      %117 = sbr.rel (%p114) target = $region28
    $region27: #{_lambda_.12} parent=5 // pred_region
      %s118 = ssub.s32 %s8, 1
      %s119 = smul.u32 2, %s13
      %p120 = scmp.lt.s32.totalorder %s119, 3
      %s121 = scalar_select %p120, %s119, 3
      %s122 = smul.addr %s121, 4
      %s123 = scalar_lea.vmem %s0, %s122
      %p124 = pneg %p34
      %p125 = pneg %p31
      %p126 = pneg %p55
      %p127 = pneg %p52
      %p128 = pneg %p81
      %p129 = pneg %p78
      %s130 = smul.u32 2, %s13
      %p131 = scmp.lt.s32.totalorder %s130, 3
      %s132 = scalar_select %p131, %s130, 3
      %s133 = smul.addr %s132, 8
      %s134 = smul.addr %s133, 4
      %s135 = scalar_lea.vmem %s2, %s134
      %s136 = smul.u32 2, %s13
      %p137 = scmp.lt.s32.totalorder %s136, 3
      %s138 = scalar_select %p137, %s136, 3
      %s139 = smul.addr %s138, 4
      %s140 = scalar_lea.vmem %s0, %s139
      %s141 = smul.u32 2, %s13
      %s142 = smul.u32 2, %s13
      %p143 = scmp.lt.s32.totalorder %s142, 3
      %s144 = scalar_select %p143, %s142, 3
      %s145 = smul.addr %s144, 8
      %s146 = smul.addr %s145, 4
      %s147 = scalar_lea.vmem %s2, %s146
      %s148 = smul.u32 2, %s13
      %v150 = vld [vmem:[%s140] sm:$0xf]
      %v151 = vld [vmem:[%s140 + $0x4] sm:$0xf]
      %v152 = vld [vmem:[%s1] sm:$0xff]
      %v153 = vld [vmem:[%s1 + $0x8] sm:$0xff]
      %v154 = vld [vmem:[%s1 + $0x10] sm:$0xff]
      %v155 = vld [vmem:[%s1 + $0x18] sm:$0xff]
      %v156 = vld [vmem:[%s1 + $0x20] sm:$0xff]
      %v157 = vld [vmem:[%s1 + $0x28] sm:$0xff]
      %v158 = vld [vmem:[%s1 + $0x30] sm:$0xff]
      %v159 = vld [vmem:[%s1 + $0x38] sm:$0xff]
      %v160 = vld [vmem:[%s1 + $0x40] sm:$0xff]
      %v161 = vld [vmem:[%s1 + $0x48] sm:$0xff]
      %v162 = vld [vmem:[%s1 + $0x50] sm:$0xff]
      %v163 = vld [vmem:[%s1 + $0x58] sm:$0xff]
      %v164 = vld [vmem:[%s1 + $0x60] sm:$0xff]
      %v165 = vld [vmem:[%s1 + $0x68] sm:$0xff]
      %v166 = vld [vmem:[%s1 + $0x70] sm:$0xff]
      %v167 = vld [vmem:[%s1 + $0x78] sm:$0xff]
      %v168 = vld [vmem:[%s1 + $0x80] sm:$0xff]
      %v169 = vld [vmem:[%s1 + $0x88] sm:$0xff]
      %v170 = vld [vmem:[%s1 + $0x90] sm:$0xff]
      %v171 = vld [vmem:[%s1 + $0x98] sm:$0xff]
      %v172 = vld [vmem:[%s1 + $0xa0] sm:$0xff]
      %v173 = vld [vmem:[%s1 + $0xa8] sm:$0xff]
      %v174 = vld [vmem:[%s1 + $0xb0] sm:$0xff]
      %v175 = vld [vmem:[%s1 + $0xb8] sm:$0xff]
      %v176 = vld [vmem:[%s1 + $0xc0] sm:$0xff]
      %v177 = vld [vmem:[%s1 + $0xc8] sm:$0xff]
      %v178 = vld [vmem:[%s1 + $0xd0] sm:$0xff]
      %v179 = vld [vmem:[%s1 + $0xd8] sm:$0xff]
      %v180 = vld [vmem:[%s1 + $0xe0] sm:$0xff]
      %v181 = vld [vmem:[%s1 + $0xe8] sm:$0xff]
      %v182 = vld [vmem:[%s1 + $0xf0] sm:$0xff]
      %v183 = vld [vmem:[%s1 + $0xf8] sm:$0xff]
      %v184 = vld [vmem:[%s1 + $0x100] sm:$0xff]
      %v185 = vld [vmem:[%s1 + $0x108] sm:$0xff]
      %v186 = vld [vmem:[%s1 + $0x110] sm:$0xff]
      %v187 = vld [vmem:[%s1 + $0x118] sm:$0xff]
      %v188 = vld [vmem:[%s1 + $0x120] sm:$0xff]
      %v189 = vld [vmem:[%s1 + $0x128] sm:$0xff]
      %v190 = vld [vmem:[%s1 + $0x130] sm:$0xff]
      %v191 = vld [vmem:[%s1 + $0x138] sm:$0xff]
      %v192 = vld [vmem:[%s1 + $0x140] sm:$0xff]
      %v193 = vld [vmem:[%s1 + $0x148] sm:$0xff]
      %v194 = vld [vmem:[%s1 + $0x150] sm:$0xff]
      %v195 = vld [vmem:[%s1 + $0x158] sm:$0xff]
      %v196 = vld [vmem:[%s1 + $0x160] sm:$0xff]
      %v197 = vld [vmem:[%s1 + $0x168] sm:$0xff]
      %v198 = vld [vmem:[%s1 + $0x170] sm:$0xff]
      %v199 = vld [vmem:[%s1 + $0x178] sm:$0xff]
      %v200 = vld [vmem:[%s1 + $0x180] sm:$0xff]
      %v201 = vld [vmem:[%s1 + $0x188] sm:$0xff]
      %v202 = vld [vmem:[%s1 + $0x190] sm:$0xff]
      %v203 = vld [vmem:[%s1 + $0x198] sm:$0xff]
      %v204 = vld [vmem:[%s1 + $0x1a0] sm:$0xff]
      %v205 = vld [vmem:[%s1 + $0x1a8] sm:$0xff]
      %v206 = vld [vmem:[%s1 + $0x1b0] sm:$0xff]
      %v207 = vld [vmem:[%s1 + $0x1b8] sm:$0xff]
      %v208 = vld [vmem:[%s1 + $0x1c0] sm:$0xff]
      %v209 = vld [vmem:[%s1 + $0x1c8] sm:$0xff]
      %v210 = vld [vmem:[%s1 + $0x1d0] sm:$0xff]
      %v211 = vld [vmem:[%s1 + $0x1d8] sm:$0xff]
      %v212 = vld [vmem:[%s1 + $0x1e0] sm:$0xff]
      %v213 = vld [vmem:[%s1 + $0x1e8] sm:$0xff]
      %v214 = vld [vmem:[%s1 + $0x1f0] sm:$0xff]
      %v215 = vld [vmem:[%s1 + $0x1f8] sm:$0xff]
      %v218 = vunpack.c.l.b16 %v150
      %v219 = vunpack.c.l.b16 %v151
      %v220 = vpack.c.b16 %v219, %v218
      %v286 = vunpack.c.l.b16 %v152
      %v287 = vunpack.c.h.b16 %v152
      %v288 = vunpack.c.l.b16 %v153
      %v289 = vunpack.c.h.b16 %v153
      %v290 = vunpack.c.l.b16 %v154
      %v291 = vunpack.c.h.b16 %v154
      %v292 = vunpack.c.l.b16 %v155
      %v293 = vunpack.c.h.b16 %v155
      %v294 = vunpack.c.l.b16 %v156
      %v295 = vunpack.c.h.b16 %v156
      %v296 = vunpack.c.l.b16 %v157
      %v297 = vunpack.c.h.b16 %v157
      %v298 = vunpack.c.l.b16 %v158
      %v299 = vunpack.c.h.b16 %v158
      %v300 = vunpack.c.l.b16 %v159
      %v301 = vunpack.c.h.b16 %v159
      %v302 = vunpack.c.l.b16 %v160
      %v303 = vunpack.c.h.b16 %v160
      %v304 = vunpack.c.l.b16 %v161
      %v305 = vunpack.c.h.b16 %v161
      %v306 = vunpack.c.l.b16 %v162
      %v307 = vunpack.c.h.b16 %v162
      %v308 = vunpack.c.l.b16 %v163
      %v309 = vunpack.c.h.b16 %v163
      %v310 = vunpack.c.l.b16 %v164
      %v311 = vunpack.c.h.b16 %v164
      %v312 = vunpack.c.l.b16 %v165
      %v313 = vunpack.c.h.b16 %v165
      %v314 = vunpack.c.l.b16 %v166
      %v315 = vunpack.c.h.b16 %v166
      %v316 = vunpack.c.l.b16 %v167
      %v317 = vunpack.c.h.b16 %v167
      %v318 = vunpack.c.l.b16 %v168
      %v319 = vunpack.c.h.b16 %v168
      %v320 = vunpack.c.l.b16 %v169
      %v321 = vunpack.c.h.b16 %v169
      %v322 = vunpack.c.l.b16 %v170
      %v323 = vunpack.c.h.b16 %v170
      %v324 = vunpack.c.l.b16 %v171
      %v325 = vunpack.c.h.b16 %v171
      %v326 = vunpack.c.l.b16 %v172
      %v327 = vunpack.c.h.b16 %v172
      %v328 = vunpack.c.l.b16 %v173
      %v329 = vunpack.c.h.b16 %v173
      %v330 = vunpack.c.l.b16 %v174
      %v331 = vunpack.c.h.b16 %v174
      %v332 = vunpack.c.l.b16 %v175
      %v333 = vunpack.c.h.b16 %v175
      %v334 = vunpack.c.l.b16 %v176
      %v335 = vunpack.c.h.b16 %v176
      %v336 = vunpack.c.l.b16 %v177
      %v337 = vunpack.c.h.b16 %v177
      %v338 = vunpack.c.l.b16 %v178
      %v339 = vunpack.c.h.b16 %v178
      %v340 = vunpack.c.l.b16 %v179
      %v341 = vunpack.c.h.b16 %v179
      %v342 = vunpack.c.l.b16 %v180
      %v343 = vunpack.c.h.b16 %v180
      %v344 = vunpack.c.l.b16 %v181
      %v345 = vunpack.c.h.b16 %v181
      %v346 = vunpack.c.l.b16 %v182
      %v347 = vunpack.c.h.b16 %v182
      %v348 = vunpack.c.l.b16 %v183
      %v349 = vunpack.c.h.b16 %v183
      %v350 = vunpack.c.l.b16 %v184
      %v351 = vunpack.c.h.b16 %v184
      %v352 = vunpack.c.l.b16 %v185
      %v353 = vunpack.c.h.b16 %v185
      %v354 = vunpack.c.l.b16 %v186
      %v355 = vunpack.c.h.b16 %v186
      %v356 = vunpack.c.l.b16 %v187
      %v357 = vunpack.c.h.b16 %v187
      %v358 = vunpack.c.l.b16 %v188
      %v359 = vunpack.c.h.b16 %v188
      %v360 = vunpack.c.l.b16 %v189
      %v361 = vunpack.c.h.b16 %v189
      %v362 = vunpack.c.l.b16 %v190
      %v363 = vunpack.c.h.b16 %v190
      %v364 = vunpack.c.l.b16 %v191
      %v365 = vunpack.c.h.b16 %v191
      %v366 = vunpack.c.l.b16 %v192
      %v367 = vunpack.c.h.b16 %v192
      %v368 = vunpack.c.l.b16 %v193
      %v369 = vunpack.c.h.b16 %v193
      %v370 = vunpack.c.l.b16 %v194
      %v371 = vunpack.c.h.b16 %v194
      %v372 = vunpack.c.l.b16 %v195
      %v373 = vunpack.c.h.b16 %v195
      %v374 = vunpack.c.l.b16 %v196
      %v375 = vunpack.c.h.b16 %v196
      %v376 = vunpack.c.l.b16 %v197
      %v377 = vunpack.c.h.b16 %v197
      %v378 = vunpack.c.l.b16 %v198
      %v379 = vunpack.c.h.b16 %v198
      %v380 = vunpack.c.l.b16 %v199
      %v381 = vunpack.c.h.b16 %v199
      %v382 = vunpack.c.l.b16 %v200
      %v383 = vunpack.c.h.b16 %v200
      %v384 = vunpack.c.l.b16 %v201
      %v385 = vunpack.c.h.b16 %v201
      %v386 = vunpack.c.l.b16 %v202
      %v387 = vunpack.c.h.b16 %v202
      %v388 = vunpack.c.l.b16 %v203
      %v389 = vunpack.c.h.b16 %v203
      %v390 = vunpack.c.l.b16 %v204
      %v391 = vunpack.c.h.b16 %v204
      %v392 = vunpack.c.l.b16 %v205
      %v393 = vunpack.c.h.b16 %v205
      %v394 = vunpack.c.l.b16 %v206
      %v395 = vunpack.c.h.b16 %v206
      %v396 = vunpack.c.l.b16 %v207
      %v397 = vunpack.c.h.b16 %v207
      %v398 = vunpack.c.l.b16 %v208
      %v399 = vunpack.c.h.b16 %v208
      %v400 = vunpack.c.l.b16 %v209
      %v401 = vunpack.c.h.b16 %v209
      %v402 = vunpack.c.l.b16 %v210
      %v403 = vunpack.c.h.b16 %v210
      %v404 = vunpack.c.l.b16 %v211
      %v405 = vunpack.c.h.b16 %v211
      %v406 = vunpack.c.l.b16 %v212
      %v407 = vunpack.c.h.b16 %v212
      %v408 = vunpack.c.l.b16 %v213
      %v409 = vunpack.c.h.b16 %v213
      %v410 = vunpack.c.l.b16 %v214
      %v411 = vunpack.c.h.b16 %v214
      %v412 = vunpack.c.l.b16 %v215
      %v413 = vunpack.c.h.b16 %v215
      %v414 = vpack.c.b16 %v294, %v286
      %v415 = vpack.c.b16 %v295, %v287
      %v416 = vpack.c.b16 %v296, %v288
      %v417 = vpack.c.b16 %v297, %v289
      %v418 = vpack.c.b16 %v298, %v290
      %v419 = vpack.c.b16 %v299, %v291
      %v420 = vpack.c.b16 %v300, %v292
      %v421 = vpack.c.b16 %v301, %v293
      %v422 = vpack.c.b16 %v310, %v302
      %v423 = vpack.c.b16 %v311, %v303
      %v424 = vpack.c.b16 %v312, %v304
      %v425 = vpack.c.b16 %v313, %v305
      %v426 = vpack.c.b16 %v314, %v306
      %v427 = vpack.c.b16 %v315, %v307
      %v428 = vpack.c.b16 %v316, %v308
      %v429 = vpack.c.b16 %v317, %v309
      %v430 = vpack.c.b16 %v326, %v318
      %v431 = vpack.c.b16 %v327, %v319
      %v432 = vpack.c.b16 %v328, %v320
      %v433 = vpack.c.b16 %v329, %v321
      %v434 = vpack.c.b16 %v330, %v322
      %v435 = vpack.c.b16 %v331, %v323
      %v436 = vpack.c.b16 %v332, %v324
      %v437 = vpack.c.b16 %v333, %v325
      %v438 = vpack.c.b16 %v342, %v334
      %v439 = vpack.c.b16 %v343, %v335
      %v440 = vpack.c.b16 %v344, %v336
      %v441 = vpack.c.b16 %v345, %v337
      %v442 = vpack.c.b16 %v346, %v338
      %v443 = vpack.c.b16 %v347, %v339
      %v444 = vpack.c.b16 %v348, %v340
      %v445 = vpack.c.b16 %v349, %v341
      %v446 = vpack.c.b16 %v358, %v350
      %v447 = vpack.c.b16 %v359, %v351
      %v448 = vpack.c.b16 %v360, %v352
      %v449 = vpack.c.b16 %v361, %v353
      %v450 = vpack.c.b16 %v362, %v354
      %v451 = vpack.c.b16 %v363, %v355
      %v452 = vpack.c.b16 %v364, %v356
      %v453 = vpack.c.b16 %v365, %v357
      %v454 = vpack.c.b16 %v374, %v366
      %v455 = vpack.c.b16 %v375, %v367
      %v456 = vpack.c.b16 %v376, %v368
      %v457 = vpack.c.b16 %v377, %v369
      %v458 = vpack.c.b16 %v378, %v370
      %v459 = vpack.c.b16 %v379, %v371
      %v460 = vpack.c.b16 %v380, %v372
      %v461 = vpack.c.b16 %v381, %v373
      %v462 = vpack.c.b16 %v390, %v382
      %v463 = vpack.c.b16 %v391, %v383
      %v464 = vpack.c.b16 %v392, %v384
      %v465 = vpack.c.b16 %v393, %v385
      %v466 = vpack.c.b16 %v394, %v386
      %v467 = vpack.c.b16 %v395, %v387
      %v468 = vpack.c.b16 %v396, %v388
      %v469 = vpack.c.b16 %v397, %v389
      %v470 = vpack.c.b16 %v406, %v398
      %v471 = vpack.c.b16 %v407, %v399
      %v472 = vpack.c.b16 %v408, %v400
      %v473 = vpack.c.b16 %v409, %v401
      %v474 = vpack.c.b16 %v410, %v402
      %v475 = vpack.c.b16 %v411, %v403
      %v476 = vpack.c.b16 %v412, %v404
      %v477 = vpack.c.b16 %v413, %v405
      %542 = vmatprep.subr.bf16.mxu0 %v415
      %543 = vmatpush1.bf16.msra.mxu0 %v414
      %544 = vmatprep.subr.bf16.mxu0 %v423
      %545 = vmatpush1.bf16.msra.mxu0 %v422
      %546 = vmatprep.subr.bf16.mxu0 %v431
      %547 = vmatpush1.bf16.msra.mxu0 %v430
      %548 = vmatprep.subr.bf16.mxu0 %v439
      %549 = vmatpush1.bf16.msra.mxu0 %v438
      %550 = vmatprep.subr.bf16.mxu0 %v447
      %551 = vmatpush1.bf16.msra.mxu0 %v446
      %552 = vmatprep.subr.bf16.mxu0 %v455
      %553 = vmatpush1.bf16.msra.mxu0 %v454
      %554 = vmatprep.subr.bf16.mxu0 %v463
      %555 = vmatpush1.bf16.msra.mxu0 %v462
      %556 = vmatprep.subr.bf16.mxu0 %v471
      %557 = vmatpush1.bf16.msra.mxu0 %v470
      %558 = vmatprep.subr.bf16.mxu0 0
      %559 = vmatpush1.bf16.msra.mxu0 0
      %560 = vmatprep.subr.bf16.mxu0 0
      %561 = vmatpush1.bf16.msra.mxu0 0
      %562 = vmatprep.subr.bf16.mxu0 0
      %563 = vmatpush1.bf16.msra.mxu0 0
      %564 = vmatprep.subr.bf16.mxu0 0
      %565 = vmatpush1.bf16.msra.mxu0 0
      %566 = vmatprep.subr.bf16.mxu0 0
      %567 = vmatpush1.bf16.msra.mxu0 0
      %568 = vmatprep.subr.bf16.mxu0 0
      %569 = vmatpush1.bf16.msra.mxu0 0
      %570 = vmatprep.subr.bf16.mxu0 0
      %571 = vmatpush1.bf16.msra.mxu0 0
      %572 = vmatprep.subr.bf16.mxu0 0
      %573 = vmatpush1.bf16.msra.mxu0 0
      %574 = vmatprep.mubr.bf16.mxu0 0
      %575 = vmatmul.mubr.bf16.gmra.mrb[0].mxu0 %v220
      %v576 = vpop.f32.mrb[0].mxu0
      %v577 = vadd.f32 0.0, %v576
      %v578 = vpop.f32.mrb[0].mxu0
      %v579 = vadd.f32 0.0, %v578
      %v580 = vpop.f32.mrb[0].mxu0
      %v581 = vadd.f32 0.0, %v580
      %v582 = vpop.f32.mrb[0].mxu0
      %v583 = vadd.f32 0.0, %v582
      %584 = vdwg.mxu0
      %585 = vmatprep.subr.bf16.mxu0 %v417
      %586 = vmatpush1.bf16.msra.mxu0 %v416
      %587 = vmatprep.subr.bf16.mxu0 %v425
      %588 = vmatpush1.bf16.msra.mxu0 %v424
      %589 = vmatprep.subr.bf16.mxu0 %v433
      %590 = vmatpush1.bf16.msra.mxu0 %v432
      %591 = vmatprep.subr.bf16.mxu0 %v441
      %592 = vmatpush1.bf16.msra.mxu0 %v440
      %593 = vmatprep.subr.bf16.mxu0 %v449
      %594 = vmatpush1.bf16.msra.mxu0 %v448
      %595 = vmatprep.subr.bf16.mxu0 %v457
      %596 = vmatpush1.bf16.msra.mxu0 %v456
      %597 = vmatprep.subr.bf16.mxu0 %v465
      %598 = vmatpush1.bf16.msra.mxu0 %v464
      %599 = vmatprep.subr.bf16.mxu0 %v473
      %600 = vmatpush1.bf16.msra.mxu0 %v472
      %601 = vmatprep.subr.bf16.mxu0 0
      %602 = vmatpush1.bf16.msra.mxu0 0
      %603 = vmatprep.subr.bf16.mxu0 0
      %604 = vmatpush1.bf16.msra.mxu0 0
      %605 = vmatprep.subr.bf16.mxu0 0
      %606 = vmatpush1.bf16.msra.mxu0 0
      %607 = vmatprep.subr.bf16.mxu0 0
      %608 = vmatpush1.bf16.msra.mxu0 0
      %609 = vmatprep.subr.bf16.mxu0 0
      %610 = vmatpush1.bf16.msra.mxu0 0
      %611 = vmatprep.subr.bf16.mxu0 0
      %612 = vmatpush1.bf16.msra.mxu0 0
      %613 = vmatprep.subr.bf16.mxu0 0
      %614 = vmatpush1.bf16.msra.mxu0 0
      %615 = vmatprep.subr.bf16.mxu0 0
      %616 = vmatpush1.bf16.msra.mxu0 0
      %617 = vmatprep.mubr.bf16.mxu0 0
      %618 = vmatmul.mubr.bf16.gmra.mrb[0].mxu0 %v220
      %v619 = vpop.f32.mrb[0].mxu0
      %v620 = vadd.f32 0.0, %v619
      %v621 = vpop.f32.mrb[0].mxu0
      %v622 = vadd.f32 0.0, %v621
      %v623 = vpop.f32.mrb[0].mxu0
      %v624 = vadd.f32 0.0, %v623
      %v625 = vpop.f32.mrb[0].mxu0
      %v626 = vadd.f32 0.0, %v625
      %627 = vdwg.mxu0
      %628 = vmatprep.subr.bf16.mxu0 %v419
      %629 = vmatpush1.bf16.msra.mxu0 %v418
      %630 = vmatprep.subr.bf16.mxu0 %v427
      %631 = vmatpush1.bf16.msra.mxu0 %v426
      %632 = vmatprep.subr.bf16.mxu0 %v435
      %633 = vmatpush1.bf16.msra.mxu0 %v434
      %634 = vmatprep.subr.bf16.mxu0 %v443
      %635 = vmatpush1.bf16.msra.mxu0 %v442
      %636 = vmatprep.subr.bf16.mxu0 %v451
      %637 = vmatpush1.bf16.msra.mxu0 %v450
      %638 = vmatprep.subr.bf16.mxu0 %v459
      %639 = vmatpush1.bf16.msra.mxu0 %v458
      %640 = vmatprep.subr.bf16.mxu0 %v467
      %641 = vmatpush1.bf16.msra.mxu0 %v466
      %642 = vmatprep.subr.bf16.mxu0 %v475
      %643 = vmatpush1.bf16.msra.mxu0 %v474
      %644 = vmatprep.subr.bf16.mxu0 0
      %645 = vmatpush1.bf16.msra.mxu0 0
      %646 = vmatprep.subr.bf16.mxu0 0
      %647 = vmatpush1.bf16.msra.mxu0 0
      %648 = vmatprep.subr.bf16.mxu0 0
      %649 = vmatpush1.bf16.msra.mxu0 0
      %650 = vmatprep.subr.bf16.mxu0 0
      %651 = vmatpush1.bf16.msra.mxu0 0
      %652 = vmatprep.subr.bf16.mxu0 0
      %653 = vmatpush1.bf16.msra.mxu0 0
      %654 = vmatprep.subr.bf16.mxu0 0
      %655 = vmatpush1.bf16.msra.mxu0 0
      %656 = vmatprep.subr.bf16.mxu0 0
      %657 = vmatpush1.bf16.msra.mxu0 0
      %658 = vmatprep.subr.bf16.mxu0 0
      %659 = vmatpush1.bf16.msra.mxu0 0
      %660 = vmatprep.mubr.bf16.mxu0 0
      %661 = vmatmul.mubr.bf16.gmra.mrb[0].mxu0 %v220
      %v662 = vpop.f32.mrb[0].mxu0
      %v663 = vadd.f32 0.0, %v662
      %v664 = vpop.f32.mrb[0].mxu0
      %v665 = vadd.f32 0.0, %v664
      %v666 = vpop.f32.mrb[0].mxu0
      %v667 = vadd.f32 0.0, %v666
      %v668 = vpop.f32.mrb[0].mxu0
      %v669 = vadd.f32 0.0, %v668
      %670 = vdwg.mxu0
      %671 = vmatprep.subr.bf16.mxu0 %v421
      %672 = vmatpush1.bf16.msra.mxu0 %v420
      %673 = vmatprep.subr.bf16.mxu0 %v429
      %674 = vmatpush1.bf16.msra.mxu0 %v428
      %675 = vmatprep.subr.bf16.mxu0 %v437
      %676 = vmatpush1.bf16.msra.mxu0 %v436
      %677 = vmatprep.subr.bf16.mxu0 %v445
      %678 = vmatpush1.bf16.msra.mxu0 %v444
      %679 = vmatprep.subr.bf16.mxu0 %v453
      %680 = vmatpush1.bf16.msra.mxu0 %v452
      %681 = vmatprep.subr.bf16.mxu0 %v461
      %682 = vmatpush1.bf16.msra.mxu0 %v460
      %683 = vmatprep.subr.bf16.mxu0 %v469
      %684 = vmatpush1.bf16.msra.mxu0 %v468
      %685 = vmatprep.subr.bf16.mxu0 %v477
      %686 = vmatpush1.bf16.msra.mxu0 %v476
      %687 = vmatprep.subr.bf16.mxu0 0
      %688 = vmatpush1.bf16.msra.mxu0 0
      %689 = vmatprep.subr.bf16.mxu0 0
      %690 = vmatpush1.bf16.msra.mxu0 0
      %691 = vmatprep.subr.bf16.mxu0 0
      %692 = vmatpush1.bf16.msra.mxu0 0
      %693 = vmatprep.subr.bf16.mxu0 0
      %694 = vmatpush1.bf16.msra.mxu0 0
      %695 = vmatprep.subr.bf16.mxu0 0
      %696 = vmatpush1.bf16.msra.mxu0 0
      %697 = vmatprep.subr.bf16.mxu0 0
      %698 = vmatpush1.bf16.msra.mxu0 0
      %699 = vmatprep.subr.bf16.mxu0 0
      %700 = vmatpush1.bf16.msra.mxu0 0
      %701 = vmatprep.subr.bf16.mxu0 0
      %702 = vmatpush1.bf16.msra.mxu0 0
      %703 = vmatprep.mubr.bf16.mxu0 0
      %704 = vmatmul.mubr.bf16.gmra.mrb[0].mxu0 %v220
      %v705 = vpop.f32.mrb[0].mxu0
      %v706 = vadd.f32 0.0, %v705
      %v707 = vpop.f32.mrb[0].mxu0
      %v708 = vadd.f32 0.0, %v707
      %v709 = vpop.f32.mrb[0].mxu0
      %v710 = vadd.f32 0.0, %v709
      %v711 = vpop.f32.mrb[0].mxu0
      %v712 = vadd.f32 0.0, %v711
      %713 = vdwg.mxu0
      %v714 = vpack.c.bf16 %v581, %v577
      %v715 = vpack.c.bf16 %v583, %v579
      %v716 = vpack.c.bf16 %v624, %v620
      %v717 = vpack.c.bf16 %v626, %v622
      %v718 = vpack.c.bf16 %v667, %v663
      %v719 = vpack.c.bf16 %v669, %v665
      %v720 = vpack.c.bf16 %v710, %v706
      %v721 = vpack.c.bf16 %v712, %v708
      %v730 = vunpack.c.l.b16 %v714
      %v731 = vunpack.c.l.b16 %v715
      %v732 = vunpack.c.l.b16 %v716
      %v733 = vunpack.c.l.b16 %v717
      %v734 = vunpack.c.l.b16 %v718
      %v735 = vunpack.c.l.b16 %v719
      %v736 = vunpack.c.l.b16 %v720
      %v737 = vunpack.c.l.b16 %v721
      %v738 = vunpack.c.h.b16 %v714
      %v739 = vunpack.c.h.b16 %v715
      %v740 = vunpack.c.h.b16 %v716
      %v741 = vunpack.c.h.b16 %v717
      %v742 = vunpack.c.h.b16 %v718
      %v743 = vunpack.c.h.b16 %v719
      %v744 = vunpack.c.h.b16 %v720
      %v745 = vunpack.c.h.b16 %v721
      %v746 = vpack.c.b16 %v731, %v730
      %v747 = vpack.c.b16 %v733, %v732
      %v748 = vpack.c.b16 %v735, %v734
      %v749 = vpack.c.b16 %v737, %v736
      %v750 = vpack.c.b16 %v739, %v738
      %v751 = vpack.c.b16 %v741, %v740
      %v752 = vpack.c.b16 %v743, %v742
      %v753 = vpack.c.b16 %v745, %v744
      %762 = vst [vmem:[%s147] sm:$0xff] %v746
      %763 = vst [vmem:[%s147 + $0x8] sm:$0xff] %v747
      %764 = vst [vmem:[%s147 + $0x10] sm:$0xff] %v748
      %765 = vst [vmem:[%s147 + $0x18] sm:$0xff] %v749
      %766 = vst [vmem:[%s147 + $0x20] sm:$0xff] %v750
      %767 = vst [vmem:[%s147 + $0x28] sm:$0xff] %v751
      %768 = vst [vmem:[%s147 + $0x30] sm:$0xff] %v752
      %769 = vst [vmem:[%s147 + $0x38] sm:$0xff] %v753
      %s770 = smul.u32 2, %s13
      %p771 = scmp.lt.s32.totalorder %s770, 3
      %s772 = scalar_select %p771, %s770, 3
      %s773 = smul.addr %s772, 8
      %s774 = smul.addr %s773, 4
      %s775 = scalar_lea.vmem %s2, %s774
      // Predicated region
      $region29: #{_lambda_.12} parent=27 // pred_check
        %p776 = pneg %p78
      $region30: #{_lambda_.12} parent=27 // pred_check_branch
        %778 = sbr.rel (%p776) target = $region32
      $region31: #{_lambda_.12} parent=27 // pred_region
        %s779 = smul.u32 2, %s13
      $region32: #{_lambda_.12} parent=27 // pred_fallthru
        _
    $region28: #{_lambda_.12} parent=5 // pred_fallthru
      _
    %p780 = scmp.le.s32.totalorder 2, %s8
    // Predicated region
    $region33: #{_lambda_.12} parent=5 // pred_check
      %p781 = pneg %p780
    $region34: #{_lambda_.12} parent=5 // pred_check_branch
      %783 = sbr.rel (%p781) target = $region36
    $region35: #{_lambda_.12} parent=5 // pred_region
      %s784 = ssub.s32 %s8, 2
      // Predicated region
      $region37: #{_lambda_.12} parent=35 // pred_check
        %p785 = pneg %p84
      $region38: #{_lambda_.12} parent=35 // pred_check_branch
        %787 = sbr.rel (%p785) target = $region40
      $region39: #{_lambda_.12} parent=35 // pred_region
        %s788 = smul.u32 2, %s14
        %p789 = scmp.lt.s32.totalorder %s788, 3
        %s790 = scalar_select %p789, %s788, 3
        %s791 = smul.addr %s790, 8
        %s792 = smul.addr %s791, 4
        %s793 = scalar_lea.vmem %s2, %s792
      $region40: #{_lambda_.12} parent=35 // pred_fallthru
        _
    $region36: #{_lambda_.12} parent=5 // pred_fallthru
      _
  $region6: #{_lambda_.12} parent=0 // loop_footer
    %s12 = sadd.s32 1, %s8
  $region7: #{_lambda_.12} parent=0 // loop_footer_branch
    %7 = sbr.rel target = $region3
  $region8: #{_lambda_.12} parent=0 // loop_exit
    _

// kernel: _lambda_.13
$region0: #{_lambda_.13}
  #allocation0 [shape = 'u32[]', space=smem, size = 0x4, offset = 0x4, fixed_abs, tag = 'smem constant byte address 0x4 - core index']
  #allocation1 [shape = 'u32[144,128]{1,0:T(1,128)}', space=vmem, size = 0x12000, scoped, tag = 'internal scratch']
  %s0 = inlined_call_operand.vmem [shape: bf16[128,64], index: 0, kind: input, shape index: {}]
  %s1 = inlined_call_operand.vmem [shape: bf16[64,512], index: 1, kind: input, shape index: {}]
  %s2 = inlined_call_operand.vmem [shape: bf16[128,512], index: 2, kind: output, shape index: {}]
  %s3 = sld [smem:[#allocation0]]
  $region41: #{_lambda_.13} parent=0
    _
  %s5 = ssub.s32 1, %s3
  %s6 = scalar_select 0, %s5, %s3
  loop: start=0, step=1, limit=4
  $region2: #{_lambda_.13} parent=0 // loop_pre_header
    _
  $region3: #{_lambda_.13} parent=0 // loop_header
    %s8 = sphi 0, %s12
    %p9 = scmp.ge.s32.totalorder %s8, 4
    %s18 = sphi 0, %s20
    %s21 = sphi 0, %s18
    %s22 = sphi 0, %s21
    %s38 = sphi 0, %s22
    %s42 = sphi 0, %s42
    %s44 = sphi 0, %s42
    %s45 = sphi 0, %s44
    %s59 = sphi 0, %s45
    %s65 = sphi 0, %s67
    %s68 = sphi 0, %s65
    %s69 = sphi 0, %s68
    %s85 = sphi 0, %s69
  $region4: #{_lambda_.13} parent=0 // loop_header_branch
    %11 = sbr.rel (%p9) target = $region8
  $region5: #{_lambda_.13} parent=0 // loop_body
    %s13 = ssub.s32 %s8, 1
    %s14 = ssub.s32 %s8, 2
    %s15 = sadd.s32 %s8, 1
    %s16 = ssub.s32 %s8, %s15
    %p17 = scmp.eq.s32.totalorder %s16, 0
    %s19 = sadd.s32 %s18, 1
    %s20 = scalar_select %p17, %s18, %s19
    %p23 = pneg %p17
    %p24 = scmp.eq.s32.totalorder %s8, 1
    %p25 = por %p23, %p24
    %p26 = scmp.ne.s32.totalorder %s18, %s21
    %p27 = scmp.eq.s32.totalorder %s8, 0
    %p28 = por %p26, %p27
    %p29 = scmp.ne.s32.totalorder %s18, %s21
    %p30 = scmp.eq.s32.totalorder %s13, 1
    %p31 = por %p29, %p30
    %p32 = scmp.ne.s32.totalorder %s21, %s22
    %p33 = scmp.eq.s32.totalorder %s13, 0
    %p34 = por %p32, %p33
    %p35 = scmp.ne.s32.totalorder %s21, %s22
    %p36 = scmp.eq.s32.totalorder %s14, 1
    %p37 = por %p35, %p36
    %p39 = scmp.ne.s32.totalorder %s22, %s38
    %p40 = scmp.eq.s32.totalorder %s14, 0
    %p41 = por %p39, %p40
    %s43 = sadd.s32 %s42, 1
    %p46 = scmp.eq.s32.totalorder %s8, 1
    %p47 = scmp.ne.s32.totalorder %s42, %s44
    %p48 = scmp.eq.s32.totalorder %s8, 0
    %p49 = por %p47, %p48
    %p50 = scmp.ne.s32.totalorder %s42, %s44
    %p51 = scmp.eq.s32.totalorder %s13, 1
    %p52 = por %p50, %p51
    %p53 = scmp.ne.s32.totalorder %s44, %s45
    %p54 = scmp.eq.s32.totalorder %s13, 0
    %p55 = por %p53, %p54
    %p56 = scmp.ne.s32.totalorder %s44, %s45
    %p57 = scmp.eq.s32.totalorder %s14, 1
    %p58 = por %p56, %p57
    %p60 = scmp.ne.s32.totalorder %s45, %s59
    %p61 = scmp.eq.s32.totalorder %s14, 0
    %p62 = por %p60, %p61
    %s63 = ssub.s32 %s8, %s15
    %p64 = scmp.eq.s32.totalorder %s63, 0
    %s66 = sadd.s32 %s65, 1
    %s67 = scalar_select %p64, %s65, %s66
    %p70 = pneg %p64
    %p71 = scmp.eq.s32.totalorder %s8, 1
    %p72 = por %p70, %p71
    %p73 = scmp.ne.s32.totalorder %s65, %s68
    %p74 = scmp.eq.s32.totalorder %s8, 0
    %p75 = por %p73, %p74
    %p76 = scmp.ne.s32.totalorder %s65, %s68
    %p77 = scmp.eq.s32.totalorder %s13, 1
    %p78 = por %p76, %p77
    %p79 = scmp.ne.s32.totalorder %s68, %s69
    %p80 = scmp.eq.s32.totalorder %s13, 0
    %p81 = por %p79, %p80
    %p82 = scmp.ne.s32.totalorder %s68, %s69
    %p83 = scmp.eq.s32.totalorder %s14, 1
    %p84 = por %p82, %p83
    %p86 = scmp.ne.s32.totalorder %s69, %s85
    %p87 = scmp.eq.s32.totalorder %s14, 0
    %p88 = por %p86, %p87
    %p89 = scmp.le.s32.totalorder 1, %s8
    %p90 = scmp.lt.s32.totalorder %s8, 3
    %p91 = pnand %p89, %p90
    %p92 = pneg %p91
    // Predicated region
    $region9: #{_lambda_.13} parent=5 // pred_check
      _
    $region10: #{_lambda_.13} parent=5 // pred_check_branch
      %94 = sbr.rel (%p91) target = $region12
    $region11: #{_lambda_.13} parent=5 // pred_region
      %s95 = ssub.s32 %s8, 1
      // Predicated region
      $region13: #{_lambda_.13} parent=11 // pred_check
        %p96 = pneg %p55
      $region14: #{_lambda_.13} parent=11 // pred_check_branch
        %98 = sbr.rel (%p96) target = $region16
      $region15: #{_lambda_.13} parent=11 // pred_region
        _
      $region16: #{_lambda_.13} parent=11 // pred_fallthru
        _
    $region12: #{_lambda_.13} parent=5 // pred_fallthru
      _
    %p99 = scmp.lt.s32.totalorder %s8, 2
    // Predicated region
    $region17: #{_lambda_.13} parent=5 // pred_check
      %p100 = pneg %p99
    $region18: #{_lambda_.13} parent=5 // pred_check_branch
      %102 = sbr.rel (%p100) target = $region20
    $region19: #{_lambda_.13} parent=5 // pred_region
      // Predicated region
      $region21: #{_lambda_.13} parent=19 // pred_check
        %p103 = pneg %p28
      $region22: #{_lambda_.13} parent=19 // pred_check_branch
        %105 = sbr.rel (%p103) target = $region24
      $region23: #{_lambda_.13} parent=19 // pred_region
        %s106 = smul.u32 8, %s8
        %p107 = scmp.lt.s32.totalorder %s106, 15
        %s108 = scalar_select %p107, %s106, 15
        %s109 = smul.addr %s108, 4
        %s110 = scalar_lea.vmem %s0, %s109
        %s111 = smul.u32 8, %s8
      $region24: #{_lambda_.13} parent=19 // pred_fallthru
        _
    $region20: #{_lambda_.13} parent=5 // pred_fallthru
      _
    %p112 = scmp.le.s32.totalorder 1, %s8
    %p113 = scmp.lt.s32.totalorder %s8, 3
    %p114 = pnand %p112, %p113
    %p115 = pneg %p114
    // Predicated region
    $region25: #{_lambda_.13} parent=5 // pred_check
      _
    $region26: #{_lambda_.13} parent=5 // pred_check_branch
      %117 = sbr.rel (%p114) target = $region28
    $region27: #{_lambda_.13} parent=5 // pred_region
      %s118 = ssub.s32 %s8, 1
      %s119 = smul.u32 8, %s13
      %p120 = scmp.lt.s32.totalorder %s119, 15
      %s121 = scalar_select %p120, %s119, 15
      %s122 = smul.addr %s121, 4
      %s123 = scalar_lea.vmem %s0, %s122
      %p124 = pneg %p34
      %p125 = pneg %p31
      %p126 = pneg %p55
      %p127 = pneg %p52
      %p128 = pneg %p81
      %p129 = pneg %p78
      %s130 = smul.u32 8, %s13
      %p131 = scmp.lt.s32.totalorder %s130, 15
      %s132 = scalar_select %p131, %s130, 15
      %s133 = smul.addr %s132, 4
      %s134 = smul.addr %s133, 4
      %s135 = scalar_lea.vmem %s2, %s134
      %s136 = smul.u32 8, %s13
      %p137 = scmp.lt.s32.totalorder %s136, 15
      %s138 = scalar_select %p137, %s136, 15
      %s139 = smul.addr %s138, 4
      %s140 = scalar_lea.vmem %s0, %s139
      %s141 = smul.u32 8, %s13
      %s142 = smul.u32 8, %s13
      %p143 = scmp.lt.s32.totalorder %s142, 15
      %s144 = scalar_select %p143, %s142, 15
      %s145 = smul.addr %s144, 4
      %s146 = smul.addr %s145, 4
      %s147 = scalar_lea.vmem %s2, %s146
      %s148 = smul.u32 8, %s13
      %v150 = vld [vmem:[%s140] sm:$0xf]
      %v151 = vld [vmem:[%s140 + $0x4] sm:$0xf]
      %v152 = vld [vmem:[%s140 + $0x8] sm:$0xf]
      %v153 = vld [vmem:[%s140 + $0xc] sm:$0xf]
      %v154 = vld [vmem:[%s140 + $0x10] sm:$0xf]
      %v155 = vld [vmem:[%s140 + $0x14] sm:$0xf]
      %v156 = vld [vmem:[%s140 + $0x18] sm:$0xf]
      %v157 = vld [vmem:[%s140 + $0x1c] sm:$0xf]
      %v158 = vld [vmem:[%s1] sm:$0xff]
      %v159 = vld [vmem:[%s1 + $0x8] sm:$0xff]
      %v160 = vld [vmem:[%s1 + $0x10] sm:$0xff]
      %v161 = vld [vmem:[%s1 + $0x18] sm:$0xff]
      %v162 = vld [vmem:[%s1 + $0x20] sm:$0xff]
      %v163 = vld [vmem:[%s1 + $0x28] sm:$0xff]
      %v164 = vld [vmem:[%s1 + $0x30] sm:$0xff]
      %v165 = vld [vmem:[%s1 + $0x38] sm:$0xff]
      %v166 = vld [vmem:[%s1 + $0x40] sm:$0xff]
      %v167 = vld [vmem:[%s1 + $0x48] sm:$0xff]
      %v168 = vld [vmem:[%s1 + $0x50] sm:$0xff]
      %v169 = vld [vmem:[%s1 + $0x58] sm:$0xff]
      %v170 = vld [vmem:[%s1 + $0x60] sm:$0xff]
      %v171 = vld [vmem:[%s1 + $0x68] sm:$0xff]
      %v172 = vld [vmem:[%s1 + $0x70] sm:$0xff]
      %v173 = vld [vmem:[%s1 + $0x78] sm:$0xff]
      %v182 = vunpack.c.l.b16 %v150
      %v183 = vunpack.c.l.b16 %v151
      %v184 = vunpack.c.l.b16 %v152
      %v185 = vunpack.c.l.b16 %v153
      %v186 = vunpack.c.l.b16 %v154
      %v187 = vunpack.c.l.b16 %v155
      %v188 = vunpack.c.l.b16 %v156
      %v189 = vunpack.c.l.b16 %v157
      %v190 = vpack.c.b16 %v183, %v182
      %v191 = vpack.c.b16 %v185, %v184
      %v192 = vpack.c.b16 %v187, %v186
      %v193 = vpack.c.b16 %v189, %v188
      %v210 = vunpack.c.l.b16 %v158
      %v211 = vunpack.c.h.b16 %v158
      %v212 = vunpack.c.l.b16 %v159
      %v213 = vunpack.c.h.b16 %v159
      %v214 = vunpack.c.l.b16 %v160
      %v215 = vunpack.c.h.b16 %v160
      %v216 = vunpack.c.l.b16 %v161
      %v217 = vunpack.c.h.b16 %v161
      %v218 = vunpack.c.l.b16 %v162
      %v219 = vunpack.c.h.b16 %v162
      %v220 = vunpack.c.l.b16 %v163
      %v221 = vunpack.c.h.b16 %v163
      %v222 = vunpack.c.l.b16 %v164
      %v223 = vunpack.c.h.b16 %v164
      %v224 = vunpack.c.l.b16 %v165
      %v225 = vunpack.c.h.b16 %v165
      %v226 = vunpack.c.l.b16 %v166
      %v227 = vunpack.c.h.b16 %v166
      %v228 = vunpack.c.l.b16 %v167
      %v229 = vunpack.c.h.b16 %v167
      %v230 = vunpack.c.l.b16 %v168
      %v231 = vunpack.c.h.b16 %v168
      %v232 = vunpack.c.l.b16 %v169
      %v233 = vunpack.c.h.b16 %v169
      %v234 = vunpack.c.l.b16 %v170
      %v235 = vunpack.c.h.b16 %v170
      %v236 = vunpack.c.l.b16 %v171
      %v237 = vunpack.c.h.b16 %v171
      %v238 = vunpack.c.l.b16 %v172
      %v239 = vunpack.c.h.b16 %v172
      %v240 = vunpack.c.l.b16 %v173
      %v241 = vunpack.c.h.b16 %v173
      %v242 = vpack.c.b16 %v214, %v210
      %v243 = vpack.c.b16 %v215, %v211
      %v244 = vpack.c.b16 %v216, %v212
      %v245 = vpack.c.b16 %v217, %v213
      %v246 = vpack.c.b16 %v222, %v218
      %v247 = vpack.c.b16 %v223, %v219
      %v248 = vpack.c.b16 %v224, %v220
      %v249 = vpack.c.b16 %v225, %v221
      %v250 = vpack.c.b16 %v230, %v226
      %v251 = vpack.c.b16 %v231, %v227
      %v252 = vpack.c.b16 %v232, %v228
      %v253 = vpack.c.b16 %v233, %v229
      %v254 = vpack.c.b16 %v238, %v234
      %v255 = vpack.c.b16 %v239, %v235
      %v256 = vpack.c.b16 %v240, %v236
      %v257 = vpack.c.b16 %v241, %v237
      %vm274 = vcmask 523264
      %v276 = vsel %vm274, %v190, 0
      %v279 = vsel %vm274, %v191, 0
      %v282 = vsel %vm274, %v192, 0
      %v285 = vsel %vm274, %v193, 0
      %287 = vmatprep.subr.bf16.mxu0 %v243
      %288 = vmatpush1.bf16.msra.mxu0 %v242
      %289 = vmatprep.subr.bf16.mxu0 %v247
      %290 = vmatpush1.bf16.msra.mxu0 %v246
      %291 = vmatprep.subr.bf16.mxu0 %v251
      %292 = vmatpush1.bf16.msra.mxu0 %v250
      %293 = vmatprep.subr.bf16.mxu0 %v255
      %294 = vmatpush1.bf16.msra.mxu0 %v254
      %295 = vmatprep.subr.bf16.mxu0 0
      %296 = vmatpush1.bf16.msra.mxu0 0
      %297 = vmatprep.subr.bf16.mxu0 0
      %298 = vmatpush1.bf16.msra.mxu0 0
      %299 = vmatprep.subr.bf16.mxu0 0
      %300 = vmatpush1.bf16.msra.mxu0 0
      %301 = vmatprep.subr.bf16.mxu0 0
      %302 = vmatpush1.bf16.msra.mxu0 0
      %303 = vmatprep.subr.bf16.mxu0 0
      %304 = vmatpush1.bf16.msra.mxu0 0
      %305 = vmatprep.subr.bf16.mxu0 0
      %306 = vmatpush1.bf16.msra.mxu0 0
      %307 = vmatprep.subr.bf16.mxu0 0
      %308 = vmatpush1.bf16.msra.mxu0 0
      %309 = vmatprep.subr.bf16.mxu0 0
      %310 = vmatpush1.bf16.msra.mxu0 0
      %311 = vmatprep.subr.bf16.mxu0 0
      %312 = vmatpush1.bf16.msra.mxu0 0
      %313 = vmatprep.subr.bf16.mxu0 0
      %314 = vmatpush1.bf16.msra.mxu0 0
      %315 = vmatprep.subr.bf16.mxu0 0
      %316 = vmatpush1.bf16.msra.mxu0 0
      %317 = vmatprep.subr.bf16.mxu0 0
      %318 = vmatpush1.bf16.msra.mxu0 0
      %319 = vmatprep.mubr.bf16.mxu0 0
      %320 = vmatmul.mubr.bf16.gmra.mrb[0].mxu0 %v276
      %v321 = vpop.f32.mrb[0].mxu0
      %v322 = vadd.f32 0.0, %v321
      %v323 = vpop.f32.mrb[0].mxu0
      %v324 = vadd.f32 0.0, %v323
      %v325 = vpop.f32.mrb[0].mxu0
      %v326 = vadd.f32 0.0, %v325
      %v327 = vpop.f32.mrb[0].mxu0
      %v328 = vadd.f32 0.0, %v327
      %329 = vmatprep.mubr.bf16.mxu0 0
      %330 = vmatmul.mubr.bf16.gmra.mrb[0].mxu0 %v279
      %v331 = vpop.f32.mrb[0].mxu0
      %v332 = vadd.f32 0.0, %v331
      %v333 = vpop.f32.mrb[0].mxu0
      %v334 = vadd.f32 0.0, %v333
      %v335 = vpop.f32.mrb[0].mxu0
      %v336 = vadd.f32 0.0, %v335
      %v337 = vpop.f32.mrb[0].mxu0
      %v338 = vadd.f32 0.0, %v337
      %339 = vmatprep.mubr.bf16.mxu0 0
      %340 = vmatmul.mubr.bf16.gmra.mrb[0].mxu0 %v282
      %v341 = vpop.f32.mrb[0].mxu0
      %v342 = vadd.f32 0.0, %v341
      %v343 = vpop.f32.mrb[0].mxu0
      %v344 = vadd.f32 0.0, %v343
      %v345 = vpop.f32.mrb[0].mxu0
      %v346 = vadd.f32 0.0, %v345
      %v347 = vpop.f32.mrb[0].mxu0
      %v348 = vadd.f32 0.0, %v347
      %349 = vmatprep.mubr.bf16.mxu0 0
      %350 = vmatmul.mubr.bf16.gmra.mrb[0].mxu0 %v285
      %v351 = vpop.f32.mrb[0].mxu0
      %v352 = vadd.f32 0.0, %v351
      %v353 = vpop.f32.mrb[0].mxu0
      %v354 = vadd.f32 0.0, %v353
      %v355 = vpop.f32.mrb[0].mxu0
      %v356 = vadd.f32 0.0, %v355
      %v357 = vpop.f32.mrb[0].mxu0
      %v358 = vadd.f32 0.0, %v357
      %359 = vdwg.mxu0
      %360 = vmatprep.subr.bf16.mxu0 %v245
      %361 = vmatpush1.bf16.msra.mxu0 %v244
      %362 = vmatprep.subr.bf16.mxu0 %v249
      %363 = vmatpush1.bf16.msra.mxu0 %v248
      %364 = vmatprep.subr.bf16.mxu0 %v253
      %365 = vmatpush1.bf16.msra.mxu0 %v252
      %366 = vmatprep.subr.bf16.mxu0 %v257
      %367 = vmatpush1.bf16.msra.mxu0 %v256
      %368 = vmatprep.subr.bf16.mxu0 0
      %369 = vmatpush1.bf16.msra.mxu0 0
      %370 = vmatprep.subr.bf16.mxu0 0
      %371 = vmatpush1.bf16.msra.mxu0 0
      %372 = vmatprep.subr.bf16.mxu0 0
      %373 = vmatpush1.bf16.msra.mxu0 0
      %374 = vmatprep.subr.bf16.mxu0 0
      %375 = vmatpush1.bf16.msra.mxu0 0
      %376 = vmatprep.subr.bf16.mxu0 0
      %377 = vmatpush1.bf16.msra.mxu0 0
      %378 = vmatprep.subr.bf16.mxu0 0
      %379 = vmatpush1.bf16.msra.mxu0 0
      %380 = vmatprep.subr.bf16.mxu0 0
      %381 = vmatpush1.bf16.msra.mxu0 0
      %382 = vmatprep.subr.bf16.mxu0 0
      %383 = vmatpush1.bf16.msra.mxu0 0
      %384 = vmatprep.subr.bf16.mxu0 0
      %385 = vmatpush1.bf16.msra.mxu0 0
      %386 = vmatprep.subr.bf16.mxu0 0
      %387 = vmatpush1.bf16.msra.mxu0 0
      %388 = vmatprep.subr.bf16.mxu0 0
      %389 = vmatpush1.bf16.msra.mxu0 0
      %390 = vmatprep.subr.bf16.mxu0 0
      %391 = vmatpush1.bf16.msra.mxu0 0
      %392 = vmatprep.mubr.bf16.mxu0 0
      %393 = vmatmul.mubr.bf16.gmra.mrb[0].mxu0 %v276
      %v394 = vpop.f32.mrb[0].mxu0
      %v395 = vadd.f32 0.0, %v394
      %v396 = vpop.f32.mrb[0].mxu0
      %v397 = vadd.f32 0.0, %v396
      %v398 = vpop.f32.mrb[0].mxu0
      %v399 = vadd.f32 0.0, %v398
      %v400 = vpop.f32.mrb[0].mxu0
      %v401 = vadd.f32 0.0, %v400
      %402 = vmatprep.mubr.bf16.mxu0 0
      %403 = vmatmul.mubr.bf16.gmra.mrb[0].mxu0 %v279
      %v404 = vpop.f32.mrb[0].mxu0
      %v405 = vadd.f32 0.0, %v404
      %v406 = vpop.f32.mrb[0].mxu0
      %v407 = vadd.f32 0.0, %v406
      %v408 = vpop.f32.mrb[0].mxu0
      %v409 = vadd.f32 0.0, %v408
      %v410 = vpop.f32.mrb[0].mxu0
      %v411 = vadd.f32 0.0, %v410
      %412 = vmatprep.mubr.bf16.mxu0 0
      %413 = vmatmul.mubr.bf16.gmra.mrb[0].mxu0 %v282
      %v414 = vpop.f32.mrb[0].mxu0
      %v415 = vadd.f32 0.0, %v414
      %v416 = vpop.f32.mrb[0].mxu0
      %v417 = vadd.f32 0.0, %v416
      %v418 = vpop.f32.mrb[0].mxu0
      %v419 = vadd.f32 0.0, %v418
      %v420 = vpop.f32.mrb[0].mxu0
      %v421 = vadd.f32 0.0, %v420
      %422 = vmatprep.mubr.bf16.mxu0 0
      %423 = vmatmul.mubr.bf16.gmra.mrb[0].mxu0 %v285
      %v424 = vpop.f32.mrb[0].mxu0
      %v425 = vadd.f32 0.0, %v424
      %v426 = vpop.f32.mrb[0].mxu0
      %v427 = vadd.f32 0.0, %v426
      %v428 = vpop.f32.mrb[0].mxu0
      %v429 = vadd.f32 0.0, %v428
      %v430 = vpop.f32.mrb[0].mxu0
      %v431 = vadd.f32 0.0, %v430
      %432 = vdwg.mxu0
      %v433 = vpack.c.bf16 %v326, %v322
      %v434 = vpack.c.bf16 %v328, %v324
      %v435 = vpack.c.bf16 %v399, %v395
      %v436 = vpack.c.bf16 %v401, %v397
      %v437 = vpack.c.bf16 %v336, %v332
      %v438 = vpack.c.bf16 %v338, %v334
      %v439 = vpack.c.bf16 %v409, %v405
      %v440 = vpack.c.bf16 %v411, %v407
      %v441 = vpack.c.bf16 %v346, %v342
      %v442 = vpack.c.bf16 %v348, %v344
      %v443 = vpack.c.bf16 %v419, %v415
      %v444 = vpack.c.bf16 %v421, %v417
      %v445 = vpack.c.bf16 %v356, %v352
      %v446 = vpack.c.bf16 %v358, %v354
      %v447 = vpack.c.bf16 %v429, %v425
      %v448 = vpack.c.bf16 %v431, %v427
      %v465 = vunpack.c.l.b16 %v433
      %v466 = vunpack.c.l.b16 %v434
      %v467 = vunpack.c.l.b16 %v435
      %v468 = vunpack.c.l.b16 %v436
      %v469 = vunpack.c.h.b16 %v433
      %v470 = vunpack.c.h.b16 %v434
      %v471 = vunpack.c.h.b16 %v435
      %v472 = vunpack.c.h.b16 %v436
      %v473 = vunpack.c.l.b16 %v437
      %v474 = vunpack.c.l.b16 %v438
      %v475 = vunpack.c.l.b16 %v439
      %v476 = vunpack.c.l.b16 %v440
      %v477 = vunpack.c.h.b16 %v437
      %v478 = vunpack.c.h.b16 %v438
      %v479 = vunpack.c.h.b16 %v439
      %v480 = vunpack.c.h.b16 %v440
      %v481 = vunpack.c.l.b16 %v441
      %v482 = vunpack.c.l.b16 %v442
      %v483 = vunpack.c.l.b16 %v443
      %v484 = vunpack.c.l.b16 %v444
      %v485 = vunpack.c.h.b16 %v441
      %v486 = vunpack.c.h.b16 %v442
      %v487 = vunpack.c.h.b16 %v443
      %v488 = vunpack.c.h.b16 %v444
      %v489 = vunpack.c.l.b16 %v445
      %v490 = vunpack.c.l.b16 %v446
      %v491 = vunpack.c.l.b16 %v447
      %v492 = vunpack.c.l.b16 %v448
      %v493 = vunpack.c.h.b16 %v445
      %v494 = vunpack.c.h.b16 %v446
      %v495 = vunpack.c.h.b16 %v447
      %v496 = vunpack.c.h.b16 %v448
      %v497 = vpack.c.b16 %v466, %v465
      %v498 = vpack.c.b16 %v468, %v467
      %v499 = vpack.c.b16 %v470, %v469
      %v500 = vpack.c.b16 %v472, %v471
      %v501 = vpack.c.b16 %v474, %v473
      %v502 = vpack.c.b16 %v476, %v475
      %v503 = vpack.c.b16 %v478, %v477
      %v504 = vpack.c.b16 %v480, %v479
      %v505 = vpack.c.b16 %v482, %v481
      %v506 = vpack.c.b16 %v484, %v483
      %v507 = vpack.c.b16 %v486, %v485
      %v508 = vpack.c.b16 %v488, %v487
      %v509 = vpack.c.b16 %v490, %v489
      %v510 = vpack.c.b16 %v492, %v491
      %v511 = vpack.c.b16 %v494, %v493
      %v512 = vpack.c.b16 %v496, %v495
      %529 = vst [vmem:[%s147] sm:$0xff] %v497
      %530 = vst [vmem:[%s147 + $0x8] sm:$0xff] %v498
      %531 = vst [vmem:[%s147 + $0x10] sm:$0xff] %v499
      %532 = vst [vmem:[%s147 + $0x18] sm:$0xff] %v500
      %533 = vst [vmem:[%s147 + $0x20] sm:$0xff] %v501
      %534 = vst [vmem:[%s147 + $0x28] sm:$0xff] %v502
      %535 = vst [vmem:[%s147 + $0x30] sm:$0xff] %v503
      %536 = vst [vmem:[%s147 + $0x38] sm:$0xff] %v504
      %537 = vst [vmem:[%s147 + $0x40] sm:$0xff] %v505
      %538 = vst [vmem:[%s147 + $0x48] sm:$0xff] %v506
      %539 = vst [vmem:[%s147 + $0x50] sm:$0xff] %v507
      %540 = vst [vmem:[%s147 + $0x58] sm:$0xff] %v508
      %541 = vst [vmem:[%s147 + $0x60] sm:$0xff] %v509
      %542 = vst [vmem:[%s147 + $0x68] sm:$0xff] %v510
      %543 = vst [vmem:[%s147 + $0x70] sm:$0xff] %v511
      %544 = vst [vmem:[%s147 + $0x78] sm:$0xff] %v512
      %s545 = smul.u32 8, %s13
      %p546 = scmp.lt.s32.totalorder %s545, 15
      %s547 = scalar_select %p546, %s545, 15
      %s548 = smul.addr %s547, 4
      %s549 = smul.addr %s548, 4
      %s550 = scalar_lea.vmem %s2, %s549
      // Predicated region
      $region29: #{_lambda_.13} parent=27 // pred_check
        %p551 = pneg %p78
      $region30: #{_lambda_.13} parent=27 // pred_check_branch
        %553 = sbr.rel (%p551) target = $region32
      $region31: #{_lambda_.13} parent=27 // pred_region
        %s554 = smul.u32 8, %s13
      $region32: #{_lambda_.13} parent=27 // pred_fallthru
        _
    $region28: #{_lambda_.13} parent=5 // pred_fallthru
      _
    %p555 = scmp.le.s32.totalorder 2, %s8
    // Predicated region
    $region33: #{_lambda_.13} parent=5 // pred_check
      %p556 = pneg %p555
    $region34: #{_lambda_.13} parent=5 // pred_check_branch
      %558 = sbr.rel (%p556) target = $region36
    $region35: #{_lambda_.13} parent=5 // pred_region
      %s559 = ssub.s32 %s8, 2
      // Predicated region
      $region37: #{_lambda_.13} parent=35 // pred_check
        %p560 = pneg %p84
      $region38: #{_lambda_.13} parent=35 // pred_check_branch
        %562 = sbr.rel (%p560) target = $region40
      $region39: #{_lambda_.13} parent=35 // pred_region
        %s563 = smul.u32 8, %s14
        %p564 = scmp.lt.s32.totalorder %s563, 15
        %s565 = scalar_select %p564, %s563, 15
        %s566 = smul.addr %s565, 4
        %s567 = smul.addr %s566, 4
        %s568 = scalar_lea.vmem %s2, %s567
      $region40: #{_lambda_.13} parent=35 // pred_fallthru
        _
    $region36: #{_lambda_.13} parent=5 // pred_fallthru
      _
  $region6: #{_lambda_.13} parent=0 // loop_footer
    %s12 = sadd.s32 1, %s8
  $region7: #{_lambda_.13} parent=0 // loop_footer_branch
    %7 = sbr.rel target = $region3
  $region8: #{_lambda_.13} parent=0 // loop_exit
    _

// kernel: _lambda_.14
$region0: #{_lambda_.14}
  #allocation0 [shape = 'u32[]', space=smem, size = 0x4, offset = 0x4, fixed_abs, tag = 'smem constant byte address 0x4 - core index']
  #allocation1 [shape = 'u32[144,128]{1,0:T(1,128)}', space=vmem, size = 0x12000, scoped, tag = 'internal scratch']
  %s0 = inlined_call_operand.vmem [shape: bf16[512,32], index: 0, kind: input, shape index: {}]
  %s1 = inlined_call_operand.vmem [shape: bf16[32,256], index: 1, kind: input, shape index: {}]
  %s2 = inlined_call_operand.vmem [shape: bf16[512,256], index: 2, kind: output, shape index: {}]
  %s3 = sld [smem:[#allocation0]]
  $region41: #{_lambda_.14} parent=0
    _
  %s5 = ssub.s32 1, %s3
  %s6 = scalar_select 0, %s5, %s3
  loop: start=0, step=1, limit=4
  $region2: #{_lambda_.14} parent=0 // loop_pre_header
    _
  $region3: #{_lambda_.14} parent=0 // loop_header
    %s8 = sphi 0, %s12
    %p9 = scmp.ge.s32.totalorder %s8, 4
    %s18 = sphi 0, %s20
    %s21 = sphi 0, %s18
    %s22 = sphi 0, %s21
    %s38 = sphi 0, %s22
    %s42 = sphi 0, %s42
    %s44 = sphi 0, %s42
    %s45 = sphi 0, %s44
    %s59 = sphi 0, %s45
    %s65 = sphi 0, %s67
    %s68 = sphi 0, %s65
    %s69 = sphi 0, %s68
    %s85 = sphi 0, %s69
  $region4: #{_lambda_.14} parent=0 // loop_header_branch
    %11 = sbr.rel (%p9) target = $region8
  $region5: #{_lambda_.14} parent=0 // loop_body
    %s13 = ssub.s32 %s8, 1
    %s14 = ssub.s32 %s8, 2
    %s15 = sadd.s32 %s8, 1
    %s16 = ssub.s32 %s8, %s15
    %p17 = scmp.eq.s32.totalorder %s16, 0
    %s19 = sadd.s32 %s18, 1
    %s20 = scalar_select %p17, %s18, %s19
    %p23 = pneg %p17
    %p24 = scmp.eq.s32.totalorder %s8, 1
    %p25 = por %p23, %p24
    %p26 = scmp.ne.s32.totalorder %s18, %s21
    %p27 = scmp.eq.s32.totalorder %s8, 0
    %p28 = por %p26, %p27
    %p29 = scmp.ne.s32.totalorder %s18, %s21
    %p30 = scmp.eq.s32.totalorder %s13, 1
    %p31 = por %p29, %p30
    %p32 = scmp.ne.s32.totalorder %s21, %s22
    %p33 = scmp.eq.s32.totalorder %s13, 0
    %p34 = por %p32, %p33
    %p35 = scmp.ne.s32.totalorder %s21, %s22
    %p36 = scmp.eq.s32.totalorder %s14, 1
    %p37 = por %p35, %p36
    %p39 = scmp.ne.s32.totalorder %s22, %s38
    %p40 = scmp.eq.s32.totalorder %s14, 0
    %p41 = por %p39, %p40
    %s43 = sadd.s32 %s42, 1
    %p46 = scmp.eq.s32.totalorder %s8, 1
    %p47 = scmp.ne.s32.totalorder %s42, %s44
    %p48 = scmp.eq.s32.totalorder %s8, 0
    %p49 = por %p47, %p48
    %p50 = scmp.ne.s32.totalorder %s42, %s44
    %p51 = scmp.eq.s32.totalorder %s13, 1
    %p52 = por %p50, %p51
    %p53 = scmp.ne.s32.totalorder %s44, %s45
    %p54 = scmp.eq.s32.totalorder %s13, 0
    %p55 = por %p53, %p54
    %p56 = scmp.ne.s32.totalorder %s44, %s45
    %p57 = scmp.eq.s32.totalorder %s14, 1
    %p58 = por %p56, %p57
    %p60 = scmp.ne.s32.totalorder %s45, %s59
    %p61 = scmp.eq.s32.totalorder %s14, 0
    %p62 = por %p60, %p61
    %s63 = ssub.s32 %s8, %s15
    %p64 = scmp.eq.s32.totalorder %s63, 0
    %s66 = sadd.s32 %s65, 1
    %s67 = scalar_select %p64, %s65, %s66
    %p70 = pneg %p64
    %p71 = scmp.eq.s32.totalorder %s8, 1
    %p72 = por %p70, %p71
    %p73 = scmp.ne.s32.totalorder %s65, %s68
    %p74 = scmp.eq.s32.totalorder %s8, 0
    %p75 = por %p73, %p74
    %p76 = scmp.ne.s32.totalorder %s65, %s68
    %p77 = scmp.eq.s32.totalorder %s13, 1
    %p78 = por %p76, %p77
    %p79 = scmp.ne.s32.totalorder %s68, %s69
    %p80 = scmp.eq.s32.totalorder %s13, 0
    %p81 = por %p79, %p80
    %p82 = scmp.ne.s32.totalorder %s68, %s69
    %p83 = scmp.eq.s32.totalorder %s14, 1
    %p84 = por %p82, %p83
    %p86 = scmp.ne.s32.totalorder %s69, %s85
    %p87 = scmp.eq.s32.totalorder %s14, 0
    %p88 = por %p86, %p87
    %p89 = scmp.le.s32.totalorder 1, %s8
    %p90 = scmp.lt.s32.totalorder %s8, 3
    %p91 = pnand %p89, %p90
    %p92 = pneg %p91
    // Predicated region
    $region9: #{_lambda_.14} parent=5 // pred_check
      _
    $region10: #{_lambda_.14} parent=5 // pred_check_branch
      %94 = sbr.rel (%p91) target = $region12
    $region11: #{_lambda_.14} parent=5 // pred_region
      %s95 = ssub.s32 %s8, 1
      // Predicated region
      $region13: #{_lambda_.14} parent=11 // pred_check
        %p96 = pneg %p55
      $region14: #{_lambda_.14} parent=11 // pred_check_branch
        %98 = sbr.rel (%p96) target = $region16
      $region15: #{_lambda_.14} parent=11 // pred_region
        _
      $region16: #{_lambda_.14} parent=11 // pred_fallthru
        _
    $region12: #{_lambda_.14} parent=5 // pred_fallthru
      _
    %p99 = scmp.lt.s32.totalorder %s8, 2
    // Predicated region
    $region17: #{_lambda_.14} parent=5 // pred_check
      %p100 = pneg %p99
    $region18: #{_lambda_.14} parent=5 // pred_check_branch
      %102 = sbr.rel (%p100) target = $region20
    $region19: #{_lambda_.14} parent=5 // pred_region
      // Predicated region
      $region21: #{_lambda_.14} parent=19 // pred_check
        %p103 = pneg %p28
      $region22: #{_lambda_.14} parent=19 // pred_check_branch
        %105 = sbr.rel (%p103) target = $region24
      $region23: #{_lambda_.14} parent=19 // pred_region
        %s106 = smul.u32 32, %s8
        %p107 = scmp.lt.s32.totalorder %s106, 63
        %s108 = scalar_select %p107, %s106, 63
        %s109 = smul.addr %s108, 4
        %s110 = scalar_lea.vmem %s0, %s109
        %s111 = smul.u32 32, %s8
      $region24: #{_lambda_.14} parent=19 // pred_fallthru
        _
    $region20: #{_lambda_.14} parent=5 // pred_fallthru
      _
    %p112 = scmp.le.s32.totalorder 1, %s8
    %p113 = scmp.lt.s32.totalorder %s8, 3
    %p114 = pnand %p112, %p113
    %p115 = pneg %p114
    // Predicated region
    $region25: #{_lambda_.14} parent=5 // pred_check
      _
    $region26: #{_lambda_.14} parent=5 // pred_check_branch
      %117 = sbr.rel (%p114) target = $region28
    $region27: #{_lambda_.14} parent=5 // pred_region
      %s118 = ssub.s32 %s8, 1
      %s119 = smul.u32 32, %s13
      %p120 = scmp.lt.s32.totalorder %s119, 63
      %s121 = scalar_select %p120, %s119, 63
      %s122 = smul.addr %s121, 4
      %s123 = scalar_lea.vmem %s0, %s122
      %p124 = pneg %p34
      %p125 = pneg %p31
      %p126 = pneg %p55
      %p127 = pneg %p52
      %p128 = pneg %p81
      %p129 = pneg %p78
      %s130 = smul.u32 32, %s13
      %p131 = scmp.lt.s32.totalorder %s130, 63
      %s132 = scalar_select %p131, %s130, 63
      %s133 = smul.addr %s132, 2
      %s134 = smul.addr %s133, 4
      %s135 = scalar_lea.vmem %s2, %s134
      %s136 = smul.u32 32, %s13
      %p137 = scmp.lt.s32.totalorder %s136, 63
      %s138 = scalar_select %p137, %s136, 63
      %s139 = smul.addr %s138, 4
      %s140 = scalar_lea.vmem %s0, %s139
      %s141 = smul.u32 32, %s13
      %s142 = smul.u32 32, %s13
      %p143 = scmp.lt.s32.totalorder %s142, 63
      %s144 = scalar_select %p143, %s142, 63
      %s145 = smul.addr %s144, 2
      %s146 = smul.addr %s145, 4
      %s147 = scalar_lea.vmem %s2, %s146
      %s148 = smul.u32 32, %s13
      %v150 = vld [vmem:[%s140] sm:$0xf]
      %v151 = vld [vmem:[%s140 + $0x4] sm:$0xf]
      %v152 = vld [vmem:[%s140 + $0x8] sm:$0xf]
      %v153 = vld [vmem:[%s140 + $0xc] sm:$0xf]
      %v154 = vld [vmem:[%s140 + $0x10] sm:$0xf]
      %v155 = vld [vmem:[%s140 + $0x14] sm:$0xf]
      %v156 = vld [vmem:[%s140 + $0x18] sm:$0xf]
      %v157 = vld [vmem:[%s140 + $0x1c] sm:$0xf]
      %v158 = vld [vmem:[%s140 + $0x20] sm:$0xf]
      %v159 = vld [vmem:[%s140 + $0x24] sm:$0xf]
      %v160 = vld [vmem:[%s140 + $0x28] sm:$0xf]
      %v161 = vld [vmem:[%s140 + $0x2c] sm:$0xf]
      %v162 = vld [vmem:[%s140 + $0x30] sm:$0xf]
      %v163 = vld [vmem:[%s140 + $0x34] sm:$0xf]
      %v164 = vld [vmem:[%s140 + $0x38] sm:$0xf]
      %v165 = vld [vmem:[%s140 + $0x3c] sm:$0xf]
      %v166 = vld [vmem:[%s140 + $0x40] sm:$0xf]
      %v167 = vld [vmem:[%s140 + $0x44] sm:$0xf]
      %v168 = vld [vmem:[%s140 + $0x48] sm:$0xf]
      %v169 = vld [vmem:[%s140 + $0x4c] sm:$0xf]
      %v170 = vld [vmem:[%s140 + $0x50] sm:$0xf]
      %v171 = vld [vmem:[%s140 + $0x54] sm:$0xf]
      %v172 = vld [vmem:[%s140 + $0x58] sm:$0xf]
      %v173 = vld [vmem:[%s140 + $0x5c] sm:$0xf]
      %v174 = vld [vmem:[%s140 + $0x60] sm:$0xf]
      %v175 = vld [vmem:[%s140 + $0x64] sm:$0xf]
      %v176 = vld [vmem:[%s140 + $0x68] sm:$0xf]
      %v177 = vld [vmem:[%s140 + $0x6c] sm:$0xf]
      %v178 = vld [vmem:[%s140 + $0x70] sm:$0xf]
      %v179 = vld [vmem:[%s140 + $0x74] sm:$0xf]
      %v180 = vld [vmem:[%s140 + $0x78] sm:$0xf]
      %v181 = vld [vmem:[%s140 + $0x7c] sm:$0xf]
      %v182 = vld [vmem:[%s1] sm:$0xff]
      %v183 = vld [vmem:[%s1 + $0x8] sm:$0xff]
      %v184 = vld [vmem:[%s1 + $0x10] sm:$0xff]
      %v185 = vld [vmem:[%s1 + $0x18] sm:$0xff]
      %v218 = vunpack.c.l.b16 %v150
      %v219 = vunpack.c.l.b16 %v151
      %v220 = vunpack.c.l.b16 %v152
      %v221 = vunpack.c.l.b16 %v153
      %v222 = vunpack.c.l.b16 %v154
      %v223 = vunpack.c.l.b16 %v155
      %v224 = vunpack.c.l.b16 %v156
      %v225 = vunpack.c.l.b16 %v157
      %v226 = vunpack.c.l.b16 %v158
      %v227 = vunpack.c.l.b16 %v159
      %v228 = vunpack.c.l.b16 %v160
      %v229 = vunpack.c.l.b16 %v161
      %v230 = vunpack.c.l.b16 %v162
      %v231 = vunpack.c.l.b16 %v163
      %v232 = vunpack.c.l.b16 %v164
      %v233 = vunpack.c.l.b16 %v165
      %v234 = vunpack.c.l.b16 %v166
      %v235 = vunpack.c.l.b16 %v167
      %v236 = vunpack.c.l.b16 %v168
      %v237 = vunpack.c.l.b16 %v169
      %v238 = vunpack.c.l.b16 %v170
      %v239 = vunpack.c.l.b16 %v171
      %v240 = vunpack.c.l.b16 %v172
      %v241 = vunpack.c.l.b16 %v173
      %v242 = vunpack.c.l.b16 %v174
      %v243 = vunpack.c.l.b16 %v175
      %v244 = vunpack.c.l.b16 %v176
      %v245 = vunpack.c.l.b16 %v177
      %v246 = vunpack.c.l.b16 %v178
      %v247 = vunpack.c.l.b16 %v179
      %v248 = vunpack.c.l.b16 %v180
      %v249 = vunpack.c.l.b16 %v181
      %v250 = vpack.c.b16 %v219, %v218
      %v251 = vpack.c.b16 %v221, %v220
      %v252 = vpack.c.b16 %v223, %v222
      %v253 = vpack.c.b16 %v225, %v224
      %v254 = vpack.c.b16 %v227, %v226
      %v255 = vpack.c.b16 %v229, %v228
      %v256 = vpack.c.b16 %v231, %v230
      %v257 = vpack.c.b16 %v233, %v232
      %v258 = vpack.c.b16 %v235, %v234
      %v259 = vpack.c.b16 %v237, %v236
      %v260 = vpack.c.b16 %v239, %v238
      %v261 = vpack.c.b16 %v241, %v240
      %v262 = vpack.c.b16 %v243, %v242
      %v263 = vpack.c.b16 %v245, %v244
      %v264 = vpack.c.b16 %v247, %v246
      %v265 = vpack.c.b16 %v249, %v248
      %v270 = vunpack.c.l.b16 %v182
      %v271 = vunpack.c.h.b16 %v182
      %v272 = vunpack.c.l.b16 %v183
      %v273 = vunpack.c.h.b16 %v183
      %v274 = vunpack.c.l.b16 %v184
      %v275 = vunpack.c.h.b16 %v184
      %v276 = vunpack.c.l.b16 %v185
      %v277 = vunpack.c.h.b16 %v185
      %v278 = vpack.c.b16 %v272, %v270
      %v279 = vpack.c.b16 %v273, %v271
      %v280 = vpack.c.b16 %v276, %v274
      %v281 = vpack.c.b16 %v277, %v275
      %vm286 = vcmask 261120
      %v288 = vsel %vm286, %v250, 0
      %v291 = vsel %vm286, %v251, 0
      %v294 = vsel %vm286, %v252, 0
      %v297 = vsel %vm286, %v253, 0
      %v300 = vsel %vm286, %v254, 0
      %v303 = vsel %vm286, %v255, 0
      %v306 = vsel %vm286, %v256, 0
      %v309 = vsel %vm286, %v257, 0
      %v312 = vsel %vm286, %v258, 0
      %v315 = vsel %vm286, %v259, 0
      %v318 = vsel %vm286, %v260, 0
      %v321 = vsel %vm286, %v261, 0
      %v324 = vsel %vm286, %v262, 0
      %v327 = vsel %vm286, %v263, 0
      %v330 = vsel %vm286, %v264, 0
      %v333 = vsel %vm286, %v265, 0
      %335 = vmatprep.subr.bf16.mxu0 %v279
      %336 = vmatpush1.bf16.msra.mxu0 %v278
      %337 = vmatprep.subr.bf16.mxu0 %v281
      %338 = vmatpush1.bf16.msra.mxu0 %v280
      %339 = vmatprep.subr.bf16.mxu0 0
      %340 = vmatpush1.bf16.msra.mxu0 0
      %341 = vmatprep.subr.bf16.mxu0 0
      %342 = vmatpush1.bf16.msra.mxu0 0
      %343 = vmatprep.subr.bf16.mxu0 0
      %344 = vmatpush1.bf16.msra.mxu0 0
      %345 = vmatprep.subr.bf16.mxu0 0
      %346 = vmatpush1.bf16.msra.mxu0 0
      %347 = vmatprep.subr.bf16.mxu0 0
      %348 = vmatpush1.bf16.msra.mxu0 0
      %349 = vmatprep.subr.bf16.mxu0 0
      %350 = vmatpush1.bf16.msra.mxu0 0
      %351 = vmatprep.subr.bf16.mxu0 0
      %352 = vmatpush1.bf16.msra.mxu0 0
      %353 = vmatprep.subr.bf16.mxu0 0
      %354 = vmatpush1.bf16.msra.mxu0 0
      %355 = vmatprep.subr.bf16.mxu0 0
      %356 = vmatpush1.bf16.msra.mxu0 0
      %357 = vmatprep.subr.bf16.mxu0 0
      %358 = vmatpush1.bf16.msra.mxu0 0
      %359 = vmatprep.subr.bf16.mxu0 0
      %360 = vmatpush1.bf16.msra.mxu0 0
      %361 = vmatprep.subr.bf16.mxu0 0
      %362 = vmatpush1.bf16.msra.mxu0 0
      %363 = vmatprep.subr.bf16.mxu0 0
      %364 = vmatpush1.bf16.msra.mxu0 0
      %365 = vmatprep.subr.bf16.mxu0 0
      %366 = vmatpush1.bf16.msra.mxu0 0
      %367 = vmatprep.mubr.bf16.mxu0 0
      %368 = vmatmul.mubr.bf16.gmra.mrb[0].mxu0 %v288
      %v369 = vpop.f32.mrb[0].mxu0
      %v370 = vadd.f32 0.0, %v369
      %v371 = vpop.f32.mrb[0].mxu0
      %v372 = vadd.f32 0.0, %v371
      %v373 = vpop.f32.mrb[0].mxu0
      %v374 = vadd.f32 0.0, %v373
      %v375 = vpop.f32.mrb[0].mxu0
      %v376 = vadd.f32 0.0, %v375
      %377 = vmatprep.mubr.bf16.mxu0 0
      %378 = vmatmul.mubr.bf16.gmra.mrb[0].mxu0 %v291
      %v379 = vpop.f32.mrb[0].mxu0
      %v380 = vadd.f32 0.0, %v379
      %v381 = vpop.f32.mrb[0].mxu0
      %v382 = vadd.f32 0.0, %v381
      %v383 = vpop.f32.mrb[0].mxu0
      %v384 = vadd.f32 0.0, %v383
      %v385 = vpop.f32.mrb[0].mxu0
      %v386 = vadd.f32 0.0, %v385
      %387 = vmatprep.mubr.bf16.mxu0 0
      %388 = vmatmul.mubr.bf16.gmra.mrb[0].mxu0 %v294
      %v389 = vpop.f32.mrb[0].mxu0
      %v390 = vadd.f32 0.0, %v389
      %v391 = vpop.f32.mrb[0].mxu0
      %v392 = vadd.f32 0.0, %v391
      %v393 = vpop.f32.mrb[0].mxu0
      %v394 = vadd.f32 0.0, %v393
      %v395 = vpop.f32.mrb[0].mxu0
      %v396 = vadd.f32 0.0, %v395
      %397 = vmatprep.mubr.bf16.mxu0 0
      %398 = vmatmul.mubr.bf16.gmra.mrb[0].mxu0 %v297
      %v399 = vpop.f32.mrb[0].mxu0
      %v400 = vadd.f32 0.0, %v399
      %v401 = vpop.f32.mrb[0].mxu0
      %v402 = vadd.f32 0.0, %v401
      %v403 = vpop.f32.mrb[0].mxu0
      %v404 = vadd.f32 0.0, %v403
      %v405 = vpop.f32.mrb[0].mxu0
      %v406 = vadd.f32 0.0, %v405
      %407 = vmatprep.mubr.bf16.mxu0 0
      %408 = vmatmul.mubr.bf16.gmra.mrb[0].mxu0 %v300
      %v409 = vpop.f32.mrb[0].mxu0
      %v410 = vadd.f32 0.0, %v409
      %v411 = vpop.f32.mrb[0].mxu0
      %v412 = vadd.f32 0.0, %v411
      %v413 = vpop.f32.mrb[0].mxu0
      %v414 = vadd.f32 0.0, %v413
      %v415 = vpop.f32.mrb[0].mxu0
      %v416 = vadd.f32 0.0, %v415
      %417 = vmatprep.mubr.bf16.mxu0 0
      %418 = vmatmul.mubr.bf16.gmra.mrb[0].mxu0 %v303
      %v419 = vpop.f32.mrb[0].mxu0
      %v420 = vadd.f32 0.0, %v419
      %v421 = vpop.f32.mrb[0].mxu0
      %v422 = vadd.f32 0.0, %v421
      %v423 = vpop.f32.mrb[0].mxu0
      %v424 = vadd.f32 0.0, %v423
      %v425 = vpop.f32.mrb[0].mxu0
      %v426 = vadd.f32 0.0, %v425
      %427 = vmatprep.mubr.bf16.mxu0 0
      %428 = vmatmul.mubr.bf16.gmra.mrb[0].mxu0 %v306
      %v429 = vpop.f32.mrb[0].mxu0
      %v430 = vadd.f32 0.0, %v429
      %v431 = vpop.f32.mrb[0].mxu0
      %v432 = vadd.f32 0.0, %v431
      %v433 = vpop.f32.mrb[0].mxu0
      %v434 = vadd.f32 0.0, %v433
      %v435 = vpop.f32.mrb[0].mxu0
      %v436 = vadd.f32 0.0, %v435
      %437 = vmatprep.mubr.bf16.mxu0 0
      %438 = vmatmul.mubr.bf16.gmra.mrb[0].mxu0 %v309
      %v439 = vpop.f32.mrb[0].mxu0
      %v440 = vadd.f32 0.0, %v439
      %v441 = vpop.f32.mrb[0].mxu0
      %v442 = vadd.f32 0.0, %v441
      %v443 = vpop.f32.mrb[0].mxu0
      %v444 = vadd.f32 0.0, %v443
      %v445 = vpop.f32.mrb[0].mxu0
      %v446 = vadd.f32 0.0, %v445
      %447 = vmatprep.mubr.bf16.mxu0 0
      %448 = vmatmul.mubr.bf16.gmra.mrb[0].mxu0 %v312
      %v449 = vpop.f32.mrb[0].mxu0
      %v450 = vadd.f32 0.0, %v449
      %v451 = vpop.f32.mrb[0].mxu0
      %v452 = vadd.f32 0.0, %v451
      %v453 = vpop.f32.mrb[0].mxu0
      %v454 = vadd.f32 0.0, %v453
      %v455 = vpop.f32.mrb[0].mxu0
      %v456 = vadd.f32 0.0, %v455
      %457 = vmatprep.mubr.bf16.mxu0 0
      %458 = vmatmul.mubr.bf16.gmra.mrb[0].mxu0 %v315
      %v459 = vpop.f32.mrb[0].mxu0
      %v460 = vadd.f32 0.0, %v459
      %v461 = vpop.f32.mrb[0].mxu0
      %v462 = vadd.f32 0.0, %v461
      %v463 = vpop.f32.mrb[0].mxu0
      %v464 = vadd.f32 0.0, %v463
      %v465 = vpop.f32.mrb[0].mxu0
      %v466 = vadd.f32 0.0, %v465
      %467 = vmatprep.mubr.bf16.mxu0 0
      %468 = vmatmul.mubr.bf16.gmra.mrb[0].mxu0 %v318
      %v469 = vpop.f32.mrb[0].mxu0
      %v470 = vadd.f32 0.0, %v469
      %v471 = vpop.f32.mrb[0].mxu0
      %v472 = vadd.f32 0.0, %v471
      %v473 = vpop.f32.mrb[0].mxu0
      %v474 = vadd.f32 0.0, %v473
      %v475 = vpop.f32.mrb[0].mxu0
      %v476 = vadd.f32 0.0, %v475
      %477 = vmatprep.mubr.bf16.mxu0 0
      %478 = vmatmul.mubr.bf16.gmra.mrb[0].mxu0 %v321
      %v479 = vpop.f32.mrb[0].mxu0
      %v480 = vadd.f32 0.0, %v479
      %v481 = vpop.f32.mrb[0].mxu0
      %v482 = vadd.f32 0.0, %v481
      %v483 = vpop.f32.mrb[0].mxu0
      %v484 = vadd.f32 0.0, %v483
      %v485 = vpop.f32.mrb[0].mxu0
      %v486 = vadd.f32 0.0, %v485
      %487 = vmatprep.mubr.bf16.mxu0 0
      %488 = vmatmul.mubr.bf16.gmra.mrb[0].mxu0 %v324
      %v489 = vpop.f32.mrb[0].mxu0
      %v490 = vadd.f32 0.0, %v489
      %v491 = vpop.f32.mrb[0].mxu0
      %v492 = vadd.f32 0.0, %v491
      %v493 = vpop.f32.mrb[0].mxu0
      %v494 = vadd.f32 0.0, %v493
      %v495 = vpop.f32.mrb[0].mxu0
      %v496 = vadd.f32 0.0, %v495
      %497 = vmatprep.mubr.bf16.mxu0 0
      %498 = vmatmul.mubr.bf16.gmra.mrb[0].mxu0 %v327
      %v499 = vpop.f32.mrb[0].mxu0
      %v500 = vadd.f32 0.0, %v499
      %v501 = vpop.f32.mrb[0].mxu0
      %v502 = vadd.f32 0.0, %v501
      %v503 = vpop.f32.mrb[0].mxu0
      %v504 = vadd.f32 0.0, %v503
      %v505 = vpop.f32.mrb[0].mxu0
      %v506 = vadd.f32 0.0, %v505
      %507 = vmatprep.mubr.bf16.mxu0 0
      %508 = vmatmul.mubr.bf16.gmra.mrb[0].mxu0 %v330
      %v509 = vpop.f32.mrb[0].mxu0
      %v510 = vadd.f32 0.0, %v509
      %v511 = vpop.f32.mrb[0].mxu0
      %v512 = vadd.f32 0.0, %v511
      %v513 = vpop.f32.mrb[0].mxu0
      %v514 = vadd.f32 0.0, %v513
      %v515 = vpop.f32.mrb[0].mxu0
      %v516 = vadd.f32 0.0, %v515
      %517 = vmatprep.mubr.bf16.mxu0 0
      %518 = vmatmul.mubr.bf16.gmra.mrb[0].mxu0 %v333
      %v519 = vpop.f32.mrb[0].mxu0
      %v520 = vadd.f32 0.0, %v519
      %v521 = vpop.f32.mrb[0].mxu0
      %v522 = vadd.f32 0.0, %v521
      %v523 = vpop.f32.mrb[0].mxu0
      %v524 = vadd.f32 0.0, %v523
      %v525 = vpop.f32.mrb[0].mxu0
      %v526 = vadd.f32 0.0, %v525
      %527 = vdwg.mxu0
      %v528 = vpack.c.bf16 %v374, %v370
      %v529 = vpack.c.bf16 %v376, %v372
      %v530 = vpack.c.bf16 %v384, %v380
      %v531 = vpack.c.bf16 %v386, %v382
      %v532 = vpack.c.bf16 %v394, %v390
      %v533 = vpack.c.bf16 %v396, %v392
      %v534 = vpack.c.bf16 %v404, %v400
      %v535 = vpack.c.bf16 %v406, %v402
      %v536 = vpack.c.bf16 %v414, %v410
      %v537 = vpack.c.bf16 %v416, %v412
      %v538 = vpack.c.bf16 %v424, %v420
      %v539 = vpack.c.bf16 %v426, %v422
      %v540 = vpack.c.bf16 %v434, %v430
      %v541 = vpack.c.bf16 %v436, %v432
      %v542 = vpack.c.bf16 %v444, %v440
      %v543 = vpack.c.bf16 %v446, %v442
      %v544 = vpack.c.bf16 %v454, %v450
      %v545 = vpack.c.bf16 %v456, %v452
      %v546 = vpack.c.bf16 %v464, %v460
      %v547 = vpack.c.bf16 %v466, %v462
      %v548 = vpack.c.bf16 %v474, %v470
      %v549 = vpack.c.bf16 %v476, %v472
      %v550 = vpack.c.bf16 %v484, %v480
      %v551 = vpack.c.bf16 %v486, %v482
      %v552 = vpack.c.bf16 %v494, %v490
      %v553 = vpack.c.bf16 %v496, %v492
      %v554 = vpack.c.bf16 %v504, %v500
      %v555 = vpack.c.bf16 %v506, %v502
      %v556 = vpack.c.bf16 %v514, %v510
      %v557 = vpack.c.bf16 %v516, %v512
      %v558 = vpack.c.bf16 %v524, %v520
      %v559 = vpack.c.bf16 %v526, %v522
      %v592 = vunpack.c.l.b16 %v528
      %v593 = vunpack.c.l.b16 %v529
      %v594 = vunpack.c.h.b16 %v528
      %v595 = vunpack.c.h.b16 %v529
      %v596 = vunpack.c.l.b16 %v530
      %v597 = vunpack.c.l.b16 %v531
      %v598 = vunpack.c.h.b16 %v530
      %v599 = vunpack.c.h.b16 %v531
      %v600 = vunpack.c.l.b16 %v532
      %v601 = vunpack.c.l.b16 %v533
      %v602 = vunpack.c.h.b16 %v532
      %v603 = vunpack.c.h.b16 %v533
      %v604 = vunpack.c.l.b16 %v534
      %v605 = vunpack.c.l.b16 %v535
      %v606 = vunpack.c.h.b16 %v534
      %v607 = vunpack.c.h.b16 %v535
      %v608 = vunpack.c.l.b16 %v536
      %v609 = vunpack.c.l.b16 %v537
      %v610 = vunpack.c.h.b16 %v536
      %v611 = vunpack.c.h.b16 %v537
      %v612 = vunpack.c.l.b16 %v538
      %v613 = vunpack.c.l.b16 %v539
      %v614 = vunpack.c.h.b16 %v538
      %v615 = vunpack.c.h.b16 %v539
      %v616 = vunpack.c.l.b16 %v540
      %v617 = vunpack.c.l.b16 %v541
      %v618 = vunpack.c.h.b16 %v540
      %v619 = vunpack.c.h.b16 %v541
      %v620 = vunpack.c.l.b16 %v542
      %v621 = vunpack.c.l.b16 %v543
      %v622 = vunpack.c.h.b16 %v542
      %v623 = vunpack.c.h.b16 %v543
      %v624 = vunpack.c.l.b16 %v544
      %v625 = vunpack.c.l.b16 %v545
      %v626 = vunpack.c.h.b16 %v544
      %v627 = vunpack.c.h.b16 %v545
      %v628 = vunpack.c.l.b16 %v546
      %v629 = vunpack.c.l.b16 %v547
      %v630 = vunpack.c.h.b16 %v546
      %v631 = vunpack.c.h.b16 %v547
      %v632 = vunpack.c.l.b16 %v548
      %v633 = vunpack.c.l.b16 %v549
      %v634 = vunpack.c.h.b16 %v548
      %v635 = vunpack.c.h.b16 %v549
      %v636 = vunpack.c.l.b16 %v550
      %v637 = vunpack.c.l.b16 %v551
      %v638 = vunpack.c.h.b16 %v550
      %v639 = vunpack.c.h.b16 %v551
      %v640 = vunpack.c.l.b16 %v552
      %v641 = vunpack.c.l.b16 %v553
      %v642 = vunpack.c.h.b16 %v552
      %v643 = vunpack.c.h.b16 %v553
      %v644 = vunpack.c.l.b16 %v554
      %v645 = vunpack.c.l.b16 %v555
      %v646 = vunpack.c.h.b16 %v554
      %v647 = vunpack.c.h.b16 %v555
      %v648 = vunpack.c.l.b16 %v556
      %v649 = vunpack.c.l.b16 %v557
      %v650 = vunpack.c.h.b16 %v556
      %v651 = vunpack.c.h.b16 %v557
      %v652 = vunpack.c.l.b16 %v558
      %v653 = vunpack.c.l.b16 %v559
      %v654 = vunpack.c.h.b16 %v558
      %v655 = vunpack.c.h.b16 %v559
      %v656 = vpack.c.b16 %v593, %v592
      %v657 = vpack.c.b16 %v595, %v594
      %v658 = vpack.c.b16 %v597, %v596
      %v659 = vpack.c.b16 %v599, %v598
      %v660 = vpack.c.b16 %v601, %v600
      %v661 = vpack.c.b16 %v603, %v602
      %v662 = vpack.c.b16 %v605, %v604
      %v663 = vpack.c.b16 %v607, %v606
      %v664 = vpack.c.b16 %v609, %v608
      %v665 = vpack.c.b16 %v611, %v610
      %v666 = vpack.c.b16 %v613, %v612
      %v667 = vpack.c.b16 %v615, %v614
      %v668 = vpack.c.b16 %v617, %v616
      %v669 = vpack.c.b16 %v619, %v618
      %v670 = vpack.c.b16 %v621, %v620
      %v671 = vpack.c.b16 %v623, %v622
      %v672 = vpack.c.b16 %v625, %v624
      %v673 = vpack.c.b16 %v627, %v626
      %v674 = vpack.c.b16 %v629, %v628
      %v675 = vpack.c.b16 %v631, %v630
      %v676 = vpack.c.b16 %v633, %v632
      %v677 = vpack.c.b16 %v635, %v634
      %v678 = vpack.c.b16 %v637, %v636
      %v679 = vpack.c.b16 %v639, %v638
      %v680 = vpack.c.b16 %v641, %v640
      %v681 = vpack.c.b16 %v643, %v642
      %v682 = vpack.c.b16 %v645, %v644
      %v683 = vpack.c.b16 %v647, %v646
      %v684 = vpack.c.b16 %v649, %v648
      %v685 = vpack.c.b16 %v651, %v650
      %v686 = vpack.c.b16 %v653, %v652
      %v687 = vpack.c.b16 %v655, %v654
      %720 = vst [vmem:[%s147] sm:$0xff] %v656
      %721 = vst [vmem:[%s147 + $0x8] sm:$0xff] %v657
      %722 = vst [vmem:[%s147 + $0x10] sm:$0xff] %v658
      %723 = vst [vmem:[%s147 + $0x18] sm:$0xff] %v659
      %724 = vst [vmem:[%s147 + $0x20] sm:$0xff] %v660
      %725 = vst [vmem:[%s147 + $0x28] sm:$0xff] %v661
      %726 = vst [vmem:[%s147 + $0x30] sm:$0xff] %v662
      %727 = vst [vmem:[%s147 + $0x38] sm:$0xff] %v663
      %728 = vst [vmem:[%s147 + $0x40] sm:$0xff] %v664
      %729 = vst [vmem:[%s147 + $0x48] sm:$0xff] %v665
      %730 = vst [vmem:[%s147 + $0x50] sm:$0xff] %v666
      %731 = vst [vmem:[%s147 + $0x58] sm:$0xff] %v667
      %732 = vst [vmem:[%s147 + $0x60] sm:$0xff] %v668
      %733 = vst [vmem:[%s147 + $0x68] sm:$0xff] %v669
      %734 = vst [vmem:[%s147 + $0x70] sm:$0xff] %v670
      %735 = vst [vmem:[%s147 + $0x78] sm:$0xff] %v671
      %736 = vst [vmem:[%s147 + $0x80] sm:$0xff] %v672
      %737 = vst [vmem:[%s147 + $0x88] sm:$0xff] %v673
      %738 = vst [vmem:[%s147 + $0x90] sm:$0xff] %v674
      %739 = vst [vmem:[%s147 + $0x98] sm:$0xff] %v675
      %740 = vst [vmem:[%s147 + $0xa0] sm:$0xff] %v676
      %741 = vst [vmem:[%s147 + $0xa8] sm:$0xff] %v677
      %742 = vst [vmem:[%s147 + $0xb0] sm:$0xff] %v678
      %743 = vst [vmem:[%s147 + $0xb8] sm:$0xff] %v679
      %744 = vst [vmem:[%s147 + $0xc0] sm:$0xff] %v680
      %745 = vst [vmem:[%s147 + $0xc8] sm:$0xff] %v681
      %746 = vst [vmem:[%s147 + $0xd0] sm:$0xff] %v682
      %747 = vst [vmem:[%s147 + $0xd8] sm:$0xff] %v683
      %748 = vst [vmem:[%s147 + $0xe0] sm:$0xff] %v684
      %749 = vst [vmem:[%s147 + $0xe8] sm:$0xff] %v685
      %750 = vst [vmem:[%s147 + $0xf0] sm:$0xff] %v686
      %751 = vst [vmem:[%s147 + $0xf8] sm:$0xff] %v687
      %s752 = smul.u32 32, %s13
      %p753 = scmp.lt.s32.totalorder %s752, 63
      %s754 = scalar_select %p753, %s752, 63
      %s755 = smul.addr %s754, 2
      %s756 = smul.addr %s755, 4
      %s757 = scalar_lea.vmem %s2, %s756
      // Predicated region
      $region29: #{_lambda_.14} parent=27 // pred_check
        %p758 = pneg %p78
      $region30: #{_lambda_.14} parent=27 // pred_check_branch
        %760 = sbr.rel (%p758) target = $region32
      $region31: #{_lambda_.14} parent=27 // pred_region
        %s761 = smul.u32 32, %s13
      $region32: #{_lambda_.14} parent=27 // pred_fallthru
        _
    $region28: #{_lambda_.14} parent=5 // pred_fallthru
      _
    %p762 = scmp.le.s32.totalorder 2, %s8
    // Predicated region
    $region33: #{_lambda_.14} parent=5 // pred_check
      %p763 = pneg %p762
    $region34: #{_lambda_.14} parent=5 // pred_check_branch
      %765 = sbr.rel (%p763) target = $region36
    $region35: #{_lambda_.14} parent=5 // pred_region
      %s766 = ssub.s32 %s8, 2
      // Predicated region
      $region37: #{_lambda_.14} parent=35 // pred_check
        %p767 = pneg %p84
      $region38: #{_lambda_.14} parent=35 // pred_check_branch
        %769 = sbr.rel (%p767) target = $region40
      $region39: #{_lambda_.14} parent=35 // pred_region
        %s770 = smul.u32 32, %s14
        %p771 = scmp.lt.s32.totalorder %s770, 63
        %s772 = scalar_select %p771, %s770, 63
        %s773 = smul.addr %s772, 2
        %s774 = smul.addr %s773, 4
        %s775 = scalar_lea.vmem %s2, %s774
      $region40: #{_lambda_.14} parent=35 // pred_fallthru
        _
    $region36: #{_lambda_.14} parent=5 // pred_fallthru
      _
  $region6: #{_lambda_.14} parent=0 // loop_footer
    %s12 = sadd.s32 1, %s8
  $region7: #{_lambda_.14} parent=0 // loop_footer_branch
    %7 = sbr.rel target = $region3
  $region8: #{_lambda_.14} parent=0 // loop_exit
    _

// kernel: _lambda_.15
$region0: #{_lambda_.15}
  #allocation0 [shape = 'u32[]', space=smem, size = 0x4, offset = 0x4, fixed_abs, tag = 'smem constant byte address 0x4 - core index']
  #allocation1 [shape = 'u32[144,128]{1,0:T(1,128)}', space=vmem, size = 0x12000, scoped, tag = 'internal scratch']
  %s0 = inlined_call_operand.vmem [shape: bf16[2048,16], index: 0, kind: input, shape index: {}]
  %s1 = inlined_call_operand.vmem [shape: bf16[16,128], index: 1, kind: input, shape index: {}]
  %s2 = inlined_call_operand.vmem [shape: bf16[2048,128], index: 2, kind: output, shape index: {}]
  %s3 = sld [smem:[#allocation0]]
  $region41: #{_lambda_.15} parent=0
    _
  %s5 = ssub.s32 1, %s3
  %s6 = scalar_select 0, %s5, %s3
  loop: start=0, step=1, limit=6
  $region2: #{_lambda_.15} parent=0 // loop_pre_header
    _
  $region3: #{_lambda_.15} parent=0 // loop_header
    %s8 = sphi 0, %s12
    %p9 = scmp.ge.s32.totalorder %s8, 6
    %s18 = sphi 0, %s20
    %s21 = sphi 0, %s18
    %s22 = sphi 0, %s21
    %s38 = sphi 0, %s22
    %s42 = sphi 0, %s42
    %s44 = sphi 0, %s42
    %s45 = sphi 0, %s44
    %s59 = sphi 0, %s45
    %s65 = sphi 0, %s67
    %s68 = sphi 0, %s65
    %s69 = sphi 0, %s68
    %s85 = sphi 0, %s69
  $region4: #{_lambda_.15} parent=0 // loop_header_branch
    %11 = sbr.rel (%p9) target = $region8
  $region5: #{_lambda_.15} parent=0 // loop_body
    %s13 = ssub.s32 %s8, 1
    %s14 = ssub.s32 %s8, 2
    %s15 = sadd.s32 %s8, 1
    %s16 = ssub.s32 %s8, %s15
    %p17 = scmp.eq.s32.totalorder %s16, 0
    %s19 = sadd.s32 %s18, 1
    %s20 = scalar_select %p17, %s18, %s19
    %p23 = pneg %p17
    %p24 = scmp.eq.s32.totalorder %s8, 3
    %p25 = por %p23, %p24
    %p26 = scmp.ne.s32.totalorder %s18, %s21
    %p27 = scmp.eq.s32.totalorder %s8, 0
    %p28 = por %p26, %p27
    %p29 = scmp.ne.s32.totalorder %s18, %s21
    %p30 = scmp.eq.s32.totalorder %s13, 3
    %p31 = por %p29, %p30
    %p32 = scmp.ne.s32.totalorder %s21, %s22
    %p33 = scmp.eq.s32.totalorder %s13, 0
    %p34 = por %p32, %p33
    %p35 = scmp.ne.s32.totalorder %s21, %s22
    %p36 = scmp.eq.s32.totalorder %s14, 3
    %p37 = por %p35, %p36
    %p39 = scmp.ne.s32.totalorder %s22, %s38
    %p40 = scmp.eq.s32.totalorder %s14, 0
    %p41 = por %p39, %p40
    %s43 = sadd.s32 %s42, 1
    %p46 = scmp.eq.s32.totalorder %s8, 3
    %p47 = scmp.ne.s32.totalorder %s42, %s44
    %p48 = scmp.eq.s32.totalorder %s8, 0
    %p49 = por %p47, %p48
    %p50 = scmp.ne.s32.totalorder %s42, %s44
    %p51 = scmp.eq.s32.totalorder %s13, 3
    %p52 = por %p50, %p51
    %p53 = scmp.ne.s32.totalorder %s44, %s45
    %p54 = scmp.eq.s32.totalorder %s13, 0
    %p55 = por %p53, %p54
    %p56 = scmp.ne.s32.totalorder %s44, %s45
    %p57 = scmp.eq.s32.totalorder %s14, 3
    %p58 = por %p56, %p57
    %p60 = scmp.ne.s32.totalorder %s45, %s59
    %p61 = scmp.eq.s32.totalorder %s14, 0
    %p62 = por %p60, %p61
    %s63 = ssub.s32 %s8, %s15
    %p64 = scmp.eq.s32.totalorder %s63, 0
    %s66 = sadd.s32 %s65, 1
    %s67 = scalar_select %p64, %s65, %s66
    %p70 = pneg %p64
    %p71 = scmp.eq.s32.totalorder %s8, 3
    %p72 = por %p70, %p71
    %p73 = scmp.ne.s32.totalorder %s65, %s68
    %p74 = scmp.eq.s32.totalorder %s8, 0
    %p75 = por %p73, %p74
    %p76 = scmp.ne.s32.totalorder %s65, %s68
    %p77 = scmp.eq.s32.totalorder %s13, 3
    %p78 = por %p76, %p77
    %p79 = scmp.ne.s32.totalorder %s68, %s69
    %p80 = scmp.eq.s32.totalorder %s13, 0
    %p81 = por %p79, %p80
    %p82 = scmp.ne.s32.totalorder %s68, %s69
    %p83 = scmp.eq.s32.totalorder %s14, 3
    %p84 = por %p82, %p83
    %p86 = scmp.ne.s32.totalorder %s69, %s85
    %p87 = scmp.eq.s32.totalorder %s14, 0
    %p88 = por %p86, %p87
    %p89 = scmp.le.s32.totalorder 1, %s8
    %p90 = scmp.lt.s32.totalorder %s8, 5
    %p91 = pnand %p89, %p90
    %p92 = pneg %p91
    // Predicated region
    $region9: #{_lambda_.15} parent=5 // pred_check
      _
    $region10: #{_lambda_.15} parent=5 // pred_check_branch
      %94 = sbr.rel (%p91) target = $region12
    $region11: #{_lambda_.15} parent=5 // pred_region
      %s95 = ssub.s32 %s8, 1
      // Predicated region
      $region13: #{_lambda_.15} parent=11 // pred_check
        %p96 = pneg %p55
      $region14: #{_lambda_.15} parent=11 // pred_check_branch
        %98 = sbr.rel (%p96) target = $region16
      $region15: #{_lambda_.15} parent=11 // pred_region
        _
      $region16: #{_lambda_.15} parent=11 // pred_fallthru
        _
    $region12: #{_lambda_.15} parent=5 // pred_fallthru
      _
    %p99 = scmp.lt.s32.totalorder %s8, 4
    // Predicated region
    $region17: #{_lambda_.15} parent=5 // pred_check
      %p100 = pneg %p99
    $region18: #{_lambda_.15} parent=5 // pred_check_branch
      %102 = sbr.rel (%p100) target = $region20
    $region19: #{_lambda_.15} parent=5 // pred_region
      // Predicated region
      $region21: #{_lambda_.15} parent=19 // pred_check
        %p103 = pneg %p28
      $region22: #{_lambda_.15} parent=19 // pred_check_branch
        %105 = sbr.rel (%p103) target = $region24
      $region23: #{_lambda_.15} parent=19 // pred_region
        %s106 = smul.u32 64, %s8
        %p107 = scmp.lt.s32.totalorder %s106, 255
        %s108 = scalar_select %p107, %s106, 255
        %s109 = smul.addr %s108, 4
        %s110 = scalar_lea.vmem %s0, %s109
        %s111 = smul.u32 64, %s8
      $region24: #{_lambda_.15} parent=19 // pred_fallthru
        _
    $region20: #{_lambda_.15} parent=5 // pred_fallthru
      _
    %p112 = scmp.le.s32.totalorder 1, %s8
    %p113 = scmp.lt.s32.totalorder %s8, 5
    %p114 = pnand %p112, %p113
    %p115 = pneg %p114
    // Predicated region
    $region25: #{_lambda_.15} parent=5 // pred_check
      _
    $region26: #{_lambda_.15} parent=5 // pred_check_branch
      %117 = sbr.rel (%p114) target = $region28
    $region27: #{_lambda_.15} parent=5 // pred_region
      %s118 = ssub.s32 %s8, 1
      %s119 = smul.u32 64, %s13
      %p120 = scmp.lt.s32.totalorder %s119, 255
      %s121 = scalar_select %p120, %s119, 255
      %s122 = smul.addr %s121, 4
      %s123 = scalar_lea.vmem %s0, %s122
      %p124 = pneg %p34
      %p125 = pneg %p31
      %p126 = pneg %p55
      %p127 = pneg %p52
      %p128 = pneg %p81
      %p129 = pneg %p78
      %s130 = smul.u32 64, %s13
      %p131 = scmp.lt.s32.totalorder %s130, 255
      %s132 = scalar_select %p131, %s130, 255
      %s133 = smul.addr %s132, 4
      %s134 = scalar_lea.vmem %s2, %s133
      %s135 = smul.u32 64, %s13
      %p136 = scmp.lt.s32.totalorder %s135, 255
      %s137 = scalar_select %p136, %s135, 255
      %s138 = smul.addr %s137, 4
      %s139 = scalar_lea.vmem %s0, %s138
      %s140 = smul.u32 64, %s13
      %s141 = smul.u32 64, %s13
      %p142 = scmp.lt.s32.totalorder %s141, 255
      %s143 = scalar_select %p142, %s141, 255
      %s144 = smul.addr %s143, 4
      %s145 = scalar_lea.vmem %s2, %s144
      %s146 = smul.u32 64, %s13
      %v148 = vld [vmem:[%s139] sm:$0xf]
      %v149 = vld [vmem:[%s139 + $0x4] sm:$0xf]
      %v150 = vld [vmem:[%s139 + $0x8] sm:$0xf]
      %v151 = vld [vmem:[%s139 + $0xc] sm:$0xf]
      %v152 = vld [vmem:[%s139 + $0x10] sm:$0xf]
      %v153 = vld [vmem:[%s139 + $0x14] sm:$0xf]
      %v154 = vld [vmem:[%s139 + $0x18] sm:$0xf]
      %v155 = vld [vmem:[%s139 + $0x1c] sm:$0xf]
      %v156 = vld [vmem:[%s139 + $0x20] sm:$0xf]
      %v157 = vld [vmem:[%s139 + $0x24] sm:$0xf]
      %v158 = vld [vmem:[%s139 + $0x28] sm:$0xf]
      %v159 = vld [vmem:[%s139 + $0x2c] sm:$0xf]
      %v160 = vld [vmem:[%s139 + $0x30] sm:$0xf]
      %v161 = vld [vmem:[%s139 + $0x34] sm:$0xf]
      %v162 = vld [vmem:[%s139 + $0x38] sm:$0xf]
      %v163 = vld [vmem:[%s139 + $0x3c] sm:$0xf]
      %v164 = vld [vmem:[%s139 + $0x40] sm:$0xf]
      %v165 = vld [vmem:[%s139 + $0x44] sm:$0xf]
      %v166 = vld [vmem:[%s139 + $0x48] sm:$0xf]
      %v167 = vld [vmem:[%s139 + $0x4c] sm:$0xf]
      %v168 = vld [vmem:[%s139 + $0x50] sm:$0xf]
      %v169 = vld [vmem:[%s139 + $0x54] sm:$0xf]
      %v170 = vld [vmem:[%s139 + $0x58] sm:$0xf]
      %v171 = vld [vmem:[%s139 + $0x5c] sm:$0xf]
      %v172 = vld [vmem:[%s139 + $0x60] sm:$0xf]
      %v173 = vld [vmem:[%s139 + $0x64] sm:$0xf]
      %v174 = vld [vmem:[%s139 + $0x68] sm:$0xf]
      %v175 = vld [vmem:[%s139 + $0x6c] sm:$0xf]
      %v176 = vld [vmem:[%s139 + $0x70] sm:$0xf]
      %v177 = vld [vmem:[%s139 + $0x74] sm:$0xf]
      %v178 = vld [vmem:[%s139 + $0x78] sm:$0xf]
      %v179 = vld [vmem:[%s139 + $0x7c] sm:$0xf]
      %v180 = vld [vmem:[%s139 + $0x80] sm:$0xf]
      %v181 = vld [vmem:[%s139 + $0x84] sm:$0xf]
      %v182 = vld [vmem:[%s139 + $0x88] sm:$0xf]
      %v183 = vld [vmem:[%s139 + $0x8c] sm:$0xf]
      %v184 = vld [vmem:[%s139 + $0x90] sm:$0xf]
      %v185 = vld [vmem:[%s139 + $0x94] sm:$0xf]
      %v186 = vld [vmem:[%s139 + $0x98] sm:$0xf]
      %v187 = vld [vmem:[%s139 + $0x9c] sm:$0xf]
      %v188 = vld [vmem:[%s139 + $0xa0] sm:$0xf]
      %v189 = vld [vmem:[%s139 + $0xa4] sm:$0xf]
      %v190 = vld [vmem:[%s139 + $0xa8] sm:$0xf]
      %v191 = vld [vmem:[%s139 + $0xac] sm:$0xf]
      %v192 = vld [vmem:[%s139 + $0xb0] sm:$0xf]
      %v193 = vld [vmem:[%s139 + $0xb4] sm:$0xf]
      %v194 = vld [vmem:[%s139 + $0xb8] sm:$0xf]
      %v195 = vld [vmem:[%s139 + $0xbc] sm:$0xf]
      %v196 = vld [vmem:[%s139 + $0xc0] sm:$0xf]
      %v197 = vld [vmem:[%s139 + $0xc4] sm:$0xf]
      %v198 = vld [vmem:[%s139 + $0xc8] sm:$0xf]
      %v199 = vld [vmem:[%s139 + $0xcc] sm:$0xf]
      %v200 = vld [vmem:[%s139 + $0xd0] sm:$0xf]
      %v201 = vld [vmem:[%s139 + $0xd4] sm:$0xf]
      %v202 = vld [vmem:[%s139 + $0xd8] sm:$0xf]
      %v203 = vld [vmem:[%s139 + $0xdc] sm:$0xf]
      %v204 = vld [vmem:[%s139 + $0xe0] sm:$0xf]
      %v205 = vld [vmem:[%s139 + $0xe4] sm:$0xf]
      %v206 = vld [vmem:[%s139 + $0xe8] sm:$0xf]
      %v207 = vld [vmem:[%s139 + $0xec] sm:$0xf]
      %v208 = vld [vmem:[%s139 + $0xf0] sm:$0xf]
      %v209 = vld [vmem:[%s139 + $0xf4] sm:$0xf]
      %v210 = vld [vmem:[%s139 + $0xf8] sm:$0xf]
      %v211 = vld [vmem:[%s139 + $0xfc] sm:$0xf]
      %v212 = vld [vmem:[%s1] sm:$0xf]
      %v213 = vld [vmem:[%s1 + $0x4] sm:$0xf]
      %v278 = vunpack.c.l.b16 %v148
      %v279 = vunpack.c.l.b16 %v149
      %v280 = vunpack.c.l.b16 %v150
      %v281 = vunpack.c.l.b16 %v151
      %v282 = vunpack.c.l.b16 %v152
      %v283 = vunpack.c.l.b16 %v153
      %v284 = vunpack.c.l.b16 %v154
      %v285 = vunpack.c.l.b16 %v155
      %v286 = vunpack.c.l.b16 %v156
      %v287 = vunpack.c.l.b16 %v157
      %v288 = vunpack.c.l.b16 %v158
      %v289 = vunpack.c.l.b16 %v159
      %v290 = vunpack.c.l.b16 %v160
      %v291 = vunpack.c.l.b16 %v161
      %v292 = vunpack.c.l.b16 %v162
      %v293 = vunpack.c.l.b16 %v163
      %v294 = vunpack.c.l.b16 %v164
      %v295 = vunpack.c.l.b16 %v165
      %v296 = vunpack.c.l.b16 %v166
      %v297 = vunpack.c.l.b16 %v167
      %v298 = vunpack.c.l.b16 %v168
      %v299 = vunpack.c.l.b16 %v169
      %v300 = vunpack.c.l.b16 %v170
      %v301 = vunpack.c.l.b16 %v171
      %v302 = vunpack.c.l.b16 %v172
      %v303 = vunpack.c.l.b16 %v173
      %v304 = vunpack.c.l.b16 %v174
      %v305 = vunpack.c.l.b16 %v175
      %v306 = vunpack.c.l.b16 %v176
      %v307 = vunpack.c.l.b16 %v177
      %v308 = vunpack.c.l.b16 %v178
      %v309 = vunpack.c.l.b16 %v179
      %v310 = vunpack.c.l.b16 %v180
      %v311 = vunpack.c.l.b16 %v181
      %v312 = vunpack.c.l.b16 %v182
      %v313 = vunpack.c.l.b16 %v183
      %v314 = vunpack.c.l.b16 %v184
      %v315 = vunpack.c.l.b16 %v185
      %v316 = vunpack.c.l.b16 %v186
      %v317 = vunpack.c.l.b16 %v187
      %v318 = vunpack.c.l.b16 %v188
      %v319 = vunpack.c.l.b16 %v189
      %v320 = vunpack.c.l.b16 %v190
      %v321 = vunpack.c.l.b16 %v191
      %v322 = vunpack.c.l.b16 %v192
      %v323 = vunpack.c.l.b16 %v193
      %v324 = vunpack.c.l.b16 %v194
      %v325 = vunpack.c.l.b16 %v195
      %v326 = vunpack.c.l.b16 %v196
      %v327 = vunpack.c.l.b16 %v197
      %v328 = vunpack.c.l.b16 %v198
      %v329 = vunpack.c.l.b16 %v199
      %v330 = vunpack.c.l.b16 %v200
      %v331 = vunpack.c.l.b16 %v201
      %v332 = vunpack.c.l.b16 %v202
      %v333 = vunpack.c.l.b16 %v203
      %v334 = vunpack.c.l.b16 %v204
      %v335 = vunpack.c.l.b16 %v205
      %v336 = vunpack.c.l.b16 %v206
      %v337 = vunpack.c.l.b16 %v207
      %v338 = vunpack.c.l.b16 %v208
      %v339 = vunpack.c.l.b16 %v209
      %v340 = vunpack.c.l.b16 %v210
      %v341 = vunpack.c.l.b16 %v211
      %v342 = vpack.c.b16 %v279, %v278
      %v343 = vpack.c.b16 %v281, %v280
      %v344 = vpack.c.b16 %v283, %v282
      %v345 = vpack.c.b16 %v285, %v284
      %v346 = vpack.c.b16 %v287, %v286
      %v347 = vpack.c.b16 %v289, %v288
      %v348 = vpack.c.b16 %v291, %v290
      %v349 = vpack.c.b16 %v293, %v292
      %v350 = vpack.c.b16 %v295, %v294
      %v351 = vpack.c.b16 %v297, %v296
      %v352 = vpack.c.b16 %v299, %v298
      %v353 = vpack.c.b16 %v301, %v300
      %v354 = vpack.c.b16 %v303, %v302
      %v355 = vpack.c.b16 %v305, %v304
      %v356 = vpack.c.b16 %v307, %v306
      %v357 = vpack.c.b16 %v309, %v308
      %v358 = vpack.c.b16 %v311, %v310
      %v359 = vpack.c.b16 %v313, %v312
      %v360 = vpack.c.b16 %v315, %v314
      %v361 = vpack.c.b16 %v317, %v316
      %v362 = vpack.c.b16 %v319, %v318
      %v363 = vpack.c.b16 %v321, %v320
      %v364 = vpack.c.b16 %v323, %v322
      %v365 = vpack.c.b16 %v325, %v324
      %v366 = vpack.c.b16 %v327, %v326
      %v367 = vpack.c.b16 %v329, %v328
      %v368 = vpack.c.b16 %v331, %v330
      %v369 = vpack.c.b16 %v333, %v332
      %v370 = vpack.c.b16 %v335, %v334
      %v371 = vpack.c.b16 %v337, %v336
      %v372 = vpack.c.b16 %v339, %v338
      %v373 = vpack.c.b16 %v341, %v340
      %v376 = vunpack.c.l.b16 %v212
      %v377 = vunpack.c.l.b16 %v213
      %v378 = vpack.c.b16 %v377, %v376
      %vm380 = vcmask 130048
      %v382 = vsel %vm380, %v342, 0
      %v385 = vsel %vm380, %v343, 0
      %v388 = vsel %vm380, %v344, 0
      %v391 = vsel %vm380, %v345, 0
      %v394 = vsel %vm380, %v346, 0
      %v397 = vsel %vm380, %v347, 0
      %v400 = vsel %vm380, %v348, 0
      %v403 = vsel %vm380, %v349, 0
      %v406 = vsel %vm380, %v350, 0
      %v409 = vsel %vm380, %v351, 0
      %v412 = vsel %vm380, %v352, 0
      %v415 = vsel %vm380, %v353, 0
      %v418 = vsel %vm380, %v354, 0
      %v421 = vsel %vm380, %v355, 0
      %v424 = vsel %vm380, %v356, 0
      %v427 = vsel %vm380, %v357, 0
      %v430 = vsel %vm380, %v358, 0
      %v433 = vsel %vm380, %v359, 0
      %v436 = vsel %vm380, %v360, 0
      %v439 = vsel %vm380, %v361, 0
      %v442 = vsel %vm380, %v362, 0
      %v445 = vsel %vm380, %v363, 0
      %v448 = vsel %vm380, %v364, 0
      %v451 = vsel %vm380, %v365, 0
      %v454 = vsel %vm380, %v366, 0
      %v457 = vsel %vm380, %v367, 0
      %v460 = vsel %vm380, %v368, 0
      %v463 = vsel %vm380, %v369, 0
      %v466 = vsel %vm380, %v370, 0
      %v469 = vsel %vm380, %v371, 0
      %v472 = vsel %vm380, %v372, 0
      %v475 = vsel %vm380, %v373, 0
      %477 = vmatprep.subr.bf16.mxu0 0
      %478 = vmatpush1.bf16.msra.mxu0 %v378
      %479 = vmatprep.subr.bf16.mxu0 0
      %480 = vmatpush1.bf16.msra.mxu0 0
      %481 = vmatprep.subr.bf16.mxu0 0
      %482 = vmatpush1.bf16.msra.mxu0 0
      %483 = vmatprep.subr.bf16.mxu0 0
      %484 = vmatpush1.bf16.msra.mxu0 0
      %485 = vmatprep.subr.bf16.mxu0 0
      %486 = vmatpush1.bf16.msra.mxu0 0
      %487 = vmatprep.subr.bf16.mxu0 0
      %488 = vmatpush1.bf16.msra.mxu0 0
      %489 = vmatprep.subr.bf16.mxu0 0
      %490 = vmatpush1.bf16.msra.mxu0 0
      %491 = vmatprep.subr.bf16.mxu0 0
      %492 = vmatpush1.bf16.msra.mxu0 0
      %493 = vmatprep.subr.bf16.mxu0 0
      %494 = vmatpush1.bf16.msra.mxu0 0
      %495 = vmatprep.subr.bf16.mxu0 0
      %496 = vmatpush1.bf16.msra.mxu0 0
      %497 = vmatprep.subr.bf16.mxu0 0
      %498 = vmatpush1.bf16.msra.mxu0 0
      %499 = vmatprep.subr.bf16.mxu0 0
      %500 = vmatpush1.bf16.msra.mxu0 0
      %501 = vmatprep.subr.bf16.mxu0 0
      %502 = vmatpush1.bf16.msra.mxu0 0
      %503 = vmatprep.subr.bf16.mxu0 0
      %504 = vmatpush1.bf16.msra.mxu0 0
      %505 = vmatprep.subr.bf16.mxu0 0
      %506 = vmatpush1.bf16.msra.mxu0 0
      %507 = vmatprep.subr.bf16.mxu0 0
      %508 = vmatpush1.bf16.msra.mxu0 0
      %509 = vmatprep.mubr.bf16.mxu0 0
      %510 = vmatmul.mubr.bf16.gmra.mrb[0].mxu0 %v382
      %v511 = vpop.f32.mrb[0].mxu0
      %v512 = vadd.f32 0.0, %v511
      %v513 = vpop.f32.mrb[0].mxu0
      %v514 = vpop.f32.mrb[0].mxu0
      %v515 = vadd.f32 0.0, %v514
      %v516 = vpop.f32.mrb[0].mxu0
      %517 = vmatprep.mubr.bf16.mxu0 0
      %518 = vmatmul.mubr.bf16.gmra.mrb[0].mxu0 %v385
      %v519 = vpop.f32.mrb[0].mxu0
      %v520 = vadd.f32 0.0, %v519
      %v521 = vpop.f32.mrb[0].mxu0
      %v522 = vpop.f32.mrb[0].mxu0
      %v523 = vadd.f32 0.0, %v522
      %v524 = vpop.f32.mrb[0].mxu0
      %525 = vmatprep.mubr.bf16.mxu0 0
      %526 = vmatmul.mubr.bf16.gmra.mrb[0].mxu0 %v388
      %v527 = vpop.f32.mrb[0].mxu0
      %v528 = vadd.f32 0.0, %v527
      %v529 = vpop.f32.mrb[0].mxu0
      %v530 = vpop.f32.mrb[0].mxu0
      %v531 = vadd.f32 0.0, %v530
      %v532 = vpop.f32.mrb[0].mxu0
      %533 = vmatprep.mubr.bf16.mxu0 0
      %534 = vmatmul.mubr.bf16.gmra.mrb[0].mxu0 %v391
      %v535 = vpop.f32.mrb[0].mxu0
      %v536 = vadd.f32 0.0, %v535
      %v537 = vpop.f32.mrb[0].mxu0
      %v538 = vpop.f32.mrb[0].mxu0
      %v539 = vadd.f32 0.0, %v538
      %v540 = vpop.f32.mrb[0].mxu0
      %541 = vmatprep.mubr.bf16.mxu0 0
      %542 = vmatmul.mubr.bf16.gmra.mrb[0].mxu0 %v394
      %v543 = vpop.f32.mrb[0].mxu0
      %v544 = vadd.f32 0.0, %v543
      %v545 = vpop.f32.mrb[0].mxu0
      %v546 = vpop.f32.mrb[0].mxu0
      %v547 = vadd.f32 0.0, %v546
      %v548 = vpop.f32.mrb[0].mxu0
      %549 = vmatprep.mubr.bf16.mxu0 0
      %550 = vmatmul.mubr.bf16.gmra.mrb[0].mxu0 %v397
      %v551 = vpop.f32.mrb[0].mxu0
      %v552 = vadd.f32 0.0, %v551
      %v553 = vpop.f32.mrb[0].mxu0
      %v554 = vpop.f32.mrb[0].mxu0
      %v555 = vadd.f32 0.0, %v554
      %v556 = vpop.f32.mrb[0].mxu0
      %557 = vmatprep.mubr.bf16.mxu0 0
      %558 = vmatmul.mubr.bf16.gmra.mrb[0].mxu0 %v400
      %v559 = vpop.f32.mrb[0].mxu0
      %v560 = vadd.f32 0.0, %v559
      %v561 = vpop.f32.mrb[0].mxu0
      %v562 = vpop.f32.mrb[0].mxu0
      %v563 = vadd.f32 0.0, %v562
      %v564 = vpop.f32.mrb[0].mxu0
      %565 = vmatprep.mubr.bf16.mxu0 0
      %566 = vmatmul.mubr.bf16.gmra.mrb[0].mxu0 %v403
      %v567 = vpop.f32.mrb[0].mxu0
      %v568 = vadd.f32 0.0, %v567
      %v569 = vpop.f32.mrb[0].mxu0
      %v570 = vpop.f32.mrb[0].mxu0
      %v571 = vadd.f32 0.0, %v570
      %v572 = vpop.f32.mrb[0].mxu0
      %573 = vmatprep.mubr.bf16.mxu0 0
      %574 = vmatmul.mubr.bf16.gmra.mrb[0].mxu0 %v406
      %v575 = vpop.f32.mrb[0].mxu0
      %v576 = vadd.f32 0.0, %v575
      %v577 = vpop.f32.mrb[0].mxu0
      %v578 = vpop.f32.mrb[0].mxu0
      %v579 = vadd.f32 0.0, %v578
      %v580 = vpop.f32.mrb[0].mxu0
      %581 = vmatprep.mubr.bf16.mxu0 0
      %582 = vmatmul.mubr.bf16.gmra.mrb[0].mxu0 %v409
      %v583 = vpop.f32.mrb[0].mxu0
      %v584 = vadd.f32 0.0, %v583
      %v585 = vpop.f32.mrb[0].mxu0
      %v586 = vpop.f32.mrb[0].mxu0
      %v587 = vadd.f32 0.0, %v586
      %v588 = vpop.f32.mrb[0].mxu0
      %589 = vmatprep.mubr.bf16.mxu0 0
      %590 = vmatmul.mubr.bf16.gmra.mrb[0].mxu0 %v412
      %v591 = vpop.f32.mrb[0].mxu0
      %v592 = vadd.f32 0.0, %v591
      %v593 = vpop.f32.mrb[0].mxu0
      %v594 = vpop.f32.mrb[0].mxu0
      %v595 = vadd.f32 0.0, %v594
      %v596 = vpop.f32.mrb[0].mxu0
      %597 = vmatprep.mubr.bf16.mxu0 0
      %598 = vmatmul.mubr.bf16.gmra.mrb[0].mxu0 %v415
      %v599 = vpop.f32.mrb[0].mxu0
      %v600 = vadd.f32 0.0, %v599
      %v601 = vpop.f32.mrb[0].mxu0
      %v602 = vpop.f32.mrb[0].mxu0
      %v603 = vadd.f32 0.0, %v602
      %v604 = vpop.f32.mrb[0].mxu0
      %605 = vmatprep.mubr.bf16.mxu0 0
      %606 = vmatmul.mubr.bf16.gmra.mrb[0].mxu0 %v418
      %v607 = vpop.f32.mrb[0].mxu0
      %v608 = vadd.f32 0.0, %v607
      %v609 = vpop.f32.mrb[0].mxu0
      %v610 = vpop.f32.mrb[0].mxu0
      %v611 = vadd.f32 0.0, %v610
      %v612 = vpop.f32.mrb[0].mxu0
      %613 = vmatprep.mubr.bf16.mxu0 0
      %614 = vmatmul.mubr.bf16.gmra.mrb[0].mxu0 %v421
      %v615 = vpop.f32.mrb[0].mxu0
      %v616 = vadd.f32 0.0, %v615
      %v617 = vpop.f32.mrb[0].mxu0
      %v618 = vpop.f32.mrb[0].mxu0
      %v619 = vadd.f32 0.0, %v618
      %v620 = vpop.f32.mrb[0].mxu0
      %621 = vmatprep.mubr.bf16.mxu0 0
      %622 = vmatmul.mubr.bf16.gmra.mrb[0].mxu0 %v424
      %v623 = vpop.f32.mrb[0].mxu0
      %v624 = vadd.f32 0.0, %v623
      %v625 = vpop.f32.mrb[0].mxu0
      %v626 = vpop.f32.mrb[0].mxu0
      %v627 = vadd.f32 0.0, %v626
      %v628 = vpop.f32.mrb[0].mxu0
      %629 = vmatprep.mubr.bf16.mxu0 0
      %630 = vmatmul.mubr.bf16.gmra.mrb[0].mxu0 %v427
      %v631 = vpop.f32.mrb[0].mxu0
      %v632 = vadd.f32 0.0, %v631
      %v633 = vpop.f32.mrb[0].mxu0
      %v634 = vpop.f32.mrb[0].mxu0
      %v635 = vadd.f32 0.0, %v634
      %v636 = vpop.f32.mrb[0].mxu0
      %637 = vmatprep.mubr.bf16.mxu0 0
      %638 = vmatmul.mubr.bf16.gmra.mrb[0].mxu0 %v430
      %v639 = vpop.f32.mrb[0].mxu0
      %v640 = vadd.f32 0.0, %v639
      %v641 = vpop.f32.mrb[0].mxu0
      %v642 = vpop.f32.mrb[0].mxu0
      %v643 = vadd.f32 0.0, %v642
      %v644 = vpop.f32.mrb[0].mxu0
      %645 = vmatprep.mubr.bf16.mxu0 0
      %646 = vmatmul.mubr.bf16.gmra.mrb[0].mxu0 %v433
      %v647 = vpop.f32.mrb[0].mxu0
      %v648 = vadd.f32 0.0, %v647
      %v649 = vpop.f32.mrb[0].mxu0
      %v650 = vpop.f32.mrb[0].mxu0
      %v651 = vadd.f32 0.0, %v650
      %v652 = vpop.f32.mrb[0].mxu0
      %653 = vmatprep.mubr.bf16.mxu0 0
      %654 = vmatmul.mubr.bf16.gmra.mrb[0].mxu0 %v436
      %v655 = vpop.f32.mrb[0].mxu0
      %v656 = vadd.f32 0.0, %v655
      %v657 = vpop.f32.mrb[0].mxu0
      %v658 = vpop.f32.mrb[0].mxu0
      %v659 = vadd.f32 0.0, %v658
      %v660 = vpop.f32.mrb[0].mxu0
      %661 = vmatprep.mubr.bf16.mxu0 0
      %662 = vmatmul.mubr.bf16.gmra.mrb[0].mxu0 %v439
      %v663 = vpop.f32.mrb[0].mxu0
      %v664 = vadd.f32 0.0, %v663
      %v665 = vpop.f32.mrb[0].mxu0
      %v666 = vpop.f32.mrb[0].mxu0
      %v667 = vadd.f32 0.0, %v666
      %v668 = vpop.f32.mrb[0].mxu0
      %669 = vmatprep.mubr.bf16.mxu0 0
      %670 = vmatmul.mubr.bf16.gmra.mrb[0].mxu0 %v442
      %v671 = vpop.f32.mrb[0].mxu0
      %v672 = vadd.f32 0.0, %v671
      %v673 = vpop.f32.mrb[0].mxu0
      %v674 = vpop.f32.mrb[0].mxu0
      %v675 = vadd.f32 0.0, %v674
      %v676 = vpop.f32.mrb[0].mxu0
      %677 = vmatprep.mubr.bf16.mxu0 0
      %678 = vmatmul.mubr.bf16.gmra.mrb[0].mxu0 %v445
      %v679 = vpop.f32.mrb[0].mxu0
      %v680 = vadd.f32 0.0, %v679
      %v681 = vpop.f32.mrb[0].mxu0
      %v682 = vpop.f32.mrb[0].mxu0
      %v683 = vadd.f32 0.0, %v682
      %v684 = vpop.f32.mrb[0].mxu0
      %685 = vmatprep.mubr.bf16.mxu0 0
      %686 = vmatmul.mubr.bf16.gmra.mrb[0].mxu0 %v448
      %v687 = vpop.f32.mrb[0].mxu0
      %v688 = vadd.f32 0.0, %v687
      %v689 = vpop.f32.mrb[0].mxu0
      %v690 = vpop.f32.mrb[0].mxu0
      %v691 = vadd.f32 0.0, %v690
      %v692 = vpop.f32.mrb[0].mxu0
      %693 = vmatprep.mubr.bf16.mxu0 0
      %694 = vmatmul.mubr.bf16.gmra.mrb[0].mxu0 %v451
      %v695 = vpop.f32.mrb[0].mxu0
      %v696 = vadd.f32 0.0, %v695
      %v697 = vpop.f32.mrb[0].mxu0
      %v698 = vpop.f32.mrb[0].mxu0
      %v699 = vadd.f32 0.0, %v698
      %v700 = vpop.f32.mrb[0].mxu0
      %701 = vmatprep.mubr.bf16.mxu0 0
      %702 = vmatmul.mubr.bf16.gmra.mrb[0].mxu0 %v454
      %v703 = vpop.f32.mrb[0].mxu0
      %v704 = vadd.f32 0.0, %v703
      %v705 = vpop.f32.mrb[0].mxu0
      %v706 = vpop.f32.mrb[0].mxu0
      %v707 = vadd.f32 0.0, %v706
      %v708 = vpop.f32.mrb[0].mxu0
      %709 = vmatprep.mubr.bf16.mxu0 0
      %710 = vmatmul.mubr.bf16.gmra.mrb[0].mxu0 %v457
      %v711 = vpop.f32.mrb[0].mxu0
      %v712 = vadd.f32 0.0, %v711
      %v713 = vpop.f32.mrb[0].mxu0
      %v714 = vpop.f32.mrb[0].mxu0
      %v715 = vadd.f32 0.0, %v714
      %v716 = vpop.f32.mrb[0].mxu0
      %717 = vmatprep.mubr.bf16.mxu0 0
      %718 = vmatmul.mubr.bf16.gmra.mrb[0].mxu0 %v460
      %v719 = vpop.f32.mrb[0].mxu0
      %v720 = vadd.f32 0.0, %v719
      %v721 = vpop.f32.mrb[0].mxu0
      %v722 = vpop.f32.mrb[0].mxu0
      %v723 = vadd.f32 0.0, %v722
      %v724 = vpop.f32.mrb[0].mxu0
      %725 = vmatprep.mubr.bf16.mxu0 0
      %726 = vmatmul.mubr.bf16.gmra.mrb[0].mxu0 %v463
      %v727 = vpop.f32.mrb[0].mxu0
      %v728 = vadd.f32 0.0, %v727
      %v729 = vpop.f32.mrb[0].mxu0
      %v730 = vpop.f32.mrb[0].mxu0
      %v731 = vadd.f32 0.0, %v730
      %v732 = vpop.f32.mrb[0].mxu0
      %733 = vmatprep.mubr.bf16.mxu0 0
      %734 = vmatmul.mubr.bf16.gmra.mrb[0].mxu0 %v466
      %v735 = vpop.f32.mrb[0].mxu0
      %v736 = vadd.f32 0.0, %v735
      %v737 = vpop.f32.mrb[0].mxu0
      %v738 = vpop.f32.mrb[0].mxu0
      %v739 = vadd.f32 0.0, %v738
      %v740 = vpop.f32.mrb[0].mxu0
      %741 = vmatprep.mubr.bf16.mxu0 0
      %742 = vmatmul.mubr.bf16.gmra.mrb[0].mxu0 %v469
      %v743 = vpop.f32.mrb[0].mxu0
      %v744 = vadd.f32 0.0, %v743
      %v745 = vpop.f32.mrb[0].mxu0
      %v746 = vpop.f32.mrb[0].mxu0
      %v747 = vadd.f32 0.0, %v746
      %v748 = vpop.f32.mrb[0].mxu0
      %749 = vmatprep.mubr.bf16.mxu0 0
      %750 = vmatmul.mubr.bf16.gmra.mrb[0].mxu0 %v472
      %v751 = vpop.f32.mrb[0].mxu0
      %v752 = vadd.f32 0.0, %v751
      %v753 = vpop.f32.mrb[0].mxu0
      %v754 = vpop.f32.mrb[0].mxu0
      %v755 = vadd.f32 0.0, %v754
      %v756 = vpop.f32.mrb[0].mxu0
      %757 = vmatprep.mubr.bf16.mxu0 0
      %758 = vmatmul.mubr.bf16.gmra.mrb[0].mxu0 %v475
      %v759 = vpop.f32.mrb[0].mxu0
      %v760 = vadd.f32 0.0, %v759
      %v761 = vpop.f32.mrb[0].mxu0
      %v762 = vpop.f32.mrb[0].mxu0
      %v763 = vadd.f32 0.0, %v762
      %v764 = vpop.f32.mrb[0].mxu0
      %765 = vdwg.mxu0
      %v766 = vpack.c.bf16 %v515, %v512
      %v767 = vpack.c.bf16 %v523, %v520
      %v768 = vpack.c.bf16 %v531, %v528
      %v769 = vpack.c.bf16 %v539, %v536
      %v770 = vpack.c.bf16 %v547, %v544
      %v771 = vpack.c.bf16 %v555, %v552
      %v772 = vpack.c.bf16 %v563, %v560
      %v773 = vpack.c.bf16 %v571, %v568
      %v774 = vpack.c.bf16 %v579, %v576
      %v775 = vpack.c.bf16 %v587, %v584
      %v776 = vpack.c.bf16 %v595, %v592
      %v777 = vpack.c.bf16 %v603, %v600
      %v778 = vpack.c.bf16 %v611, %v608
      %v779 = vpack.c.bf16 %v619, %v616
      %v780 = vpack.c.bf16 %v627, %v624
      %v781 = vpack.c.bf16 %v635, %v632
      %v782 = vpack.c.bf16 %v643, %v640
      %v783 = vpack.c.bf16 %v651, %v648
      %v784 = vpack.c.bf16 %v659, %v656
      %v785 = vpack.c.bf16 %v667, %v664
      %v786 = vpack.c.bf16 %v675, %v672
      %v787 = vpack.c.bf16 %v683, %v680
      %v788 = vpack.c.bf16 %v691, %v688
      %v789 = vpack.c.bf16 %v699, %v696
      %v790 = vpack.c.bf16 %v707, %v704
      %v791 = vpack.c.bf16 %v715, %v712
      %v792 = vpack.c.bf16 %v723, %v720
      %v793 = vpack.c.bf16 %v731, %v728
      %v794 = vpack.c.bf16 %v739, %v736
      %v795 = vpack.c.bf16 %v747, %v744
      %v796 = vpack.c.bf16 %v755, %v752
      %v797 = vpack.c.bf16 %v763, %v760
      %v830 = vunpack.c.l.b16 %v766
      %v831 = vunpack.c.h.b16 %v766
      %v832 = vunpack.c.l.b16 %v767
      %v833 = vunpack.c.h.b16 %v767
      %v834 = vunpack.c.l.b16 %v768
      %v835 = vunpack.c.h.b16 %v768
      %v836 = vunpack.c.l.b16 %v769
      %v837 = vunpack.c.h.b16 %v769
      %v838 = vunpack.c.l.b16 %v770
      %v839 = vunpack.c.h.b16 %v770
      %v840 = vunpack.c.l.b16 %v771
      %v841 = vunpack.c.h.b16 %v771
      %v842 = vunpack.c.l.b16 %v772
      %v843 = vunpack.c.h.b16 %v772
      %v844 = vunpack.c.l.b16 %v773
      %v845 = vunpack.c.h.b16 %v773
      %v846 = vunpack.c.l.b16 %v774
      %v847 = vunpack.c.h.b16 %v774
      %v848 = vunpack.c.l.b16 %v775
      %v849 = vunpack.c.h.b16 %v775
      %v850 = vunpack.c.l.b16 %v776
      %v851 = vunpack.c.h.b16 %v776
      %v852 = vunpack.c.l.b16 %v777
      %v853 = vunpack.c.h.b16 %v777
      %v854 = vunpack.c.l.b16 %v778
      %v855 = vunpack.c.h.b16 %v778
      %v856 = vunpack.c.l.b16 %v779
      %v857 = vunpack.c.h.b16 %v779
      %v858 = vunpack.c.l.b16 %v780
      %v859 = vunpack.c.h.b16 %v780
      %v860 = vunpack.c.l.b16 %v781
      %v861 = vunpack.c.h.b16 %v781
      %v862 = vunpack.c.l.b16 %v782
      %v863 = vunpack.c.h.b16 %v782
      %v864 = vunpack.c.l.b16 %v783
      %v865 = vunpack.c.h.b16 %v783
      %v866 = vunpack.c.l.b16 %v784
      %v867 = vunpack.c.h.b16 %v784
      %v868 = vunpack.c.l.b16 %v785
      %v869 = vunpack.c.h.b16 %v785
      %v870 = vunpack.c.l.b16 %v786
      %v871 = vunpack.c.h.b16 %v786
      %v872 = vunpack.c.l.b16 %v787
      %v873 = vunpack.c.h.b16 %v787
      %v874 = vunpack.c.l.b16 %v788
      %v875 = vunpack.c.h.b16 %v788
      %v876 = vunpack.c.l.b16 %v789
      %v877 = vunpack.c.h.b16 %v789
      %v878 = vunpack.c.l.b16 %v790
      %v879 = vunpack.c.h.b16 %v790
      %v880 = vunpack.c.l.b16 %v791
      %v881 = vunpack.c.h.b16 %v791
      %v882 = vunpack.c.l.b16 %v792
      %v883 = vunpack.c.h.b16 %v792
      %v884 = vunpack.c.l.b16 %v793
      %v885 = vunpack.c.h.b16 %v793
      %v886 = vunpack.c.l.b16 %v794
      %v887 = vunpack.c.h.b16 %v794
      %v888 = vunpack.c.l.b16 %v795
      %v889 = vunpack.c.h.b16 %v795
      %v890 = vunpack.c.l.b16 %v796
      %v891 = vunpack.c.h.b16 %v796
      %v892 = vunpack.c.l.b16 %v797
      %v893 = vunpack.c.h.b16 %v797
      %v894 = vpack.c.b16 %v830, %v830
      %v895 = vpack.c.b16 %v831, %v831
      %v896 = vpack.c.b16 %v832, %v832
      %v897 = vpack.c.b16 %v833, %v833
      %v898 = vpack.c.b16 %v834, %v834
      %v899 = vpack.c.b16 %v835, %v835
      %v900 = vpack.c.b16 %v836, %v836
      %v901 = vpack.c.b16 %v837, %v837
      %v902 = vpack.c.b16 %v838, %v838
      %v903 = vpack.c.b16 %v839, %v839
      %v904 = vpack.c.b16 %v840, %v840
      %v905 = vpack.c.b16 %v841, %v841
      %v906 = vpack.c.b16 %v842, %v842
      %v907 = vpack.c.b16 %v843, %v843
      %v908 = vpack.c.b16 %v844, %v844
      %v909 = vpack.c.b16 %v845, %v845
      %v910 = vpack.c.b16 %v846, %v846
      %v911 = vpack.c.b16 %v847, %v847
      %v912 = vpack.c.b16 %v848, %v848
      %v913 = vpack.c.b16 %v849, %v849
      %v914 = vpack.c.b16 %v850, %v850
      %v915 = vpack.c.b16 %v851, %v851
      %v916 = vpack.c.b16 %v852, %v852
      %v917 = vpack.c.b16 %v853, %v853
      %v918 = vpack.c.b16 %v854, %v854
      %v919 = vpack.c.b16 %v855, %v855
      %v920 = vpack.c.b16 %v856, %v856
      %v921 = vpack.c.b16 %v857, %v857
      %v922 = vpack.c.b16 %v858, %v858
      %v923 = vpack.c.b16 %v859, %v859
      %v924 = vpack.c.b16 %v860, %v860
      %v925 = vpack.c.b16 %v861, %v861
      %v926 = vpack.c.b16 %v862, %v862
      %v927 = vpack.c.b16 %v863, %v863
      %v928 = vpack.c.b16 %v864, %v864
      %v929 = vpack.c.b16 %v865, %v865
      %v930 = vpack.c.b16 %v866, %v866
      %v931 = vpack.c.b16 %v867, %v867
      %v932 = vpack.c.b16 %v868, %v868
      %v933 = vpack.c.b16 %v869, %v869
      %v934 = vpack.c.b16 %v870, %v870
      %v935 = vpack.c.b16 %v871, %v871
      %v936 = vpack.c.b16 %v872, %v872
      %v937 = vpack.c.b16 %v873, %v873
      %v938 = vpack.c.b16 %v874, %v874
      %v939 = vpack.c.b16 %v875, %v875
      %v940 = vpack.c.b16 %v876, %v876
      %v941 = vpack.c.b16 %v877, %v877
      %v942 = vpack.c.b16 %v878, %v878
      %v943 = vpack.c.b16 %v879, %v879
      %v944 = vpack.c.b16 %v880, %v880
      %v945 = vpack.c.b16 %v881, %v881
      %v946 = vpack.c.b16 %v882, %v882
      %v947 = vpack.c.b16 %v883, %v883
      %v948 = vpack.c.b16 %v884, %v884
      %v949 = vpack.c.b16 %v885, %v885
      %v950 = vpack.c.b16 %v886, %v886
      %v951 = vpack.c.b16 %v887, %v887
      %v952 = vpack.c.b16 %v888, %v888
      %v953 = vpack.c.b16 %v889, %v889
      %v954 = vpack.c.b16 %v890, %v890
      %v955 = vpack.c.b16 %v891, %v891
      %v956 = vpack.c.b16 %v892, %v892
      %v957 = vpack.c.b16 %v893, %v893
      %1022 = vst [vmem:[%s145] sm:$0xf] %v894
      %1023 = vst [vmem:[%s145 + $0x4] sm:$0xf] %v895
      %1024 = vst [vmem:[%s145 + $0x8] sm:$0xf] %v896
      %1025 = vst [vmem:[%s145 + $0xc] sm:$0xf] %v897
      %1026 = vst [vmem:[%s145 + $0x10] sm:$0xf] %v898
      %1027 = vst [vmem:[%s145 + $0x14] sm:$0xf] %v899
      %1028 = vst [vmem:[%s145 + $0x18] sm:$0xf] %v900
      %1029 = vst [vmem:[%s145 + $0x1c] sm:$0xf] %v901
      %1030 = vst [vmem:[%s145 + $0x20] sm:$0xf] %v902
      %1031 = vst [vmem:[%s145 + $0x24] sm:$0xf] %v903
      %1032 = vst [vmem:[%s145 + $0x28] sm:$0xf] %v904
      %1033 = vst [vmem:[%s145 + $0x2c] sm:$0xf] %v905
      %1034 = vst [vmem:[%s145 + $0x30] sm:$0xf] %v906
      %1035 = vst [vmem:[%s145 + $0x34] sm:$0xf] %v907
      %1036 = vst [vmem:[%s145 + $0x38] sm:$0xf] %v908
      %1037 = vst [vmem:[%s145 + $0x3c] sm:$0xf] %v909
      %1038 = vst [vmem:[%s145 + $0x40] sm:$0xf] %v910
      %1039 = vst [vmem:[%s145 + $0x44] sm:$0xf] %v911
      %1040 = vst [vmem:[%s145 + $0x48] sm:$0xf] %v912
      %1041 = vst [vmem:[%s145 + $0x4c] sm:$0xf] %v913
      %1042 = vst [vmem:[%s145 + $0x50] sm:$0xf] %v914
      %1043 = vst [vmem:[%s145 + $0x54] sm:$0xf] %v915
      %1044 = vst [vmem:[%s145 + $0x58] sm:$0xf] %v916
      %1045 = vst [vmem:[%s145 + $0x5c] sm:$0xf] %v917
      %1046 = vst [vmem:[%s145 + $0x60] sm:$0xf] %v918
      %1047 = vst [vmem:[%s145 + $0x64] sm:$0xf] %v919
      %1048 = vst [vmem:[%s145 + $0x68] sm:$0xf] %v920
      %1049 = vst [vmem:[%s145 + $0x6c] sm:$0xf] %v921
      %1050 = vst [vmem:[%s145 + $0x70] sm:$0xf] %v922
      %1051 = vst [vmem:[%s145 + $0x74] sm:$0xf] %v923
      %1052 = vst [vmem:[%s145 + $0x78] sm:$0xf] %v924
      %1053 = vst [vmem:[%s145 + $0x7c] sm:$0xf] %v925
      %1054 = vst [vmem:[%s145 + $0x80] sm:$0xf] %v926
      %1055 = vst [vmem:[%s145 + $0x84] sm:$0xf] %v927
      %1056 = vst [vmem:[%s145 + $0x88] sm:$0xf] %v928
      %1057 = vst [vmem:[%s145 + $0x8c] sm:$0xf] %v929
      %1058 = vst [vmem:[%s145 + $0x90] sm:$0xf] %v930
      %1059 = vst [vmem:[%s145 + $0x94] sm:$0xf] %v931
      %1060 = vst [vmem:[%s145 + $0x98] sm:$0xf] %v932
      %1061 = vst [vmem:[%s145 + $0x9c] sm:$0xf] %v933
      %1062 = vst [vmem:[%s145 + $0xa0] sm:$0xf] %v934
      %1063 = vst [vmem:[%s145 + $0xa4] sm:$0xf] %v935
      %1064 = vst [vmem:[%s145 + $0xa8] sm:$0xf] %v936
      %1065 = vst [vmem:[%s145 + $0xac] sm:$0xf] %v937
      %1066 = vst [vmem:[%s145 + $0xb0] sm:$0xf] %v938
      %1067 = vst [vmem:[%s145 + $0xb4] sm:$0xf] %v939
      %1068 = vst [vmem:[%s145 + $0xb8] sm:$0xf] %v940
      %1069 = vst [vmem:[%s145 + $0xbc] sm:$0xf] %v941
      %1070 = vst [vmem:[%s145 + $0xc0] sm:$0xf] %v942
      %1071 = vst [vmem:[%s145 + $0xc4] sm:$0xf] %v943
      %1072 = vst [vmem:[%s145 + $0xc8] sm:$0xf] %v944
      %1073 = vst [vmem:[%s145 + $0xcc] sm:$0xf] %v945
      %1074 = vst [vmem:[%s145 + $0xd0] sm:$0xf] %v946
      %1075 = vst [vmem:[%s145 + $0xd4] sm:$0xf] %v947
      %1076 = vst [vmem:[%s145 + $0xd8] sm:$0xf] %v948
      %1077 = vst [vmem:[%s145 + $0xdc] sm:$0xf] %v949
      %1078 = vst [vmem:[%s145 + $0xe0] sm:$0xf] %v950
      %1079 = vst [vmem:[%s145 + $0xe4] sm:$0xf] %v951
      %1080 = vst [vmem:[%s145 + $0xe8] sm:$0xf] %v952
      %1081 = vst [vmem:[%s145 + $0xec] sm:$0xf] %v953
      %1082 = vst [vmem:[%s145 + $0xf0] sm:$0xf] %v954
      %1083 = vst [vmem:[%s145 + $0xf4] sm:$0xf] %v955
      %1084 = vst [vmem:[%s145 + $0xf8] sm:$0xf] %v956
      %1085 = vst [vmem:[%s145 + $0xfc] sm:$0xf] %v957
      %s1086 = smul.u32 64, %s13
      %p1087 = scmp.lt.s32.totalorder %s1086, 255
      %s1088 = scalar_select %p1087, %s1086, 255
      %s1089 = smul.addr %s1088, 4
      %s1090 = scalar_lea.vmem %s2, %s1089
      // Predicated region
      $region29: #{_lambda_.15} parent=27 // pred_check
        %p1091 = pneg %p78
      $region30: #{_lambda_.15} parent=27 // pred_check_branch
        %1093 = sbr.rel (%p1091) target = $region32
      $region31: #{_lambda_.15} parent=27 // pred_region
        %s1094 = smul.u32 64, %s13
      $region32: #{_lambda_.15} parent=27 // pred_fallthru
        _
    $region28: #{_lambda_.15} parent=5 // pred_fallthru
      _
    %p1095 = scmp.le.s32.totalorder 2, %s8
    // Predicated region
    $region33: #{_lambda_.15} parent=5 // pred_check
      %p1096 = pneg %p1095
    $region34: #{_lambda_.15} parent=5 // pred_check_branch
      %1098 = sbr.rel (%p1096) target = $region36
    $region35: #{_lambda_.15} parent=5 // pred_region
      %s1099 = ssub.s32 %s8, 2
      // Predicated region
      $region37: #{_lambda_.15} parent=35 // pred_check
        %p1100 = pneg %p84
      $region38: #{_lambda_.15} parent=35 // pred_check_branch
        %1102 = sbr.rel (%p1100) target = $region40
      $region39: #{_lambda_.15} parent=35 // pred_region
        %s1103 = smul.u32 64, %s14
        %p1104 = scmp.lt.s32.totalorder %s1103, 255
        %s1105 = scalar_select %p1104, %s1103, 255
        %s1106 = smul.addr %s1105, 4
        %s1107 = scalar_lea.vmem %s2, %s1106
      $region40: #{_lambda_.15} parent=35 // pred_fallthru
        _
    $region36: #{_lambda_.15} parent=5 // pred_fallthru
      _
  $region6: #{_lambda_.15} parent=0 // loop_footer
    %s12 = sadd.s32 1, %s8
  $region7: #{_lambda_.15} parent=0 // loop_footer_branch
    %7 = sbr.rel target = $region3
  $region8: #{_lambda_.15} parent=0 // loop_exit
    _

</llo_original>
